<compile_context>
chip_gen: v7x
topology: tpu7x:2x2x1
jax: 0.10.0
libtpu: 0.0.40
codegen_flags: <defaults>
</compile_context>

<pallas_src>
import jax
import jax.numpy as jnp
from jax.experimental import pallas as pl
from jax.experimental.pallas import tpu as pltpu

_VMEM_LIMIT = 48 * 1024 * 1024        # > default scoped limit, < v7x physical
_STREAM_BUDGET = 12 * 1024 * 1024     # VMEM budget for the double-buffered
                                      # xg + hseq streams in the recurrence


def _round_up(x, m):
    return (x + m - 1) // m * m


def _pick_tile(dim, align, cap):
    """Largest tile <= cap that divides dim (multiple of align), or the full
    dim when it fits in one block.  Falls back to `align` (=> padding)."""
    if dim <= cap:
        return dim
    t = (cap // align) * align
    while t >= align:
        if dim % t == 0:
            return t
        t -= align
    return align


def _pick_batch_tile(B):
    # Split batch in two (megacore "parallel" axis) when each half stays
    # sublane-aligned; otherwise keep the whole batch in one block.
    if B % 16 == 0:
        return B // 2
    return B


def _pick_time_chunk(L, Bt, H, elem_bytes=2,
                     budget_bytes=_STREAM_BUDGET, cap=64):
    """Size the time chunk from a VMEM budget: double-buffered xg (Tc,Bt,4H)
    + hseq (Tc,Bt,H) bf16 blocks must fit `budget_bytes`."""
    per_step = 2 * (4 * H + H) * Bt * elem_bytes
    tc = max(1, min(L, cap, budget_bytes // max(per_step, 1)))
    while L % tc:
        tc -= 1
    return tc


def _sigmoid(x):
    # 0.5*(tanh(0.5x)+1): keeps the transcendental on the EUP slot, no divide.
    return 0.5 * (jnp.tanh(0.5 * x) + 1.0)


# ----------------------------------------------------------------------------
# Tiled matmul (+bias) kernel: hoisted X@W_ih slabs, decoder context gates and
# the vocab projection.  bf16 operands, f32 accumulation.
# ----------------------------------------------------------------------------
def _matmul_kernel(x_ref, w_ref, b_ref, o_ref, acc_ref):
    k = pl.program_id(2)

    @pl.when(k == 0)
    def _():
        acc_ref[...] = jnp.zeros_like(acc_ref)

    acc_ref[...] += jnp.dot(x_ref[...], w_ref[...],
                            preferred_element_type=jnp.float32)

    @pl.when(k == pl.num_programs(2) - 1)
    def _():
        o_ref[...] = (acc_ref[...] + b_ref[...]).astype(o_ref.dtype)


def matmul_bias(x, w_t, bias, *, out_dtype=jnp.float32,
                tm_cap=512, tn_cap=512, tk_cap=512):
    """x: (M, K); w_t: (K, N) bf16 (pre-transposed at init); bias: (1, N) f32."""
    if x.dtype != jnp.bfloat16:
        x = x.astype(jnp.bfloat16)
    if bias.ndim == 1:
        bias = bias.reshape(1, -1)
    M, K = x.shape
    N = w_t.shape[1]

    tm = _pick_tile(M, 8, tm_cap)
    tn = _pick_tile(N, 128, tn_cap)
    tk = _pick_tile(K, 128, tk_cap)

    # Fallback padding only when a dim has no usable divisor (never hit for
    # the shapes in this script; weights are shaped nicely at init time).
    Mp = M if M % tm == 0 else _round_up(M, tm)
    Kp = K if K % tk == 0 else _round_up(K, tk)
    Np = N if N % tn == 0 else _round_up(N, tn)
    xp = x if (Mp, Kp) == (M, K) else jnp.pad(x, ((0, Mp - M), (0, Kp - K)))
    wp = w_t if (Kp, Np) == (K, N) else jnp.pad(w_t, ((0, Kp - K), (0, Np - N)))
    bp = bias if Np == N else jnp.pad(bias, ((0, 0), (0, Np - N)))

    out = pl.pallas_call(
        _matmul_kernel,
        grid=(Mp // tm, Np // tn, Kp // tk),
        in_specs=[
            pl.BlockSpec((tm, tk), lambda i, j, k: (i, k)),
            pl.BlockSpec((tk, tn), lambda i, j, k: (k, j)),
            pl.BlockSpec((1, tn), lambda i, j, k: (0, j)),
        ],
        out_specs=pl.BlockSpec((tm, tn), lambda i, j, k: (i, j)),
        out_shape=jax.ShapeDtypeStruct((Mp, Np), out_dtype),
        scratch_shapes=[pltpu.VMEM((tm, tn), jnp.float32)],
        compiler_params=pltpu.CompilerParams(
            dimension_semantics=("parallel", "parallel", "arbitrary"),
            vmem_limit_bytes=_VMEM_LIMIT),
    )(xp, wp, bp)
    if (Mp, Np) != (M, N):
        out = out[:M, :N]
    return out


# ----------------------------------------------------------------------------
# Recurrent LSTM kernel: only the hidden-to-hidden work stays in the loop.
# Grid = (batch blocks ["parallel"], time chunks ["arbitrary"]).
# ----------------------------------------------------------------------------
def _make_lstm_kernel(has_g0, batch_major):
    def kernel(len_ref, xg_ref, whh_ref, *rest):
        if has_g0:
            g0_ref, hseq_ref, hlast_ref, c_sc = rest
        else:
            g0_ref = None
            hseq_ref, hlast_ref, c_sc = rest

        chunk = pl.program_id(1)
        Tc = xg_ref.shape[0]
        H = hlast_ref.shape[1]

        @pl.when(chunk == 0)
        def _():
            hlast_ref[...] = jnp.zeros_like(hlast_ref)
            c_sc[...] = jnp.zeros_like(c_sc)

        lens = len_ref[...]                      # (Bt, 1) int32, resident
        whh = whh_ref[...]                       # (H, 4H) bf16, resident
        g0 = g0_ref[...] if has_g0 else None     # (Bt, 4H) f32
        t0 = chunk * Tc

        # packed-sequence masks: independent of h, hoisted off the serial chain
        masks = [((t0 + t) < lens).astype(jnp.float32) for t in range(Tc)]

        for t in range(Tc):                      # static unroll inside chunk
            h_prev = hlast_ref[...]              # f32 state
            c_prev = c_sc[...]

            gates = xg_ref[t] + jnp.dot(h_prev.astype(jnp.bfloat16), whh,
                                        preferred_element_type=jnp.float32)
            if has_g0:
                gates = gates + g0
            i_g = _sigmoid(gates[:, 0 * H:1 * H])
            f_g = _sigmoid(gates[:, 1 * H:2 * H])
            g_g = jnp.tanh(gates[:, 2 * H:3 * H])
            o_g = _sigmoid(gates[:, 3 * H:4 * H])

            c_new = f_g * c_prev + i_g * g_g
            h_new = o_g * jnp.tanh(c_new)

            m = masks[t]                         # (Bt, 1)
            h_t = m * h_new + (1.0 - m) * h_prev   # freeze past each length
            c_t = m * c_new + (1.0 - m) * c_prev

            hlast_ref[...] = h_t
            c_sc[...] = c_t
            h_out = (h_t * m).astype(hseq_ref.dtype)   # zero-fill padding
            if batch_major:
                hseq_ref[:, t, :] = h_out        # static t -> static slice
            else:
                hseq_ref[t] = h_out
    return kernel


def lstm_layer(xg_tm, lengths_col, whh_t, g0=None, *, batch_major_out=False,
               time_chunk=None, batch_tile=None):
    """xg_tm: (L, B, 4H) bf16 precomputed input gates (+bias);
    lengths_col: (B,1) int32; whh_t: (H,4H) bf16; g0: optional (B,4H) f32
    extra gate bias (decoder context).  Returns (h_seq bf16, h_n (B,H) f32);
    h_seq is (B,L,H) if batch_major_out else (L,B,H)."""
    L, B, G = xg_tm.shape
    H = whh_t.shape[0]
    Bt = batch_tile or _pick_batch_tile(B)
    Tc = time_chunk or _pick_time_chunk(L, Bt, H)

    in_specs = [
        pl.BlockSpec((Bt, 1), lambda b, c: (b, 0)),
        pl.BlockSpec((Tc, Bt, G), lambda b, c: (c, b, 0)),
        pl.BlockSpec((H, G), lambda b, c: (0, 0)),
    ]
    operands = [lengths_col, xg_tm, whh_t]
    if g0 is not None:
        in_specs.append(pl.BlockSpec((Bt, G), lambda b, c: (b, 0)))
        operands.append(g0)

    if batch_major_out:
        hseq_shape = (B, L, H)
        hseq_spec = pl.BlockSpec((Bt, Tc, H), lambda b, c: (b, c, 0))
    else:
        hseq_shape = (L, B, H)
        hseq_spec = pl.BlockSpec((Tc, Bt, H), lambda b, c: (c, b, 0))

    hseq, hlast = pl.pallas_call(
        _make_lstm_kernel(g0 is not None, batch_major_out),
        grid=(B // Bt, L // Tc),
        in_specs=in_specs,
        out_specs=[hseq_spec,
                   pl.BlockSpec((Bt, H), lambda b, c: (b, 0))],
        out_shape=[jax.ShapeDtypeStruct(hseq_shape, jnp.bfloat16),
                   jax.ShapeDtypeStruct((B, H), jnp.float32)],
        scratch_shapes=[pltpu.VMEM((Bt, H), jnp.float32)],
        compiler_params=pltpu.CompilerParams(
            dimension_semantics=("parallel", "arbitrary"),
            vmem_limit_bytes=_VMEM_LIMIT),
    )(*operands)
    return hseq, hlast


# ----------------------------------------------------------------------------
# Parameters: pre-transposed / pre-fused / bf16-cast once at init time
# (matches Seq2Seq.init_weights: uniform(-0.1, 0.1), zero linear bias).
# ----------------------------------------------------------------------------
def init_params(key, emsize, nhidden, ntokens, nlayers):
    initrange = 0.1

    def u(k, shape):
        return jax.random.uniform(k, shape, jnp.float32, -initrange, initrange)

    bf16 = jnp.bfloat16
    keys = iter(jax.random.split(key, 64))
    params = {
        "enc_embedding": u(next(keys), (ntokens, emsize)).astype(bf16),
        "dec_embedding": u(next(keys), (ntokens, emsize)).astype(bf16),
    }
    enc_layers = []
    for layer in range(nlayers):
        fin = emsize if layer == 0 else nhidden
        w_ih = u(next(keys), (4 * nhidden, fin))
        w_hh = u(next(keys), (4 * nhidden, nhidden))
        b_ih = u(next(keys), (4 * nhidden,))
        b_hh = u(next(keys), (4 * nhidden,))
        enc_layers.append(dict(
            wih_t=jnp.transpose(w_ih).astype(bf16),        # (F, 4H)
            whh_t=jnp.transpose(w_hh).astype(bf16),        # (H, 4H)
            bias=(b_ih + b_hh).reshape(1, -1),             # (1, 4H) f32
        ))
    params["encoder"] = enc_layers

    w_ih_dec = u(next(keys), (4 * nhidden, emsize + nhidden))
    w_hh_dec = u(next(keys), (4 * nhidden, nhidden))
    b_ih_dec = u(next(keys), (4 * nhidden,))
    b_hh_dec = u(next(keys), (4 * nhidden,))
    wih_dec_t = jnp.transpose(w_ih_dec)                    # (E+H, 4H)
    params["decoder"] = dict(
        wih_e_t=wih_dec_t[:emsize].astype(bf16),           # (E, 4H) emb part
        wih_h_t=wih_dec_t[emsize:].astype(bf16),           # (H, 4H) ctx part
        whh_t=jnp.transpose(w_hh_dec).astype(bf16),
        bias=(b_ih_dec + b_hh_dec).reshape(1, -1),
    )
    params["linear_w_t"] = jnp.transpose(
        u(next(keys), (ntokens, nhidden))).astype(bf16)    # (H, V)
    params["linear_b"] = jnp.zeros((1, ntokens), jnp.float32)
    return params


# ----------------------------------------------------------------------------
# Seq2Seq forward (encode -> L2 normalize -> LSTM decode -> linear)
# ----------------------------------------------------------------------------
def seq2seq_forward(params, inp, lengths):
    """inp: (B, L) int32; lengths: (B,) int32 sorted descending with
    lengths[0] == L (so maxlen == lengths.max() == L, static)."""
    B, L = inp.shape
    H = params["encoder"][0]["whh_t"].shape[0]
    lengths_col = lengths.astype(jnp.int32).reshape(B, 1)
    inp_t = inp.T    # gather time-major ids: no activation transposes needed

    # ----- encode -----
    x = jnp.take(params["enc_embedding"], inp_t, axis=0)          # (L,B,E) bf16
    hlast = None
    for lp in params["encoder"]:
        F = x.shape[-1]
        xg = matmul_bias(x.reshape(L * B, F), lp["wih_t"], lp["bias"],
                         out_dtype=jnp.bfloat16).reshape(L, B, 4 * H)
        x, hlast = lstm_layer(xg, lengths_col, lp["whh_t"])       # no g0 add
    internal = hlast / jnp.linalg.norm(hlast, axis=1, keepdims=True)   # (B,H)

    # ----- decode (dec_type='lstm') -----
    dp = params["decoder"]
    dec_x = jnp.take(params["dec_embedding"], inp_t, axis=0)      # (L,B,E) bf16
    E = dec_x.shape[-1]
    xg_dec = matmul_bias(dec_x.reshape(L * B, E), dp["wih_e_t"], dp["bias"],
                         out_dtype=jnp.bfloat16).reshape(L, B, 4 * H)
    # Constant decoder context folded into a per-batch gate bias (B, 4H).
    ctx_gates = matmul_bias(internal, dp["wih_h_t"],
                            jnp.zeros((1, 4 * H), jnp.float32))
    hseq_bm, _ = lstm_layer(xg_dec, lengths_col, dp["whh_t"], g0=ctx_gates,
                            batch_major_out=True)                 # (B,L,H) bf16

    logits = matmul_bias(hseq_bm.reshape(B * L, H), params["linear_w_t"],
                         params["linear_b"])                      # (B*L,V) f32
    return logits.reshape(B, L, -1)


# ----------------------------------------------------------------------------
# Pure-JAX f32 reference (mirrors the PyTorch structure: concat embs+context).
# Uses the same bf16-rounded weights upcast to f32.
# ----------------------------------------------------------------------------
def _f32(a):
    return a.astype(jnp.float32)


def _lstm_layer_ref(x_tm, mask_tm, wih_t, whh_t, bias):
    H = whh_t.shape[1] // 4
    B = x_tm.shape[1]

    def step(carry, xm):
        h, c = carry
        x, m = xm
        gates = jnp.dot(x, wih_t) + jnp.dot(h, whh_t) + bias
        i = jax.nn.sigmoid(gates[:, :H])
        f = jax.nn.sigmoid(gates[:, H:2 * H])
        g = jnp.tanh(gates[:, 2 * H:3 * H])
        o = jax.nn.sigmoid(gates[:, 3 * H:])
        c_new = f * c + i * g
        h_new = o * jnp.tanh(c_new)
        h2 = m * h_new + (1.0 - m) * h
        c2 = m * c_new + (1.0 - m) * c
        return (h2, c2), h2 * m

    init = (jnp.zeros((B, H), jnp.float32), jnp.zeros((B, H), jnp.float32))
    (h, _), hs = jax.lax.scan(step, init, (x_tm, mask_tm))
    return hs, h


def seq2seq_forward_ref(params, inp, lengths):
    B, L = inp.shape
    mask_tm = (jnp.arange(L)[:, None] < lengths[None, :]
               ).astype(jnp.float32)[..., None]                   # (L, B, 1)
    x = jnp.transpose(jnp.take(_f32(params["enc_embedding"]), inp, axis=0),
                      (1, 0, 2))
    hlast = None
    for lp in params["encoder"]:
        x, hlast = _lstm_layer_ref(x, mask_tm, _f32(lp["wih_t"]),
                                   _f32(lp["whh_t"]), _f32(lp["bias"]))
    internal = hlast / jnp.linalg.norm(hlast, axis=1, keepdims=True)

    dp = params["decoder"]
    dec_embs = jnp.transpose(jnp.take(_f32(params["dec_embedding"]), inp,
                                      axis=0), (1, 0, 2))
    hiddens = jnp.broadcast_to(internal[None, :, :], (L,) + internal.shape)
    aug = jnp.concatenate([dec_embs, hiddens], axis=-1)
    wih_full_t = jnp.concatenate([_f32(dp["wih_e_t"]), _f32(dp["wih_h_t"])],
                                 axis=0)
    hseq, _ = _lstm_layer_ref(aug, mask_tm, wih_full_t, _f32(dp["whh_t"]),
                              _f32(dp["bias"]))

    output = jnp.transpose(hseq, (1, 0, 2)).reshape(B * L, -1)
    logits = jnp.dot(output, _f32(params["linear_w_t"])) + params["linear_b"]
    return logits.reshape(B, L, -1)


if __name__ == "__main__":
    emsize, nhidden, ntokens, nlayers = 16, 32, 50, 2
    B, L = 2, 8

    key = jax.random.PRNGKey(0)
    pkey, ikey = jax.random.split(key)
    params = init_params(pkey, emsize, nhidden, ntokens, nlayers)
    inp = jax.random.randint(ikey, (B, L), 0, ntokens, dtype=jnp.int32)
    lengths = jnp.array([L, 5], dtype=jnp.int32)   # sorted desc, max == L

    fwd = jax.jit(seq2seq_forward)
    out = jax.block_until_ready(fwd(params, inp, lengths))
    assert out.shape == (B, L, ntokens), out.shape

    ref = seq2seq_forward_ref(params, inp, lengths)
    err = float(jnp.max(jnp.abs(out - ref)))
    assert jnp.allclose(out, ref, atol=3e-2, rtol=3e-2), err

    print("KERNEL_OK")
</pallas_src>

<mosaic_0001>
module attributes {stable_mosaic.version = 11 : i64} {
  func.func @_matmul_kernel(%arg0: i32, %arg1: i32, %arg2: i32, %arg3: memref<16x16xbf16, #tpu.memory_space<vmem>>, %arg4: memref<16x128xbf16, #tpu.memory_space<vmem>>, %arg5: memref<1x128xf32, #tpu.memory_space<vmem>>, %arg6: memref<16x128xbf16, #tpu.memory_space<vmem>>, %arg7: memref<16x128xf32, #tpu.memory_space<vmem>>) attributes {dimension_semantics = [#tpu.dimension_semantics<parallel>, #tpu.dimension_semantics<parallel>, #tpu.dimension_semantics<arbitrary>], iteration_bounds = array<i64: 1, 1, 1>, scalar_prefetch = 0 : i64, scratch_operands = 1 : i64, tpu.core_type = #tpu.core_type<tc>, window_params = [{transform_indices = @transform_0, window_bounds = array<i64: 16, 16>}, {transform_indices = @transform_1, window_bounds = array<i64: 16, 128>}, {transform_indices = @transform_2, window_bounds = array<i64: 1, 128>}, {transform_indices = @transform_3, window_bounds = array<i64: 16, 128>}]} {
    %c0_i32 = arith.constant 0 : i32
    %0 = arith.cmpi eq, %arg2, %c0_i32 : i32
    %1 = arith.extui %0 : i1 to i32
    %c0_i32_0 = arith.constant 0 : i32
    %2 = arith.cmpi ne, %1, %c0_i32_0 : i32
    scf.if %2 {
      %cst_10 = arith.constant 0.000000e+00 : f32
      %12 = vector.broadcast %cst_10 : f32 to vector<16x128xf32>
      %c0_11 = arith.constant 0 : index
      %c0_12 = arith.constant 0 : index
      %13 = vector.load %arg7[%c0_11, %c0_12] : memref<16x128xf32, #tpu.memory_space<vmem>>, vector<16x128xf32>
      tpu.vector_store %arg7[%c0_11, %c0_12], %12 {strides = array<i32>} : memref<16x128xf32, #tpu.memory_space<vmem>>, vector<16x128xf32>,
    } else {
    }
    %c0 = arith.constant 0 : index
    %c0_1 = arith.constant 0 : index
    %3 = vector.load %arg7[%c0, %c0_1] : memref<16x128xf32, #tpu.memory_space<vmem>>, vector<16x128xf32>
    %c0_2 = arith.constant 0 : index
    %c0_3 = arith.constant 0 : index
    %4 = vector.load %arg3[%c0_2, %c0_3] : memref<16x16xbf16, #tpu.memory_space<vmem>>, vector<16x16xbf16>
    %c0_4 = arith.constant 0 : index
    %c0_5 = arith.constant 0 : index
    %5 = vector.load %arg4[%c0_4, %c0_5] : memref<16x128xbf16, #tpu.memory_space<vmem>>, vector<16x128xbf16>
    %cst = arith.constant dense<0.000000e+00> : vector<16x128xf32>
    %6 = tpu.matmul %4, %5, %cst {dimension_numbers = #tpu.dot_dimension_numbers<[1], [0], [0], [1], [0, 0, 1, 1], [], []>} : vector<16x16xbf16>, vector<16x128xbf16>, vector<16x128xf32> -> vector<16x128xf32>
    %7 = arith.addf %3, %6 : vector<16x128xf32>
    %c0_6 = arith.constant 0 : index
    %c0_7 = arith.constant 0 : index
    %8 = vector.load %arg7[%c0_6, %c0_7] : memref<16x128xf32, #tpu.memory_space<vmem>>, vector<16x128xf32>
    tpu.vector_store %arg7[%c0_6, %c0_7], %7 {strides = array<i32>} : memref<16x128xf32, #tpu.memory_space<vmem>>, vector<16x128xf32>,
    %c0_i32_8 = arith.constant 0 : i32
    %9 = arith.cmpi eq, %arg2, %c0_i32_8 : i32
    %10 = arith.extui %9 : i1 to i32
    %c0_i32_9 = arith.constant 0 : i32
    %11 = arith.cmpi ne, %10, %c0_i32_9 : i32
    scf.if %11 {
      %c0_10 = arith.constant 0 : index
      %c0_11 = arith.constant 0 : index
      %12 = vector.load %arg7[%c0_10, %c0_11] : memref<16x128xf32, #tpu.memory_space<vmem>>, vector<16x128xf32>
      %c0_12 = arith.constant 0 : index
      %c0_13 = arith.constant 0 : index
      %13 = vector.load %arg5[%c0_12, %c0_13] : memref<1x128xf32, #tpu.memory_space<vmem>>, vector<1x128xf32>
      %14 = vector.broadcast %13 : vector<1x128xf32> to vector<16x128xf32>
      %15 = arith.addf %12, %14 : vector<16x128xf32>
      %16 = arith.truncf %15 : vector<16x128xf32> to vector<16x128xbf16>
      %c0_14 = arith.constant 0 : index
      %c0_15 = arith.constant 0 : index
      %17 = vector.load %arg6[%c0_14, %c0_15] : memref<16x128xbf16, #tpu.memory_space<vmem>>, vector<16x128xbf16>
      tpu.vector_store %arg6[%c0_14, %c0_15], %16 {strides = array<i32>} : memref<16x128xbf16, #tpu.memory_space<vmem>>, vector<16x128xbf16>,
    } else {
    }
    return
  }
  func.func @transform_0(%arg0: i32, %arg1: i32, %arg2: i32) -> (i32, i32) {
    %c0_i32 = arith.constant 0 : i32
    return %arg0, %arg2 : i32, i32
  }
  func.func @transform_1(%arg0: i32, %arg1: i32, %arg2: i32) -> (i32, i32) {
    %c0_i32 = arith.constant 0 : i32
    return %arg2, %arg1 : i32, i32
  }
  func.func @transform_2(%arg0: i32, %arg1: i32, %arg2: i32) -> (i32, i32) {
    %c0_i32 = arith.constant 0 : i32
    %c0_i32_0 = arith.constant 0 : i32
    return %c0_i32, %arg1 : i32, i32
  }
  func.func @transform_3(%arg0: i32, %arg1: i32, %arg2: i32) -> (i32, i32) {
    %c0_i32 = arith.constant 0 : i32
    return %arg0, %arg1 : i32, i32
  }
}

module attributes {stable_mosaic.version = 11 : i64} {
  func.func @_matmul_kernel(%arg0: i32, %arg1: i32, %arg2: i32, %arg3: memref<16x32xbf16, #tpu.memory_space<vmem>>, %arg4: memref<32x128xbf16, #tpu.memory_space<vmem>>, %arg5: memref<1x128xf32, #tpu.memory_space<vmem>>, %arg6: memref<16x128xbf16, #tpu.memory_space<vmem>>, %arg7: memref<16x128xf32, #tpu.memory_space<vmem>>) attributes {dimension_semantics = [#tpu.dimension_semantics<parallel>, #tpu.dimension_semantics<parallel>, #tpu.dimension_semantics<arbitrary>], iteration_bounds = array<i64: 1, 1, 1>, scalar_prefetch = 0 : i64, scratch_operands = 1 : i64, tpu.core_type = #tpu.core_type<tc>, window_params = [{transform_indices = @transform_0, window_bounds = array<i64: 16, 32>}, {transform_indices = @transform_1, window_bounds = array<i64: 32, 128>}, {transform_indices = @transform_2, window_bounds = array<i64: 1, 128>}, {transform_indices = @transform_3, window_bounds = array<i64: 16, 128>}]} {
    %c0_i32 = arith.constant 0 : i32
    %0 = arith.cmpi eq, %arg2, %c0_i32 : i32
    %1 = arith.extui %0 : i1 to i32
    %c0_i32_0 = arith.constant 0 : i32
    %2 = arith.cmpi ne, %1, %c0_i32_0 : i32
    scf.if %2 {
      %cst_10 = arith.constant 0.000000e+00 : f32
      %12 = vector.broadcast %cst_10 : f32 to vector<16x128xf32>
      %c0_11 = arith.constant 0 : index
      %c0_12 = arith.constant 0 : index
      %13 = vector.load %arg7[%c0_11, %c0_12] : memref<16x128xf32, #tpu.memory_space<vmem>>, vector<16x128xf32>
      tpu.vector_store %arg7[%c0_11, %c0_12], %12 {strides = array<i32>} : memref<16x128xf32, #tpu.memory_space<vmem>>, vector<16x128xf32>,
    } else {
    }
    %c0 = arith.constant 0 : index
    %c0_1 = arith.constant 0 : index
    %3 = vector.load %arg7[%c0, %c0_1] : memref<16x128xf32, #tpu.memory_space<vmem>>, vector<16x128xf32>
    %c0_2 = arith.constant 0 : index
    %c0_3 = arith.constant 0 : index
    %4 = vector.load %arg3[%c0_2, %c0_3] : memref<16x32xbf16, #tpu.memory_space<vmem>>, vector<16x32xbf16>
    %c0_4 = arith.constant 0 : index
    %c0_5 = arith.constant 0 : index
    %5 = vector.load %arg4[%c0_4, %c0_5] : memref<32x128xbf16, #tpu.memory_space<vmem>>, vector<32x128xbf16>
    %cst = arith.constant dense<0.000000e+00> : vector<16x128xf32>
    %6 = tpu.matmul %4, %5, %cst {dimension_numbers = #tpu.dot_dimension_numbers<[1], [0], [0], [1], [0, 0, 1, 1], [], []>} : vector<16x32xbf16>, vector<32x128xbf16>, vector<16x128xf32> -> vector<16x128xf32>
    %7 = arith.addf %3, %6 : vector<16x128xf32>
    %c0_6 = arith.constant 0 : index
    %c0_7 = arith.constant 0 : index
    %8 = vector.load %arg7[%c0_6, %c0_7] : memref<16x128xf32, #tpu.memory_space<vmem>>, vector<16x128xf32>
    tpu.vector_store %arg7[%c0_6, %c0_7], %7 {strides = array<i32>} : memref<16x128xf32, #tpu.memory_space<vmem>>, vector<16x128xf32>,
    %c0_i32_8 = arith.constant 0 : i32
    %9 = arith.cmpi eq, %arg2, %c0_i32_8 : i32
    %10 = arith.extui %9 : i1 to i32
    %c0_i32_9 = arith.constant 0 : i32
    %11 = arith.cmpi ne, %10, %c0_i32_9 : i32
    scf.if %11 {
      %c0_10 = arith.constant 0 : index
      %c0_11 = arith.constant 0 : index
      %12 = vector.load %arg7[%c0_10, %c0_11] : memref<16x128xf32, #tpu.memory_space<vmem>>, vector<16x128xf32>
      %c0_12 = arith.constant 0 : index
      %c0_13 = arith.constant 0 : index
      %13 = vector.load %arg5[%c0_12, %c0_13] : memref<1x128xf32, #tpu.memory_space<vmem>>, vector<1x128xf32>
      %14 = vector.broadcast %13 : vector<1x128xf32> to vector<16x128xf32>
      %15 = arith.addf %12, %14 : vector<16x128xf32>
      %16 = arith.truncf %15 : vector<16x128xf32> to vector<16x128xbf16>
      %c0_14 = arith.constant 0 : index
      %c0_15 = arith.constant 0 : index
      %17 = vector.load %arg6[%c0_14, %c0_15] : memref<16x128xbf16, #tpu.memory_space<vmem>>, vector<16x128xbf16>
      tpu.vector_store %arg6[%c0_14, %c0_15], %16 {strides = array<i32>} : memref<16x128xbf16, #tpu.memory_space<vmem>>, vector<16x128xbf16>,
    } else {
    }
    return
  }
  func.func @transform_0(%arg0: i32, %arg1: i32, %arg2: i32) -> (i32, i32) {
    %c0_i32 = arith.constant 0 : i32
    return %arg0, %arg2 : i32, i32
  }
  func.func @transform_1(%arg0: i32, %arg1: i32, %arg2: i32) -> (i32, i32) {
    %c0_i32 = arith.constant 0 : i32
    return %arg2, %arg1 : i32, i32
  }
  func.func @transform_2(%arg0: i32, %arg1: i32, %arg2: i32) -> (i32, i32) {
    %c0_i32 = arith.constant 0 : i32
    %c0_i32_0 = arith.constant 0 : i32
    return %c0_i32, %arg1 : i32, i32
  }
  func.func @transform_3(%arg0: i32, %arg1: i32, %arg2: i32) -> (i32, i32) {
    %c0_i32 = arith.constant 0 : i32
    return %arg0, %arg1 : i32, i32
  }
}

module attributes {stable_mosaic.version = 11 : i64} {
  func.func @kernel(%arg0: i32, %arg1: i32, %arg2: memref<2x1xi32, #tpu.memory_space<vmem>>, %arg3: memref<8x2x128xbf16, #tpu.memory_space<vmem>>, %arg4: memref<32x128xbf16, #tpu.memory_space<vmem>>, %arg5: memref<8x2x32xbf16, #tpu.memory_space<vmem>>, %arg6: memref<2x32xf32, #tpu.memory_space<vmem>>, %arg7: memref<2x32xf32, #tpu.memory_space<vmem>>) attributes {dimension_semantics = [#tpu.dimension_semantics<parallel>, #tpu.dimension_semantics<arbitrary>], iteration_bounds = array<i64: 1, 1>, scalar_prefetch = 0 : i64, scratch_operands = 1 : i64, tpu.core_type = #tpu.core_type<tc>, window_params = [{transform_indices = @transform_0, window_bounds = array<i64: 2, 1>}, {transform_indices = @transform_1, window_bounds = array<i64: 8, 2, 128>}, {pipeline_mode = #tpu.pipeline_mode<synchronous>, transform_indices = @transform_2, window_bounds = array<i64: 32, 128>}, {transform_indices = @transform_3, window_bounds = array<i64: 8, 2, 32>}, {transform_indices = @transform_4, window_bounds = array<i64: 2, 32>}]} {
    %c0_i32 = arith.constant 0 : i32
    %0 = arith.cmpi eq, %arg1, %c0_i32 : i32
    %1 = arith.extui %0 : i1 to i32
    %c0_i32_0 = arith.constant 0 : i32
    %2 = arith.cmpi ne, %1, %c0_i32_0 : i32
    scf.if %2 {
      %cst_205 = arith.constant 0.000000e+00 : f32
      %534 = vector.broadcast %cst_205 : f32 to vector<2x32xf32>
      %c0_206 = arith.constant 0 : index
      %c0_207 = arith.constant 0 : index
      %535 = vector.load %arg6[%c0_206, %c0_207] : memref<2x32xf32, #tpu.memory_space<vmem>>, vector<2x32xf32>
      tpu.vector_store %arg6[%c0_206, %c0_207], %534 {strides = array<i32>} : memref<2x32xf32, #tpu.memory_space<vmem>>, vector<2x32xf32>,
      %cst_208 = arith.constant 0.000000e+00 : f32
      %536 = vector.broadcast %cst_208 : f32 to vector<2x32xf32>
      %c0_209 = arith.constant 0 : index
      %c0_210 = arith.constant 0 : index
      %537 = vector.load %arg7[%c0_209, %c0_210] : memref<2x32xf32, #tpu.memory_space<vmem>>, vector<2x32xf32>
      tpu.vector_store %arg7[%c0_209, %c0_210], %536 {strides = array<i32>} : memref<2x32xf32, #tpu.memory_space<vmem>>, vector<2x32xf32>,
    } else {
    }
    %c0 = arith.constant 0 : index
    %c0_1 = arith.constant 0 : index
    %3 = vector.load %arg2[%c0, %c0_1] : memref<2x1xi32, #tpu.memory_space<vmem>>, vector<2x1xi32>
    %c0_2 = arith.constant 0 : index
    %c0_3 = arith.constant 0 : index
    %4 = vector.load %arg4[%c0_2, %c0_3] : memref<32x128xbf16, #tpu.memory_space<vmem>>, vector<32x128xbf16>
    %c8_i32 = arith.constant 8 : i32
    %5 = arith.muli %arg1, %c8_i32 : i32
    %c0_i32_4 = arith.constant 0 : i32
    %6 = arith.addi %5, %c0_i32_4 : i32
    %7 = vector.broadcast %6 : i32 to vector<2x1xi32>
    %8 = arith.cmpi slt, %7, %3 : vector<2x1xi32>
    %9 = arith.extui %8 : vector<2x1xi1> to vector<2x1xi32>
    %10 = arith.sitofp %9 : vector<2x1xi32> to vector<2x1xf32>
    %c1_i32 = arith.constant 1 : i32
    %11 = arith.addi %5, %c1_i32 : i32
    %12 = vector.broadcast %11 : i32 to vector<2x1xi32>
    %13 = arith.cmpi slt, %12, %3 : vector<2x1xi32>
    %14 = arith.extui %13 : vector<2x1xi1> to vector<2x1xi32>
    %15 = arith.sitofp %14 : vector<2x1xi32> to vector<2x1xf32>
    %c2_i32 = arith.constant 2 : i32
    %16 = arith.addi %5, %c2_i32 : i32
    %17 = vector.broadcast %16 : i32 to vector<2x1xi32>
    %18 = arith.cmpi slt, %17, %3 : vector<2x1xi32>
    %19 = arith.extui %18 : vector<2x1xi1> to vector<2x1xi32>
    %20 = arith.sitofp %19 : vector<2x1xi32> to vector<2x1xf32>
    %c3_i32 = arith.constant 3 : i32
    %21 = arith.addi %5, %c3_i32 : i32
    %22 = vector.broadcast %21 : i32 to vector<2x1xi32>
    %23 = arith.cmpi slt, %22, %3 : vector<2x1xi32>
    %24 = arith.extui %23 : vector<2x1xi1> to vector<2x1xi32>
    %25 = arith.sitofp %24 : vector<2x1xi32> to vector<2x1xf32>
    %c4_i32 = arith.constant 4 : i32
    %26 = arith.addi %5, %c4_i32 : i32
    %27 = vector.broadcast %26 : i32 to vector<2x1xi32>
    %28 = arith.cmpi slt, %27, %3 : vector<2x1xi32>
    %29 = arith.extui %28 : vector<2x1xi1> to vector<2x1xi32>
    %30 = arith.sitofp %29 : vector<2x1xi32> to vector<2x1xf32>
    %c5_i32 = arith.constant 5 : i32
    %31 = arith.addi %5, %c5_i32 : i32
    %32 = vector.broadcast %31 : i32 to vector<2x1xi32>
    %33 = arith.cmpi slt, %32, %3 : vector<2x1xi32>
    %34 = arith.extui %33 : vector<2x1xi1> to vector<2x1xi32>
    %35 = arith.sitofp %34 : vector<2x1xi32> to vector<2x1xf32>
    %c6_i32 = arith.constant 6 : i32
    %36 = arith.addi %5, %c6_i32 : i32
    %37 = vector.broadcast %36 : i32 to vector<2x1xi32>
    %38 = arith.cmpi slt, %37, %3 : vector<2x1xi32>
    %39 = arith.extui %38 : vector<2x1xi1> to vector<2x1xi32>
    %40 = arith.sitofp %39 : vector<2x1xi32> to vector<2x1xf32>
    %c7_i32 = arith.constant 7 : i32
    %41 = arith.addi %5, %c7_i32 : i32
    %42 = vector.broadcast %41 : i32 to vector<2x1xi32>
    %43 = arith.cmpi slt, %42, %3 : vector<2x1xi32>
    %44 = arith.extui %43 : vector<2x1xi1> to vector<2x1xi32>
    %45 = arith.sitofp %44 : vector<2x1xi32> to vector<2x1xf32>
    %c0_5 = arith.constant 0 : index
    %c0_6 = arith.constant 0 : index
    %46 = vector.load %arg6[%c0_5, %c0_6] : memref<2x32xf32, #tpu.memory_space<vmem>>, vector<2x32xf32>
    %c0_7 = arith.constant 0 : index
    %c0_8 = arith.constant 0 : index
    %47 = vector.load %arg7[%c0_7, %c0_8] : memref<2x32xf32, #tpu.memory_space<vmem>>, vector<2x32xf32>
    %c0_9 = arith.constant 0 : index
    %c0_10 = arith.constant 0 : index
    %c0_11 = arith.constant 0 : index
    %48 = vector.load %arg3[%c0_9, %c0_10, %c0_11] : memref<8x2x128xbf16, #tpu.memory_space<vmem>>, vector<1x2x128xbf16>
    %49 = vector.shape_cast %48 : vector<1x2x128xbf16> to vector<2x128xbf16>
    %50 = arith.truncf %46 : vector<2x32xf32> to vector<2x32xbf16>
    %cst = arith.constant dense<0.000000e+00> : vector<2x128xf32>
    %51 = tpu.matmul %50, %4, %cst {dimension_numbers = #tpu.dot_dimension_numbers<[1], [0], [0], [1], [0, 0, 1, 1], [], []>} : vector<2x32xbf16>, vector<32x128xbf16>, vector<2x128xf32> -> vector<2x128xf32>
    %52 = arith.extf %49 : vector<2x128xbf16> to vector<2x128xf32>
    %53 = arith.addf %52, %51 : vector<2x128xf32>
    %54 = vector.extract_strided_slice %53 {offsets = [0, 0], sizes = [2, 32], strides = [1, 1]} : vector<2x128xf32> to vector<2x32xf32>
    %cst_12 = arith.constant 5.000000e-01 : f32
    %55 = vector.broadcast %cst_12 : f32 to vector<2x32xf32>
    %56 = arith.mulf %55, %54 : vector<2x32xf32>
    %57 = math.tanh %56 : vector<2x32xf32>
    %cst_13 = arith.constant 1.000000e+00 : f32
    %58 = vector.broadcast %cst_13 : f32 to vector<2x32xf32>
    %59 = arith.addf %57, %58 : vector<2x32xf32>
    %cst_14 = arith.constant 5.000000e-01 : f32
    %60 = vector.broadcast %cst_14 : f32 to vector<2x32xf32>
    %61 = arith.mulf %60, %59 : vector<2x32xf32>
    %62 = vector.extract_strided_slice %53 {offsets = [0, 32], sizes = [2, 32], strides = [1, 1]} : vector<2x128xf32> to vector<2x32xf32>
    %cst_15 = arith.constant 5.000000e-01 : f32
    %63 = vector.broadcast %cst_15 : f32 to vector<2x32xf32>
    %64 = arith.mulf %63, %62 : vector<2x32xf32>
    %65 = math.tanh %64 : vector<2x32xf32>
    %cst_16 = arith.constant 1.000000e+00 : f32
    %66 = vector.broadcast %cst_16 : f32 to vector<2x32xf32>
    %67 = arith.addf %65, %66 : vector<2x32xf32>
    %cst_17 = arith.constant 5.000000e-01 : f32
    %68 = vector.broadcast %cst_17 : f32 to vector<2x32xf32>
    %69 = arith.mulf %68, %67 : vector<2x32xf32>
    %70 = vector.extract_strided_slice %53 {offsets = [0, 64], sizes = [2, 32], strides = [1, 1]} : vector<2x128xf32> to vector<2x32xf32>
    %71 = math.tanh %70 : vector<2x32xf32>
    %72 = vector.extract_strided_slice %53 {offsets = [0, 96], sizes = [2, 32], strides = [1, 1]} : vector<2x128xf32> to vector<2x32xf32>
    %cst_18 = arith.constant 5.000000e-01 : f32
    %73 = vector.broadcast %cst_18 : f32 to vector<2x32xf32>
    %74 = arith.mulf %73, %72 : vector<2x32xf32>
    %75 = math.tanh %74 : vector<2x32xf32>
    %cst_19 = arith.constant 1.000000e+00 : f32
    %76 = vector.broadcast %cst_19 : f32 to vector<2x32xf32>
    %77 = arith.addf %75, %76 : vector<2x32xf32>
    %cst_20 = arith.constant 5.000000e-01 : f32
    %78 = vector.broadcast %cst_20 : f32 to vector<2x32xf32>
    %79 = arith.mulf %78, %77 : vector<2x32xf32>
    %80 = arith.mulf %69, %47 : vector<2x32xf32>
    %81 = arith.mulf %61, %71 : vector<2x32xf32>
    %82 = arith.addf %80, %81 : vector<2x32xf32>
    %83 = math.tanh %82 : vector<2x32xf32>
    %84 = arith.mulf %79, %83 : vector<2x32xf32>
    %85 = vector.broadcast %10 : vector<2x1xf32> to vector<2x32xf32>
    %86 = arith.mulf %85, %84 : vector<2x32xf32>
    %cst_21 = arith.constant 1.000000e+00 : f32
    %87 = vector.broadcast %cst_21 : f32 to vector<2x1xf32>
    %88 = arith.subf %87, %10 : vector<2x1xf32>
    %89 = vector.broadcast %88 : vector<2x1xf32> to vector<2x32xf32>
    %90 = arith.mulf %89, %46 : vector<2x32xf32>
    %91 = arith.addf %86, %90 : vector<2x32xf32>
    %92 = vector.broadcast %10 : vector<2x1xf32> to vector<2x32xf32>
    %93 = arith.mulf %92, %82 : vector<2x32xf32>
    %cst_22 = arith.constant 1.000000e+00 : f32
    %94 = vector.broadcast %cst_22 : f32 to vector<2x1xf32>
    %95 = arith.subf %94, %10 : vector<2x1xf32>
    %96 = vector.broadcast %95 : vector<2x1xf32> to vector<2x32xf32>
    %97 = arith.mulf %96, %47 : vector<2x32xf32>
    %98 = arith.addf %93, %97 : vector<2x32xf32>
    %c0_23 = arith.constant 0 : index
    %c0_24 = arith.constant 0 : index
    %99 = vector.load %arg6[%c0_23, %c0_24] : memref<2x32xf32, #tpu.memory_space<vmem>>, vector<2x32xf32>
    tpu.vector_store %arg6[%c0_23, %c0_24], %91 {strides = array<i32>} : memref<2x32xf32, #tpu.memory_space<vmem>>, vector<2x32xf32>,
    %c0_25 = arith.constant 0 : index
    %c0_26 = arith.constant 0 : index
    %100 = vector.load %arg7[%c0_25, %c0_26] : memref<2x32xf32, #tpu.memory_space<vmem>>, vector<2x32xf32>
    tpu.vector_store %arg7[%c0_25, %c0_26], %98 {strides = array<i32>} : memref<2x32xf32, #tpu.memory_space<vmem>>, vector<2x32xf32>,
    %101 = vector.broadcast %10 : vector<2x1xf32> to vector<2x32xf32>
    %102 = arith.mulf %91, %101 : vector<2x32xf32>
    %103 = arith.truncf %102 : vector<2x32xf32> to vector<2x32xbf16>
    %c0_27 = arith.constant 0 : index
    %c0_28 = arith.constant 0 : index
    %c0_29 = arith.constant 0 : index
    %104 = vector.load %arg5[%c0_27, %c0_28, %c0_29] : memref<8x2x32xbf16, #tpu.memory_space<vmem>>, vector<1x2x32xbf16>
    %105 = vector.shape_cast %104 : vector<1x2x32xbf16> to vector<2x32xbf16>
    %106 = vector.shape_cast %103 : vector<2x32xbf16> to vector<1x2x32xbf16>
    tpu.vector_store %arg5[%c0_27, %c0_28, %c0_29], %106 {strides = array<i32>} : memref<8x2x32xbf16, #tpu.memory_space<vmem>>, vector<1x2x32xbf16>,
    %c0_30 = arith.constant 0 : index
    %c0_31 = arith.constant 0 : index
    %107 = vector.load %arg6[%c0_30, %c0_31] : memref<2x32xf32, #tpu.memory_space<vmem>>, vector<2x32xf32>
    %c0_32 = arith.constant 0 : index
    %c0_33 = arith.constant 0 : index
    %108 = vector.load %arg7[%c0_32, %c0_33] : memref<2x32xf32, #tpu.memory_space<vmem>>, vector<2x32xf32>
    %c1 = arith.constant 1 : index
    %c0_34 = arith.constant 0 : index
    %c0_35 = arith.constant 0 : index
    %109 = vector.load %arg3[%c1, %c0_34, %c0_35] : memref<8x2x128xbf16, #tpu.memory_space<vmem>>, vector<1x2x128xbf16>
    %110 = vector.shape_cast %109 : vector<1x2x128xbf16> to vector<2x128xbf16>
    %111 = arith.truncf %107 : vector<2x32xf32> to vector<2x32xbf16>
    %cst_36 = arith.constant dense<0.000000e+00> : vector<2x128xf32>
    %112 = tpu.matmul %111, %4, %cst_36 {dimension_numbers = #tpu.dot_dimension_numbers<[1], [0], [0], [1], [0, 0, 1, 1], [], []>} : vector<2x32xbf16>, vector<32x128xbf16>, vector<2x128xf32> -> vector<2x128xf32>
    %113 = arith.extf %110 : vector<2x128xbf16> to vector<2x128xf32>
    %114 = arith.addf %113, %112 : vector<2x128xf32>
    %115 = vector.extract_strided_slice %114 {offsets = [0, 0], sizes = [2, 32], strides = [1, 1]} : vector<2x128xf32> to vector<2x32xf32>
    %cst_37 = arith.constant 5.000000e-01 : f32
    %116 = vector.broadcast %cst_37 : f32 to vector<2x32xf32>
    %117 = arith.mulf %116, %115 : vector<2x32xf32>
    %118 = math.tanh %117 : vector<2x32xf32>
    %cst_38 = arith.constant 1.000000e+00 : f32
    %119 = vector.broadcast %cst_38 : f32 to vector<2x32xf32>
    %120 = arith.addf %118, %119 : vector<2x32xf32>
    %cst_39 = arith.constant 5.000000e-01 : f32
    %121 = vector.broadcast %cst_39 : f32 to vector<2x32xf32>
    %122 = arith.mulf %121, %120 : vector<2x32xf32>
    %123 = vector.extract_strided_slice %114 {offsets = [0, 32], sizes = [2, 32], strides = [1, 1]} : vector<2x128xf32> to vector<2x32xf32>
    %cst_40 = arith.constant 5.000000e-01 : f32
    %124 = vector.broadcast %cst_40 : f32 to vector<2x32xf32>
    %125 = arith.mulf %124, %123 : vector<2x32xf32>
    %126 = math.tanh %125 : vector<2x32xf32>
    %cst_41 = arith.constant 1.000000e+00 : f32
    %127 = vector.broadcast %cst_41 : f32 to vector<2x32xf32>
    %128 = arith.addf %126, %127 : vector<2x32xf32>
    %cst_42 = arith.constant 5.000000e-01 : f32
    %129 = vector.broadcast %cst_42 : f32 to vector<2x32xf32>
    %130 = arith.mulf %129, %128 : vector<2x32xf32>
    %131 = vector.extract_strided_slice %114 {offsets = [0, 64], sizes = [2, 32], strides = [1, 1]} : vector<2x128xf32> to vector<2x32xf32>
    %132 = math.tanh %131 : vector<2x32xf32>
    %133 = vector.extract_strided_slice %114 {offsets = [0, 96], sizes = [2, 32], strides = [1, 1]} : vector<2x128xf32> to vector<2x32xf32>
    %cst_43 = arith.constant 5.000000e-01 : f32
    %134 = vector.broadcast %cst_43 : f32 to vector<2x32xf32>
    %135 = arith.mulf %134, %133 : vector<2x32xf32>
    %136 = math.tanh %135 : vector<2x32xf32>
    %cst_44 = arith.constant 1.000000e+00 : f32
    %137 = vector.broadcast %cst_44 : f32 to vector<2x32xf32>
    %138 = arith.addf %136, %137 : vector<2x32xf32>
    %cst_45 = arith.constant 5.000000e-01 : f32
    %139 = vector.broadcast %cst_45 : f32 to vector<2x32xf32>
    %140 = arith.mulf %139, %138 : vector<2x32xf32>
    %141 = arith.mulf %130, %108 : vector<2x32xf32>
    %142 = arith.mulf %122, %132 : vector<2x32xf32>
    %143 = arith.addf %141, %142 : vector<2x32xf32>
    %144 = math.tanh %143 : vector<2x32xf32>
    %145 = arith.mulf %140, %144 : vector<2x32xf32>
    %146 = vector.broadcast %15 : vector<2x1xf32> to vector<2x32xf32>
    %147 = arith.mulf %146, %145 : vector<2x32xf32>
    %cst_46 = arith.constant 1.000000e+00 : f32
    %148 = vector.broadcast %cst_46 : f32 to vector<2x1xf32>
    %149 = arith.subf %148, %15 : vector<2x1xf32>
    %150 = vector.broadcast %149 : vector<2x1xf32> to vector<2x32xf32>
    %151 = arith.mulf %150, %107 : vector<2x32xf32>
    %152 = arith.addf %147, %151 : vector<2x32xf32>
    %153 = vector.broadcast %15 : vector<2x1xf32> to vector<2x32xf32>
    %154 = arith.mulf %153, %143 : vector<2x32xf32>
    %cst_47 = arith.constant 1.000000e+00 : f32
    %155 = vector.broadcast %cst_47 : f32 to vector<2x1xf32>
    %156 = arith.subf %155, %15 : vector<2x1xf32>
    %157 = vector.broadcast %156 : vector<2x1xf32> to vector<2x32xf32>
    %158 = arith.mulf %157, %108 : vector<2x32xf32>
    %159 = arith.addf %154, %158 : vector<2x32xf32>
    %c0_48 = arith.constant 0 : index
    %c0_49 = arith.constant 0 : index
    %160 = vector.load %arg6[%c0_48, %c0_49] : memref<2x32xf32, #tpu.memory_space<vmem>>, vector<2x32xf32>
    tpu.vector_store %arg6[%c0_48, %c0_49], %152 {strides = array<i32>} : memref<2x32xf32, #tpu.memory_space<vmem>>, vector<2x32xf32>,
    %c0_50 = arith.constant 0 : index
    %c0_51 = arith.constant 0 : index
    %161 = vector.load %arg7[%c0_50, %c0_51] : memref<2x32xf32, #tpu.memory_space<vmem>>, vector<2x32xf32>
    tpu.vector_store %arg7[%c0_50, %c0_51], %159 {strides = array<i32>} : memref<2x32xf32, #tpu.memory_space<vmem>>, vector<2x32xf32>,
    %162 = vector.broadcast %15 : vector<2x1xf32> to vector<2x32xf32>
    %163 = arith.mulf %152, %162 : vector<2x32xf32>
    %164 = arith.truncf %163 : vector<2x32xf32> to vector<2x32xbf16>
    %c1_52 = arith.constant 1 : index
    %c0_53 = arith.constant 0 : index
    %c0_54 = arith.constant 0 : index
    %165 = vector.load %arg5[%c1_52, %c0_53, %c0_54] : memref<8x2x32xbf16, #tpu.memory_space<vmem>>, vector<1x2x32xbf16>
    %166 = vector.shape_cast %165 : vector<1x2x32xbf16> to vector<2x32xbf16>
    %167 = vector.shape_cast %164 : vector<2x32xbf16> to vector<1x2x32xbf16>
    tpu.vector_store %arg5[%c1_52, %c0_53, %c0_54], %167 {strides = array<i32>} : memref<8x2x32xbf16, #tpu.memory_space<vmem>>, vector<1x2x32xbf16>,
    %c0_55 = arith.constant 0 : index
    %c0_56 = arith.constant 0 : index
    %168 = vector.load %arg6[%c0_55, %c0_56] : memref<2x32xf32, #tpu.memory_space<vmem>>, vector<2x32xf32>
    %c0_57 = arith.constant 0 : index
    %c0_58 = arith.constant 0 : index
    %169 = vector.load %arg7[%c0_57, %c0_58] : memref<2x32xf32, #tpu.memory_space<vmem>>, vector<2x32xf32>
    %c2 = arith.constant 2 : index
    %c0_59 = arith.constant 0 : index
    %c0_60 = arith.constant 0 : index
    %170 = vector.load %arg3[%c2, %c0_59, %c0_60] : memref<8x2x128xbf16, #tpu.memory_space<vmem>>, vector<1x2x128xbf16>
    %171 = vector.shape_cast %170 : vector<1x2x128xbf16> to vector<2x128xbf16>
    %172 = arith.truncf %168 : vector<2x32xf32> to vector<2x32xbf16>
    %cst_61 = arith.constant dense<0.000000e+00> : vector<2x128xf32>
    %173 = tpu.matmul %172, %4, %cst_61 {dimension_numbers = #tpu.dot_dimension_numbers<[1], [0], [0], [1], [0, 0, 1, 1], [], []>} : vector<2x32xbf16>, vector<32x128xbf16>, vector<2x128xf32> -> vector<2x128xf32>
    %174 = arith.extf %171 : vector<2x128xbf16> to vector<2x128xf32>
    %175 = arith.addf %174, %173 : vector<2x128xf32>
    %176 = vector.extract_strided_slice %175 {offsets = [0, 0], sizes = [2, 32], strides = [1, 1]} : vector<2x128xf32> to vector<2x32xf32>
    %cst_62 = arith.constant 5.000000e-01 : f32
    %177 = vector.broadcast %cst_62 : f32 to vector<2x32xf32>
    %178 = arith.mulf %177, %176 : vector<2x32xf32>
    %179 = math.tanh %178 : vector<2x32xf32>
    %cst_63 = arith.constant 1.000000e+00 : f32
    %180 = vector.broadcast %cst_63 : f32 to vector<2x32xf32>
    %181 = arith.addf %179, %180 : vector<2x32xf32>
    %cst_64 = arith.constant 5.000000e-01 : f32
    %182 = vector.broadcast %cst_64 : f32 to vector<2x32xf32>
    %183 = arith.mulf %182, %181 : vector<2x32xf32>
    %184 = vector.extract_strided_slice %175 {offsets = [0, 32], sizes = [2, 32], strides = [1, 1]} : vector<2x128xf32> to vector<2x32xf32>
    %cst_65 = arith.constant 5.000000e-01 : f32
    %185 = vector.broadcast %cst_65 : f32 to vector<2x32xf32>
    %186 = arith.mulf %185, %184 : vector<2x32xf32>
    %187 = math.tanh %186 : vector<2x32xf32>
    %cst_66 = arith.constant 1.000000e+00 : f32
    %188 = vector.broadcast %cst_66 : f32 to vector<2x32xf32>
    %189 = arith.addf %187, %188 : vector<2x32xf32>
    %cst_67 = arith.constant 5.000000e-01 : f32
    %190 = vector.broadcast %cst_67 : f32 to vector<2x32xf32>
    %191 = arith.mulf %190, %189 : vector<2x32xf32>
    %192 = vector.extract_strided_slice %175 {offsets = [0, 64], sizes = [2, 32], strides = [1, 1]} : vector<2x128xf32> to vector<2x32xf32>
    %193 = math.tanh %192 : vector<2x32xf32>
    %194 = vector.extract_strided_slice %175 {offsets = [0, 96], sizes = [2, 32], strides = [1, 1]} : vector<2x128xf32> to vector<2x32xf32>
    %cst_68 = arith.constant 5.000000e-01 : f32
    %195 = vector.broadcast %cst_68 : f32 to vector<2x32xf32>
    %196 = arith.mulf %195, %194 : vector<2x32xf32>
    %197 = math.tanh %196 : vector<2x32xf32>
    %cst_69 = arith.constant 1.000000e+00 : f32
    %198 = vector.broadcast %cst_69 : f32 to vector<2x32xf32>
    %199 = arith.addf %197, %198 : vector<2x32xf32>
    %cst_70 = arith.constant 5.000000e-01 : f32
    %200 = vector.broadcast %cst_70 : f32 to vector<2x32xf32>
    %201 = arith.mulf %200, %199 : vector<2x32xf32>
    %202 = arith.mulf %191, %169 : vector<2x32xf32>
    %203 = arith.mulf %183, %193 : vector<2x32xf32>
    %204 = arith.addf %202, %203 : vector<2x32xf32>
    %205 = math.tanh %204 : vector<2x32xf32>
    %206 = arith.mulf %201, %205 : vector<2x32xf32>
    %207 = vector.broadcast %20 : vector<2x1xf32> to vector<2x32xf32>
    %208 = arith.mulf %207, %206 : vector<2x32xf32>
    %cst_71 = arith.constant 1.000000e+00 : f32
    %209 = vector.broadcast %cst_71 : f32 to vector<2x1xf32>
    %210 = arith.subf %209, %20 : vector<2x1xf32>
    %211 = vector.broadcast %210 : vector<2x1xf32> to vector<2x32xf32>
    %212 = arith.mulf %211, %168 : vector<2x32xf32>
    %213 = arith.addf %208, %212 : vector<2x32xf32>
    %214 = vector.broadcast %20 : vector<2x1xf32> to vector<2x32xf32>
    %215 = arith.mulf %214, %204 : vector<2x32xf32>
    %cst_72 = arith.constant 1.000000e+00 : f32
    %216 = vector.broadcast %cst_72 : f32 to vector<2x1xf32>
    %217 = arith.subf %216, %20 : vector<2x1xf32>
    %218 = vector.broadcast %217 : vector<2x1xf32> to vector<2x32xf32>
    %219 = arith.mulf %218, %169 : vector<2x32xf32>
    %220 = arith.addf %215, %219 : vector<2x32xf32>
    %c0_73 = arith.constant 0 : index
    %c0_74 = arith.constant 0 : index
    %221 = vector.load %arg6[%c0_73, %c0_74] : memref<2x32xf32, #tpu.memory_space<vmem>>, vector<2x32xf32>
    tpu.vector_store %arg6[%c0_73, %c0_74], %213 {strides = array<i32>} : memref<2x32xf32, #tpu.memory_space<vmem>>, vector<2x32xf32>,
    %c0_75 = arith.constant 0 : index
    %c0_76 = arith.constant 0 : index
    %222 = vector.load %arg7[%c0_75, %c0_76] : memref<2x32xf32, #tpu.memory_space<vmem>>, vector<2x32xf32>
    tpu.vector_store %arg7[%c0_75, %c0_76], %220 {strides = array<i32>} : memref<2x32xf32, #tpu.memory_space<vmem>>, vector<2x32xf32>,
    %223 = vector.broadcast %20 : vector<2x1xf32> to vector<2x32xf32>
    %224 = arith.mulf %213, %223 : vector<2x32xf32>
    %225 = arith.truncf %224 : vector<2x32xf32> to vector<2x32xbf16>
    %c2_77 = arith.constant 2 : index
    %c0_78 = arith.constant 0 : index
    %c0_79 = arith.constant 0 : index
    %226 = vector.load %arg5[%c2_77, %c0_78, %c0_79] : memref<8x2x32xbf16, #tpu.memory_space<vmem>>, vector<1x2x32xbf16>
    %227 = vector.shape_cast %226 : vector<1x2x32xbf16> to vector<2x32xbf16>
    %228 = vector.shape_cast %225 : vector<2x32xbf16> to vector<1x2x32xbf16>
    tpu.vector_store %arg5[%c2_77, %c0_78, %c0_79], %228 {strides = array<i32>} : memref<8x2x32xbf16, #tpu.memory_space<vmem>>, vector<1x2x32xbf16>,
    %c0_80 = arith.constant 0 : index
    %c0_81 = arith.constant 0 : index
    %229 = vector.load %arg6[%c0_80, %c0_81] : memref<2x32xf32, #tpu.memory_space<vmem>>, vector<2x32xf32>
    %c0_82 = arith.constant 0 : index
    %c0_83 = arith.constant 0 : index
    %230 = vector.load %arg7[%c0_82, %c0_83] : memref<2x32xf32, #tpu.memory_space<vmem>>, vector<2x32xf32>
    %c3 = arith.constant 3 : index
    %c0_84 = arith.constant 0 : index
    %c0_85 = arith.constant 0 : index
    %231 = vector.load %arg3[%c3, %c0_84, %c0_85] : memref<8x2x128xbf16, #tpu.memory_space<vmem>>, vector<1x2x128xbf16>
    %232 = vector.shape_cast %231 : vector<1x2x128xbf16> to vector<2x128xbf16>
    %233 = arith.truncf %229 : vector<2x32xf32> to vector<2x32xbf16>
    %cst_86 = arith.constant dense<0.000000e+00> : vector<2x128xf32>
    %234 = tpu.matmul %233, %4, %cst_86 {dimension_numbers = #tpu.dot_dimension_numbers<[1], [0], [0], [1], [0, 0, 1, 1], [], []>} : vector<2x32xbf16>, vector<32x128xbf16>, vector<2x128xf32> -> vector<2x128xf32>
    %235 = arith.extf %232 : vector<2x128xbf16> to vector<2x128xf32>
    %236 = arith.addf %235, %234 : vector<2x128xf32>
    %237 = vector.extract_strided_slice %236 {offsets = [0, 0], sizes = [2, 32], strides = [1, 1]} : vector<2x128xf32> to vector<2x32xf32>
    %cst_87 = arith.constant 5.000000e-01 : f32
    %238 = vector.broadcast %cst_87 : f32 to vector<2x32xf32>
    %239 = arith.mulf %238, %237 : vector<2x32xf32>
    %240 = math.tanh %239 : vector<2x32xf32>
    %cst_88 = arith.constant 1.000000e+00 : f32
    %241 = vector.broadcast %cst_88 : f32 to vector<2x32xf32>
    %242 = arith.addf %240, %241 : vector<2x32xf32>
    %cst_89 = arith.constant 5.000000e-01 : f32
    %243 = vector.broadcast %cst_89 : f32 to vector<2x32xf32>
    %244 = arith.mulf %243, %242 : vector<2x32xf32>
    %245 = vector.extract_strided_slice %236 {offsets = [0, 32], sizes = [2, 32], strides = [1, 1]} : vector<2x128xf32> to vector<2x32xf32>
    %cst_90 = arith.constant 5.000000e-01 : f32
    %246 = vector.broadcast %cst_90 : f32 to vector<2x32xf32>
    %247 = arith.mulf %246, %245 : vector<2x32xf32>
    %248 = math.tanh %247 : vector<2x32xf32>
    %cst_91 = arith.constant 1.000000e+00 : f32
    %249 = vector.broadcast %cst_91 : f32 to vector<2x32xf32>
    %250 = arith.addf %248, %249 : vector<2x32xf32>
    %cst_92 = arith.constant 5.000000e-01 : f32
    %251 = vector.broadcast %cst_92 : f32 to vector<2x32xf32>
    %252 = arith.mulf %251, %250 : vector<2x32xf32>
    %253 = vector.extract_strided_slice %236 {offsets = [0, 64], sizes = [2, 32], strides = [1, 1]} : vector<2x128xf32> to vector<2x32xf32>
    %254 = math.tanh %253 : vector<2x32xf32>
    %255 = vector.extract_strided_slice %236 {offsets = [0, 96], sizes = [2, 32], strides = [1, 1]} : vector<2x128xf32> to vector<2x32xf32>
    %cst_93 = arith.constant 5.000000e-01 : f32
    %256 = vector.broadcast %cst_93 : f32 to vector<2x32xf32>
    %257 = arith.mulf %256, %255 : vector<2x32xf32>
    %258 = math.tanh %257 : vector<2x32xf32>
    %cst_94 = arith.constant 1.000000e+00 : f32
    %259 = vector.broadcast %cst_94 : f32 to vector<2x32xf32>
    %260 = arith.addf %258, %259 : vector<2x32xf32>
    %cst_95 = arith.constant 5.000000e-01 : f32
    %261 = vector.broadcast %cst_95 : f32 to vector<2x32xf32>
    %262 = arith.mulf %261, %260 : vector<2x32xf32>
    %263 = arith.mulf %252, %230 : vector<2x32xf32>
    %264 = arith.mulf %244, %254 : vector<2x32xf32>
    %265 = arith.addf %263, %264 : vector<2x32xf32>
    %266 = math.tanh %265 : vector<2x32xf32>
    %267 = arith.mulf %262, %266 : vector<2x32xf32>
    %268 = vector.broadcast %25 : vector<2x1xf32> to vector<2x32xf32>
    %269 = arith.mulf %268, %267 : vector<2x32xf32>
    %cst_96 = arith.constant 1.000000e+00 : f32
    %270 = vector.broadcast %cst_96 : f32 to vector<2x1xf32>
    %271 = arith.subf %270, %25 : vector<2x1xf32>
    %272 = vector.broadcast %271 : vector<2x1xf32> to vector<2x32xf32>
    %273 = arith.mulf %272, %229 : vector<2x32xf32>
    %274 = arith.addf %269, %273 : vector<2x32xf32>
    %275 = vector.broadcast %25 : vector<2x1xf32> to vector<2x32xf32>
    %276 = arith.mulf %275, %265 : vector<2x32xf32>
    %cst_97 = arith.constant 1.000000e+00 : f32
    %277 = vector.broadcast %cst_97 : f32 to vector<2x1xf32>
    %278 = arith.subf %277, %25 : vector<2x1xf32>
    %279 = vector.broadcast %278 : vector<2x1xf32> to vector<2x32xf32>
    %280 = arith.mulf %279, %230 : vector<2x32xf32>
    %281 = arith.addf %276, %280 : vector<2x32xf32>
    %c0_98 = arith.constant 0 : index
    %c0_99 = arith.constant 0 : index
    %282 = vector.load %arg6[%c0_98, %c0_99] : memref<2x32xf32, #tpu.memory_space<vmem>>, vector<2x32xf32>
    tpu.vector_store %arg6[%c0_98, %c0_99], %274 {strides = array<i32>} : memref<2x32xf32, #tpu.memory_space<vmem>>, vector<2x32xf32>,
    %c0_100 = arith.constant 0 : index
    %c0_101 = arith.constant 0 : index
    %283 = vector.load %arg7[%c0_100, %c0_101] : memref<2x32xf32, #tpu.memory_space<vmem>>, vector<2x32xf32>
    tpu.vector_store %arg7[%c0_100, %c0_101], %281 {strides = array<i32>} : memref<2x32xf32, #tpu.memory_space<vmem>>, vector<2x32xf32>,
    %284 = vector.broadcast %25 : vector<2x1xf32> to vector<2x32xf32>
    %285 = arith.mulf %274, %284 : vector<2x32xf32>
    %286 = arith.truncf %285 : vector<2x32xf32> to vector<2x32xbf16>
    %c3_102 = arith.constant 3 : index
    %c0_103 = arith.constant 0 : index
    %c0_104 = arith.constant 0 : index
    %287 = vector.load %arg5[%c3_102, %c0_103, %c0_104] : memref<8x2x32xbf16, #tpu.memory_space<vmem>>, vector<1x2x32xbf16>
    %288 = vector.shape_cast %287 : vector<1x2x32xbf16> to vector<2x32xbf16>
    %289 = vector.shape_cast %286 : vector<2x32xbf16> to vector<1x2x32xbf16>
    tpu.vector_store %arg5[%c3_102, %c0_103, %c0_104], %289 {strides = array<i32>} : memref<8x2x32xbf16, #tpu.memory_space<vmem>>, vector<1x2x32xbf16>,
    %c0_105 = arith.constant 0 : index
    %c0_106 = arith.constant 0 : index
    %290 = vector.load %arg6[%c0_105, %c0_106] : memref<2x32xf32, #tpu.memory_space<vmem>>, vector<2x32xf32>
    %c0_107 = arith.constant 0 : index
    %c0_108 = arith.constant 0 : index
    %291 = vector.load %arg7[%c0_107, %c0_108] : memref<2x32xf32, #tpu.memory_space<vmem>>, vector<2x32xf32>
    %c4 = arith.constant 4 : index
    %c0_109 = arith.constant 0 : index
    %c0_110 = arith.constant 0 : index
    %292 = vector.load %arg3[%c4, %c0_109, %c0_110] : memref<8x2x128xbf16, #tpu.memory_space<vmem>>, vector<1x2x128xbf16>
    %293 = vector.shape_cast %292 : vector<1x2x128xbf16> to vector<2x128xbf16>
    %294 = arith.truncf %290 : vector<2x32xf32> to vector<2x32xbf16>
    %cst_111 = arith.constant dense<0.000000e+00> : vector<2x128xf32>
    %295 = tpu.matmul %294, %4, %cst_111 {dimension_numbers = #tpu.dot_dimension_numbers<[1], [0], [0], [1], [0, 0, 1, 1], [], []>} : vector<2x32xbf16>, vector<32x128xbf16>, vector<2x128xf32> -> vector<2x128xf32>
    %296 = arith.extf %293 : vector<2x128xbf16> to vector<2x128xf32>
    %297 = arith.addf %296, %295 : vector<2x128xf32>
    %298 = vector.extract_strided_slice %297 {offsets = [0, 0], sizes = [2, 32], strides = [1, 1]} : vector<2x128xf32> to vector<2x32xf32>
    %cst_112 = arith.constant 5.000000e-01 : f32
    %299 = vector.broadcast %cst_112 : f32 to vector<2x32xf32>
    %300 = arith.mulf %299, %298 : vector<2x32xf32>
    %301 = math.tanh %300 : vector<2x32xf32>
    %cst_113 = arith.constant 1.000000e+00 : f32
    %302 = vector.broadcast %cst_113 : f32 to vector<2x32xf32>
    %303 = arith.addf %301, %302 : vector<2x32xf32>
    %cst_114 = arith.constant 5.000000e-01 : f32
    %304 = vector.broadcast %cst_114 : f32 to vector<2x32xf32>
    %305 = arith.mulf %304, %303 : vector<2x32xf32>
    %306 = vector.extract_strided_slice %297 {offsets = [0, 32], sizes = [2, 32], strides = [1, 1]} : vector<2x128xf32> to vector<2x32xf32>
    %cst_115 = arith.constant 5.000000e-01 : f32
    %307 = vector.broadcast %cst_115 : f32 to vector<2x32xf32>
    %308 = arith.mulf %307, %306 : vector<2x32xf32>
    %309 = math.tanh %308 : vector<2x32xf32>
    %cst_116 = arith.constant 1.000000e+00 : f32
    %310 = vector.broadcast %cst_116 : f32 to vector<2x32xf32>
    %311 = arith.addf %309, %310 : vector<2x32xf32>
    %cst_117 = arith.constant 5.000000e-01 : f32
    %312 = vector.broadcast %cst_117 : f32 to vector<2x32xf32>
    %313 = arith.mulf %312, %311 : vector<2x32xf32>
    %314 = vector.extract_strided_slice %297 {offsets = [0, 64], sizes = [2, 32], strides = [1, 1]} : vector<2x128xf32> to vector<2x32xf32>
    %315 = math.tanh %314 : vector<2x32xf32>
    %316 = vector.extract_strided_slice %297 {offsets = [0, 96], sizes = [2, 32], strides = [1, 1]} : vector<2x128xf32> to vector<2x32xf32>
    %cst_118 = arith.constant 5.000000e-01 : f32
    %317 = vector.broadcast %cst_118 : f32 to vector<2x32xf32>
    %318 = arith.mulf %317, %316 : vector<2x32xf32>
    %319 = math.tanh %318 : vector<2x32xf32>
    %cst_119 = arith.constant 1.000000e+00 : f32
    %320 = vector.broadcast %cst_119 : f32 to vector<2x32xf32>
    %321 = arith.addf %319, %320 : vector<2x32xf32>
    %cst_120 = arith.constant 5.000000e-01 : f32
    %322 = vector.broadcast %cst_120 : f32 to vector<2x32xf32>
    %323 = arith.mulf %322, %321 : vector<2x32xf32>
    %324 = arith.mulf %313, %291 : vector<2x32xf32>
    %325 = arith.mulf %305, %315 : vector<2x32xf32>
    %326 = arith.addf %324, %325 : vector<2x32xf32>
    %327 = math.tanh %326 : vector<2x32xf32>
    %328 = arith.mulf %323, %327 : vector<2x32xf32>
    %329 = vector.broadcast %30 : vector<2x1xf32> to vector<2x32xf32>
    %330 = arith.mulf %329, %328 : vector<2x32xf32>
    %cst_121 = arith.constant 1.000000e+00 : f32
    %331 = vector.broadcast %cst_121 : f32 to vector<2x1xf32>
    %332 = arith.subf %331, %30 : vector<2x1xf32>
    %333 = vector.broadcast %332 : vector<2x1xf32> to vector<2x32xf32>
    %334 = arith.mulf %333, %290 : vector<2x32xf32>
    %335 = arith.addf %330, %334 : vector<2x32xf32>
    %336 = vector.broadcast %30 : vector<2x1xf32> to vector<2x32xf32>
    %337 = arith.mulf %336, %326 : vector<2x32xf32>
    %cst_122 = arith.constant 1.000000e+00 : f32
    %338 = vector.broadcast %cst_122 : f32 to vector<2x1xf32>
    %339 = arith.subf %338, %30 : vector<2x1xf32>
    %340 = vector.broadcast %339 : vector<2x1xf32> to vector<2x32xf32>
    %341 = arith.mulf %340, %291 : vector<2x32xf32>
    %342 = arith.addf %337, %341 : vector<2x32xf32>
    %c0_123 = arith.constant 0 : index
    %c0_124 = arith.constant 0 : index
    %343 = vector.load %arg6[%c0_123, %c0_124] : memref<2x32xf32, #tpu.memory_space<vmem>>, vector<2x32xf32>
    tpu.vector_store %arg6[%c0_123, %c0_124], %335 {strides = array<i32>} : memref<2x32xf32, #tpu.memory_space<vmem>>, vector<2x32xf32>,
    %c0_125 = arith.constant 0 : index
    %c0_126 = arith.constant 0 : index
    %344 = vector.load %arg7[%c0_125, %c0_126] : memref<2x32xf32, #tpu.memory_space<vmem>>, vector<2x32xf32>
    tpu.vector_store %arg7[%c0_125, %c0_126], %342 {strides = array<i32>} : memref<2x32xf32, #tpu.memory_space<vmem>>, vector<2x32xf32>,
    %345 = vector.broadcast %30 : vector<2x1xf32> to vector<2x32xf32>
    %346 = arith.mulf %335, %345 : vector<2x32xf32>
    %347 = arith.truncf %346 : vector<2x32xf32> to vector<2x32xbf16>
    %c4_127 = arith.constant 4 : index
    %c0_128 = arith.constant 0 : index
    %c0_129 = arith.constant 0 : index
    %348 = vector.load %arg5[%c4_127, %c0_128, %c0_129] : memref<8x2x32xbf16, #tpu.memory_space<vmem>>, vector<1x2x32xbf16>
    %349 = vector.shape_cast %348 : vector<1x2x32xbf16> to vector<2x32xbf16>
    %350 = vector.shape_cast %347 : vector<2x32xbf16> to vector<1x2x32xbf16>
    tpu.vector_store %arg5[%c4_127, %c0_128, %c0_129], %350 {strides = array<i32>} : memref<8x2x32xbf16, #tpu.memory_space<vmem>>, vector<1x2x32xbf16>,
    %c0_130 = arith.constant 0 : index
    %c0_131 = arith.constant 0 : index
    %351 = vector.load %arg6[%c0_130, %c0_131] : memref<2x32xf32, #tpu.memory_space<vmem>>, vector<2x32xf32>
    %c0_132 = arith.constant 0 : index
    %c0_133 = arith.constant 0 : index
    %352 = vector.load %arg7[%c0_132, %c0_133] : memref<2x32xf32, #tpu.memory_space<vmem>>, vector<2x32xf32>
    %c5 = arith.constant 5 : index
    %c0_134 = arith.constant 0 : index
    %c0_135 = arith.constant 0 : index
    %353 = vector.load %arg3[%c5, %c0_134, %c0_135] : memref<8x2x128xbf16, #tpu.memory_space<vmem>>, vector<1x2x128xbf16>
    %354 = vector.shape_cast %353 : vector<1x2x128xbf16> to vector<2x128xbf16>
    %355 = arith.truncf %351 : vector<2x32xf32> to vector<2x32xbf16>
    %cst_136 = arith.constant dense<0.000000e+00> : vector<2x128xf32>
    %356 = tpu.matmul %355, %4, %cst_136 {dimension_numbers = #tpu.dot_dimension_numbers<[1], [0], [0], [1], [0, 0, 1, 1], [], []>} : vector<2x32xbf16>, vector<32x128xbf16>, vector<2x128xf32> -> vector<2x128xf32>
    %357 = arith.extf %354 : vector<2x128xbf16> to vector<2x128xf32>
    %358 = arith.addf %357, %356 : vector<2x128xf32>
    %359 = vector.extract_strided_slice %358 {offsets = [0, 0], sizes = [2, 32], strides = [1, 1]} : vector<2x128xf32> to vector<2x32xf32>
    %cst_137 = arith.constant 5.000000e-01 : f32
    %360 = vector.broadcast %cst_137 : f32 to vector<2x32xf32>
    %361 = arith.mulf %360, %359 : vector<2x32xf32>
    %362 = math.tanh %361 : vector<2x32xf32>
    %cst_138 = arith.constant 1.000000e+00 : f32
    %363 = vector.broadcast %cst_138 : f32 to vector<2x32xf32>
    %364 = arith.addf %362, %363 : vector<2x32xf32>
    %cst_139 = arith.constant 5.000000e-01 : f32
    %365 = vector.broadcast %cst_139 : f32 to vector<2x32xf32>
    %366 = arith.mulf %365, %364 : vector<2x32xf32>
    %367 = vector.extract_strided_slice %358 {offsets = [0, 32], sizes = [2, 32], strides = [1, 1]} : vector<2x128xf32> to vector<2x32xf32>
    %cst_140 = arith.constant 5.000000e-01 : f32
    %368 = vector.broadcast %cst_140 : f32 to vector<2x32xf32>
    %369 = arith.mulf %368, %367 : vector<2x32xf32>
    %370 = math.tanh %369 : vector<2x32xf32>
    %cst_141 = arith.constant 1.000000e+00 : f32
    %371 = vector.broadcast %cst_141 : f32 to vector<2x32xf32>
    %372 = arith.addf %370, %371 : vector<2x32xf32>
    %cst_142 = arith.constant 5.000000e-01 : f32
    %373 = vector.broadcast %cst_142 : f32 to vector<2x32xf32>
    %374 = arith.mulf %373, %372 : vector<2x32xf32>
    %375 = vector.extract_strided_slice %358 {offsets = [0, 64], sizes = [2, 32], strides = [1, 1]} : vector<2x128xf32> to vector<2x32xf32>
    %376 = math.tanh %375 : vector<2x32xf32>
    %377 = vector.extract_strided_slice %358 {offsets = [0, 96], sizes = [2, 32], strides = [1, 1]} : vector<2x128xf32> to vector<2x32xf32>
    %cst_143 = arith.constant 5.000000e-01 : f32
    %378 = vector.broadcast %cst_143 : f32 to vector<2x32xf32>
    %379 = arith.mulf %378, %377 : vector<2x32xf32>
    %380 = math.tanh %379 : vector<2x32xf32>
    %cst_144 = arith.constant 1.000000e+00 : f32
    %381 = vector.broadcast %cst_144 : f32 to vector<2x32xf32>
    %382 = arith.addf %380, %381 : vector<2x32xf32>
    %cst_145 = arith.constant 5.000000e-01 : f32
    %383 = vector.broadcast %cst_145 : f32 to vector<2x32xf32>
    %384 = arith.mulf %383, %382 : vector<2x32xf32>
    %385 = arith.mulf %374, %352 : vector<2x32xf32>
    %386 = arith.mulf %366, %376 : vector<2x32xf32>
    %387 = arith.addf %385, %386 : vector<2x32xf32>
    %388 = math.tanh %387 : vector<2x32xf32>
    %389 = arith.mulf %384, %388 : vector<2x32xf32>
    %390 = vector.broadcast %35 : vector<2x1xf32> to vector<2x32xf32>
    %391 = arith.mulf %390, %389 : vector<2x32xf32>
    %cst_146 = arith.constant 1.000000e+00 : f32
    %392 = vector.broadcast %cst_146 : f32 to vector<2x1xf32>
    %393 = arith.subf %392, %35 : vector<2x1xf32>
    %394 = vector.broadcast %393 : vector<2x1xf32> to vector<2x32xf32>
    %395 = arith.mulf %394, %351 : vector<2x32xf32>
    %396 = arith.addf %391, %395 : vector<2x32xf32>
    %397 = vector.broadcast %35 : vector<2x1xf32> to vector<2x32xf32>
    %398 = arith.mulf %397, %387 : vector<2x32xf32>
    %cst_147 = arith.constant 1.000000e+00 : f32
    %399 = vector.broadcast %cst_147 : f32 to vector<2x1xf32>
    %400 = arith.subf %399, %35 : vector<2x1xf32>
    %401 = vector.broadcast %400 : vector<2x1xf32> to vector<2x32xf32>
    %402 = arith.mulf %401, %352 : vector<2x32xf32>
    %403 = arith.addf %398, %402 : vector<2x32xf32>
    %c0_148 = arith.constant 0 : index
    %c0_149 = arith.constant 0 : index
    %404 = vector.load %arg6[%c0_148, %c0_149] : memref<2x32xf32, #tpu.memory_space<vmem>>, vector<2x32xf32>
    tpu.vector_store %arg6[%c0_148, %c0_149], %396 {strides = array<i32>} : memref<2x32xf32, #tpu.memory_space<vmem>>, vector<2x32xf32>,
    %c0_150 = arith.constant 0 : index
    %c0_151 = arith.constant 0 : index
    %405 = vector.load %arg7[%c0_150, %c0_151] : memref<2x32xf32, #tpu.memory_space<vmem>>, vector<2x32xf32>
    tpu.vector_store %arg7[%c0_150, %c0_151], %403 {strides = array<i32>} : memref<2x32xf32, #tpu.memory_space<vmem>>, vector<2x32xf32>,
    %406 = vector.broadcast %35 : vector<2x1xf32> to vector<2x32xf32>
    %407 = arith.mulf %396, %406 : vector<2x32xf32>
    %408 = arith.truncf %407 : vector<2x32xf32> to vector<2x32xbf16>
    %c5_152 = arith.constant 5 : index
    %c0_153 = arith.constant 0 : index
    %c0_154 = arith.constant 0 : index
    %409 = vector.load %arg5[%c5_152, %c0_153, %c0_154] : memref<8x2x32xbf16, #tpu.memory_space<vmem>>, vector<1x2x32xbf16>
    %410 = vector.shape_cast %409 : vector<1x2x32xbf16> to vector<2x32xbf16>
    %411 = vector.shape_cast %408 : vector<2x32xbf16> to vector<1x2x32xbf16>
    tpu.vector_store %arg5[%c5_152, %c0_153, %c0_154], %411 {strides = array<i32>} : memref<8x2x32xbf16, #tpu.memory_space<vmem>>, vector<1x2x32xbf16>,
    %c0_155 = arith.constant 0 : index
    %c0_156 = arith.constant 0 : index
    %412 = vector.load %arg6[%c0_155, %c0_156] : memref<2x32xf32, #tpu.memory_space<vmem>>, vector<2x32xf32>
    %c0_157 = arith.constant 0 : index
    %c0_158 = arith.constant 0 : index
    %413 = vector.load %arg7[%c0_157, %c0_158] : memref<2x32xf32, #tpu.memory_space<vmem>>, vector<2x32xf32>
    %c6 = arith.constant 6 : index
    %c0_159 = arith.constant 0 : index
    %c0_160 = arith.constant 0 : index
    %414 = vector.load %arg3[%c6, %c0_159, %c0_160] : memref<8x2x128xbf16, #tpu.memory_space<vmem>>, vector<1x2x128xbf16>
    %415 = vector.shape_cast %414 : vector<1x2x128xbf16> to vector<2x128xbf16>
    %416 = arith.truncf %412 : vector<2x32xf32> to vector<2x32xbf16>
    %cst_161 = arith.constant dense<0.000000e+00> : vector<2x128xf32>
    %417 = tpu.matmul %416, %4, %cst_161 {dimension_numbers = #tpu.dot_dimension_numbers<[1], [0], [0], [1], [0, 0, 1, 1], [], []>} : vector<2x32xbf16>, vector<32x128xbf16>, vector<2x128xf32> -> vector<2x128xf32>
    %418 = arith.extf %415 : vector<2x128xbf16> to vector<2x128xf32>
    %419 = arith.addf %418, %417 : vector<2x128xf32>
    %420 = vector.extract_strided_slice %419 {offsets = [0, 0], sizes = [2, 32], strides = [1, 1]} : vector<2x128xf32> to vector<2x32xf32>
    %cst_162 = arith.constant 5.000000e-01 : f32
    %421 = vector.broadcast %cst_162 : f32 to vector<2x32xf32>
    %422 = arith.mulf %421, %420 : vector<2x32xf32>
    %423 = math.tanh %422 : vector<2x32xf32>
    %cst_163 = arith.constant 1.000000e+00 : f32
    %424 = vector.broadcast %cst_163 : f32 to vector<2x32xf32>
    %425 = arith.addf %423, %424 : vector<2x32xf32>
    %cst_164 = arith.constant 5.000000e-01 : f32
    %426 = vector.broadcast %cst_164 : f32 to vector<2x32xf32>
    %427 = arith.mulf %426, %425 : vector<2x32xf32>
    %428 = vector.extract_strided_slice %419 {offsets = [0, 32], sizes = [2, 32], strides = [1, 1]} : vector<2x128xf32> to vector<2x32xf32>
    %cst_165 = arith.constant 5.000000e-01 : f32
    %429 = vector.broadcast %cst_165 : f32 to vector<2x32xf32>
    %430 = arith.mulf %429, %428 : vector<2x32xf32>
    %431 = math.tanh %430 : vector<2x32xf32>
    %cst_166 = arith.constant 1.000000e+00 : f32
    %432 = vector.broadcast %cst_166 : f32 to vector<2x32xf32>
    %433 = arith.addf %431, %432 : vector<2x32xf32>
    %cst_167 = arith.constant 5.000000e-01 : f32
    %434 = vector.broadcast %cst_167 : f32 to vector<2x32xf32>
    %435 = arith.mulf %434, %433 : vector<2x32xf32>
    %436 = vector.extract_strided_slice %419 {offsets = [0, 64], sizes = [2, 32], strides = [1, 1]} : vector<2x128xf32> to vector<2x32xf32>
    %437 = math.tanh %436 : vector<2x32xf32>
    %438 = vector.extract_strided_slice %419 {offsets = [0, 96], sizes = [2, 32], strides = [1, 1]} : vector<2x128xf32> to vector<2x32xf32>
    %cst_168 = arith.constant 5.000000e-01 : f32
    %439 = vector.broadcast %cst_168 : f32 to vector<2x32xf32>
    %440 = arith.mulf %439, %438 : vector<2x32xf32>
    %441 = math.tanh %440 : vector<2x32xf32>
    %cst_169 = arith.constant 1.000000e+00 : f32
    %442 = vector.broadcast %cst_169 : f32 to vector<2x32xf32>
    %443 = arith.addf %441, %442 : vector<2x32xf32>
    %cst_170 = arith.constant 5.000000e-01 : f32
    %444 = vector.broadcast %cst_170 : f32 to vector<2x32xf32>
    %445 = arith.mulf %444, %443 : vector<2x32xf32>
    %446 = arith.mulf %435, %413 : vector<2x32xf32>
    %447 = arith.mulf %427, %437 : vector<2x32xf32>
    %448 = arith.addf %446, %447 : vector<2x32xf32>
    %449 = math.tanh %448 : vector<2x32xf32>
    %450 = arith.mulf %445, %449 : vector<2x32xf32>
    %451 = vector.broadcast %40 : vector<2x1xf32> to vector<2x32xf32>
    %452 = arith.mulf %451, %450 : vector<2x32xf32>
    %cst_171 = arith.constant 1.000000e+00 : f32
    %453 = vector.broadcast %cst_171 : f32 to vector<2x1xf32>
    %454 = arith.subf %453, %40 : vector<2x1xf32>
    %455 = vector.broadcast %454 : vector<2x1xf32> to vector<2x32xf32>
    %456 = arith.mulf %455, %412 : vector<2x32xf32>
    %457 = arith.addf %452, %456 : vector<2x32xf32>
    %458 = vector.broadcast %40 : vector<2x1xf32> to vector<2x32xf32>
    %459 = arith.mulf %458, %448 : vector<2x32xf32>
    %cst_172 = arith.constant 1.000000e+00 : f32
    %460 = vector.broadcast %cst_172 : f32 to vector<2x1xf32>
    %461 = arith.subf %460, %40 : vector<2x1xf32>
    %462 = vector.broadcast %461 : vector<2x1xf32> to vector<2x32xf32>
    %463 = arith.mulf %462, %413 : vector<2x32xf32>
    %464 = arith.addf %459, %463 : vector<2x32xf32>
    %c0_173 = arith.constant 0 : index
    %c0_174 = arith.constant 0 : index
    %465 = vector.load %arg6[%c0_173, %c0_174] : memref<2x32xf32, #tpu.memory_space<vmem>>, vector<2x32xf32>
    tpu.vector_store %arg6[%c0_173, %c0_174], %457 {strides = array<i32>} : memref<2x32xf32, #tpu.memory_space<vmem>>, vector<2x32xf32>,
    %c0_175 = arith.constant 0 : index
    %c0_176 = arith.constant 0 : index
    %466 = vector.load %arg7[%c0_175, %c0_176] : memref<2x32xf32, #tpu.memory_space<vmem>>, vector<2x32xf32>
    tpu.vector_store %arg7[%c0_175, %c0_176], %464 {strides = array<i32>} : memref<2x32xf32, #tpu.memory_space<vmem>>, vector<2x32xf32>,
    %467 = vector.broadcast %40 : vector<2x1xf32> to vector<2x32xf32>
    %468 = arith.mulf %457, %467 : vector<2x32xf32>
    %469 = arith.truncf %468 : vector<2x32xf32> to vector<2x32xbf16>
    %c6_177 = arith.constant 6 : index
    %c0_178 = arith.constant 0 : index
    %c0_179 = arith.constant 0 : index
    %470 = vector.load %arg5[%c6_177, %c0_178, %c0_179] : memref<8x2x32xbf16, #tpu.memory_space<vmem>>, vector<1x2x32xbf16>
    %471 = vector.shape_cast %470 : vector<1x2x32xbf16> to vector<2x32xbf16>
    %472 = vector.shape_cast %469 : vector<2x32xbf16> to vector<1x2x32xbf16>
    tpu.vector_store %arg5[%c6_177, %c0_178, %c0_179], %472 {strides = array<i32>} : memref<8x2x32xbf16, #tpu.memory_space<vmem>>, vector<1x2x32xbf16>,
    %c0_180 = arith.constant 0 : index
    %c0_181 = arith.constant 0 : index
    %473 = vector.load %arg6[%c0_180, %c0_181] : memref<2x32xf32, #tpu.memory_space<vmem>>, vector<2x32xf32>
    %c0_182 = arith.constant 0 : index
    %c0_183 = arith.constant 0 : index
    %474 = vector.load %arg7[%c0_182, %c0_183] : memref<2x32xf32, #tpu.memory_space<vmem>>, vector<2x32xf32>
    %c7 = arith.constant 7 : index
    %c0_184 = arith.constant 0 : index
    %c0_185 = arith.constant 0 : index
    %475 = vector.load %arg3[%c7, %c0_184, %c0_185] : memref<8x2x128xbf16, #tpu.memory_space<vmem>>, vector<1x2x128xbf16>
    %476 = vector.shape_cast %475 : vector<1x2x128xbf16> to vector<2x128xbf16>
    %477 = arith.truncf %473 : vector<2x32xf32> to vector<2x32xbf16>
    %cst_186 = arith.constant dense<0.000000e+00> : vector<2x128xf32>
    %478 = tpu.matmul %477, %4, %cst_186 {dimension_numbers = #tpu.dot_dimension_numbers<[1], [0], [0], [1], [0, 0, 1, 1], [], []>} : vector<2x32xbf16>, vector<32x128xbf16>, vector<2x128xf32> -> vector<2x128xf32>
    %479 = arith.extf %476 : vector<2x128xbf16> to vector<2x128xf32>
    %480 = arith.addf %479, %478 : vector<2x128xf32>
    %481 = vector.extract_strided_slice %480 {offsets = [0, 0], sizes = [2, 32], strides = [1, 1]} : vector<2x128xf32> to vector<2x32xf32>
    %cst_187 = arith.constant 5.000000e-01 : f32
    %482 = vector.broadcast %cst_187 : f32 to vector<2x32xf32>
    %483 = arith.mulf %482, %481 : vector<2x32xf32>
    %484 = math.tanh %483 : vector<2x32xf32>
    %cst_188 = arith.constant 1.000000e+00 : f32
    %485 = vector.broadcast %cst_188 : f32 to vector<2x32xf32>
    %486 = arith.addf %484, %485 : vector<2x32xf32>
    %cst_189 = arith.constant 5.000000e-01 : f32
    %487 = vector.broadcast %cst_189 : f32 to vector<2x32xf32>
    %488 = arith.mulf %487, %486 : vector<2x32xf32>
    %489 = vector.extract_strided_slice %480 {offsets = [0, 32], sizes = [2, 32], strides = [1, 1]} : vector<2x128xf32> to vector<2x32xf32>
    %cst_190 = arith.constant 5.000000e-01 : f32
    %490 = vector.broadcast %cst_190 : f32 to vector<2x32xf32>
    %491 = arith.mulf %490, %489 : vector<2x32xf32>
    %492 = math.tanh %491 : vector<2x32xf32>
    %cst_191 = arith.constant 1.000000e+00 : f32
    %493 = vector.broadcast %cst_191 : f32 to vector<2x32xf32>
    %494 = arith.addf %492, %493 : vector<2x32xf32>
    %cst_192 = arith.constant 5.000000e-01 : f32
    %495 = vector.broadcast %cst_192 : f32 to vector<2x32xf32>
    %496 = arith.mulf %495, %494 : vector<2x32xf32>
    %497 = vector.extract_strided_slice %480 {offsets = [0, 64], sizes = [2, 32], strides = [1, 1]} : vector<2x128xf32> to vector<2x32xf32>
    %498 = math.tanh %497 : vector<2x32xf32>
    %499 = vector.extract_strided_slice %480 {offsets = [0, 96], sizes = [2, 32], strides = [1, 1]} : vector<2x128xf32> to vector<2x32xf32>
    %cst_193 = arith.constant 5.000000e-01 : f32
    %500 = vector.broadcast %cst_193 : f32 to vector<2x32xf32>
    %501 = arith.mulf %500, %499 : vector<2x32xf32>
    %502 = math.tanh %501 : vector<2x32xf32>
    %cst_194 = arith.constant 1.000000e+00 : f32
    %503 = vector.broadcast %cst_194 : f32 to vector<2x32xf32>
    %504 = arith.addf %502, %503 : vector<2x32xf32>
    %cst_195 = arith.constant 5.000000e-01 : f32
    %505 = vector.broadcast %cst_195 : f32 to vector<2x32xf32>
    %506 = arith.mulf %505, %504 : vector<2x32xf32>
    %507 = arith.mulf %496, %474 : vector<2x32xf32>
    %508 = arith.mulf %488, %498 : vector<2x32xf32>
    %509 = arith.addf %507, %508 : vector<2x32xf32>
    %510 = math.tanh %509 : vector<2x32xf32>
    %511 = arith.mulf %506, %510 : vector<2x32xf32>
    %512 = vector.broadcast %45 : vector<2x1xf32> to vector<2x32xf32>
    %513 = arith.mulf %512, %511 : vector<2x32xf32>
    %cst_196 = arith.constant 1.000000e+00 : f32
    %514 = vector.broadcast %cst_196 : f32 to vector<2x1xf32>
    %515 = arith.subf %514, %45 : vector<2x1xf32>
    %516 = vector.broadcast %515 : vector<2x1xf32> to vector<2x32xf32>
    %517 = arith.mulf %516, %473 : vector<2x32xf32>
    %518 = arith.addf %513, %517 : vector<2x32xf32>
    %519 = vector.broadcast %45 : vector<2x1xf32> to vector<2x32xf32>
    %520 = arith.mulf %519, %509 : vector<2x32xf32>
    %cst_197 = arith.constant 1.000000e+00 : f32
    %521 = vector.broadcast %cst_197 : f32 to vector<2x1xf32>
    %522 = arith.subf %521, %45 : vector<2x1xf32>
    %523 = vector.broadcast %522 : vector<2x1xf32> to vector<2x32xf32>
    %524 = arith.mulf %523, %474 : vector<2x32xf32>
    %525 = arith.addf %520, %524 : vector<2x32xf32>
    %c0_198 = arith.constant 0 : index
    %c0_199 = arith.constant 0 : index
    %526 = vector.load %arg6[%c0_198, %c0_199] : memref<2x32xf32, #tpu.memory_space<vmem>>, vector<2x32xf32>
    tpu.vector_store %arg6[%c0_198, %c0_199], %518 {strides = array<i32>} : memref<2x32xf32, #tpu.memory_space<vmem>>, vector<2x32xf32>,
    %c0_200 = arith.constant 0 : index
    %c0_201 = arith.constant 0 : index
    %527 = vector.load %arg7[%c0_200, %c0_201] : memref<2x32xf32, #tpu.memory_space<vmem>>, vector<2x32xf32>
    tpu.vector_store %arg7[%c0_200, %c0_201], %525 {strides = array<i32>} : memref<2x32xf32, #tpu.memory_space<vmem>>, vector<2x32xf32>,
    %528 = vector.broadcast %45 : vector<2x1xf32> to vector<2x32xf32>
    %529 = arith.mulf %518, %528 : vector<2x32xf32>
    %530 = arith.truncf %529 : vector<2x32xf32> to vector<2x32xbf16>
    %c7_202 = arith.constant 7 : index
    %c0_203 = arith.constant 0 : index
    %c0_204 = arith.constant 0 : index
    %531 = vector.load %arg5[%c7_202, %c0_203, %c0_204] : memref<8x2x32xbf16, #tpu.memory_space<vmem>>, vector<1x2x32xbf16>
    %532 = vector.shape_cast %531 : vector<1x2x32xbf16> to vector<2x32xbf16>
    %533 = vector.shape_cast %530 : vector<2x32xbf16> to vector<1x2x32xbf16>
    tpu.vector_store %arg5[%c7_202, %c0_203, %c0_204], %533 {strides = array<i32>} : memref<8x2x32xbf16, #tpu.memory_space<vmem>>, vector<1x2x32xbf16>,
    return
  }
  func.func @transform_0(%arg0: i32, %arg1: i32) -> (i32, i32) {
    %c0_i32 = arith.constant 0 : i32
    %c0_i32_0 = arith.constant 0 : i32
    return %arg0, %c0_i32 : i32, i32
  }
  func.func @transform_1(%arg0: i32, %arg1: i32) -> (i32, i32, i32) {
    %c0_i32 = arith.constant 0 : i32
    %c0_i32_0 = arith.constant 0 : i32
    return %arg1, %arg0, %c0_i32 : i32, i32, i32
  }
  func.func @transform_2(%arg0: i32, %arg1: i32) -> (i32, i32) {
    %c0_i32 = arith.constant 0 : i32
    %c0_i32_0 = arith.constant 0 : i32
    %c0_i32_1 = arith.constant 0 : i32
    return %c0_i32, %c0_i32_0 : i32, i32
  }
  func.func @transform_3(%arg0: i32, %arg1: i32) -> (i32, i32, i32) {
    %c0_i32 = arith.constant 0 : i32
    %c0_i32_0 = arith.constant 0 : i32
    return %arg1, %arg0, %c0_i32 : i32, i32, i32
  }
  func.func @transform_4(%arg0: i32, %arg1: i32) -> (i32, i32) {
    %c0_i32 = arith.constant 0 : i32
    %c0_i32_0 = arith.constant 0 : i32
    return %arg0, %c0_i32 : i32, i32
  }
}

module attributes {stable_mosaic.version = 11 : i64} {
  func.func @kernel(%arg0: i32, %arg1: i32, %arg2: memref<2x1xi32, #tpu.memory_space<vmem>>, %arg3: memref<8x2x128xbf16, #tpu.memory_space<vmem>>, %arg4: memref<32x128xbf16, #tpu.memory_space<vmem>>, %arg5: memref<8x2x32xbf16, #tpu.memory_space<vmem>>, %arg6: memref<2x32xf32, #tpu.memory_space<vmem>>, %arg7: memref<2x32xf32, #tpu.memory_space<vmem>>) attributes {dimension_semantics = [#tpu.dimension_semantics<parallel>, #tpu.dimension_semantics<arbitrary>], iteration_bounds = array<i64: 1, 1>, scalar_prefetch = 0 : i64, scratch_operands = 1 : i64, tpu.core_type = #tpu.core_type<tc>, window_params = [{transform_indices = @transform_0, window_bounds = array<i64: 2, 1>}, {transform_indices = @transform_1, window_bounds = array<i64: 8, 2, 128>}, {pipeline_mode = #tpu.pipeline_mode<synchronous>, transform_indices = @transform_2, window_bounds = array<i64: 32, 128>}, {transform_indices = @transform_3, window_bounds = array<i64: 8, 2, 32>}, {transform_indices = @transform_4, window_bounds = array<i64: 2, 32>}]} {
    %c0_i32 = arith.constant 0 : i32
    %0 = arith.cmpi eq, %arg1, %c0_i32 : i32
    %1 = arith.extui %0 : i1 to i32
    %c0_i32_0 = arith.constant 0 : i32
    %2 = arith.cmpi ne, %1, %c0_i32_0 : i32
    scf.if %2 {
      %cst_205 = arith.constant 0.000000e+00 : f32
      %534 = vector.broadcast %cst_205 : f32 to vector<2x32xf32>
      %c0_206 = arith.constant 0 : index
      %c0_207 = arith.constant 0 : index
      %535 = vector.load %arg6[%c0_206, %c0_207] : memref<2x32xf32, #tpu.memory_space<vmem>>, vector<2x32xf32>
      tpu.vector_store %arg6[%c0_206, %c0_207], %534 {strides = array<i32>} : memref<2x32xf32, #tpu.memory_space<vmem>>, vector<2x32xf32>,
      %cst_208 = arith.constant 0.000000e+00 : f32
      %536 = vector.broadcast %cst_208 : f32 to vector<2x32xf32>
      %c0_209 = arith.constant 0 : index
      %c0_210 = arith.constant 0 : index
      %537 = vector.load %arg7[%c0_209, %c0_210] : memref<2x32xf32, #tpu.memory_space<vmem>>, vector<2x32xf32>
      tpu.vector_store %arg7[%c0_209, %c0_210], %536 {strides = array<i32>} : memref<2x32xf32, #tpu.memory_space<vmem>>, vector<2x32xf32>,
    } else {
    }
    %c0 = arith.constant 0 : index
    %c0_1 = arith.constant 0 : index
    %3 = vector.load %arg2[%c0, %c0_1] : memref<2x1xi32, #tpu.memory_space<vmem>>, vector<2x1xi32>
    %c0_2 = arith.constant 0 : index
    %c0_3 = arith.constant 0 : index
    %4 = vector.load %arg4[%c0_2, %c0_3] : memref<32x128xbf16, #tpu.memory_space<vmem>>, vector<32x128xbf16>
    %c8_i32 = arith.constant 8 : i32
    %5 = arith.muli %arg1, %c8_i32 : i32
    %c0_i32_4 = arith.constant 0 : i32
    %6 = arith.addi %5, %c0_i32_4 : i32
    %7 = vector.broadcast %6 : i32 to vector<2x1xi32>
    %8 = arith.cmpi slt, %7, %3 : vector<2x1xi32>
    %9 = arith.extui %8 : vector<2x1xi1> to vector<2x1xi32>
    %10 = arith.sitofp %9 : vector<2x1xi32> to vector<2x1xf32>
    %c1_i32 = arith.constant 1 : i32
    %11 = arith.addi %5, %c1_i32 : i32
    %12 = vector.broadcast %11 : i32 to vector<2x1xi32>
    %13 = arith.cmpi slt, %12, %3 : vector<2x1xi32>
    %14 = arith.extui %13 : vector<2x1xi1> to vector<2x1xi32>
    %15 = arith.sitofp %14 : vector<2x1xi32> to vector<2x1xf32>
    %c2_i32 = arith.constant 2 : i32
    %16 = arith.addi %5, %c2_i32 : i32
    %17 = vector.broadcast %16 : i32 to vector<2x1xi32>
    %18 = arith.cmpi slt, %17, %3 : vector<2x1xi32>
    %19 = arith.extui %18 : vector<2x1xi1> to vector<2x1xi32>
    %20 = arith.sitofp %19 : vector<2x1xi32> to vector<2x1xf32>
    %c3_i32 = arith.constant 3 : i32
    %21 = arith.addi %5, %c3_i32 : i32
    %22 = vector.broadcast %21 : i32 to vector<2x1xi32>
    %23 = arith.cmpi slt, %22, %3 : vector<2x1xi32>
    %24 = arith.extui %23 : vector<2x1xi1> to vector<2x1xi32>
    %25 = arith.sitofp %24 : vector<2x1xi32> to vector<2x1xf32>
    %c4_i32 = arith.constant 4 : i32
    %26 = arith.addi %5, %c4_i32 : i32
    %27 = vector.broadcast %26 : i32 to vector<2x1xi32>
    %28 = arith.cmpi slt, %27, %3 : vector<2x1xi32>
    %29 = arith.extui %28 : vector<2x1xi1> to vector<2x1xi32>
    %30 = arith.sitofp %29 : vector<2x1xi32> to vector<2x1xf32>
    %c5_i32 = arith.constant 5 : i32
    %31 = arith.addi %5, %c5_i32 : i32
    %32 = vector.broadcast %31 : i32 to vector<2x1xi32>
    %33 = arith.cmpi slt, %32, %3 : vector<2x1xi32>
    %34 = arith.extui %33 : vector<2x1xi1> to vector<2x1xi32>
    %35 = arith.sitofp %34 : vector<2x1xi32> to vector<2x1xf32>
    %c6_i32 = arith.constant 6 : i32
    %36 = arith.addi %5, %c6_i32 : i32
    %37 = vector.broadcast %36 : i32 to vector<2x1xi32>
    %38 = arith.cmpi slt, %37, %3 : vector<2x1xi32>
    %39 = arith.extui %38 : vector<2x1xi1> to vector<2x1xi32>
    %40 = arith.sitofp %39 : vector<2x1xi32> to vector<2x1xf32>
    %c7_i32 = arith.constant 7 : i32
    %41 = arith.addi %5, %c7_i32 : i32
    %42 = vector.broadcast %41 : i32 to vector<2x1xi32>
    %43 = arith.cmpi slt, %42, %3 : vector<2x1xi32>
    %44 = arith.extui %43 : vector<2x1xi1> to vector<2x1xi32>
    %45 = arith.sitofp %44 : vector<2x1xi32> to vector<2x1xf32>
    %c0_5 = arith.constant 0 : index
    %c0_6 = arith.constant 0 : index
    %46 = vector.load %arg6[%c0_5, %c0_6] : memref<2x32xf32, #tpu.memory_space<vmem>>, vector<2x32xf32>
    %c0_7 = arith.constant 0 : index
    %c0_8 = arith.constant 0 : index
    %47 = vector.load %arg7[%c0_7, %c0_8] : memref<2x32xf32, #tpu.memory_space<vmem>>, vector<2x32xf32>
    %c0_9 = arith.constant 0 : index
    %c0_10 = arith.constant 0 : index
    %c0_11 = arith.constant 0 : index
    %48 = vector.load %arg3[%c0_9, %c0_10, %c0_11] : memref<8x2x128xbf16, #tpu.memory_space<vmem>>, vector<1x2x128xbf16>
    %49 = vector.shape_cast %48 : vector<1x2x128xbf16> to vector<2x128xbf16>
    %50 = arith.truncf %46 : vector<2x32xf32> to vector<2x32xbf16>
    %cst = arith.constant dense<0.000000e+00> : vector<2x128xf32>
    %51 = tpu.matmul %50, %4, %cst {dimension_numbers = #tpu.dot_dimension_numbers<[1], [0], [0], [1], [0, 0, 1, 1], [], []>} : vector<2x32xbf16>, vector<32x128xbf16>, vector<2x128xf32> -> vector<2x128xf32>
    %52 = arith.extf %49 : vector<2x128xbf16> to vector<2x128xf32>
    %53 = arith.addf %52, %51 : vector<2x128xf32>
    %54 = vector.extract_strided_slice %53 {offsets = [0, 0], sizes = [2, 32], strides = [1, 1]} : vector<2x128xf32> to vector<2x32xf32>
    %cst_12 = arith.constant 5.000000e-01 : f32
    %55 = vector.broadcast %cst_12 : f32 to vector<2x32xf32>
    %56 = arith.mulf %55, %54 : vector<2x32xf32>
    %57 = math.tanh %56 : vector<2x32xf32>
    %cst_13 = arith.constant 1.000000e+00 : f32
    %58 = vector.broadcast %cst_13 : f32 to vector<2x32xf32>
    %59 = arith.addf %57, %58 : vector<2x32xf32>
    %cst_14 = arith.constant 5.000000e-01 : f32
    %60 = vector.broadcast %cst_14 : f32 to vector<2x32xf32>
    %61 = arith.mulf %60, %59 : vector<2x32xf32>
    %62 = vector.extract_strided_slice %53 {offsets = [0, 32], sizes = [2, 32], strides = [1, 1]} : vector<2x128xf32> to vector<2x32xf32>
    %cst_15 = arith.constant 5.000000e-01 : f32
    %63 = vector.broadcast %cst_15 : f32 to vector<2x32xf32>
    %64 = arith.mulf %63, %62 : vector<2x32xf32>
    %65 = math.tanh %64 : vector<2x32xf32>
    %cst_16 = arith.constant 1.000000e+00 : f32
    %66 = vector.broadcast %cst_16 : f32 to vector<2x32xf32>
    %67 = arith.addf %65, %66 : vector<2x32xf32>
    %cst_17 = arith.constant 5.000000e-01 : f32
    %68 = vector.broadcast %cst_17 : f32 to vector<2x32xf32>
    %69 = arith.mulf %68, %67 : vector<2x32xf32>
    %70 = vector.extract_strided_slice %53 {offsets = [0, 64], sizes = [2, 32], strides = [1, 1]} : vector<2x128xf32> to vector<2x32xf32>
    %71 = math.tanh %70 : vector<2x32xf32>
    %72 = vector.extract_strided_slice %53 {offsets = [0, 96], sizes = [2, 32], strides = [1, 1]} : vector<2x128xf32> to vector<2x32xf32>
    %cst_18 = arith.constant 5.000000e-01 : f32
    %73 = vector.broadcast %cst_18 : f32 to vector<2x32xf32>
    %74 = arith.mulf %73, %72 : vector<2x32xf32>
    %75 = math.tanh %74 : vector<2x32xf32>
    %cst_19 = arith.constant 1.000000e+00 : f32
    %76 = vector.broadcast %cst_19 : f32 to vector<2x32xf32>
    %77 = arith.addf %75, %76 : vector<2x32xf32>
    %cst_20 = arith.constant 5.000000e-01 : f32
    %78 = vector.broadcast %cst_20 : f32 to vector<2x32xf32>
    %79 = arith.mulf %78, %77 : vector<2x32xf32>
    %80 = arith.mulf %69, %47 : vector<2x32xf32>
    %81 = arith.mulf %61, %71 : vector<2x32xf32>
    %82 = arith.addf %80, %81 : vector<2x32xf32>
    %83 = math.tanh %82 : vector<2x32xf32>
    %84 = arith.mulf %79, %83 : vector<2x32xf32>
    %85 = vector.broadcast %10 : vector<2x1xf32> to vector<2x32xf32>
    %86 = arith.mulf %85, %84 : vector<2x32xf32>
    %cst_21 = arith.constant 1.000000e+00 : f32
    %87 = vector.broadcast %cst_21 : f32 to vector<2x1xf32>
    %88 = arith.subf %87, %10 : vector<2x1xf32>
    %89 = vector.broadcast %88 : vector<2x1xf32> to vector<2x32xf32>
    %90 = arith.mulf %89, %46 : vector<2x32xf32>
    %91 = arith.addf %86, %90 : vector<2x32xf32>
    %92 = vector.broadcast %10 : vector<2x1xf32> to vector<2x32xf32>
    %93 = arith.mulf %92, %82 : vector<2x32xf32>
    %cst_22 = arith.constant 1.000000e+00 : f32
    %94 = vector.broadcast %cst_22 : f32 to vector<2x1xf32>
    %95 = arith.subf %94, %10 : vector<2x1xf32>
    %96 = vector.broadcast %95 : vector<2x1xf32> to vector<2x32xf32>
    %97 = arith.mulf %96, %47 : vector<2x32xf32>
    %98 = arith.addf %93, %97 : vector<2x32xf32>
    %c0_23 = arith.constant 0 : index
    %c0_24 = arith.constant 0 : index
    %99 = vector.load %arg6[%c0_23, %c0_24] : memref<2x32xf32, #tpu.memory_space<vmem>>, vector<2x32xf32>
    tpu.vector_store %arg6[%c0_23, %c0_24], %91 {strides = array<i32>} : memref<2x32xf32, #tpu.memory_space<vmem>>, vector<2x32xf32>,
    %c0_25 = arith.constant 0 : index
    %c0_26 = arith.constant 0 : index
    %100 = vector.load %arg7[%c0_25, %c0_26] : memref<2x32xf32, #tpu.memory_space<vmem>>, vector<2x32xf32>
    tpu.vector_store %arg7[%c0_25, %c0_26], %98 {strides = array<i32>} : memref<2x32xf32, #tpu.memory_space<vmem>>, vector<2x32xf32>,
    %101 = vector.broadcast %10 : vector<2x1xf32> to vector<2x32xf32>
    %102 = arith.mulf %91, %101 : vector<2x32xf32>
    %103 = arith.truncf %102 : vector<2x32xf32> to vector<2x32xbf16>
    %c0_27 = arith.constant 0 : index
    %c0_28 = arith.constant 0 : index
    %c0_29 = arith.constant 0 : index
    %104 = vector.load %arg5[%c0_27, %c0_28, %c0_29] : memref<8x2x32xbf16, #tpu.memory_space<vmem>>, vector<1x2x32xbf16>
    %105 = vector.shape_cast %104 : vector<1x2x32xbf16> to vector<2x32xbf16>
    %106 = vector.shape_cast %103 : vector<2x32xbf16> to vector<1x2x32xbf16>
    tpu.vector_store %arg5[%c0_27, %c0_28, %c0_29], %106 {strides = array<i32>} : memref<8x2x32xbf16, #tpu.memory_space<vmem>>, vector<1x2x32xbf16>,
    %c0_30 = arith.constant 0 : index
    %c0_31 = arith.constant 0 : index
    %107 = vector.load %arg6[%c0_30, %c0_31] : memref<2x32xf32, #tpu.memory_space<vmem>>, vector<2x32xf32>
    %c0_32 = arith.constant 0 : index
    %c0_33 = arith.constant 0 : index
    %108 = vector.load %arg7[%c0_32, %c0_33] : memref<2x32xf32, #tpu.memory_space<vmem>>, vector<2x32xf32>
    %c1 = arith.constant 1 : index
    %c0_34 = arith.constant 0 : index
    %c0_35 = arith.constant 0 : index
    %109 = vector.load %arg3[%c1, %c0_34, %c0_35] : memref<8x2x128xbf16, #tpu.memory_space<vmem>>, vector<1x2x128xbf16>
    %110 = vector.shape_cast %109 : vector<1x2x128xbf16> to vector<2x128xbf16>
    %111 = arith.truncf %107 : vector<2x32xf32> to vector<2x32xbf16>
    %cst_36 = arith.constant dense<0.000000e+00> : vector<2x128xf32>
    %112 = tpu.matmul %111, %4, %cst_36 {dimension_numbers = #tpu.dot_dimension_numbers<[1], [0], [0], [1], [0, 0, 1, 1], [], []>} : vector<2x32xbf16>, vector<32x128xbf16>, vector<2x128xf32> -> vector<2x128xf32>
    %113 = arith.extf %110 : vector<2x128xbf16> to vector<2x128xf32>
    %114 = arith.addf %113, %112 : vector<2x128xf32>
    %115 = vector.extract_strided_slice %114 {offsets = [0, 0], sizes = [2, 32], strides = [1, 1]} : vector<2x128xf32> to vector<2x32xf32>
    %cst_37 = arith.constant 5.000000e-01 : f32
    %116 = vector.broadcast %cst_37 : f32 to vector<2x32xf32>
    %117 = arith.mulf %116, %115 : vector<2x32xf32>
    %118 = math.tanh %117 : vector<2x32xf32>
    %cst_38 = arith.constant 1.000000e+00 : f32
    %119 = vector.broadcast %cst_38 : f32 to vector<2x32xf32>
    %120 = arith.addf %118, %119 : vector<2x32xf32>
    %cst_39 = arith.constant 5.000000e-01 : f32
    %121 = vector.broadcast %cst_39 : f32 to vector<2x32xf32>
    %122 = arith.mulf %121, %120 : vector<2x32xf32>
    %123 = vector.extract_strided_slice %114 {offsets = [0, 32], sizes = [2, 32], strides = [1, 1]} : vector<2x128xf32> to vector<2x32xf32>
    %cst_40 = arith.constant 5.000000e-01 : f32
    %124 = vector.broadcast %cst_40 : f32 to vector<2x32xf32>
    %125 = arith.mulf %124, %123 : vector<2x32xf32>
    %126 = math.tanh %125 : vector<2x32xf32>
    %cst_41 = arith.constant 1.000000e+00 : f32
    %127 = vector.broadcast %cst_41 : f32 to vector<2x32xf32>
    %128 = arith.addf %126, %127 : vector<2x32xf32>
    %cst_42 = arith.constant 5.000000e-01 : f32
    %129 = vector.broadcast %cst_42 : f32 to vector<2x32xf32>
    %130 = arith.mulf %129, %128 : vector<2x32xf32>
    %131 = vector.extract_strided_slice %114 {offsets = [0, 64], sizes = [2, 32], strides = [1, 1]} : vector<2x128xf32> to vector<2x32xf32>
    %132 = math.tanh %131 : vector<2x32xf32>
    %133 = vector.extract_strided_slice %114 {offsets = [0, 96], sizes = [2, 32], strides = [1, 1]} : vector<2x128xf32> to vector<2x32xf32>
    %cst_43 = arith.constant 5.000000e-01 : f32
    %134 = vector.broadcast %cst_43 : f32 to vector<2x32xf32>
    %135 = arith.mulf %134, %133 : vector<2x32xf32>
    %136 = math.tanh %135 : vector<2x32xf32>
    %cst_44 = arith.constant 1.000000e+00 : f32
    %137 = vector.broadcast %cst_44 : f32 to vector<2x32xf32>
    %138 = arith.addf %136, %137 : vector<2x32xf32>
    %cst_45 = arith.constant 5.000000e-01 : f32
    %139 = vector.broadcast %cst_45 : f32 to vector<2x32xf32>
    %140 = arith.mulf %139, %138 : vector<2x32xf32>
    %141 = arith.mulf %130, %108 : vector<2x32xf32>
    %142 = arith.mulf %122, %132 : vector<2x32xf32>
    %143 = arith.addf %141, %142 : vector<2x32xf32>
    %144 = math.tanh %143 : vector<2x32xf32>
    %145 = arith.mulf %140, %144 : vector<2x32xf32>
    %146 = vector.broadcast %15 : vector<2x1xf32> to vector<2x32xf32>
    %147 = arith.mulf %146, %145 : vector<2x32xf32>
    %cst_46 = arith.constant 1.000000e+00 : f32
    %148 = vector.broadcast %cst_46 : f32 to vector<2x1xf32>
    %149 = arith.subf %148, %15 : vector<2x1xf32>
    %150 = vector.broadcast %149 : vector<2x1xf32> to vector<2x32xf32>
    %151 = arith.mulf %150, %107 : vector<2x32xf32>
    %152 = arith.addf %147, %151 : vector<2x32xf32>
    %153 = vector.broadcast %15 : vector<2x1xf32> to vector<2x32xf32>
    %154 = arith.mulf %153, %143 : vector<2x32xf32>
    %cst_47 = arith.constant 1.000000e+00 : f32
    %155 = vector.broadcast %cst_47 : f32 to vector<2x1xf32>
    %156 = arith.subf %155, %15 : vector<2x1xf32>
    %157 = vector.broadcast %156 : vector<2x1xf32> to vector<2x32xf32>
    %158 = arith.mulf %157, %108 : vector<2x32xf32>
    %159 = arith.addf %154, %158 : vector<2x32xf32>
    %c0_48 = arith.constant 0 : index
    %c0_49 = arith.constant 0 : index
    %160 = vector.load %arg6[%c0_48, %c0_49] : memref<2x32xf32, #tpu.memory_space<vmem>>, vector<2x32xf32>
    tpu.vector_store %arg6[%c0_48, %c0_49], %152 {strides = array<i32>} : memref<2x32xf32, #tpu.memory_space<vmem>>, vector<2x32xf32>,
    %c0_50 = arith.constant 0 : index
    %c0_51 = arith.constant 0 : index
    %161 = vector.load %arg7[%c0_50, %c0_51] : memref<2x32xf32, #tpu.memory_space<vmem>>, vector<2x32xf32>
    tpu.vector_store %arg7[%c0_50, %c0_51], %159 {strides = array<i32>} : memref<2x32xf32, #tpu.memory_space<vmem>>, vector<2x32xf32>,
    %162 = vector.broadcast %15 : vector<2x1xf32> to vector<2x32xf32>
    %163 = arith.mulf %152, %162 : vector<2x32xf32>
    %164 = arith.truncf %163 : vector<2x32xf32> to vector<2x32xbf16>
    %c1_52 = arith.constant 1 : index
    %c0_53 = arith.constant 0 : index
    %c0_54 = arith.constant 0 : index
    %165 = vector.load %arg5[%c1_52, %c0_53, %c0_54] : memref<8x2x32xbf16, #tpu.memory_space<vmem>>, vector<1x2x32xbf16>
    %166 = vector.shape_cast %165 : vector<1x2x32xbf16> to vector<2x32xbf16>
    %167 = vector.shape_cast %164 : vector<2x32xbf16> to vector<1x2x32xbf16>
    tpu.vector_store %arg5[%c1_52, %c0_53, %c0_54], %167 {strides = array<i32>} : memref<8x2x32xbf16, #tpu.memory_space<vmem>>, vector<1x2x32xbf16>,
    %c0_55 = arith.constant 0 : index
    %c0_56 = arith.constant 0 : index
    %168 = vector.load %arg6[%c0_55, %c0_56] : memref<2x32xf32, #tpu.memory_space<vmem>>, vector<2x32xf32>
    %c0_57 = arith.constant 0 : index
    %c0_58 = arith.constant 0 : index
    %169 = vector.load %arg7[%c0_57, %c0_58] : memref<2x32xf32, #tpu.memory_space<vmem>>, vector<2x32xf32>
    %c2 = arith.constant 2 : index
    %c0_59 = arith.constant 0 : index
    %c0_60 = arith.constant 0 : index
    %170 = vector.load %arg3[%c2, %c0_59, %c0_60] : memref<8x2x128xbf16, #tpu.memory_space<vmem>>, vector<1x2x128xbf16>
    %171 = vector.shape_cast %170 : vector<1x2x128xbf16> to vector<2x128xbf16>
    %172 = arith.truncf %168 : vector<2x32xf32> to vector<2x32xbf16>
    %cst_61 = arith.constant dense<0.000000e+00> : vector<2x128xf32>
    %173 = tpu.matmul %172, %4, %cst_61 {dimension_numbers = #tpu.dot_dimension_numbers<[1], [0], [0], [1], [0, 0, 1, 1], [], []>} : vector<2x32xbf16>, vector<32x128xbf16>, vector<2x128xf32> -> vector<2x128xf32>
    %174 = arith.extf %171 : vector<2x128xbf16> to vector<2x128xf32>
    %175 = arith.addf %174, %173 : vector<2x128xf32>
    %176 = vector.extract_strided_slice %175 {offsets = [0, 0], sizes = [2, 32], strides = [1, 1]} : vector<2x128xf32> to vector<2x32xf32>
    %cst_62 = arith.constant 5.000000e-01 : f32
    %177 = vector.broadcast %cst_62 : f32 to vector<2x32xf32>
    %178 = arith.mulf %177, %176 : vector<2x32xf32>
    %179 = math.tanh %178 : vector<2x32xf32>
    %cst_63 = arith.constant 1.000000e+00 : f32
    %180 = vector.broadcast %cst_63 : f32 to vector<2x32xf32>
    %181 = arith.addf %179, %180 : vector<2x32xf32>
    %cst_64 = arith.constant 5.000000e-01 : f32
    %182 = vector.broadcast %cst_64 : f32 to vector<2x32xf32>
    %183 = arith.mulf %182, %181 : vector<2x32xf32>
    %184 = vector.extract_strided_slice %175 {offsets = [0, 32], sizes = [2, 32], strides = [1, 1]} : vector<2x128xf32> to vector<2x32xf32>
    %cst_65 = arith.constant 5.000000e-01 : f32
    %185 = vector.broadcast %cst_65 : f32 to vector<2x32xf32>
    %186 = arith.mulf %185, %184 : vector<2x32xf32>
    %187 = math.tanh %186 : vector<2x32xf32>
    %cst_66 = arith.constant 1.000000e+00 : f32
    %188 = vector.broadcast %cst_66 : f32 to vector<2x32xf32>
    %189 = arith.addf %187, %188 : vector<2x32xf32>
    %cst_67 = arith.constant 5.000000e-01 : f32
    %190 = vector.broadcast %cst_67 : f32 to vector<2x32xf32>
    %191 = arith.mulf %190, %189 : vector<2x32xf32>
    %192 = vector.extract_strided_slice %175 {offsets = [0, 64], sizes = [2, 32], strides = [1, 1]} : vector<2x128xf32> to vector<2x32xf32>
    %193 = math.tanh %192 : vector<2x32xf32>
    %194 = vector.extract_strided_slice %175 {offsets = [0, 96], sizes = [2, 32], strides = [1, 1]} : vector<2x128xf32> to vector<2x32xf32>
    %cst_68 = arith.constant 5.000000e-01 : f32
    %195 = vector.broadcast %cst_68 : f32 to vector<2x32xf32>
    %196 = arith.mulf %195, %194 : vector<2x32xf32>
    %197 = math.tanh %196 : vector<2x32xf32>
    %cst_69 = arith.constant 1.000000e+00 : f32
    %198 = vector.broadcast %cst_69 : f32 to vector<2x32xf32>
    %199 = arith.addf %197, %198 : vector<2x32xf32>
    %cst_70 = arith.constant 5.000000e-01 : f32
    %200 = vector.broadcast %cst_70 : f32 to vector<2x32xf32>
    %201 = arith.mulf %200, %199 : vector<2x32xf32>
    %202 = arith.mulf %191, %169 : vector<2x32xf32>
    %203 = arith.mulf %183, %193 : vector<2x32xf32>
    %204 = arith.addf %202, %203 : vector<2x32xf32>
    %205 = math.tanh %204 : vector<2x32xf32>
    %206 = arith.mulf %201, %205 : vector<2x32xf32>
    %207 = vector.broadcast %20 : vector<2x1xf32> to vector<2x32xf32>
    %208 = arith.mulf %207, %206 : vector<2x32xf32>
    %cst_71 = arith.constant 1.000000e+00 : f32
    %209 = vector.broadcast %cst_71 : f32 to vector<2x1xf32>
    %210 = arith.subf %209, %20 : vector<2x1xf32>
    %211 = vector.broadcast %210 : vector<2x1xf32> to vector<2x32xf32>
    %212 = arith.mulf %211, %168 : vector<2x32xf32>
    %213 = arith.addf %208, %212 : vector<2x32xf32>
    %214 = vector.broadcast %20 : vector<2x1xf32> to vector<2x32xf32>
    %215 = arith.mulf %214, %204 : vector<2x32xf32>
    %cst_72 = arith.constant 1.000000e+00 : f32
    %216 = vector.broadcast %cst_72 : f32 to vector<2x1xf32>
    %217 = arith.subf %216, %20 : vector<2x1xf32>
    %218 = vector.broadcast %217 : vector<2x1xf32> to vector<2x32xf32>
    %219 = arith.mulf %218, %169 : vector<2x32xf32>
    %220 = arith.addf %215, %219 : vector<2x32xf32>
    %c0_73 = arith.constant 0 : index
    %c0_74 = arith.constant 0 : index
    %221 = vector.load %arg6[%c0_73, %c0_74] : memref<2x32xf32, #tpu.memory_space<vmem>>, vector<2x32xf32>
    tpu.vector_store %arg6[%c0_73, %c0_74], %213 {strides = array<i32>} : memref<2x32xf32, #tpu.memory_space<vmem>>, vector<2x32xf32>,
    %c0_75 = arith.constant 0 : index
    %c0_76 = arith.constant 0 : index
    %222 = vector.load %arg7[%c0_75, %c0_76] : memref<2x32xf32, #tpu.memory_space<vmem>>, vector<2x32xf32>
    tpu.vector_store %arg7[%c0_75, %c0_76], %220 {strides = array<i32>} : memref<2x32xf32, #tpu.memory_space<vmem>>, vector<2x32xf32>,
    %223 = vector.broadcast %20 : vector<2x1xf32> to vector<2x32xf32>
    %224 = arith.mulf %213, %223 : vector<2x32xf32>
    %225 = arith.truncf %224 : vector<2x32xf32> to vector<2x32xbf16>
    %c2_77 = arith.constant 2 : index
    %c0_78 = arith.constant 0 : index
    %c0_79 = arith.constant 0 : index
    %226 = vector.load %arg5[%c2_77, %c0_78, %c0_79] : memref<8x2x32xbf16, #tpu.memory_space<vmem>>, vector<1x2x32xbf16>
    %227 = vector.shape_cast %226 : vector<1x2x32xbf16> to vector<2x32xbf16>
    %228 = vector.shape_cast %225 : vector<2x32xbf16> to vector<1x2x32xbf16>
    tpu.vector_store %arg5[%c2_77, %c0_78, %c0_79], %228 {strides = array<i32>} : memref<8x2x32xbf16, #tpu.memory_space<vmem>>, vector<1x2x32xbf16>,
    %c0_80 = arith.constant 0 : index
    %c0_81 = arith.constant 0 : index
    %229 = vector.load %arg6[%c0_80, %c0_81] : memref<2x32xf32, #tpu.memory_space<vmem>>, vector<2x32xf32>
    %c0_82 = arith.constant 0 : index
    %c0_83 = arith.constant 0 : index
    %230 = vector.load %arg7[%c0_82, %c0_83] : memref<2x32xf32, #tpu.memory_space<vmem>>, vector<2x32xf32>
    %c3 = arith.constant 3 : index
    %c0_84 = arith.constant 0 : index
    %c0_85 = arith.constant 0 : index
    %231 = vector.load %arg3[%c3, %c0_84, %c0_85] : memref<8x2x128xbf16, #tpu.memory_space<vmem>>, vector<1x2x128xbf16>
    %232 = vector.shape_cast %231 : vector<1x2x128xbf16> to vector<2x128xbf16>
    %233 = arith.truncf %229 : vector<2x32xf32> to vector<2x32xbf16>
    %cst_86 = arith.constant dense<0.000000e+00> : vector<2x128xf32>
    %234 = tpu.matmul %233, %4, %cst_86 {dimension_numbers = #tpu.dot_dimension_numbers<[1], [0], [0], [1], [0, 0, 1, 1], [], []>} : vector<2x32xbf16>, vector<32x128xbf16>, vector<2x128xf32> -> vector<2x128xf32>
    %235 = arith.extf %232 : vector<2x128xbf16> to vector<2x128xf32>
    %236 = arith.addf %235, %234 : vector<2x128xf32>
    %237 = vector.extract_strided_slice %236 {offsets = [0, 0], sizes = [2, 32], strides = [1, 1]} : vector<2x128xf32> to vector<2x32xf32>
    %cst_87 = arith.constant 5.000000e-01 : f32
    %238 = vector.broadcast %cst_87 : f32 to vector<2x32xf32>
    %239 = arith.mulf %238, %237 : vector<2x32xf32>
    %240 = math.tanh %239 : vector<2x32xf32>
    %cst_88 = arith.constant 1.000000e+00 : f32
    %241 = vector.broadcast %cst_88 : f32 to vector<2x32xf32>
    %242 = arith.addf %240, %241 : vector<2x32xf32>
    %cst_89 = arith.constant 5.000000e-01 : f32
    %243 = vector.broadcast %cst_89 : f32 to vector<2x32xf32>
    %244 = arith.mulf %243, %242 : vector<2x32xf32>
    %245 = vector.extract_strided_slice %236 {offsets = [0, 32], sizes = [2, 32], strides = [1, 1]} : vector<2x128xf32> to vector<2x32xf32>
    %cst_90 = arith.constant 5.000000e-01 : f32
    %246 = vector.broadcast %cst_90 : f32 to vector<2x32xf32>
    %247 = arith.mulf %246, %245 : vector<2x32xf32>
    %248 = math.tanh %247 : vector<2x32xf32>
    %cst_91 = arith.constant 1.000000e+00 : f32
    %249 = vector.broadcast %cst_91 : f32 to vector<2x32xf32>
    %250 = arith.addf %248, %249 : vector<2x32xf32>
    %cst_92 = arith.constant 5.000000e-01 : f32
    %251 = vector.broadcast %cst_92 : f32 to vector<2x32xf32>
    %252 = arith.mulf %251, %250 : vector<2x32xf32>
    %253 = vector.extract_strided_slice %236 {offsets = [0, 64], sizes = [2, 32], strides = [1, 1]} : vector<2x128xf32> to vector<2x32xf32>
    %254 = math.tanh %253 : vector<2x32xf32>
    %255 = vector.extract_strided_slice %236 {offsets = [0, 96], sizes = [2, 32], strides = [1, 1]} : vector<2x128xf32> to vector<2x32xf32>
    %cst_93 = arith.constant 5.000000e-01 : f32
    %256 = vector.broadcast %cst_93 : f32 to vector<2x32xf32>
    %257 = arith.mulf %256, %255 : vector<2x32xf32>
    %258 = math.tanh %257 : vector<2x32xf32>
    %cst_94 = arith.constant 1.000000e+00 : f32
    %259 = vector.broadcast %cst_94 : f32 to vector<2x32xf32>
    %260 = arith.addf %258, %259 : vector<2x32xf32>
    %cst_95 = arith.constant 5.000000e-01 : f32
    %261 = vector.broadcast %cst_95 : f32 to vector<2x32xf32>
    %262 = arith.mulf %261, %260 : vector<2x32xf32>
    %263 = arith.mulf %252, %230 : vector<2x32xf32>
    %264 = arith.mulf %244, %254 : vector<2x32xf32>
    %265 = arith.addf %263, %264 : vector<2x32xf32>
    %266 = math.tanh %265 : vector<2x32xf32>
    %267 = arith.mulf %262, %266 : vector<2x32xf32>
    %268 = vector.broadcast %25 : vector<2x1xf32> to vector<2x32xf32>
    %269 = arith.mulf %268, %267 : vector<2x32xf32>
    %cst_96 = arith.constant 1.000000e+00 : f32
    %270 = vector.broadcast %cst_96 : f32 to vector<2x1xf32>
    %271 = arith.subf %270, %25 : vector<2x1xf32>
    %272 = vector.broadcast %271 : vector<2x1xf32> to vector<2x32xf32>
    %273 = arith.mulf %272, %229 : vector<2x32xf32>
    %274 = arith.addf %269, %273 : vector<2x32xf32>
    %275 = vector.broadcast %25 : vector<2x1xf32> to vector<2x32xf32>
    %276 = arith.mulf %275, %265 : vector<2x32xf32>
    %cst_97 = arith.constant 1.000000e+00 : f32
    %277 = vector.broadcast %cst_97 : f32 to vector<2x1xf32>
    %278 = arith.subf %277, %25 : vector<2x1xf32>
    %279 = vector.broadcast %278 : vector<2x1xf32> to vector<2x32xf32>
    %280 = arith.mulf %279, %230 : vector<2x32xf32>
    %281 = arith.addf %276, %280 : vector<2x32xf32>
    %c0_98 = arith.constant 0 : index
    %c0_99 = arith.constant 0 : index
    %282 = vector.load %arg6[%c0_98, %c0_99] : memref<2x32xf32, #tpu.memory_space<vmem>>, vector<2x32xf32>
    tpu.vector_store %arg6[%c0_98, %c0_99], %274 {strides = array<i32>} : memref<2x32xf32, #tpu.memory_space<vmem>>, vector<2x32xf32>,
    %c0_100 = arith.constant 0 : index
    %c0_101 = arith.constant 0 : index
    %283 = vector.load %arg7[%c0_100, %c0_101] : memref<2x32xf32, #tpu.memory_space<vmem>>, vector<2x32xf32>
    tpu.vector_store %arg7[%c0_100, %c0_101], %281 {strides = array<i32>} : memref<2x32xf32, #tpu.memory_space<vmem>>, vector<2x32xf32>,
    %284 = vector.broadcast %25 : vector<2x1xf32> to vector<2x32xf32>
    %285 = arith.mulf %274, %284 : vector<2x32xf32>
    %286 = arith.truncf %285 : vector<2x32xf32> to vector<2x32xbf16>
    %c3_102 = arith.constant 3 : index
    %c0_103 = arith.constant 0 : index
    %c0_104 = arith.constant 0 : index
    %287 = vector.load %arg5[%c3_102, %c0_103, %c0_104] : memref<8x2x32xbf16, #tpu.memory_space<vmem>>, vector<1x2x32xbf16>
    %288 = vector.shape_cast %287 : vector<1x2x32xbf16> to vector<2x32xbf16>
    %289 = vector.shape_cast %286 : vector<2x32xbf16> to vector<1x2x32xbf16>
    tpu.vector_store %arg5[%c3_102, %c0_103, %c0_104], %289 {strides = array<i32>} : memref<8x2x32xbf16, #tpu.memory_space<vmem>>, vector<1x2x32xbf16>,
    %c0_105 = arith.constant 0 : index
    %c0_106 = arith.constant 0 : index
    %290 = vector.load %arg6[%c0_105, %c0_106] : memref<2x32xf32, #tpu.memory_space<vmem>>, vector<2x32xf32>
    %c0_107 = arith.constant 0 : index
    %c0_108 = arith.constant 0 : index
    %291 = vector.load %arg7[%c0_107, %c0_108] : memref<2x32xf32, #tpu.memory_space<vmem>>, vector<2x32xf32>
    %c4 = arith.constant 4 : index
    %c0_109 = arith.constant 0 : index
    %c0_110 = arith.constant 0 : index
    %292 = vector.load %arg3[%c4, %c0_109, %c0_110] : memref<8x2x128xbf16, #tpu.memory_space<vmem>>, vector<1x2x128xbf16>
    %293 = vector.shape_cast %292 : vector<1x2x128xbf16> to vector<2x128xbf16>
    %294 = arith.truncf %290 : vector<2x32xf32> to vector<2x32xbf16>
    %cst_111 = arith.constant dense<0.000000e+00> : vector<2x128xf32>
    %295 = tpu.matmul %294, %4, %cst_111 {dimension_numbers = #tpu.dot_dimension_numbers<[1], [0], [0], [1], [0, 0, 1, 1], [], []>} : vector<2x32xbf16>, vector<32x128xbf16>, vector<2x128xf32> -> vector<2x128xf32>
    %296 = arith.extf %293 : vector<2x128xbf16> to vector<2x128xf32>
    %297 = arith.addf %296, %295 : vector<2x128xf32>
    %298 = vector.extract_strided_slice %297 {offsets = [0, 0], sizes = [2, 32], strides = [1, 1]} : vector<2x128xf32> to vector<2x32xf32>
    %cst_112 = arith.constant 5.000000e-01 : f32
    %299 = vector.broadcast %cst_112 : f32 to vector<2x32xf32>
    %300 = arith.mulf %299, %298 : vector<2x32xf32>
    %301 = math.tanh %300 : vector<2x32xf32>
    %cst_113 = arith.constant 1.000000e+00 : f32
    %302 = vector.broadcast %cst_113 : f32 to vector<2x32xf32>
    %303 = arith.addf %301, %302 : vector<2x32xf32>
    %cst_114 = arith.constant 5.000000e-01 : f32
    %304 = vector.broadcast %cst_114 : f32 to vector<2x32xf32>
    %305 = arith.mulf %304, %303 : vector<2x32xf32>
    %306 = vector.extract_strided_slice %297 {offsets = [0, 32], sizes = [2, 32], strides = [1, 1]} : vector<2x128xf32> to vector<2x32xf32>
    %cst_115 = arith.constant 5.000000e-01 : f32
    %307 = vector.broadcast %cst_115 : f32 to vector<2x32xf32>
    %308 = arith.mulf %307, %306 : vector<2x32xf32>
    %309 = math.tanh %308 : vector<2x32xf32>
    %cst_116 = arith.constant 1.000000e+00 : f32
    %310 = vector.broadcast %cst_116 : f32 to vector<2x32xf32>
    %311 = arith.addf %309, %310 : vector<2x32xf32>
    %cst_117 = arith.constant 5.000000e-01 : f32
    %312 = vector.broadcast %cst_117 : f32 to vector<2x32xf32>
    %313 = arith.mulf %312, %311 : vector<2x32xf32>
    %314 = vector.extract_strided_slice %297 {offsets = [0, 64], sizes = [2, 32], strides = [1, 1]} : vector<2x128xf32> to vector<2x32xf32>
    %315 = math.tanh %314 : vector<2x32xf32>
    %316 = vector.extract_strided_slice %297 {offsets = [0, 96], sizes = [2, 32], strides = [1, 1]} : vector<2x128xf32> to vector<2x32xf32>
    %cst_118 = arith.constant 5.000000e-01 : f32
    %317 = vector.broadcast %cst_118 : f32 to vector<2x32xf32>
    %318 = arith.mulf %317, %316 : vector<2x32xf32>
    %319 = math.tanh %318 : vector<2x32xf32>
    %cst_119 = arith.constant 1.000000e+00 : f32
    %320 = vector.broadcast %cst_119 : f32 to vector<2x32xf32>
    %321 = arith.addf %319, %320 : vector<2x32xf32>
    %cst_120 = arith.constant 5.000000e-01 : f32
    %322 = vector.broadcast %cst_120 : f32 to vector<2x32xf32>
    %323 = arith.mulf %322, %321 : vector<2x32xf32>
    %324 = arith.mulf %313, %291 : vector<2x32xf32>
    %325 = arith.mulf %305, %315 : vector<2x32xf32>
    %326 = arith.addf %324, %325 : vector<2x32xf32>
    %327 = math.tanh %326 : vector<2x32xf32>
    %328 = arith.mulf %323, %327 : vector<2x32xf32>
    %329 = vector.broadcast %30 : vector<2x1xf32> to vector<2x32xf32>
    %330 = arith.mulf %329, %328 : vector<2x32xf32>
    %cst_121 = arith.constant 1.000000e+00 : f32
    %331 = vector.broadcast %cst_121 : f32 to vector<2x1xf32>
    %332 = arith.subf %331, %30 : vector<2x1xf32>
    %333 = vector.broadcast %332 : vector<2x1xf32> to vector<2x32xf32>
    %334 = arith.mulf %333, %290 : vector<2x32xf32>
    %335 = arith.addf %330, %334 : vector<2x32xf32>
    %336 = vector.broadcast %30 : vector<2x1xf32> to vector<2x32xf32>
    %337 = arith.mulf %336, %326 : vector<2x32xf32>
    %cst_122 = arith.constant 1.000000e+00 : f32
    %338 = vector.broadcast %cst_122 : f32 to vector<2x1xf32>
    %339 = arith.subf %338, %30 : vector<2x1xf32>
    %340 = vector.broadcast %339 : vector<2x1xf32> to vector<2x32xf32>
    %341 = arith.mulf %340, %291 : vector<2x32xf32>
    %342 = arith.addf %337, %341 : vector<2x32xf32>
    %c0_123 = arith.constant 0 : index
    %c0_124 = arith.constant 0 : index
    %343 = vector.load %arg6[%c0_123, %c0_124] : memref<2x32xf32, #tpu.memory_space<vmem>>, vector<2x32xf32>
    tpu.vector_store %arg6[%c0_123, %c0_124], %335 {strides = array<i32>} : memref<2x32xf32, #tpu.memory_space<vmem>>, vector<2x32xf32>,
    %c0_125 = arith.constant 0 : index
    %c0_126 = arith.constant 0 : index
    %344 = vector.load %arg7[%c0_125, %c0_126] : memref<2x32xf32, #tpu.memory_space<vmem>>, vector<2x32xf32>
    tpu.vector_store %arg7[%c0_125, %c0_126], %342 {strides = array<i32>} : memref<2x32xf32, #tpu.memory_space<vmem>>, vector<2x32xf32>,
    %345 = vector.broadcast %30 : vector<2x1xf32> to vector<2x32xf32>
    %346 = arith.mulf %335, %345 : vector<2x32xf32>
    %347 = arith.truncf %346 : vector<2x32xf32> to vector<2x32xbf16>
    %c4_127 = arith.constant 4 : index
    %c0_128 = arith.constant 0 : index
    %c0_129 = arith.constant 0 : index
    %348 = vector.load %arg5[%c4_127, %c0_128, %c0_129] : memref<8x2x32xbf16, #tpu.memory_space<vmem>>, vector<1x2x32xbf16>
    %349 = vector.shape_cast %348 : vector<1x2x32xbf16> to vector<2x32xbf16>
    %350 = vector.shape_cast %347 : vector<2x32xbf16> to vector<1x2x32xbf16>
    tpu.vector_store %arg5[%c4_127, %c0_128, %c0_129], %350 {strides = array<i32>} : memref<8x2x32xbf16, #tpu.memory_space<vmem>>, vector<1x2x32xbf16>,
    %c0_130 = arith.constant 0 : index
    %c0_131 = arith.constant 0 : index
    %351 = vector.load %arg6[%c0_130, %c0_131] : memref<2x32xf32, #tpu.memory_space<vmem>>, vector<2x32xf32>
    %c0_132 = arith.constant 0 : index
    %c0_133 = arith.constant 0 : index
    %352 = vector.load %arg7[%c0_132, %c0_133] : memref<2x32xf32, #tpu.memory_space<vmem>>, vector<2x32xf32>
    %c5 = arith.constant 5 : index
    %c0_134 = arith.constant 0 : index
    %c0_135 = arith.constant 0 : index
    %353 = vector.load %arg3[%c5, %c0_134, %c0_135] : memref<8x2x128xbf16, #tpu.memory_space<vmem>>, vector<1x2x128xbf16>
    %354 = vector.shape_cast %353 : vector<1x2x128xbf16> to vector<2x128xbf16>
    %355 = arith.truncf %351 : vector<2x32xf32> to vector<2x32xbf16>
    %cst_136 = arith.constant dense<0.000000e+00> : vector<2x128xf32>
    %356 = tpu.matmul %355, %4, %cst_136 {dimension_numbers = #tpu.dot_dimension_numbers<[1], [0], [0], [1], [0, 0, 1, 1], [], []>} : vector<2x32xbf16>, vector<32x128xbf16>, vector<2x128xf32> -> vector<2x128xf32>
    %357 = arith.extf %354 : vector<2x128xbf16> to vector<2x128xf32>
    %358 = arith.addf %357, %356 : vector<2x128xf32>
    %359 = vector.extract_strided_slice %358 {offsets = [0, 0], sizes = [2, 32], strides = [1, 1]} : vector<2x128xf32> to vector<2x32xf32>
    %cst_137 = arith.constant 5.000000e-01 : f32
    %360 = vector.broadcast %cst_137 : f32 to vector<2x32xf32>
    %361 = arith.mulf %360, %359 : vector<2x32xf32>
    %362 = math.tanh %361 : vector<2x32xf32>
    %cst_138 = arith.constant 1.000000e+00 : f32
    %363 = vector.broadcast %cst_138 : f32 to vector<2x32xf32>
    %364 = arith.addf %362, %363 : vector<2x32xf32>
    %cst_139 = arith.constant 5.000000e-01 : f32
    %365 = vector.broadcast %cst_139 : f32 to vector<2x32xf32>
    %366 = arith.mulf %365, %364 : vector<2x32xf32>
    %367 = vector.extract_strided_slice %358 {offsets = [0, 32], sizes = [2, 32], strides = [1, 1]} : vector<2x128xf32> to vector<2x32xf32>
    %cst_140 = arith.constant 5.000000e-01 : f32
    %368 = vector.broadcast %cst_140 : f32 to vector<2x32xf32>
    %369 = arith.mulf %368, %367 : vector<2x32xf32>
    %370 = math.tanh %369 : vector<2x32xf32>
    %cst_141 = arith.constant 1.000000e+00 : f32
    %371 = vector.broadcast %cst_141 : f32 to vector<2x32xf32>
    %372 = arith.addf %370, %371 : vector<2x32xf32>
    %cst_142 = arith.constant 5.000000e-01 : f32
    %373 = vector.broadcast %cst_142 : f32 to vector<2x32xf32>
    %374 = arith.mulf %373, %372 : vector<2x32xf32>
    %375 = vector.extract_strided_slice %358 {offsets = [0, 64], sizes = [2, 32], strides = [1, 1]} : vector<2x128xf32> to vector<2x32xf32>
    %376 = math.tanh %375 : vector<2x32xf32>
    %377 = vector.extract_strided_slice %358 {offsets = [0, 96], sizes = [2, 32], strides = [1, 1]} : vector<2x128xf32> to vector<2x32xf32>
    %cst_143 = arith.constant 5.000000e-01 : f32
    %378 = vector.broadcast %cst_143 : f32 to vector<2x32xf32>
    %379 = arith.mulf %378, %377 : vector<2x32xf32>
    %380 = math.tanh %379 : vector<2x32xf32>
    %cst_144 = arith.constant 1.000000e+00 : f32
    %381 = vector.broadcast %cst_144 : f32 to vector<2x32xf32>
    %382 = arith.addf %380, %381 : vector<2x32xf32>
    %cst_145 = arith.constant 5.000000e-01 : f32
    %383 = vector.broadcast %cst_145 : f32 to vector<2x32xf32>
    %384 = arith.mulf %383, %382 : vector<2x32xf32>
    %385 = arith.mulf %374, %352 : vector<2x32xf32>
    %386 = arith.mulf %366, %376 : vector<2x32xf32>
    %387 = arith.addf %385, %386 : vector<2x32xf32>
    %388 = math.tanh %387 : vector<2x32xf32>
    %389 = arith.mulf %384, %388 : vector<2x32xf32>
    %390 = vector.broadcast %35 : vector<2x1xf32> to vector<2x32xf32>
    %391 = arith.mulf %390, %389 : vector<2x32xf32>
    %cst_146 = arith.constant 1.000000e+00 : f32
    %392 = vector.broadcast %cst_146 : f32 to vector<2x1xf32>
    %393 = arith.subf %392, %35 : vector<2x1xf32>
    %394 = vector.broadcast %393 : vector<2x1xf32> to vector<2x32xf32>
    %395 = arith.mulf %394, %351 : vector<2x32xf32>
    %396 = arith.addf %391, %395 : vector<2x32xf32>
    %397 = vector.broadcast %35 : vector<2x1xf32> to vector<2x32xf32>
    %398 = arith.mulf %397, %387 : vector<2x32xf32>
    %cst_147 = arith.constant 1.000000e+00 : f32
    %399 = vector.broadcast %cst_147 : f32 to vector<2x1xf32>
    %400 = arith.subf %399, %35 : vector<2x1xf32>
    %401 = vector.broadcast %400 : vector<2x1xf32> to vector<2x32xf32>
    %402 = arith.mulf %401, %352 : vector<2x32xf32>
    %403 = arith.addf %398, %402 : vector<2x32xf32>
    %c0_148 = arith.constant 0 : index
    %c0_149 = arith.constant 0 : index
    %404 = vector.load %arg6[%c0_148, %c0_149] : memref<2x32xf32, #tpu.memory_space<vmem>>, vector<2x32xf32>
    tpu.vector_store %arg6[%c0_148, %c0_149], %396 {strides = array<i32>} : memref<2x32xf32, #tpu.memory_space<vmem>>, vector<2x32xf32>,
    %c0_150 = arith.constant 0 : index
    %c0_151 = arith.constant 0 : index
    %405 = vector.load %arg7[%c0_150, %c0_151] : memref<2x32xf32, #tpu.memory_space<vmem>>, vector<2x32xf32>
    tpu.vector_store %arg7[%c0_150, %c0_151], %403 {strides = array<i32>} : memref<2x32xf32, #tpu.memory_space<vmem>>, vector<2x32xf32>,
    %406 = vector.broadcast %35 : vector<2x1xf32> to vector<2x32xf32>
    %407 = arith.mulf %396, %406 : vector<2x32xf32>
    %408 = arith.truncf %407 : vector<2x32xf32> to vector<2x32xbf16>
    %c5_152 = arith.constant 5 : index
    %c0_153 = arith.constant 0 : index
    %c0_154 = arith.constant 0 : index
    %409 = vector.load %arg5[%c5_152, %c0_153, %c0_154] : memref<8x2x32xbf16, #tpu.memory_space<vmem>>, vector<1x2x32xbf16>
    %410 = vector.shape_cast %409 : vector<1x2x32xbf16> to vector<2x32xbf16>
    %411 = vector.shape_cast %408 : vector<2x32xbf16> to vector<1x2x32xbf16>
    tpu.vector_store %arg5[%c5_152, %c0_153, %c0_154], %411 {strides = array<i32>} : memref<8x2x32xbf16, #tpu.memory_space<vmem>>, vector<1x2x32xbf16>,
    %c0_155 = arith.constant 0 : index
    %c0_156 = arith.constant 0 : index
    %412 = vector.load %arg6[%c0_155, %c0_156] : memref<2x32xf32, #tpu.memory_space<vmem>>, vector<2x32xf32>
    %c0_157 = arith.constant 0 : index
    %c0_158 = arith.constant 0 : index
    %413 = vector.load %arg7[%c0_157, %c0_158] : memref<2x32xf32, #tpu.memory_space<vmem>>, vector<2x32xf32>
    %c6 = arith.constant 6 : index
    %c0_159 = arith.constant 0 : index
    %c0_160 = arith.constant 0 : index
    %414 = vector.load %arg3[%c6, %c0_159, %c0_160] : memref<8x2x128xbf16, #tpu.memory_space<vmem>>, vector<1x2x128xbf16>
    %415 = vector.shape_cast %414 : vector<1x2x128xbf16> to vector<2x128xbf16>
    %416 = arith.truncf %412 : vector<2x32xf32> to vector<2x32xbf16>
    %cst_161 = arith.constant dense<0.000000e+00> : vector<2x128xf32>
    %417 = tpu.matmul %416, %4, %cst_161 {dimension_numbers = #tpu.dot_dimension_numbers<[1], [0], [0], [1], [0, 0, 1, 1], [], []>} : vector<2x32xbf16>, vector<32x128xbf16>, vector<2x128xf32> -> vector<2x128xf32>
    %418 = arith.extf %415 : vector<2x128xbf16> to vector<2x128xf32>
    %419 = arith.addf %418, %417 : vector<2x128xf32>
    %420 = vector.extract_strided_slice %419 {offsets = [0, 0], sizes = [2, 32], strides = [1, 1]} : vector<2x128xf32> to vector<2x32xf32>
    %cst_162 = arith.constant 5.000000e-01 : f32
    %421 = vector.broadcast %cst_162 : f32 to vector<2x32xf32>
    %422 = arith.mulf %421, %420 : vector<2x32xf32>
    %423 = math.tanh %422 : vector<2x32xf32>
    %cst_163 = arith.constant 1.000000e+00 : f32
    %424 = vector.broadcast %cst_163 : f32 to vector<2x32xf32>
    %425 = arith.addf %423, %424 : vector<2x32xf32>
    %cst_164 = arith.constant 5.000000e-01 : f32
    %426 = vector.broadcast %cst_164 : f32 to vector<2x32xf32>
    %427 = arith.mulf %426, %425 : vector<2x32xf32>
    %428 = vector.extract_strided_slice %419 {offsets = [0, 32], sizes = [2, 32], strides = [1, 1]} : vector<2x128xf32> to vector<2x32xf32>
    %cst_165 = arith.constant 5.000000e-01 : f32
    %429 = vector.broadcast %cst_165 : f32 to vector<2x32xf32>
    %430 = arith.mulf %429, %428 : vector<2x32xf32>
    %431 = math.tanh %430 : vector<2x32xf32>
    %cst_166 = arith.constant 1.000000e+00 : f32
    %432 = vector.broadcast %cst_166 : f32 to vector<2x32xf32>
    %433 = arith.addf %431, %432 : vector<2x32xf32>
    %cst_167 = arith.constant 5.000000e-01 : f32
    %434 = vector.broadcast %cst_167 : f32 to vector<2x32xf32>
    %435 = arith.mulf %434, %433 : vector<2x32xf32>
    %436 = vector.extract_strided_slice %419 {offsets = [0, 64], sizes = [2, 32], strides = [1, 1]} : vector<2x128xf32> to vector<2x32xf32>
    %437 = math.tanh %436 : vector<2x32xf32>
    %438 = vector.extract_strided_slice %419 {offsets = [0, 96], sizes = [2, 32], strides = [1, 1]} : vector<2x128xf32> to vector<2x32xf32>
    %cst_168 = arith.constant 5.000000e-01 : f32
    %439 = vector.broadcast %cst_168 : f32 to vector<2x32xf32>
    %440 = arith.mulf %439, %438 : vector<2x32xf32>
    %441 = math.tanh %440 : vector<2x32xf32>
    %cst_169 = arith.constant 1.000000e+00 : f32
    %442 = vector.broadcast %cst_169 : f32 to vector<2x32xf32>
    %443 = arith.addf %441, %442 : vector<2x32xf32>
    %cst_170 = arith.constant 5.000000e-01 : f32
    %444 = vector.broadcast %cst_170 : f32 to vector<2x32xf32>
    %445 = arith.mulf %444, %443 : vector<2x32xf32>
    %446 = arith.mulf %435, %413 : vector<2x32xf32>
    %447 = arith.mulf %427, %437 : vector<2x32xf32>
    %448 = arith.addf %446, %447 : vector<2x32xf32>
    %449 = math.tanh %448 : vector<2x32xf32>
    %450 = arith.mulf %445, %449 : vector<2x32xf32>
    %451 = vector.broadcast %40 : vector<2x1xf32> to vector<2x32xf32>
    %452 = arith.mulf %451, %450 : vector<2x32xf32>
    %cst_171 = arith.constant 1.000000e+00 : f32
    %453 = vector.broadcast %cst_171 : f32 to vector<2x1xf32>
    %454 = arith.subf %453, %40 : vector<2x1xf32>
    %455 = vector.broadcast %454 : vector<2x1xf32> to vector<2x32xf32>
    %456 = arith.mulf %455, %412 : vector<2x32xf32>
    %457 = arith.addf %452, %456 : vector<2x32xf32>
    %458 = vector.broadcast %40 : vector<2x1xf32> to vector<2x32xf32>
    %459 = arith.mulf %458, %448 : vector<2x32xf32>
    %cst_172 = arith.constant 1.000000e+00 : f32
    %460 = vector.broadcast %cst_172 : f32 to vector<2x1xf32>
    %461 = arith.subf %460, %40 : vector<2x1xf32>
    %462 = vector.broadcast %461 : vector<2x1xf32> to vector<2x32xf32>
    %463 = arith.mulf %462, %413 : vector<2x32xf32>
    %464 = arith.addf %459, %463 : vector<2x32xf32>
    %c0_173 = arith.constant 0 : index
    %c0_174 = arith.constant 0 : index
    %465 = vector.load %arg6[%c0_173, %c0_174] : memref<2x32xf32, #tpu.memory_space<vmem>>, vector<2x32xf32>
    tpu.vector_store %arg6[%c0_173, %c0_174], %457 {strides = array<i32>} : memref<2x32xf32, #tpu.memory_space<vmem>>, vector<2x32xf32>,
    %c0_175 = arith.constant 0 : index
    %c0_176 = arith.constant 0 : index
    %466 = vector.load %arg7[%c0_175, %c0_176] : memref<2x32xf32, #tpu.memory_space<vmem>>, vector<2x32xf32>
    tpu.vector_store %arg7[%c0_175, %c0_176], %464 {strides = array<i32>} : memref<2x32xf32, #tpu.memory_space<vmem>>, vector<2x32xf32>,
    %467 = vector.broadcast %40 : vector<2x1xf32> to vector<2x32xf32>
    %468 = arith.mulf %457, %467 : vector<2x32xf32>
    %469 = arith.truncf %468 : vector<2x32xf32> to vector<2x32xbf16>
    %c6_177 = arith.constant 6 : index
    %c0_178 = arith.constant 0 : index
    %c0_179 = arith.constant 0 : index
    %470 = vector.load %arg5[%c6_177, %c0_178, %c0_179] : memref<8x2x32xbf16, #tpu.memory_space<vmem>>, vector<1x2x32xbf16>
    %471 = vector.shape_cast %470 : vector<1x2x32xbf16> to vector<2x32xbf16>
    %472 = vector.shape_cast %469 : vector<2x32xbf16> to vector<1x2x32xbf16>
    tpu.vector_store %arg5[%c6_177, %c0_178, %c0_179], %472 {strides = array<i32>} : memref<8x2x32xbf16, #tpu.memory_space<vmem>>, vector<1x2x32xbf16>,
    %c0_180 = arith.constant 0 : index
    %c0_181 = arith.constant 0 : index
    %473 = vector.load %arg6[%c0_180, %c0_181] : memref<2x32xf32, #tpu.memory_space<vmem>>, vector<2x32xf32>
    %c0_182 = arith.constant 0 : index
    %c0_183 = arith.constant 0 : index
    %474 = vector.load %arg7[%c0_182, %c0_183] : memref<2x32xf32, #tpu.memory_space<vmem>>, vector<2x32xf32>
    %c7 = arith.constant 7 : index
    %c0_184 = arith.constant 0 : index
    %c0_185 = arith.constant 0 : index
    %475 = vector.load %arg3[%c7, %c0_184, %c0_185] : memref<8x2x128xbf16, #tpu.memory_space<vmem>>, vector<1x2x128xbf16>
    %476 = vector.shape_cast %475 : vector<1x2x128xbf16> to vector<2x128xbf16>
    %477 = arith.truncf %473 : vector<2x32xf32> to vector<2x32xbf16>
    %cst_186 = arith.constant dense<0.000000e+00> : vector<2x128xf32>
    %478 = tpu.matmul %477, %4, %cst_186 {dimension_numbers = #tpu.dot_dimension_numbers<[1], [0], [0], [1], [0, 0, 1, 1], [], []>} : vector<2x32xbf16>, vector<32x128xbf16>, vector<2x128xf32> -> vector<2x128xf32>
    %479 = arith.extf %476 : vector<2x128xbf16> to vector<2x128xf32>
    %480 = arith.addf %479, %478 : vector<2x128xf32>
    %481 = vector.extract_strided_slice %480 {offsets = [0, 0], sizes = [2, 32], strides = [1, 1]} : vector<2x128xf32> to vector<2x32xf32>
    %cst_187 = arith.constant 5.000000e-01 : f32
    %482 = vector.broadcast %cst_187 : f32 to vector<2x32xf32>
    %483 = arith.mulf %482, %481 : vector<2x32xf32>
    %484 = math.tanh %483 : vector<2x32xf32>
    %cst_188 = arith.constant 1.000000e+00 : f32
    %485 = vector.broadcast %cst_188 : f32 to vector<2x32xf32>
    %486 = arith.addf %484, %485 : vector<2x32xf32>
    %cst_189 = arith.constant 5.000000e-01 : f32
    %487 = vector.broadcast %cst_189 : f32 to vector<2x32xf32>
    %488 = arith.mulf %487, %486 : vector<2x32xf32>
    %489 = vector.extract_strided_slice %480 {offsets = [0, 32], sizes = [2, 32], strides = [1, 1]} : vector<2x128xf32> to vector<2x32xf32>
    %cst_190 = arith.constant 5.000000e-01 : f32
    %490 = vector.broadcast %cst_190 : f32 to vector<2x32xf32>
    %491 = arith.mulf %490, %489 : vector<2x32xf32>
    %492 = math.tanh %491 : vector<2x32xf32>
    %cst_191 = arith.constant 1.000000e+00 : f32
    %493 = vector.broadcast %cst_191 : f32 to vector<2x32xf32>
    %494 = arith.addf %492, %493 : vector<2x32xf32>
    %cst_192 = arith.constant 5.000000e-01 : f32
    %495 = vector.broadcast %cst_192 : f32 to vector<2x32xf32>
    %496 = arith.mulf %495, %494 : vector<2x32xf32>
    %497 = vector.extract_strided_slice %480 {offsets = [0, 64], sizes = [2, 32], strides = [1, 1]} : vector<2x128xf32> to vector<2x32xf32>
    %498 = math.tanh %497 : vector<2x32xf32>
    %499 = vector.extract_strided_slice %480 {offsets = [0, 96], sizes = [2, 32], strides = [1, 1]} : vector<2x128xf32> to vector<2x32xf32>
    %cst_193 = arith.constant 5.000000e-01 : f32
    %500 = vector.broadcast %cst_193 : f32 to vector<2x32xf32>
    %501 = arith.mulf %500, %499 : vector<2x32xf32>
    %502 = math.tanh %501 : vector<2x32xf32>
    %cst_194 = arith.constant 1.000000e+00 : f32
    %503 = vector.broadcast %cst_194 : f32 to vector<2x32xf32>
    %504 = arith.addf %502, %503 : vector<2x32xf32>
    %cst_195 = arith.constant 5.000000e-01 : f32
    %505 = vector.broadcast %cst_195 : f32 to vector<2x32xf32>
    %506 = arith.mulf %505, %504 : vector<2x32xf32>
    %507 = arith.mulf %496, %474 : vector<2x32xf32>
    %508 = arith.mulf %488, %498 : vector<2x32xf32>
    %509 = arith.addf %507, %508 : vector<2x32xf32>
    %510 = math.tanh %509 : vector<2x32xf32>
    %511 = arith.mulf %506, %510 : vector<2x32xf32>
    %512 = vector.broadcast %45 : vector<2x1xf32> to vector<2x32xf32>
    %513 = arith.mulf %512, %511 : vector<2x32xf32>
    %cst_196 = arith.constant 1.000000e+00 : f32
    %514 = vector.broadcast %cst_196 : f32 to vector<2x1xf32>
    %515 = arith.subf %514, %45 : vector<2x1xf32>
    %516 = vector.broadcast %515 : vector<2x1xf32> to vector<2x32xf32>
    %517 = arith.mulf %516, %473 : vector<2x32xf32>
    %518 = arith.addf %513, %517 : vector<2x32xf32>
    %519 = vector.broadcast %45 : vector<2x1xf32> to vector<2x32xf32>
    %520 = arith.mulf %519, %509 : vector<2x32xf32>
    %cst_197 = arith.constant 1.000000e+00 : f32
    %521 = vector.broadcast %cst_197 : f32 to vector<2x1xf32>
    %522 = arith.subf %521, %45 : vector<2x1xf32>
    %523 = vector.broadcast %522 : vector<2x1xf32> to vector<2x32xf32>
    %524 = arith.mulf %523, %474 : vector<2x32xf32>
    %525 = arith.addf %520, %524 : vector<2x32xf32>
    %c0_198 = arith.constant 0 : index
    %c0_199 = arith.constant 0 : index
    %526 = vector.load %arg6[%c0_198, %c0_199] : memref<2x32xf32, #tpu.memory_space<vmem>>, vector<2x32xf32>
    tpu.vector_store %arg6[%c0_198, %c0_199], %518 {strides = array<i32>} : memref<2x32xf32, #tpu.memory_space<vmem>>, vector<2x32xf32>,
    %c0_200 = arith.constant 0 : index
    %c0_201 = arith.constant 0 : index
    %527 = vector.load %arg7[%c0_200, %c0_201] : memref<2x32xf32, #tpu.memory_space<vmem>>, vector<2x32xf32>
    tpu.vector_store %arg7[%c0_200, %c0_201], %525 {strides = array<i32>} : memref<2x32xf32, #tpu.memory_space<vmem>>, vector<2x32xf32>,
    %528 = vector.broadcast %45 : vector<2x1xf32> to vector<2x32xf32>
    %529 = arith.mulf %518, %528 : vector<2x32xf32>
    %530 = arith.truncf %529 : vector<2x32xf32> to vector<2x32xbf16>
    %c7_202 = arith.constant 7 : index
    %c0_203 = arith.constant 0 : index
    %c0_204 = arith.constant 0 : index
    %531 = vector.load %arg5[%c7_202, %c0_203, %c0_204] : memref<8x2x32xbf16, #tpu.memory_space<vmem>>, vector<1x2x32xbf16>
    %532 = vector.shape_cast %531 : vector<1x2x32xbf16> to vector<2x32xbf16>
    %533 = vector.shape_cast %530 : vector<2x32xbf16> to vector<1x2x32xbf16>
    tpu.vector_store %arg5[%c7_202, %c0_203, %c0_204], %533 {strides = array<i32>} : memref<8x2x32xbf16, #tpu.memory_space<vmem>>, vector<1x2x32xbf16>,
    return
  }
  func.func @transform_0(%arg0: i32, %arg1: i32) -> (i32, i32) {
    %c0_i32 = arith.constant 0 : i32
    %c0_i32_0 = arith.constant 0 : i32
    return %arg0, %c0_i32 : i32, i32
  }
  func.func @transform_1(%arg0: i32, %arg1: i32) -> (i32, i32, i32) {
    %c0_i32 = arith.constant 0 : i32
    %c0_i32_0 = arith.constant 0 : i32
    return %arg1, %arg0, %c0_i32 : i32, i32, i32
  }
  func.func @transform_2(%arg0: i32, %arg1: i32) -> (i32, i32) {
    %c0_i32 = arith.constant 0 : i32
    %c0_i32_0 = arith.constant 0 : i32
    %c0_i32_1 = arith.constant 0 : i32
    return %c0_i32, %c0_i32_0 : i32, i32
  }
  func.func @transform_3(%arg0: i32, %arg1: i32) -> (i32, i32, i32) {
    %c0_i32 = arith.constant 0 : i32
    %c0_i32_0 = arith.constant 0 : i32
    return %arg1, %arg0, %c0_i32 : i32, i32, i32
  }
  func.func @transform_4(%arg0: i32, %arg1: i32) -> (i32, i32) {
    %c0_i32 = arith.constant 0 : i32
    %c0_i32_0 = arith.constant 0 : i32
    return %arg0, %c0_i32 : i32, i32
  }
}

module attributes {stable_mosaic.version = 11 : i64} {
  func.func @_matmul_kernel(%arg0: i32, %arg1: i32, %arg2: i32, %arg3: memref<2x32xbf16, #tpu.memory_space<vmem>>, %arg4: memref<32x128xbf16, #tpu.memory_space<vmem>>, %arg5: memref<1x128xf32, #tpu.memory_space<vmem>>, %arg6: memref<2x128xf32, #tpu.memory_space<vmem>>, %arg7: memref<2x128xf32, #tpu.memory_space<vmem>>) attributes {dimension_semantics = [#tpu.dimension_semantics<parallel>, #tpu.dimension_semantics<parallel>, #tpu.dimension_semantics<arbitrary>], iteration_bounds = array<i64: 1, 1, 1>, scalar_prefetch = 0 : i64, scratch_operands = 1 : i64, tpu.core_type = #tpu.core_type<tc>, window_params = [{transform_indices = @transform_0, window_bounds = array<i64: 2, 32>}, {transform_indices = @transform_1, window_bounds = array<i64: 32, 128>}, {transform_indices = @transform_2, window_bounds = array<i64: 1, 128>}, {transform_indices = @transform_3, window_bounds = array<i64: 2, 128>}]} {
    %c0_i32 = arith.constant 0 : i32
    %0 = arith.cmpi eq, %arg2, %c0_i32 : i32
    %1 = arith.extui %0 : i1 to i32
    %c0_i32_0 = arith.constant 0 : i32
    %2 = arith.cmpi ne, %1, %c0_i32_0 : i32
    scf.if %2 {
      %cst_10 = arith.constant 0.000000e+00 : f32
      %12 = vector.broadcast %cst_10 : f32 to vector<2x128xf32>
      %c0_11 = arith.constant 0 : index
      %c0_12 = arith.constant 0 : index
      %13 = vector.load %arg7[%c0_11, %c0_12] : memref<2x128xf32, #tpu.memory_space<vmem>>, vector<2x128xf32>
      tpu.vector_store %arg7[%c0_11, %c0_12], %12 {strides = array<i32>} : memref<2x128xf32, #tpu.memory_space<vmem>>, vector<2x128xf32>,
    } else {
    }
    %c0 = arith.constant 0 : index
    %c0_1 = arith.constant 0 : index
    %3 = vector.load %arg7[%c0, %c0_1] : memref<2x128xf32, #tpu.memory_space<vmem>>, vector<2x128xf32>
    %c0_2 = arith.constant 0 : index
    %c0_3 = arith.constant 0 : index
    %4 = vector.load %arg3[%c0_2, %c0_3] : memref<2x32xbf16, #tpu.memory_space<vmem>>, vector<2x32xbf16>
    %c0_4 = arith.constant 0 : index
    %c0_5 = arith.constant 0 : index
    %5 = vector.load %arg4[%c0_4, %c0_5] : memref<32x128xbf16, #tpu.memory_space<vmem>>, vector<32x128xbf16>
    %cst = arith.constant dense<0.000000e+00> : vector<2x128xf32>
    %6 = tpu.matmul %4, %5, %cst {dimension_numbers = #tpu.dot_dimension_numbers<[1], [0], [0], [1], [0, 0, 1, 1], [], []>} : vector<2x32xbf16>, vector<32x128xbf16>, vector<2x128xf32> -> vector<2x128xf32>
    %7 = arith.addf %3, %6 : vector<2x128xf32>
    %c0_6 = arith.constant 0 : index
    %c0_7 = arith.constant 0 : index
    %8 = vector.load %arg7[%c0_6, %c0_7] : memref<2x128xf32, #tpu.memory_space<vmem>>, vector<2x128xf32>
    tpu.vector_store %arg7[%c0_6, %c0_7], %7 {strides = array<i32>} : memref<2x128xf32, #tpu.memory_space<vmem>>, vector<2x128xf32>,
    %c0_i32_8 = arith.constant 0 : i32
    %9 = arith.cmpi eq, %arg2, %c0_i32_8 : i32
    %10 = arith.extui %9 : i1 to i32
    %c0_i32_9 = arith.constant 0 : i32
    %11 = arith.cmpi ne, %10, %c0_i32_9 : i32
    scf.if %11 {
      %c0_10 = arith.constant 0 : index
      %c0_11 = arith.constant 0 : index
      %12 = vector.load %arg7[%c0_10, %c0_11] : memref<2x128xf32, #tpu.memory_space<vmem>>, vector<2x128xf32>
      %c0_12 = arith.constant 0 : index
      %c0_13 = arith.constant 0 : index
      %13 = vector.load %arg5[%c0_12, %c0_13] : memref<1x128xf32, #tpu.memory_space<vmem>>, vector<1x128xf32>
      %14 = vector.broadcast %13 : vector<1x128xf32> to vector<2x128xf32>
      %15 = arith.addf %12, %14 : vector<2x128xf32>
      %c0_14 = arith.constant 0 : index
      %c0_15 = arith.constant 0 : index
      %16 = vector.load %arg6[%c0_14, %c0_15] : memref<2x128xf32, #tpu.memory_space<vmem>>, vector<2x128xf32>
      tpu.vector_store %arg6[%c0_14, %c0_15], %15 {strides = array<i32>} : memref<2x128xf32, #tpu.memory_space<vmem>>, vector<2x128xf32>,
    } else {
    }
    return
  }
  func.func @transform_0(%arg0: i32, %arg1: i32, %arg2: i32) -> (i32, i32) {
    %c0_i32 = arith.constant 0 : i32
    return %arg0, %arg2 : i32, i32
  }
  func.func @transform_1(%arg0: i32, %arg1: i32, %arg2: i32) -> (i32, i32) {
    %c0_i32 = arith.constant 0 : i32
    return %arg2, %arg1 : i32, i32
  }
  func.func @transform_2(%arg0: i32, %arg1: i32, %arg2: i32) -> (i32, i32) {
    %c0_i32 = arith.constant 0 : i32
    %c0_i32_0 = arith.constant 0 : i32
    return %c0_i32, %arg1 : i32, i32
  }
  func.func @transform_3(%arg0: i32, %arg1: i32, %arg2: i32) -> (i32, i32) {
    %c0_i32 = arith.constant 0 : i32
    return %arg0, %arg1 : i32, i32
  }
}

module attributes {stable_mosaic.version = 11 : i64} {
  func.func @kernel(%arg0: i32, %arg1: i32, %arg2: memref<2x1xi32, #tpu.memory_space<vmem>>, %arg3: memref<8x2x128xbf16, #tpu.memory_space<vmem>>, %arg4: memref<32x128xbf16, #tpu.memory_space<vmem>>, %arg5: memref<2x128xf32, #tpu.memory_space<vmem>>, %arg6: memref<2x8x32xbf16, #tpu.memory_space<vmem>>, %arg7: memref<2x32xf32, #tpu.memory_space<vmem>>, %arg8: memref<2x32xf32, #tpu.memory_space<vmem>>) attributes {dimension_semantics = [#tpu.dimension_semantics<parallel>, #tpu.dimension_semantics<arbitrary>], iteration_bounds = array<i64: 1, 1>, scalar_prefetch = 0 : i64, scratch_operands = 1 : i64, tpu.core_type = #tpu.core_type<tc>, window_params = [{transform_indices = @transform_0, window_bounds = array<i64: 2, 1>}, {transform_indices = @transform_1, window_bounds = array<i64: 8, 2, 128>}, {pipeline_mode = #tpu.pipeline_mode<synchronous>, transform_indices = @transform_2, window_bounds = array<i64: 32, 128>}, {transform_indices = @transform_3, window_bounds = array<i64: 2, 128>}, {transform_indices = @transform_4, window_bounds = array<i64: 2, 8, 32>}, {transform_indices = @transform_5, window_bounds = array<i64: 2, 32>}]} {
    %c0_i32 = arith.constant 0 : i32
    %0 = arith.cmpi eq, %arg1, %c0_i32 : i32
    %1 = arith.extui %0 : i1 to i32
    %c0_i32_0 = arith.constant 0 : i32
    %2 = arith.cmpi ne, %1, %c0_i32_0 : i32
    scf.if %2 {
      %cst_207 = arith.constant 0.000000e+00 : f32
      %543 = vector.broadcast %cst_207 : f32 to vector<2x32xf32>
      %c0_208 = arith.constant 0 : index
      %c0_209 = arith.constant 0 : index
      %544 = vector.load %arg7[%c0_208, %c0_209] : memref<2x32xf32, #tpu.memory_space<vmem>>, vector<2x32xf32>
      tpu.vector_store %arg7[%c0_208, %c0_209], %543 {strides = array<i32>} : memref<2x32xf32, #tpu.memory_space<vmem>>, vector<2x32xf32>,
      %cst_210 = arith.constant 0.000000e+00 : f32
      %545 = vector.broadcast %cst_210 : f32 to vector<2x32xf32>
      %c0_211 = arith.constant 0 : index
      %c0_212 = arith.constant 0 : index
      %546 = vector.load %arg8[%c0_211, %c0_212] : memref<2x32xf32, #tpu.memory_space<vmem>>, vector<2x32xf32>
      tpu.vector_store %arg8[%c0_211, %c0_212], %545 {strides = array<i32>} : memref<2x32xf32, #tpu.memory_space<vmem>>, vector<2x32xf32>,
    } else {
    }
    %c0 = arith.constant 0 : index
    %c0_1 = arith.constant 0 : index
    %3 = vector.load %arg2[%c0, %c0_1] : memref<2x1xi32, #tpu.memory_space<vmem>>, vector<2x1xi32>
    %c0_2 = arith.constant 0 : index
    %c0_3 = arith.constant 0 : index
    %4 = vector.load %arg4[%c0_2, %c0_3] : memref<32x128xbf16, #tpu.memory_space<vmem>>, vector<32x128xbf16>
    %c0_4 = arith.constant 0 : index
    %c0_5 = arith.constant 0 : index
    %5 = vector.load %arg5[%c0_4, %c0_5] : memref<2x128xf32, #tpu.memory_space<vmem>>, vector<2x128xf32>
    %c8_i32 = arith.constant 8 : i32
    %6 = arith.muli %arg1, %c8_i32 : i32
    %c0_i32_6 = arith.constant 0 : i32
    %7 = arith.addi %6, %c0_i32_6 : i32
    %8 = vector.broadcast %7 : i32 to vector<2x1xi32>
    %9 = arith.cmpi slt, %8, %3 : vector<2x1xi32>
    %10 = arith.extui %9 : vector<2x1xi1> to vector<2x1xi32>
    %11 = arith.sitofp %10 : vector<2x1xi32> to vector<2x1xf32>
    %c1_i32 = arith.constant 1 : i32
    %12 = arith.addi %6, %c1_i32 : i32
    %13 = vector.broadcast %12 : i32 to vector<2x1xi32>
    %14 = arith.cmpi slt, %13, %3 : vector<2x1xi32>
    %15 = arith.extui %14 : vector<2x1xi1> to vector<2x1xi32>
    %16 = arith.sitofp %15 : vector<2x1xi32> to vector<2x1xf32>
    %c2_i32 = arith.constant 2 : i32
    %17 = arith.addi %6, %c2_i32 : i32
    %18 = vector.broadcast %17 : i32 to vector<2x1xi32>
    %19 = arith.cmpi slt, %18, %3 : vector<2x1xi32>
    %20 = arith.extui %19 : vector<2x1xi1> to vector<2x1xi32>
    %21 = arith.sitofp %20 : vector<2x1xi32> to vector<2x1xf32>
    %c3_i32 = arith.constant 3 : i32
    %22 = arith.addi %6, %c3_i32 : i32
    %23 = vector.broadcast %22 : i32 to vector<2x1xi32>
    %24 = arith.cmpi slt, %23, %3 : vector<2x1xi32>
    %25 = arith.extui %24 : vector<2x1xi1> to vector<2x1xi32>
    %26 = arith.sitofp %25 : vector<2x1xi32> to vector<2x1xf32>
    %c4_i32 = arith.constant 4 : i32
    %27 = arith.addi %6, %c4_i32 : i32
    %28 = vector.broadcast %27 : i32 to vector<2x1xi32>
    %29 = arith.cmpi slt, %28, %3 : vector<2x1xi32>
    %30 = arith.extui %29 : vector<2x1xi1> to vector<2x1xi32>
    %31 = arith.sitofp %30 : vector<2x1xi32> to vector<2x1xf32>
    %c5_i32 = arith.constant 5 : i32
    %32 = arith.addi %6, %c5_i32 : i32
    %33 = vector.broadcast %32 : i32 to vector<2x1xi32>
    %34 = arith.cmpi slt, %33, %3 : vector<2x1xi32>
    %35 = arith.extui %34 : vector<2x1xi1> to vector<2x1xi32>
    %36 = arith.sitofp %35 : vector<2x1xi32> to vector<2x1xf32>
    %c6_i32 = arith.constant 6 : i32
    %37 = arith.addi %6, %c6_i32 : i32
    %38 = vector.broadcast %37 : i32 to vector<2x1xi32>
    %39 = arith.cmpi slt, %38, %3 : vector<2x1xi32>
    %40 = arith.extui %39 : vector<2x1xi1> to vector<2x1xi32>
    %41 = arith.sitofp %40 : vector<2x1xi32> to vector<2x1xf32>
    %c7_i32 = arith.constant 7 : i32
    %42 = arith.addi %6, %c7_i32 : i32
    %43 = vector.broadcast %42 : i32 to vector<2x1xi32>
    %44 = arith.cmpi slt, %43, %3 : vector<2x1xi32>
    %45 = arith.extui %44 : vector<2x1xi1> to vector<2x1xi32>
    %46 = arith.sitofp %45 : vector<2x1xi32> to vector<2x1xf32>
    %c0_7 = arith.constant 0 : index
    %c0_8 = arith.constant 0 : index
    %47 = vector.load %arg7[%c0_7, %c0_8] : memref<2x32xf32, #tpu.memory_space<vmem>>, vector<2x32xf32>
    %c0_9 = arith.constant 0 : index
    %c0_10 = arith.constant 0 : index
    %48 = vector.load %arg8[%c0_9, %c0_10] : memref<2x32xf32, #tpu.memory_space<vmem>>, vector<2x32xf32>
    %c0_11 = arith.constant 0 : index
    %c0_12 = arith.constant 0 : index
    %c0_13 = arith.constant 0 : index
    %49 = vector.load %arg3[%c0_11, %c0_12, %c0_13] : memref<8x2x128xbf16, #tpu.memory_space<vmem>>, vector<1x2x128xbf16>
    %50 = vector.shape_cast %49 : vector<1x2x128xbf16> to vector<2x128xbf16>
    %51 = arith.truncf %47 : vector<2x32xf32> to vector<2x32xbf16>
    %cst = arith.constant dense<0.000000e+00> : vector<2x128xf32>
    %52 = tpu.matmul %51, %4, %cst {dimension_numbers = #tpu.dot_dimension_numbers<[1], [0], [0], [1], [0, 0, 1, 1], [], []>} : vector<2x32xbf16>, vector<32x128xbf16>, vector<2x128xf32> -> vector<2x128xf32>
    %53 = arith.extf %50 : vector<2x128xbf16> to vector<2x128xf32>
    %54 = arith.addf %53, %52 : vector<2x128xf32>
    %55 = arith.addf %54, %5 : vector<2x128xf32>
    %56 = vector.extract_strided_slice %55 {offsets = [0, 0], sizes = [2, 32], strides = [1, 1]} : vector<2x128xf32> to vector<2x32xf32>
    %cst_14 = arith.constant 5.000000e-01 : f32
    %57 = vector.broadcast %cst_14 : f32 to vector<2x32xf32>
    %58 = arith.mulf %57, %56 : vector<2x32xf32>
    %59 = math.tanh %58 : vector<2x32xf32>
    %cst_15 = arith.constant 1.000000e+00 : f32
    %60 = vector.broadcast %cst_15 : f32 to vector<2x32xf32>
    %61 = arith.addf %59, %60 : vector<2x32xf32>
    %cst_16 = arith.constant 5.000000e-01 : f32
    %62 = vector.broadcast %cst_16 : f32 to vector<2x32xf32>
    %63 = arith.mulf %62, %61 : vector<2x32xf32>
    %64 = vector.extract_strided_slice %55 {offsets = [0, 32], sizes = [2, 32], strides = [1, 1]} : vector<2x128xf32> to vector<2x32xf32>
    %cst_17 = arith.constant 5.000000e-01 : f32
    %65 = vector.broadcast %cst_17 : f32 to vector<2x32xf32>
    %66 = arith.mulf %65, %64 : vector<2x32xf32>
    %67 = math.tanh %66 : vector<2x32xf32>
    %cst_18 = arith.constant 1.000000e+00 : f32
    %68 = vector.broadcast %cst_18 : f32 to vector<2x32xf32>
    %69 = arith.addf %67, %68 : vector<2x32xf32>
    %cst_19 = arith.constant 5.000000e-01 : f32
    %70 = vector.broadcast %cst_19 : f32 to vector<2x32xf32>
    %71 = arith.mulf %70, %69 : vector<2x32xf32>
    %72 = vector.extract_strided_slice %55 {offsets = [0, 64], sizes = [2, 32], strides = [1, 1]} : vector<2x128xf32> to vector<2x32xf32>
    %73 = math.tanh %72 : vector<2x32xf32>
    %74 = vector.extract_strided_slice %55 {offsets = [0, 96], sizes = [2, 32], strides = [1, 1]} : vector<2x128xf32> to vector<2x32xf32>
    %cst_20 = arith.constant 5.000000e-01 : f32
    %75 = vector.broadcast %cst_20 : f32 to vector<2x32xf32>
    %76 = arith.mulf %75, %74 : vector<2x32xf32>
    %77 = math.tanh %76 : vector<2x32xf32>
    %cst_21 = arith.constant 1.000000e+00 : f32
    %78 = vector.broadcast %cst_21 : f32 to vector<2x32xf32>
    %79 = arith.addf %77, %78 : vector<2x32xf32>
    %cst_22 = arith.constant 5.000000e-01 : f32
    %80 = vector.broadcast %cst_22 : f32 to vector<2x32xf32>
    %81 = arith.mulf %80, %79 : vector<2x32xf32>
    %82 = arith.mulf %71, %48 : vector<2x32xf32>
    %83 = arith.mulf %63, %73 : vector<2x32xf32>
    %84 = arith.addf %82, %83 : vector<2x32xf32>
    %85 = math.tanh %84 : vector<2x32xf32>
    %86 = arith.mulf %81, %85 : vector<2x32xf32>
    %87 = vector.broadcast %11 : vector<2x1xf32> to vector<2x32xf32>
    %88 = arith.mulf %87, %86 : vector<2x32xf32>
    %cst_23 = arith.constant 1.000000e+00 : f32
    %89 = vector.broadcast %cst_23 : f32 to vector<2x1xf32>
    %90 = arith.subf %89, %11 : vector<2x1xf32>
    %91 = vector.broadcast %90 : vector<2x1xf32> to vector<2x32xf32>
    %92 = arith.mulf %91, %47 : vector<2x32xf32>
    %93 = arith.addf %88, %92 : vector<2x32xf32>
    %94 = vector.broadcast %11 : vector<2x1xf32> to vector<2x32xf32>
    %95 = arith.mulf %94, %84 : vector<2x32xf32>
    %cst_24 = arith.constant 1.000000e+00 : f32
    %96 = vector.broadcast %cst_24 : f32 to vector<2x1xf32>
    %97 = arith.subf %96, %11 : vector<2x1xf32>
    %98 = vector.broadcast %97 : vector<2x1xf32> to vector<2x32xf32>
    %99 = arith.mulf %98, %48 : vector<2x32xf32>
    %100 = arith.addf %95, %99 : vector<2x32xf32>
    %c0_25 = arith.constant 0 : index
    %c0_26 = arith.constant 0 : index
    %101 = vector.load %arg7[%c0_25, %c0_26] : memref<2x32xf32, #tpu.memory_space<vmem>>, vector<2x32xf32>
    tpu.vector_store %arg7[%c0_25, %c0_26], %93 {strides = array<i32>} : memref<2x32xf32, #tpu.memory_space<vmem>>, vector<2x32xf32>,
    %c0_27 = arith.constant 0 : index
    %c0_28 = arith.constant 0 : index
    %102 = vector.load %arg8[%c0_27, %c0_28] : memref<2x32xf32, #tpu.memory_space<vmem>>, vector<2x32xf32>
    tpu.vector_store %arg8[%c0_27, %c0_28], %100 {strides = array<i32>} : memref<2x32xf32, #tpu.memory_space<vmem>>, vector<2x32xf32>,
    %103 = vector.broadcast %11 : vector<2x1xf32> to vector<2x32xf32>
    %104 = arith.mulf %93, %103 : vector<2x32xf32>
    %105 = arith.truncf %104 : vector<2x32xf32> to vector<2x32xbf16>
    %c0_29 = arith.constant 0 : index
    %c0_30 = arith.constant 0 : index
    %c0_31 = arith.constant 0 : index
    %106 = vector.load %arg6[%c0_29, %c0_30, %c0_31] : memref<2x8x32xbf16, #tpu.memory_space<vmem>>, vector<2x1x32xbf16>
    %107 = vector.shape_cast %106 : vector<2x1x32xbf16> to vector<2x32xbf16>
    %108 = vector.shape_cast %105 : vector<2x32xbf16> to vector<2x1x32xbf16>
    tpu.vector_store %arg6[%c0_29, %c0_30, %c0_31], %108 {strides = array<i32>} : memref<2x8x32xbf16, #tpu.memory_space<vmem>>, vector<2x1x32xbf16>,
    %c0_32 = arith.constant 0 : index
    %c0_33 = arith.constant 0 : index
    %109 = vector.load %arg7[%c0_32, %c0_33] : memref<2x32xf32, #tpu.memory_space<vmem>>, vector<2x32xf32>
    %c0_34 = arith.constant 0 : index
    %c0_35 = arith.constant 0 : index
    %110 = vector.load %arg8[%c0_34, %c0_35] : memref<2x32xf32, #tpu.memory_space<vmem>>, vector<2x32xf32>
    %c1 = arith.constant 1 : index
    %c0_36 = arith.constant 0 : index
    %c0_37 = arith.constant 0 : index
    %111 = vector.load %arg3[%c1, %c0_36, %c0_37] : memref<8x2x128xbf16, #tpu.memory_space<vmem>>, vector<1x2x128xbf16>
    %112 = vector.shape_cast %111 : vector<1x2x128xbf16> to vector<2x128xbf16>
    %113 = arith.truncf %109 : vector<2x32xf32> to vector<2x32xbf16>
    %cst_38 = arith.constant dense<0.000000e+00> : vector<2x128xf32>
    %114 = tpu.matmul %113, %4, %cst_38 {dimension_numbers = #tpu.dot_dimension_numbers<[1], [0], [0], [1], [0, 0, 1, 1], [], []>} : vector<2x32xbf16>, vector<32x128xbf16>, vector<2x128xf32> -> vector<2x128xf32>
    %115 = arith.extf %112 : vector<2x128xbf16> to vector<2x128xf32>
    %116 = arith.addf %115, %114 : vector<2x128xf32>
    %117 = arith.addf %116, %5 : vector<2x128xf32>
    %118 = vector.extract_strided_slice %117 {offsets = [0, 0], sizes = [2, 32], strides = [1, 1]} : vector<2x128xf32> to vector<2x32xf32>
    %cst_39 = arith.constant 5.000000e-01 : f32
    %119 = vector.broadcast %cst_39 : f32 to vector<2x32xf32>
    %120 = arith.mulf %119, %118 : vector<2x32xf32>
    %121 = math.tanh %120 : vector<2x32xf32>
    %cst_40 = arith.constant 1.000000e+00 : f32
    %122 = vector.broadcast %cst_40 : f32 to vector<2x32xf32>
    %123 = arith.addf %121, %122 : vector<2x32xf32>
    %cst_41 = arith.constant 5.000000e-01 : f32
    %124 = vector.broadcast %cst_41 : f32 to vector<2x32xf32>
    %125 = arith.mulf %124, %123 : vector<2x32xf32>
    %126 = vector.extract_strided_slice %117 {offsets = [0, 32], sizes = [2, 32], strides = [1, 1]} : vector<2x128xf32> to vector<2x32xf32>
    %cst_42 = arith.constant 5.000000e-01 : f32
    %127 = vector.broadcast %cst_42 : f32 to vector<2x32xf32>
    %128 = arith.mulf %127, %126 : vector<2x32xf32>
    %129 = math.tanh %128 : vector<2x32xf32>
    %cst_43 = arith.constant 1.000000e+00 : f32
    %130 = vector.broadcast %cst_43 : f32 to vector<2x32xf32>
    %131 = arith.addf %129, %130 : vector<2x32xf32>
    %cst_44 = arith.constant 5.000000e-01 : f32
    %132 = vector.broadcast %cst_44 : f32 to vector<2x32xf32>
    %133 = arith.mulf %132, %131 : vector<2x32xf32>
    %134 = vector.extract_strided_slice %117 {offsets = [0, 64], sizes = [2, 32], strides = [1, 1]} : vector<2x128xf32> to vector<2x32xf32>
    %135 = math.tanh %134 : vector<2x32xf32>
    %136 = vector.extract_strided_slice %117 {offsets = [0, 96], sizes = [2, 32], strides = [1, 1]} : vector<2x128xf32> to vector<2x32xf32>
    %cst_45 = arith.constant 5.000000e-01 : f32
    %137 = vector.broadcast %cst_45 : f32 to vector<2x32xf32>
    %138 = arith.mulf %137, %136 : vector<2x32xf32>
    %139 = math.tanh %138 : vector<2x32xf32>
    %cst_46 = arith.constant 1.000000e+00 : f32
    %140 = vector.broadcast %cst_46 : f32 to vector<2x32xf32>
    %141 = arith.addf %139, %140 : vector<2x32xf32>
    %cst_47 = arith.constant 5.000000e-01 : f32
    %142 = vector.broadcast %cst_47 : f32 to vector<2x32xf32>
    %143 = arith.mulf %142, %141 : vector<2x32xf32>
    %144 = arith.mulf %133, %110 : vector<2x32xf32>
    %145 = arith.mulf %125, %135 : vector<2x32xf32>
    %146 = arith.addf %144, %145 : vector<2x32xf32>
    %147 = math.tanh %146 : vector<2x32xf32>
    %148 = arith.mulf %143, %147 : vector<2x32xf32>
    %149 = vector.broadcast %16 : vector<2x1xf32> to vector<2x32xf32>
    %150 = arith.mulf %149, %148 : vector<2x32xf32>
    %cst_48 = arith.constant 1.000000e+00 : f32
    %151 = vector.broadcast %cst_48 : f32 to vector<2x1xf32>
    %152 = arith.subf %151, %16 : vector<2x1xf32>
    %153 = vector.broadcast %152 : vector<2x1xf32> to vector<2x32xf32>
    %154 = arith.mulf %153, %109 : vector<2x32xf32>
    %155 = arith.addf %150, %154 : vector<2x32xf32>
    %156 = vector.broadcast %16 : vector<2x1xf32> to vector<2x32xf32>
    %157 = arith.mulf %156, %146 : vector<2x32xf32>
    %cst_49 = arith.constant 1.000000e+00 : f32
    %158 = vector.broadcast %cst_49 : f32 to vector<2x1xf32>
    %159 = arith.subf %158, %16 : vector<2x1xf32>
    %160 = vector.broadcast %159 : vector<2x1xf32> to vector<2x32xf32>
    %161 = arith.mulf %160, %110 : vector<2x32xf32>
    %162 = arith.addf %157, %161 : vector<2x32xf32>
    %c0_50 = arith.constant 0 : index
    %c0_51 = arith.constant 0 : index
    %163 = vector.load %arg7[%c0_50, %c0_51] : memref<2x32xf32, #tpu.memory_space<vmem>>, vector<2x32xf32>
    tpu.vector_store %arg7[%c0_50, %c0_51], %155 {strides = array<i32>} : memref<2x32xf32, #tpu.memory_space<vmem>>, vector<2x32xf32>,
    %c0_52 = arith.constant 0 : index
    %c0_53 = arith.constant 0 : index
    %164 = vector.load %arg8[%c0_52, %c0_53] : memref<2x32xf32, #tpu.memory_space<vmem>>, vector<2x32xf32>
    tpu.vector_store %arg8[%c0_52, %c0_53], %162 {strides = array<i32>} : memref<2x32xf32, #tpu.memory_space<vmem>>, vector<2x32xf32>,
    %165 = vector.broadcast %16 : vector<2x1xf32> to vector<2x32xf32>
    %166 = arith.mulf %155, %165 : vector<2x32xf32>
    %167 = arith.truncf %166 : vector<2x32xf32> to vector<2x32xbf16>
    %c0_54 = arith.constant 0 : index
    %c1_55 = arith.constant 1 : index
    %c0_56 = arith.constant 0 : index
    %168 = vector.load %arg6[%c0_54, %c1_55, %c0_56] : memref<2x8x32xbf16, #tpu.memory_space<vmem>>, vector<2x1x32xbf16>
    %169 = vector.shape_cast %168 : vector<2x1x32xbf16> to vector<2x32xbf16>
    %170 = vector.shape_cast %167 : vector<2x32xbf16> to vector<2x1x32xbf16>
    tpu.vector_store %arg6[%c0_54, %c1_55, %c0_56], %170 {strides = array<i32>} : memref<2x8x32xbf16, #tpu.memory_space<vmem>>, vector<2x1x32xbf16>,
    %c0_57 = arith.constant 0 : index
    %c0_58 = arith.constant 0 : index
    %171 = vector.load %arg7[%c0_57, %c0_58] : memref<2x32xf32, #tpu.memory_space<vmem>>, vector<2x32xf32>
    %c0_59 = arith.constant 0 : index
    %c0_60 = arith.constant 0 : index
    %172 = vector.load %arg8[%c0_59, %c0_60] : memref<2x32xf32, #tpu.memory_space<vmem>>, vector<2x32xf32>
    %c2 = arith.constant 2 : index
    %c0_61 = arith.constant 0 : index
    %c0_62 = arith.constant 0 : index
    %173 = vector.load %arg3[%c2, %c0_61, %c0_62] : memref<8x2x128xbf16, #tpu.memory_space<vmem>>, vector<1x2x128xbf16>
    %174 = vector.shape_cast %173 : vector<1x2x128xbf16> to vector<2x128xbf16>
    %175 = arith.truncf %171 : vector<2x32xf32> to vector<2x32xbf16>
    %cst_63 = arith.constant dense<0.000000e+00> : vector<2x128xf32>
    %176 = tpu.matmul %175, %4, %cst_63 {dimension_numbers = #tpu.dot_dimension_numbers<[1], [0], [0], [1], [0, 0, 1, 1], [], []>} : vector<2x32xbf16>, vector<32x128xbf16>, vector<2x128xf32> -> vector<2x128xf32>
    %177 = arith.extf %174 : vector<2x128xbf16> to vector<2x128xf32>
    %178 = arith.addf %177, %176 : vector<2x128xf32>
    %179 = arith.addf %178, %5 : vector<2x128xf32>
    %180 = vector.extract_strided_slice %179 {offsets = [0, 0], sizes = [2, 32], strides = [1, 1]} : vector<2x128xf32> to vector<2x32xf32>
    %cst_64 = arith.constant 5.000000e-01 : f32
    %181 = vector.broadcast %cst_64 : f32 to vector<2x32xf32>
    %182 = arith.mulf %181, %180 : vector<2x32xf32>
    %183 = math.tanh %182 : vector<2x32xf32>
    %cst_65 = arith.constant 1.000000e+00 : f32
    %184 = vector.broadcast %cst_65 : f32 to vector<2x32xf32>
    %185 = arith.addf %183, %184 : vector<2x32xf32>
    %cst_66 = arith.constant 5.000000e-01 : f32
    %186 = vector.broadcast %cst_66 : f32 to vector<2x32xf32>
    %187 = arith.mulf %186, %185 : vector<2x32xf32>
    %188 = vector.extract_strided_slice %179 {offsets = [0, 32], sizes = [2, 32], strides = [1, 1]} : vector<2x128xf32> to vector<2x32xf32>
    %cst_67 = arith.constant 5.000000e-01 : f32
    %189 = vector.broadcast %cst_67 : f32 to vector<2x32xf32>
    %190 = arith.mulf %189, %188 : vector<2x32xf32>
    %191 = math.tanh %190 : vector<2x32xf32>
    %cst_68 = arith.constant 1.000000e+00 : f32
    %192 = vector.broadcast %cst_68 : f32 to vector<2x32xf32>
    %193 = arith.addf %191, %192 : vector<2x32xf32>
    %cst_69 = arith.constant 5.000000e-01 : f32
    %194 = vector.broadcast %cst_69 : f32 to vector<2x32xf32>
    %195 = arith.mulf %194, %193 : vector<2x32xf32>
    %196 = vector.extract_strided_slice %179 {offsets = [0, 64], sizes = [2, 32], strides = [1, 1]} : vector<2x128xf32> to vector<2x32xf32>
    %197 = math.tanh %196 : vector<2x32xf32>
    %198 = vector.extract_strided_slice %179 {offsets = [0, 96], sizes = [2, 32], strides = [1, 1]} : vector<2x128xf32> to vector<2x32xf32>
    %cst_70 = arith.constant 5.000000e-01 : f32
    %199 = vector.broadcast %cst_70 : f32 to vector<2x32xf32>
    %200 = arith.mulf %199, %198 : vector<2x32xf32>
    %201 = math.tanh %200 : vector<2x32xf32>
    %cst_71 = arith.constant 1.000000e+00 : f32
    %202 = vector.broadcast %cst_71 : f32 to vector<2x32xf32>
    %203 = arith.addf %201, %202 : vector<2x32xf32>
    %cst_72 = arith.constant 5.000000e-01 : f32
    %204 = vector.broadcast %cst_72 : f32 to vector<2x32xf32>
    %205 = arith.mulf %204, %203 : vector<2x32xf32>
    %206 = arith.mulf %195, %172 : vector<2x32xf32>
    %207 = arith.mulf %187, %197 : vector<2x32xf32>
    %208 = arith.addf %206, %207 : vector<2x32xf32>
    %209 = math.tanh %208 : vector<2x32xf32>
    %210 = arith.mulf %205, %209 : vector<2x32xf32>
    %211 = vector.broadcast %21 : vector<2x1xf32> to vector<2x32xf32>
    %212 = arith.mulf %211, %210 : vector<2x32xf32>
    %cst_73 = arith.constant 1.000000e+00 : f32
    %213 = vector.broadcast %cst_73 : f32 to vector<2x1xf32>
    %214 = arith.subf %213, %21 : vector<2x1xf32>
    %215 = vector.broadcast %214 : vector<2x1xf32> to vector<2x32xf32>
    %216 = arith.mulf %215, %171 : vector<2x32xf32>
    %217 = arith.addf %212, %216 : vector<2x32xf32>
    %218 = vector.broadcast %21 : vector<2x1xf32> to vector<2x32xf32>
    %219 = arith.mulf %218, %208 : vector<2x32xf32>
    %cst_74 = arith.constant 1.000000e+00 : f32
    %220 = vector.broadcast %cst_74 : f32 to vector<2x1xf32>
    %221 = arith.subf %220, %21 : vector<2x1xf32>
    %222 = vector.broadcast %221 : vector<2x1xf32> to vector<2x32xf32>
    %223 = arith.mulf %222, %172 : vector<2x32xf32>
    %224 = arith.addf %219, %223 : vector<2x32xf32>
    %c0_75 = arith.constant 0 : index
    %c0_76 = arith.constant 0 : index
    %225 = vector.load %arg7[%c0_75, %c0_76] : memref<2x32xf32, #tpu.memory_space<vmem>>, vector<2x32xf32>
    tpu.vector_store %arg7[%c0_75, %c0_76], %217 {strides = array<i32>} : memref<2x32xf32, #tpu.memory_space<vmem>>, vector<2x32xf32>,
    %c0_77 = arith.constant 0 : index
    %c0_78 = arith.constant 0 : index
    %226 = vector.load %arg8[%c0_77, %c0_78] : memref<2x32xf32, #tpu.memory_space<vmem>>, vector<2x32xf32>
    tpu.vector_store %arg8[%c0_77, %c0_78], %224 {strides = array<i32>} : memref<2x32xf32, #tpu.memory_space<vmem>>, vector<2x32xf32>,
    %227 = vector.broadcast %21 : vector<2x1xf32> to vector<2x32xf32>
    %228 = arith.mulf %217, %227 : vector<2x32xf32>
    %229 = arith.truncf %228 : vector<2x32xf32> to vector<2x32xbf16>
    %c0_79 = arith.constant 0 : index
    %c2_80 = arith.constant 2 : index
    %c0_81 = arith.constant 0 : index
    %230 = vector.load %arg6[%c0_79, %c2_80, %c0_81] : memref<2x8x32xbf16, #tpu.memory_space<vmem>>, vector<2x1x32xbf16>
    %231 = vector.shape_cast %230 : vector<2x1x32xbf16> to vector<2x32xbf16>
    %232 = vector.shape_cast %229 : vector<2x32xbf16> to vector<2x1x32xbf16>
    tpu.vector_store %arg6[%c0_79, %c2_80, %c0_81], %232 {strides = array<i32>} : memref<2x8x32xbf16, #tpu.memory_space<vmem>>, vector<2x1x32xbf16>,
    %c0_82 = arith.constant 0 : index
    %c0_83 = arith.constant 0 : index
    %233 = vector.load %arg7[%c0_82, %c0_83] : memref<2x32xf32, #tpu.memory_space<vmem>>, vector<2x32xf32>
    %c0_84 = arith.constant 0 : index
    %c0_85 = arith.constant 0 : index
    %234 = vector.load %arg8[%c0_84, %c0_85] : memref<2x32xf32, #tpu.memory_space<vmem>>, vector<2x32xf32>
    %c3 = arith.constant 3 : index
    %c0_86 = arith.constant 0 : index
    %c0_87 = arith.constant 0 : index
    %235 = vector.load %arg3[%c3, %c0_86, %c0_87] : memref<8x2x128xbf16, #tpu.memory_space<vmem>>, vector<1x2x128xbf16>
    %236 = vector.shape_cast %235 : vector<1x2x128xbf16> to vector<2x128xbf16>
    %237 = arith.truncf %233 : vector<2x32xf32> to vector<2x32xbf16>
    %cst_88 = arith.constant dense<0.000000e+00> : vector<2x128xf32>
    %238 = tpu.matmul %237, %4, %cst_88 {dimension_numbers = #tpu.dot_dimension_numbers<[1], [0], [0], [1], [0, 0, 1, 1], [], []>} : vector<2x32xbf16>, vector<32x128xbf16>, vector<2x128xf32> -> vector<2x128xf32>
    %239 = arith.extf %236 : vector<2x128xbf16> to vector<2x128xf32>
    %240 = arith.addf %239, %238 : vector<2x128xf32>
    %241 = arith.addf %240, %5 : vector<2x128xf32>
    %242 = vector.extract_strided_slice %241 {offsets = [0, 0], sizes = [2, 32], strides = [1, 1]} : vector<2x128xf32> to vector<2x32xf32>
    %cst_89 = arith.constant 5.000000e-01 : f32
    %243 = vector.broadcast %cst_89 : f32 to vector<2x32xf32>
    %244 = arith.mulf %243, %242 : vector<2x32xf32>
    %245 = math.tanh %244 : vector<2x32xf32>
    %cst_90 = arith.constant 1.000000e+00 : f32
    %246 = vector.broadcast %cst_90 : f32 to vector<2x32xf32>
    %247 = arith.addf %245, %246 : vector<2x32xf32>
    %cst_91 = arith.constant 5.000000e-01 : f32
    %248 = vector.broadcast %cst_91 : f32 to vector<2x32xf32>
    %249 = arith.mulf %248, %247 : vector<2x32xf32>
    %250 = vector.extract_strided_slice %241 {offsets = [0, 32], sizes = [2, 32], strides = [1, 1]} : vector<2x128xf32> to vector<2x32xf32>
    %cst_92 = arith.constant 5.000000e-01 : f32
    %251 = vector.broadcast %cst_92 : f32 to vector<2x32xf32>
    %252 = arith.mulf %251, %250 : vector<2x32xf32>
    %253 = math.tanh %252 : vector<2x32xf32>
    %cst_93 = arith.constant 1.000000e+00 : f32
    %254 = vector.broadcast %cst_93 : f32 to vector<2x32xf32>
    %255 = arith.addf %253, %254 : vector<2x32xf32>
    %cst_94 = arith.constant 5.000000e-01 : f32
    %256 = vector.broadcast %cst_94 : f32 to vector<2x32xf32>
    %257 = arith.mulf %256, %255 : vector<2x32xf32>
    %258 = vector.extract_strided_slice %241 {offsets = [0, 64], sizes = [2, 32], strides = [1, 1]} : vector<2x128xf32> to vector<2x32xf32>
    %259 = math.tanh %258 : vector<2x32xf32>
    %260 = vector.extract_strided_slice %241 {offsets = [0, 96], sizes = [2, 32], strides = [1, 1]} : vector<2x128xf32> to vector<2x32xf32>
    %cst_95 = arith.constant 5.000000e-01 : f32
    %261 = vector.broadcast %cst_95 : f32 to vector<2x32xf32>
    %262 = arith.mulf %261, %260 : vector<2x32xf32>
    %263 = math.tanh %262 : vector<2x32xf32>
    %cst_96 = arith.constant 1.000000e+00 : f32
    %264 = vector.broadcast %cst_96 : f32 to vector<2x32xf32>
    %265 = arith.addf %263, %264 : vector<2x32xf32>
    %cst_97 = arith.constant 5.000000e-01 : f32
    %266 = vector.broadcast %cst_97 : f32 to vector<2x32xf32>
    %267 = arith.mulf %266, %265 : vector<2x32xf32>
    %268 = arith.mulf %257, %234 : vector<2x32xf32>
    %269 = arith.mulf %249, %259 : vector<2x32xf32>
    %270 = arith.addf %268, %269 : vector<2x32xf32>
    %271 = math.tanh %270 : vector<2x32xf32>
    %272 = arith.mulf %267, %271 : vector<2x32xf32>
    %273 = vector.broadcast %26 : vector<2x1xf32> to vector<2x32xf32>
    %274 = arith.mulf %273, %272 : vector<2x32xf32>
    %cst_98 = arith.constant 1.000000e+00 : f32
    %275 = vector.broadcast %cst_98 : f32 to vector<2x1xf32>
    %276 = arith.subf %275, %26 : vector<2x1xf32>
    %277 = vector.broadcast %276 : vector<2x1xf32> to vector<2x32xf32>
    %278 = arith.mulf %277, %233 : vector<2x32xf32>
    %279 = arith.addf %274, %278 : vector<2x32xf32>
    %280 = vector.broadcast %26 : vector<2x1xf32> to vector<2x32xf32>
    %281 = arith.mulf %280, %270 : vector<2x32xf32>
    %cst_99 = arith.constant 1.000000e+00 : f32
    %282 = vector.broadcast %cst_99 : f32 to vector<2x1xf32>
    %283 = arith.subf %282, %26 : vector<2x1xf32>
    %284 = vector.broadcast %283 : vector<2x1xf32> to vector<2x32xf32>
    %285 = arith.mulf %284, %234 : vector<2x32xf32>
    %286 = arith.addf %281, %285 : vector<2x32xf32>
    %c0_100 = arith.constant 0 : index
    %c0_101 = arith.constant 0 : index
    %287 = vector.load %arg7[%c0_100, %c0_101] : memref<2x32xf32, #tpu.memory_space<vmem>>, vector<2x32xf32>
    tpu.vector_store %arg7[%c0_100, %c0_101], %279 {strides = array<i32>} : memref<2x32xf32, #tpu.memory_space<vmem>>, vector<2x32xf32>,
    %c0_102 = arith.constant 0 : index
    %c0_103 = arith.constant 0 : index
    %288 = vector.load %arg8[%c0_102, %c0_103] : memref<2x32xf32, #tpu.memory_space<vmem>>, vector<2x32xf32>
    tpu.vector_store %arg8[%c0_102, %c0_103], %286 {strides = array<i32>} : memref<2x32xf32, #tpu.memory_space<vmem>>, vector<2x32xf32>,
    %289 = vector.broadcast %26 : vector<2x1xf32> to vector<2x32xf32>
    %290 = arith.mulf %279, %289 : vector<2x32xf32>
    %291 = arith.truncf %290 : vector<2x32xf32> to vector<2x32xbf16>
    %c0_104 = arith.constant 0 : index
    %c3_105 = arith.constant 3 : index
    %c0_106 = arith.constant 0 : index
    %292 = vector.load %arg6[%c0_104, %c3_105, %c0_106] : memref<2x8x32xbf16, #tpu.memory_space<vmem>>, vector<2x1x32xbf16>
    %293 = vector.shape_cast %292 : vector<2x1x32xbf16> to vector<2x32xbf16>
    %294 = vector.shape_cast %291 : vector<2x32xbf16> to vector<2x1x32xbf16>
    tpu.vector_store %arg6[%c0_104, %c3_105, %c0_106], %294 {strides = array<i32>} : memref<2x8x32xbf16, #tpu.memory_space<vmem>>, vector<2x1x32xbf16>,
    %c0_107 = arith.constant 0 : index
    %c0_108 = arith.constant 0 : index
    %295 = vector.load %arg7[%c0_107, %c0_108] : memref<2x32xf32, #tpu.memory_space<vmem>>, vector<2x32xf32>
    %c0_109 = arith.constant 0 : index
    %c0_110 = arith.constant 0 : index
    %296 = vector.load %arg8[%c0_109, %c0_110] : memref<2x32xf32, #tpu.memory_space<vmem>>, vector<2x32xf32>
    %c4 = arith.constant 4 : index
    %c0_111 = arith.constant 0 : index
    %c0_112 = arith.constant 0 : index
    %297 = vector.load %arg3[%c4, %c0_111, %c0_112] : memref<8x2x128xbf16, #tpu.memory_space<vmem>>, vector<1x2x128xbf16>
    %298 = vector.shape_cast %297 : vector<1x2x128xbf16> to vector<2x128xbf16>
    %299 = arith.truncf %295 : vector<2x32xf32> to vector<2x32xbf16>
    %cst_113 = arith.constant dense<0.000000e+00> : vector<2x128xf32>
    %300 = tpu.matmul %299, %4, %cst_113 {dimension_numbers = #tpu.dot_dimension_numbers<[1], [0], [0], [1], [0, 0, 1, 1], [], []>} : vector<2x32xbf16>, vector<32x128xbf16>, vector<2x128xf32> -> vector<2x128xf32>
    %301 = arith.extf %298 : vector<2x128xbf16> to vector<2x128xf32>
    %302 = arith.addf %301, %300 : vector<2x128xf32>
    %303 = arith.addf %302, %5 : vector<2x128xf32>
    %304 = vector.extract_strided_slice %303 {offsets = [0, 0], sizes = [2, 32], strides = [1, 1]} : vector<2x128xf32> to vector<2x32xf32>
    %cst_114 = arith.constant 5.000000e-01 : f32
    %305 = vector.broadcast %cst_114 : f32 to vector<2x32xf32>
    %306 = arith.mulf %305, %304 : vector<2x32xf32>
    %307 = math.tanh %306 : vector<2x32xf32>
    %cst_115 = arith.constant 1.000000e+00 : f32
    %308 = vector.broadcast %cst_115 : f32 to vector<2x32xf32>
    %309 = arith.addf %307, %308 : vector<2x32xf32>
    %cst_116 = arith.constant 5.000000e-01 : f32
    %310 = vector.broadcast %cst_116 : f32 to vector<2x32xf32>
    %311 = arith.mulf %310, %309 : vector<2x32xf32>
    %312 = vector.extract_strided_slice %303 {offsets = [0, 32], sizes = [2, 32], strides = [1, 1]} : vector<2x128xf32> to vector<2x32xf32>
    %cst_117 = arith.constant 5.000000e-01 : f32
    %313 = vector.broadcast %cst_117 : f32 to vector<2x32xf32>
    %314 = arith.mulf %313, %312 : vector<2x32xf32>
    %315 = math.tanh %314 : vector<2x32xf32>
    %cst_118 = arith.constant 1.000000e+00 : f32
    %316 = vector.broadcast %cst_118 : f32 to vector<2x32xf32>
    %317 = arith.addf %315, %316 : vector<2x32xf32>
    %cst_119 = arith.constant 5.000000e-01 : f32
    %318 = vector.broadcast %cst_119 : f32 to vector<2x32xf32>
    %319 = arith.mulf %318, %317 : vector<2x32xf32>
    %320 = vector.extract_strided_slice %303 {offsets = [0, 64], sizes = [2, 32], strides = [1, 1]} : vector<2x128xf32> to vector<2x32xf32>
    %321 = math.tanh %320 : vector<2x32xf32>
    %322 = vector.extract_strided_slice %303 {offsets = [0, 96], sizes = [2, 32], strides = [1, 1]} : vector<2x128xf32> to vector<2x32xf32>
    %cst_120 = arith.constant 5.000000e-01 : f32
    %323 = vector.broadcast %cst_120 : f32 to vector<2x32xf32>
    %324 = arith.mulf %323, %322 : vector<2x32xf32>
    %325 = math.tanh %324 : vector<2x32xf32>
    %cst_121 = arith.constant 1.000000e+00 : f32
    %326 = vector.broadcast %cst_121 : f32 to vector<2x32xf32>
    %327 = arith.addf %325, %326 : vector<2x32xf32>
    %cst_122 = arith.constant 5.000000e-01 : f32
    %328 = vector.broadcast %cst_122 : f32 to vector<2x32xf32>
    %329 = arith.mulf %328, %327 : vector<2x32xf32>
    %330 = arith.mulf %319, %296 : vector<2x32xf32>
    %331 = arith.mulf %311, %321 : vector<2x32xf32>
    %332 = arith.addf %330, %331 : vector<2x32xf32>
    %333 = math.tanh %332 : vector<2x32xf32>
    %334 = arith.mulf %329, %333 : vector<2x32xf32>
    %335 = vector.broadcast %31 : vector<2x1xf32> to vector<2x32xf32>
    %336 = arith.mulf %335, %334 : vector<2x32xf32>
    %cst_123 = arith.constant 1.000000e+00 : f32
    %337 = vector.broadcast %cst_123 : f32 to vector<2x1xf32>
    %338 = arith.subf %337, %31 : vector<2x1xf32>
    %339 = vector.broadcast %338 : vector<2x1xf32> to vector<2x32xf32>
    %340 = arith.mulf %339, %295 : vector<2x32xf32>
    %341 = arith.addf %336, %340 : vector<2x32xf32>
    %342 = vector.broadcast %31 : vector<2x1xf32> to vector<2x32xf32>
    %343 = arith.mulf %342, %332 : vector<2x32xf32>
    %cst_124 = arith.constant 1.000000e+00 : f32
    %344 = vector.broadcast %cst_124 : f32 to vector<2x1xf32>
    %345 = arith.subf %344, %31 : vector<2x1xf32>
    %346 = vector.broadcast %345 : vector<2x1xf32> to vector<2x32xf32>
    %347 = arith.mulf %346, %296 : vector<2x32xf32>
    %348 = arith.addf %343, %347 : vector<2x32xf32>
    %c0_125 = arith.constant 0 : index
    %c0_126 = arith.constant 0 : index
    %349 = vector.load %arg7[%c0_125, %c0_126] : memref<2x32xf32, #tpu.memory_space<vmem>>, vector<2x32xf32>
    tpu.vector_store %arg7[%c0_125, %c0_126], %341 {strides = array<i32>} : memref<2x32xf32, #tpu.memory_space<vmem>>, vector<2x32xf32>,
    %c0_127 = arith.constant 0 : index
    %c0_128 = arith.constant 0 : index
    %350 = vector.load %arg8[%c0_127, %c0_128] : memref<2x32xf32, #tpu.memory_space<vmem>>, vector<2x32xf32>
    tpu.vector_store %arg8[%c0_127, %c0_128], %348 {strides = array<i32>} : memref<2x32xf32, #tpu.memory_space<vmem>>, vector<2x32xf32>,
    %351 = vector.broadcast %31 : vector<2x1xf32> to vector<2x32xf32>
    %352 = arith.mulf %341, %351 : vector<2x32xf32>
    %353 = arith.truncf %352 : vector<2x32xf32> to vector<2x32xbf16>
    %c0_129 = arith.constant 0 : index
    %c4_130 = arith.constant 4 : index
    %c0_131 = arith.constant 0 : index
    %354 = vector.load %arg6[%c0_129, %c4_130, %c0_131] : memref<2x8x32xbf16, #tpu.memory_space<vmem>>, vector<2x1x32xbf16>
    %355 = vector.shape_cast %354 : vector<2x1x32xbf16> to vector<2x32xbf16>
    %356 = vector.shape_cast %353 : vector<2x32xbf16> to vector<2x1x32xbf16>
    tpu.vector_store %arg6[%c0_129, %c4_130, %c0_131], %356 {strides = array<i32>} : memref<2x8x32xbf16, #tpu.memory_space<vmem>>, vector<2x1x32xbf16>,
    %c0_132 = arith.constant 0 : index
    %c0_133 = arith.constant 0 : index
    %357 = vector.load %arg7[%c0_132, %c0_133] : memref<2x32xf32, #tpu.memory_space<vmem>>, vector<2x32xf32>
    %c0_134 = arith.constant 0 : index
    %c0_135 = arith.constant 0 : index
    %358 = vector.load %arg8[%c0_134, %c0_135] : memref<2x32xf32, #tpu.memory_space<vmem>>, vector<2x32xf32>
    %c5 = arith.constant 5 : index
    %c0_136 = arith.constant 0 : index
    %c0_137 = arith.constant 0 : index
    %359 = vector.load %arg3[%c5, %c0_136, %c0_137] : memref<8x2x128xbf16, #tpu.memory_space<vmem>>, vector<1x2x128xbf16>
    %360 = vector.shape_cast %359 : vector<1x2x128xbf16> to vector<2x128xbf16>
    %361 = arith.truncf %357 : vector<2x32xf32> to vector<2x32xbf16>
    %cst_138 = arith.constant dense<0.000000e+00> : vector<2x128xf32>
    %362 = tpu.matmul %361, %4, %cst_138 {dimension_numbers = #tpu.dot_dimension_numbers<[1], [0], [0], [1], [0, 0, 1, 1], [], []>} : vector<2x32xbf16>, vector<32x128xbf16>, vector<2x128xf32> -> vector<2x128xf32>
    %363 = arith.extf %360 : vector<2x128xbf16> to vector<2x128xf32>
    %364 = arith.addf %363, %362 : vector<2x128xf32>
    %365 = arith.addf %364, %5 : vector<2x128xf32>
    %366 = vector.extract_strided_slice %365 {offsets = [0, 0], sizes = [2, 32], strides = [1, 1]} : vector<2x128xf32> to vector<2x32xf32>
    %cst_139 = arith.constant 5.000000e-01 : f32
    %367 = vector.broadcast %cst_139 : f32 to vector<2x32xf32>
    %368 = arith.mulf %367, %366 : vector<2x32xf32>
    %369 = math.tanh %368 : vector<2x32xf32>
    %cst_140 = arith.constant 1.000000e+00 : f32
    %370 = vector.broadcast %cst_140 : f32 to vector<2x32xf32>
    %371 = arith.addf %369, %370 : vector<2x32xf32>
    %cst_141 = arith.constant 5.000000e-01 : f32
    %372 = vector.broadcast %cst_141 : f32 to vector<2x32xf32>
    %373 = arith.mulf %372, %371 : vector<2x32xf32>
    %374 = vector.extract_strided_slice %365 {offsets = [0, 32], sizes = [2, 32], strides = [1, 1]} : vector<2x128xf32> to vector<2x32xf32>
    %cst_142 = arith.constant 5.000000e-01 : f32
    %375 = vector.broadcast %cst_142 : f32 to vector<2x32xf32>
    %376 = arith.mulf %375, %374 : vector<2x32xf32>
    %377 = math.tanh %376 : vector<2x32xf32>
    %cst_143 = arith.constant 1.000000e+00 : f32
    %378 = vector.broadcast %cst_143 : f32 to vector<2x32xf32>
    %379 = arith.addf %377, %378 : vector<2x32xf32>
    %cst_144 = arith.constant 5.000000e-01 : f32
    %380 = vector.broadcast %cst_144 : f32 to vector<2x32xf32>
    %381 = arith.mulf %380, %379 : vector<2x32xf32>
    %382 = vector.extract_strided_slice %365 {offsets = [0, 64], sizes = [2, 32], strides = [1, 1]} : vector<2x128xf32> to vector<2x32xf32>
    %383 = math.tanh %382 : vector<2x32xf32>
    %384 = vector.extract_strided_slice %365 {offsets = [0, 96], sizes = [2, 32], strides = [1, 1]} : vector<2x128xf32> to vector<2x32xf32>
    %cst_145 = arith.constant 5.000000e-01 : f32
    %385 = vector.broadcast %cst_145 : f32 to vector<2x32xf32>
    %386 = arith.mulf %385, %384 : vector<2x32xf32>
    %387 = math.tanh %386 : vector<2x32xf32>
    %cst_146 = arith.constant 1.000000e+00 : f32
    %388 = vector.broadcast %cst_146 : f32 to vector<2x32xf32>
    %389 = arith.addf %387, %388 : vector<2x32xf32>
    %cst_147 = arith.constant 5.000000e-01 : f32
    %390 = vector.broadcast %cst_147 : f32 to vector<2x32xf32>
    %391 = arith.mulf %390, %389 : vector<2x32xf32>
    %392 = arith.mulf %381, %358 : vector<2x32xf32>
    %393 = arith.mulf %373, %383 : vector<2x32xf32>
    %394 = arith.addf %392, %393 : vector<2x32xf32>
    %395 = math.tanh %394 : vector<2x32xf32>
    %396 = arith.mulf %391, %395 : vector<2x32xf32>
    %397 = vector.broadcast %36 : vector<2x1xf32> to vector<2x32xf32>
    %398 = arith.mulf %397, %396 : vector<2x32xf32>
    %cst_148 = arith.constant 1.000000e+00 : f32
    %399 = vector.broadcast %cst_148 : f32 to vector<2x1xf32>
    %400 = arith.subf %399, %36 : vector<2x1xf32>
    %401 = vector.broadcast %400 : vector<2x1xf32> to vector<2x32xf32>
    %402 = arith.mulf %401, %357 : vector<2x32xf32>
    %403 = arith.addf %398, %402 : vector<2x32xf32>
    %404 = vector.broadcast %36 : vector<2x1xf32> to vector<2x32xf32>
    %405 = arith.mulf %404, %394 : vector<2x32xf32>
    %cst_149 = arith.constant 1.000000e+00 : f32
    %406 = vector.broadcast %cst_149 : f32 to vector<2x1xf32>
    %407 = arith.subf %406, %36 : vector<2x1xf32>
    %408 = vector.broadcast %407 : vector<2x1xf32> to vector<2x32xf32>
    %409 = arith.mulf %408, %358 : vector<2x32xf32>
    %410 = arith.addf %405, %409 : vector<2x32xf32>
    %c0_150 = arith.constant 0 : index
    %c0_151 = arith.constant 0 : index
    %411 = vector.load %arg7[%c0_150, %c0_151] : memref<2x32xf32, #tpu.memory_space<vmem>>, vector<2x32xf32>
    tpu.vector_store %arg7[%c0_150, %c0_151], %403 {strides = array<i32>} : memref<2x32xf32, #tpu.memory_space<vmem>>, vector<2x32xf32>,
    %c0_152 = arith.constant 0 : index
    %c0_153 = arith.constant 0 : index
    %412 = vector.load %arg8[%c0_152, %c0_153] : memref<2x32xf32, #tpu.memory_space<vmem>>, vector<2x32xf32>
    tpu.vector_store %arg8[%c0_152, %c0_153], %410 {strides = array<i32>} : memref<2x32xf32, #tpu.memory_space<vmem>>, vector<2x32xf32>,
    %413 = vector.broadcast %36 : vector<2x1xf32> to vector<2x32xf32>
    %414 = arith.mulf %403, %413 : vector<2x32xf32>
    %415 = arith.truncf %414 : vector<2x32xf32> to vector<2x32xbf16>
    %c0_154 = arith.constant 0 : index
    %c5_155 = arith.constant 5 : index
    %c0_156 = arith.constant 0 : index
    %416 = vector.load %arg6[%c0_154, %c5_155, %c0_156] : memref<2x8x32xbf16, #tpu.memory_space<vmem>>, vector<2x1x32xbf16>
    %417 = vector.shape_cast %416 : vector<2x1x32xbf16> to vector<2x32xbf16>
    %418 = vector.shape_cast %415 : vector<2x32xbf16> to vector<2x1x32xbf16>
    tpu.vector_store %arg6[%c0_154, %c5_155, %c0_156], %418 {strides = array<i32>} : memref<2x8x32xbf16, #tpu.memory_space<vmem>>, vector<2x1x32xbf16>,
    %c0_157 = arith.constant 0 : index
    %c0_158 = arith.constant 0 : index
    %419 = vector.load %arg7[%c0_157, %c0_158] : memref<2x32xf32, #tpu.memory_space<vmem>>, vector<2x32xf32>
    %c0_159 = arith.constant 0 : index
    %c0_160 = arith.constant 0 : index
    %420 = vector.load %arg8[%c0_159, %c0_160] : memref<2x32xf32, #tpu.memory_space<vmem>>, vector<2x32xf32>
    %c6 = arith.constant 6 : index
    %c0_161 = arith.constant 0 : index
    %c0_162 = arith.constant 0 : index
    %421 = vector.load %arg3[%c6, %c0_161, %c0_162] : memref<8x2x128xbf16, #tpu.memory_space<vmem>>, vector<1x2x128xbf16>
    %422 = vector.shape_cast %421 : vector<1x2x128xbf16> to vector<2x128xbf16>
    %423 = arith.truncf %419 : vector<2x32xf32> to vector<2x32xbf16>
    %cst_163 = arith.constant dense<0.000000e+00> : vector<2x128xf32>
    %424 = tpu.matmul %423, %4, %cst_163 {dimension_numbers = #tpu.dot_dimension_numbers<[1], [0], [0], [1], [0, 0, 1, 1], [], []>} : vector<2x32xbf16>, vector<32x128xbf16>, vector<2x128xf32> -> vector<2x128xf32>
    %425 = arith.extf %422 : vector<2x128xbf16> to vector<2x128xf32>
    %426 = arith.addf %425, %424 : vector<2x128xf32>
    %427 = arith.addf %426, %5 : vector<2x128xf32>
    %428 = vector.extract_strided_slice %427 {offsets = [0, 0], sizes = [2, 32], strides = [1, 1]} : vector<2x128xf32> to vector<2x32xf32>
    %cst_164 = arith.constant 5.000000e-01 : f32
    %429 = vector.broadcast %cst_164 : f32 to vector<2x32xf32>
    %430 = arith.mulf %429, %428 : vector<2x32xf32>
    %431 = math.tanh %430 : vector<2x32xf32>
    %cst_165 = arith.constant 1.000000e+00 : f32
    %432 = vector.broadcast %cst_165 : f32 to vector<2x32xf32>
    %433 = arith.addf %431, %432 : vector<2x32xf32>
    %cst_166 = arith.constant 5.000000e-01 : f32
    %434 = vector.broadcast %cst_166 : f32 to vector<2x32xf32>
    %435 = arith.mulf %434, %433 : vector<2x32xf32>
    %436 = vector.extract_strided_slice %427 {offsets = [0, 32], sizes = [2, 32], strides = [1, 1]} : vector<2x128xf32> to vector<2x32xf32>
    %cst_167 = arith.constant 5.000000e-01 : f32
    %437 = vector.broadcast %cst_167 : f32 to vector<2x32xf32>
    %438 = arith.mulf %437, %436 : vector<2x32xf32>
    %439 = math.tanh %438 : vector<2x32xf32>
    %cst_168 = arith.constant 1.000000e+00 : f32
    %440 = vector.broadcast %cst_168 : f32 to vector<2x32xf32>
    %441 = arith.addf %439, %440 : vector<2x32xf32>
    %cst_169 = arith.constant 5.000000e-01 : f32
    %442 = vector.broadcast %cst_169 : f32 to vector<2x32xf32>
    %443 = arith.mulf %442, %441 : vector<2x32xf32>
    %444 = vector.extract_strided_slice %427 {offsets = [0, 64], sizes = [2, 32], strides = [1, 1]} : vector<2x128xf32> to vector<2x32xf32>
    %445 = math.tanh %444 : vector<2x32xf32>
    %446 = vector.extract_strided_slice %427 {offsets = [0, 96], sizes = [2, 32], strides = [1, 1]} : vector<2x128xf32> to vector<2x32xf32>
    %cst_170 = arith.constant 5.000000e-01 : f32
    %447 = vector.broadcast %cst_170 : f32 to vector<2x32xf32>
    %448 = arith.mulf %447, %446 : vector<2x32xf32>
    %449 = math.tanh %448 : vector<2x32xf32>
    %cst_171 = arith.constant 1.000000e+00 : f32
    %450 = vector.broadcast %cst_171 : f32 to vector<2x32xf32>
    %451 = arith.addf %449, %450 : vector<2x32xf32>
    %cst_172 = arith.constant 5.000000e-01 : f32
    %452 = vector.broadcast %cst_172 : f32 to vector<2x32xf32>
    %453 = arith.mulf %452, %451 : vector<2x32xf32>
    %454 = arith.mulf %443, %420 : vector<2x32xf32>
    %455 = arith.mulf %435, %445 : vector<2x32xf32>
    %456 = arith.addf %454, %455 : vector<2x32xf32>
    %457 = math.tanh %456 : vector<2x32xf32>
    %458 = arith.mulf %453, %457 : vector<2x32xf32>
    %459 = vector.broadcast %41 : vector<2x1xf32> to vector<2x32xf32>
    %460 = arith.mulf %459, %458 : vector<2x32xf32>
    %cst_173 = arith.constant 1.000000e+00 : f32
    %461 = vector.broadcast %cst_173 : f32 to vector<2x1xf32>
    %462 = arith.subf %461, %41 : vector<2x1xf32>
    %463 = vector.broadcast %462 : vector<2x1xf32> to vector<2x32xf32>
    %464 = arith.mulf %463, %419 : vector<2x32xf32>
    %465 = arith.addf %460, %464 : vector<2x32xf32>
    %466 = vector.broadcast %41 : vector<2x1xf32> to vector<2x32xf32>
    %467 = arith.mulf %466, %456 : vector<2x32xf32>
    %cst_174 = arith.constant 1.000000e+00 : f32
    %468 = vector.broadcast %cst_174 : f32 to vector<2x1xf32>
    %469 = arith.subf %468, %41 : vector<2x1xf32>
    %470 = vector.broadcast %469 : vector<2x1xf32> to vector<2x32xf32>
    %471 = arith.mulf %470, %420 : vector<2x32xf32>
    %472 = arith.addf %467, %471 : vector<2x32xf32>
    %c0_175 = arith.constant 0 : index
    %c0_176 = arith.constant 0 : index
    %473 = vector.load %arg7[%c0_175, %c0_176] : memref<2x32xf32, #tpu.memory_space<vmem>>, vector<2x32xf32>
    tpu.vector_store %arg7[%c0_175, %c0_176], %465 {strides = array<i32>} : memref<2x32xf32, #tpu.memory_space<vmem>>, vector<2x32xf32>,
    %c0_177 = arith.constant 0 : index
    %c0_178 = arith.constant 0 : index
    %474 = vector.load %arg8[%c0_177, %c0_178] : memref<2x32xf32, #tpu.memory_space<vmem>>, vector<2x32xf32>
    tpu.vector_store %arg8[%c0_177, %c0_178], %472 {strides = array<i32>} : memref<2x32xf32, #tpu.memory_space<vmem>>, vector<2x32xf32>,
    %475 = vector.broadcast %41 : vector<2x1xf32> to vector<2x32xf32>
    %476 = arith.mulf %465, %475 : vector<2x32xf32>
    %477 = arith.truncf %476 : vector<2x32xf32> to vector<2x32xbf16>
    %c0_179 = arith.constant 0 : index
    %c6_180 = arith.constant 6 : index
    %c0_181 = arith.constant 0 : index
    %478 = vector.load %arg6[%c0_179, %c6_180, %c0_181] : memref<2x8x32xbf16, #tpu.memory_space<vmem>>, vector<2x1x32xbf16>
    %479 = vector.shape_cast %478 : vector<2x1x32xbf16> to vector<2x32xbf16>
    %480 = vector.shape_cast %477 : vector<2x32xbf16> to vector<2x1x32xbf16>
    tpu.vector_store %arg6[%c0_179, %c6_180, %c0_181], %480 {strides = array<i32>} : memref<2x8x32xbf16, #tpu.memory_space<vmem>>, vector<2x1x32xbf16>,
    %c0_182 = arith.constant 0 : index
    %c0_183 = arith.constant 0 : index
    %481 = vector.load %arg7[%c0_182, %c0_183] : memref<2x32xf32, #tpu.memory_space<vmem>>, vector<2x32xf32>
    %c0_184 = arith.constant 0 : index
    %c0_185 = arith.constant 0 : index
    %482 = vector.load %arg8[%c0_184, %c0_185] : memref<2x32xf32, #tpu.memory_space<vmem>>, vector<2x32xf32>
    %c7 = arith.constant 7 : index
    %c0_186 = arith.constant 0 : index
    %c0_187 = arith.constant 0 : index
    %483 = vector.load %arg3[%c7, %c0_186, %c0_187] : memref<8x2x128xbf16, #tpu.memory_space<vmem>>, vector<1x2x128xbf16>
    %484 = vector.shape_cast %483 : vector<1x2x128xbf16> to vector<2x128xbf16>
    %485 = arith.truncf %481 : vector<2x32xf32> to vector<2x32xbf16>
    %cst_188 = arith.constant dense<0.000000e+00> : vector<2x128xf32>
    %486 = tpu.matmul %485, %4, %cst_188 {dimension_numbers = #tpu.dot_dimension_numbers<[1], [0], [0], [1], [0, 0, 1, 1], [], []>} : vector<2x32xbf16>, vector<32x128xbf16>, vector<2x128xf32> -> vector<2x128xf32>
    %487 = arith.extf %484 : vector<2x128xbf16> to vector<2x128xf32>
    %488 = arith.addf %487, %486 : vector<2x128xf32>
    %489 = arith.addf %488, %5 : vector<2x128xf32>
    %490 = vector.extract_strided_slice %489 {offsets = [0, 0], sizes = [2, 32], strides = [1, 1]} : vector<2x128xf32> to vector<2x32xf32>
    %cst_189 = arith.constant 5.000000e-01 : f32
    %491 = vector.broadcast %cst_189 : f32 to vector<2x32xf32>
    %492 = arith.mulf %491, %490 : vector<2x32xf32>
    %493 = math.tanh %492 : vector<2x32xf32>
    %cst_190 = arith.constant 1.000000e+00 : f32
    %494 = vector.broadcast %cst_190 : f32 to vector<2x32xf32>
    %495 = arith.addf %493, %494 : vector<2x32xf32>
    %cst_191 = arith.constant 5.000000e-01 : f32
    %496 = vector.broadcast %cst_191 : f32 to vector<2x32xf32>
    %497 = arith.mulf %496, %495 : vector<2x32xf32>
    %498 = vector.extract_strided_slice %489 {offsets = [0, 32], sizes = [2, 32], strides = [1, 1]} : vector<2x128xf32> to vector<2x32xf32>
    %cst_192 = arith.constant 5.000000e-01 : f32
    %499 = vector.broadcast %cst_192 : f32 to vector<2x32xf32>
    %500 = arith.mulf %499, %498 : vector<2x32xf32>
    %501 = math.tanh %500 : vector<2x32xf32>
    %cst_193 = arith.constant 1.000000e+00 : f32
    %502 = vector.broadcast %cst_193 : f32 to vector<2x32xf32>
    %503 = arith.addf %501, %502 : vector<2x32xf32>
    %cst_194 = arith.constant 5.000000e-01 : f32
    %504 = vector.broadcast %cst_194 : f32 to vector<2x32xf32>
    %505 = arith.mulf %504, %503 : vector<2x32xf32>
    %506 = vector.extract_strided_slice %489 {offsets = [0, 64], sizes = [2, 32], strides = [1, 1]} : vector<2x128xf32> to vector<2x32xf32>
    %507 = math.tanh %506 : vector<2x32xf32>
    %508 = vector.extract_strided_slice %489 {offsets = [0, 96], sizes = [2, 32], strides = [1, 1]} : vector<2x128xf32> to vector<2x32xf32>
    %cst_195 = arith.constant 5.000000e-01 : f32
    %509 = vector.broadcast %cst_195 : f32 to vector<2x32xf32>
    %510 = arith.mulf %509, %508 : vector<2x32xf32>
    %511 = math.tanh %510 : vector<2x32xf32>
    %cst_196 = arith.constant 1.000000e+00 : f32
    %512 = vector.broadcast %cst_196 : f32 to vector<2x32xf32>
    %513 = arith.addf %511, %512 : vector<2x32xf32>
    %cst_197 = arith.constant 5.000000e-01 : f32
    %514 = vector.broadcast %cst_197 : f32 to vector<2x32xf32>
    %515 = arith.mulf %514, %513 : vector<2x32xf32>
    %516 = arith.mulf %505, %482 : vector<2x32xf32>
    %517 = arith.mulf %497, %507 : vector<2x32xf32>
    %518 = arith.addf %516, %517 : vector<2x32xf32>
    %519 = math.tanh %518 : vector<2x32xf32>
    %520 = arith.mulf %515, %519 : vector<2x32xf32>
    %521 = vector.broadcast %46 : vector<2x1xf32> to vector<2x32xf32>
    %522 = arith.mulf %521, %520 : vector<2x32xf32>
    %cst_198 = arith.constant 1.000000e+00 : f32
    %523 = vector.broadcast %cst_198 : f32 to vector<2x1xf32>
    %524 = arith.subf %523, %46 : vector<2x1xf32>
    %525 = vector.broadcast %524 : vector<2x1xf32> to vector<2x32xf32>
    %526 = arith.mulf %525, %481 : vector<2x32xf32>
    %527 = arith.addf %522, %526 : vector<2x32xf32>
    %528 = vector.broadcast %46 : vector<2x1xf32> to vector<2x32xf32>
    %529 = arith.mulf %528, %518 : vector<2x32xf32>
    %cst_199 = arith.constant 1.000000e+00 : f32
    %530 = vector.broadcast %cst_199 : f32 to vector<2x1xf32>
    %531 = arith.subf %530, %46 : vector<2x1xf32>
    %532 = vector.broadcast %531 : vector<2x1xf32> to vector<2x32xf32>
    %533 = arith.mulf %532, %482 : vector<2x32xf32>
    %534 = arith.addf %529, %533 : vector<2x32xf32>
    %c0_200 = arith.constant 0 : index
    %c0_201 = arith.constant 0 : index
    %535 = vector.load %arg7[%c0_200, %c0_201] : memref<2x32xf32, #tpu.memory_space<vmem>>, vector<2x32xf32>
    tpu.vector_store %arg7[%c0_200, %c0_201], %527 {strides = array<i32>} : memref<2x32xf32, #tpu.memory_space<vmem>>, vector<2x32xf32>,
    %c0_202 = arith.constant 0 : index
    %c0_203 = arith.constant 0 : index
    %536 = vector.load %arg8[%c0_202, %c0_203] : memref<2x32xf32, #tpu.memory_space<vmem>>, vector<2x32xf32>
    tpu.vector_store %arg8[%c0_202, %c0_203], %534 {strides = array<i32>} : memref<2x32xf32, #tpu.memory_space<vmem>>, vector<2x32xf32>,
    %537 = vector.broadcast %46 : vector<2x1xf32> to vector<2x32xf32>
    %538 = arith.mulf %527, %537 : vector<2x32xf32>
    %539 = arith.truncf %538 : vector<2x32xf32> to vector<2x32xbf16>
    %c0_204 = arith.constant 0 : index
    %c7_205 = arith.constant 7 : index
    %c0_206 = arith.constant 0 : index
    %540 = vector.load %arg6[%c0_204, %c7_205, %c0_206] : memref<2x8x32xbf16, #tpu.memory_space<vmem>>, vector<2x1x32xbf16>
    %541 = vector.shape_cast %540 : vector<2x1x32xbf16> to vector<2x32xbf16>
    %542 = vector.shape_cast %539 : vector<2x32xbf16> to vector<2x1x32xbf16>
    tpu.vector_store %arg6[%c0_204, %c7_205, %c0_206], %542 {strides = array<i32>} : memref<2x8x32xbf16, #tpu.memory_space<vmem>>, vector<2x1x32xbf16>,
    return
  }
  func.func @transform_0(%arg0: i32, %arg1: i32) -> (i32, i32) {
    %c0_i32 = arith.constant 0 : i32
    %c0_i32_0 = arith.constant 0 : i32
    return %arg0, %c0_i32 : i32, i32
  }
  func.func @transform_1(%arg0: i32, %arg1: i32) -> (i32, i32, i32) {
    %c0_i32 = arith.constant 0 : i32
    %c0_i32_0 = arith.constant 0 : i32
    return %arg1, %arg0, %c0_i32 : i32, i32, i32
  }
  func.func @transform_2(%arg0: i32, %arg1: i32) -> (i32, i32) {
    %c0_i32 = arith.constant 0 : i32
    %c0_i32_0 = arith.constant 0 : i32
    %c0_i32_1 = arith.constant 0 : i32
    return %c0_i32, %c0_i32_0 : i32, i32
  }
  func.func @transform_3(%arg0: i32, %arg1: i32) -> (i32, i32) {
    %c0_i32 = arith.constant 0 : i32
    %c0_i32_0 = arith.constant 0 : i32
    return %arg0, %c0_i32 : i32, i32
  }
  func.func @transform_4(%arg0: i32, %arg1: i32) -> (i32, i32, i32) {
    %c0_i32 = arith.constant 0 : i32
    %c0_i32_0 = arith.constant 0 : i32
    return %arg0, %arg1, %c0_i32 : i32, i32, i32
  }
  func.func @transform_5(%arg0: i32, %arg1: i32) -> (i32, i32) {
    %c0_i32 = arith.constant 0 : i32
    %c0_i32_0 = arith.constant 0 : i32
    return %arg0, %c0_i32 : i32, i32
  }
}

module attributes {stable_mosaic.version = 11 : i64} {
  func.func @_matmul_kernel(%arg0: i32, %arg1: i32, %arg2: i32, %arg3: memref<16x32xbf16, #tpu.memory_space<vmem>>, %arg4: memref<32x50xbf16, #tpu.memory_space<vmem>>, %arg5: memref<1x50xf32, #tpu.memory_space<vmem>>, %arg6: memref<16x50xf32, #tpu.memory_space<vmem>>, %arg7: memref<16x50xf32, #tpu.memory_space<vmem>>) attributes {dimension_semantics = [#tpu.dimension_semantics<parallel>, #tpu.dimension_semantics<parallel>, #tpu.dimension_semantics<arbitrary>], iteration_bounds = array<i64: 1, 1, 1>, scalar_prefetch = 0 : i64, scratch_operands = 1 : i64, tpu.core_type = #tpu.core_type<tc>, window_params = [{transform_indices = @transform_0, window_bounds = array<i64: 16, 32>}, {transform_indices = @transform_1, window_bounds = array<i64: 32, 50>}, {transform_indices = @transform_2, window_bounds = array<i64: 1, 50>}, {transform_indices = @transform_3, window_bounds = array<i64: 16, 50>}]} {
    %c0_i32 = arith.constant 0 : i32
    %0 = arith.cmpi eq, %arg2, %c0_i32 : i32
    %1 = arith.extui %0 : i1 to i32
    %c0_i32_0 = arith.constant 0 : i32
    %2 = arith.cmpi ne, %1, %c0_i32_0 : i32
    scf.if %2 {
      %cst_10 = arith.constant 0.000000e+00 : f32
      %12 = vector.broadcast %cst_10 : f32 to vector<16x50xf32>
      %c0_11 = arith.constant 0 : index
      %c0_12 = arith.constant 0 : index
      %13 = vector.load %arg7[%c0_11, %c0_12] : memref<16x50xf32, #tpu.memory_space<vmem>>, vector<16x50xf32>
      tpu.vector_store %arg7[%c0_11, %c0_12], %12 {strides = array<i32>} : memref<16x50xf32, #tpu.memory_space<vmem>>, vector<16x50xf32>,
    } else {
    }
    %c0 = arith.constant 0 : index
    %c0_1 = arith.constant 0 : index
    %3 = vector.load %arg7[%c0, %c0_1] : memref<16x50xf32, #tpu.memory_space<vmem>>, vector<16x50xf32>
    %c0_2 = arith.constant 0 : index
    %c0_3 = arith.constant 0 : index
    %4 = vector.load %arg3[%c0_2, %c0_3] : memref<16x32xbf16, #tpu.memory_space<vmem>>, vector<16x32xbf16>
    %c0_4 = arith.constant 0 : index
    %c0_5 = arith.constant 0 : index
    %5 = vector.load %arg4[%c0_4, %c0_5] : memref<32x50xbf16, #tpu.memory_space<vmem>>, vector<32x50xbf16>
    %cst = arith.constant dense<0.000000e+00> : vector<16x50xf32>
    %6 = tpu.matmul %4, %5, %cst {dimension_numbers = #tpu.dot_dimension_numbers<[1], [0], [0], [1], [0, 0, 1, 1], [], []>} : vector<16x32xbf16>, vector<32x50xbf16>, vector<16x50xf32> -> vector<16x50xf32>
    %7 = arith.addf %3, %6 : vector<16x50xf32>
    %c0_6 = arith.constant 0 : index
    %c0_7 = arith.constant 0 : index
    %8 = vector.load %arg7[%c0_6, %c0_7] : memref<16x50xf32, #tpu.memory_space<vmem>>, vector<16x50xf32>
    tpu.vector_store %arg7[%c0_6, %c0_7], %7 {strides = array<i32>} : memref<16x50xf32, #tpu.memory_space<vmem>>, vector<16x50xf32>,
    %c0_i32_8 = arith.constant 0 : i32
    %9 = arith.cmpi eq, %arg2, %c0_i32_8 : i32
    %10 = arith.extui %9 : i1 to i32
    %c0_i32_9 = arith.constant 0 : i32
    %11 = arith.cmpi ne, %10, %c0_i32_9 : i32
    scf.if %11 {
      %c0_10 = arith.constant 0 : index
      %c0_11 = arith.constant 0 : index
      %12 = vector.load %arg7[%c0_10, %c0_11] : memref<16x50xf32, #tpu.memory_space<vmem>>, vector<16x50xf32>
      %c0_12 = arith.constant 0 : index
      %c0_13 = arith.constant 0 : index
      %13 = vector.load %arg5[%c0_12, %c0_13] : memref<1x50xf32, #tpu.memory_space<vmem>>, vector<1x50xf32>
      %14 = vector.broadcast %13 : vector<1x50xf32> to vector<16x50xf32>
      %15 = arith.addf %12, %14 : vector<16x50xf32>
      %c0_14 = arith.constant 0 : index
      %c0_15 = arith.constant 0 : index
      %16 = vector.load %arg6[%c0_14, %c0_15] : memref<16x50xf32, #tpu.memory_space<vmem>>, vector<16x50xf32>
      tpu.vector_store %arg6[%c0_14, %c0_15], %15 {strides = array<i32>} : memref<16x50xf32, #tpu.memory_space<vmem>>, vector<16x50xf32>,
    } else {
    }
    return
  }
  func.func @transform_0(%arg0: i32, %arg1: i32, %arg2: i32) -> (i32, i32) {
    %c0_i32 = arith.constant 0 : i32
    return %arg0, %arg2 : i32, i32
  }
  func.func @transform_1(%arg0: i32, %arg1: i32, %arg2: i32) -> (i32, i32) {
    %c0_i32 = arith.constant 0 : i32
    return %arg2, %arg1 : i32, i32
  }
  func.func @transform_2(%arg0: i32, %arg1: i32, %arg2: i32) -> (i32, i32) {
    %c0_i32 = arith.constant 0 : i32
    %c0_i32_0 = arith.constant 0 : i32
    return %c0_i32, %arg1 : i32, i32
  }
  func.func @transform_3(%arg0: i32, %arg1: i32, %arg2: i32) -> (i32, i32) {
    %c0_i32 = arith.constant 0 : i32
    return %arg0, %arg1 : i32, i32
  }
}

</mosaic_0001>

<llo_original>
// kernel: seq2seq_forward.8
$region0: #{seq2seq_forward.8}
  #allocation0 [shape = 'u32[]', space=smem, size = 0x4, offset = 0x4, fixed_abs, tag = 'smem constant byte address 0x4 - core index']
  #allocation1 [shape = 'u32[144,128]{1,0:T(1,128)}', space=vmem, size = 0x12000, scoped, tag = 'internal scratch']
  #allocation2 [shape = 'f32[16,128]{1,0:T(8,128)}', space=vmem, size = 0x2000, scoped, tag = 'scratch operand']
  %s0 = inlined_call_operand.vmem [shape: bf16[16,16], index: 0, kind: input, shape index: {}]
  %s1 = inlined_call_operand.vmem [shape: bf16[16,128], index: 1, kind: input, shape index: {}]
  %s2 = inlined_call_operand.vmem [shape: f32[1,128], index: 2, kind: input, shape index: {}]
  %s3 = inlined_call_operand.vmem [shape: bf16[16,128], index: 3, kind: output, shape index: {}]
  %s4 = sld [smem:[#allocation0]]
  $region30: #{seq2seq_forward.8} parent=0
    _
  %s6 = ssub.s32 1, %s4
  %s7 = scalar_select 0, %s6, %s4
  // Predicated region
  $region2: #{seq2seq_forward.8} parent=0 // pred_check
    _
  $region3: #{seq2seq_forward.8} parent=0 // pred_check_branch
    %9 = sbr.rel (0) target = $region5
  $region4: #{seq2seq_forward.8} parent=0 // pred_region
    _
  $region5: #{seq2seq_forward.8} parent=0 // pred_fallthru
    _
  // Predicated region
  $region6: #{seq2seq_forward.8} parent=0 // pred_check
    _
  $region7: #{seq2seq_forward.8} parent=0 // pred_check_branch
    %11 = sbr.rel (0) target = $region9
  $region8: #{seq2seq_forward.8} parent=0 // pred_region
    _
  $region9: #{seq2seq_forward.8} parent=0 // pred_fallthru
    _
  // Predicated region
  $region10: #{seq2seq_forward.8} parent=0 // pred_check
    _
  $region11: #{seq2seq_forward.8} parent=0 // pred_check_branch
    %13 = sbr.rel (0) target = $region13
  $region12: #{seq2seq_forward.8} parent=0 // pred_region
    _
  $region13: #{seq2seq_forward.8} parent=0 // pred_fallthru
    _
  %p15 = scmp.eq.s32.totalorder 0, 0
  // Predicated region
  $region14: #{seq2seq_forward.8} parent=0 // pred_check
    %p16 = pneg %p15
  $region15: #{seq2seq_forward.8} parent=0 // pred_check_branch
    %18 = sbr.rel (%p16) target = $region17
  $region16: #{seq2seq_forward.8} parent=0 // pred_region
    %19 = vst [vmem:[#allocation2] sm:$0xff] 0.0
    %20 = vst [vmem:[#allocation2 + $0x8] sm:$0xff] 0.0
  $region17: #{seq2seq_forward.8} parent=0 // pred_fallthru
    _
  %v21 = vld [vmem:[#allocation2] sm:$0xff]
  %v22 = vld [vmem:[#allocation2 + $0x8] sm:$0xff]
  %v23 = vld [vmem:[%s0] sm:$0xf]
  %v24 = vld [vmem:[%s0 + $0x4] sm:$0xf]
  %v25 = vld [vmem:[%s1] sm:$0xf]
  %v26 = vld [vmem:[%s1 + $0x4] sm:$0xf]
  %v29 = vunpack.c.l.b16 %v23
  %v30 = vunpack.c.l.b16 %v24
  %v31 = vpack.c.b16 %v30, %v29
  %v34 = vunpack.c.l.b16 %v25
  %v35 = vunpack.c.l.b16 %v26
  %v36 = vpack.c.b16 %v35, %v34
  %vm38 = vcmask 130048
  %v40 = vsel %vm38, %v31, 0
  %42 = vmatprep.subr.bf16.mxu0 0
  %43 = vmatpush1.bf16.msra.mxu0 %v36
  %44 = vmatprep.subr.bf16.mxu0 0
  %45 = vmatpush1.bf16.msra.mxu0 0
  %46 = vmatprep.subr.bf16.mxu0 0
  %47 = vmatpush1.bf16.msra.mxu0 0
  %48 = vmatprep.subr.bf16.mxu0 0
  %49 = vmatpush1.bf16.msra.mxu0 0
  %50 = vmatprep.subr.bf16.mxu0 0
  %51 = vmatpush1.bf16.msra.mxu0 0
  %52 = vmatprep.subr.bf16.mxu0 0
  %53 = vmatpush1.bf16.msra.mxu0 0
  %54 = vmatprep.subr.bf16.mxu0 0
  %55 = vmatpush1.bf16.msra.mxu0 0
  %56 = vmatprep.subr.bf16.mxu0 0
  %57 = vmatpush1.bf16.msra.mxu0 0
  %58 = vmatprep.subr.bf16.mxu0 0
  %59 = vmatpush1.bf16.msra.mxu0 0
  %60 = vmatprep.subr.bf16.mxu0 0
  %61 = vmatpush1.bf16.msra.mxu0 0
  %62 = vmatprep.subr.bf16.mxu0 0
  %63 = vmatpush1.bf16.msra.mxu0 0
  %64 = vmatprep.subr.bf16.mxu0 0
  %65 = vmatpush1.bf16.msra.mxu0 0
  %66 = vmatprep.subr.bf16.mxu0 0
  %67 = vmatpush1.bf16.msra.mxu0 0
  %68 = vmatprep.subr.bf16.mxu0 0
  %69 = vmatpush1.bf16.msra.mxu0 0
  %70 = vmatprep.subr.bf16.mxu0 0
  %71 = vmatpush1.bf16.msra.mxu0 0
  %72 = vmatprep.subr.bf16.mxu0 0
  %73 = vmatpush1.bf16.msra.mxu0 0
  %74 = vmatprep.mubr.bf16.mxu0 0
  %75 = vmatmul.mubr.bf16.gmra.mrb[0].mxu0 %v40
  %v76 = vpop.f32.mrb[0].mxu0
  %v77 = vadd.f32 0.0, %v76
  %v78 = vpop.f32.mrb[0].mxu0
  %v79 = vpop.f32.mrb[0].mxu0
  %v80 = vadd.f32 0.0, %v79
  %v81 = vpop.f32.mrb[0].mxu0
  %82 = vdwg.mxu0
  %v83 = vadd.f32 %v21, %v77
  %v84 = vadd.f32 %v22, %v80
  %85 = vst [vmem:[#allocation2] sm:$0xff] %v83
  %86 = vst [vmem:[#allocation2 + $0x8] sm:$0xff] %v84
  // Predicated region
  $region18: #{seq2seq_forward.8} parent=0 // pred_check
    %p87 = pneg %p15
  $region19: #{seq2seq_forward.8} parent=0 // pred_check_branch
    %89 = sbr.rel (%p87) target = $region21
  $region20: #{seq2seq_forward.8} parent=0 // pred_region
    %v90 = vld [vmem:[#allocation2] sm:$0xff]
    %v91 = vld [vmem:[#allocation2 + $0x8] sm:$0xff]
    %v92 = vld [vmem:[%s2] sm:$0x1]
    %v94 = vlaneseq
    %v95 = vshrl.u32 %v94, 7
    %v96 = vsub.s32 0, %v95
    %v97 = vrot.slane %v92, %v96
    %v99 = vadd.f32 %v90, %v97
    %v100 = vadd.f32 %v91, %v97
    %v101 = vpack.c.bf16 %v100, %v99
    %v103 = vunpack.c.l.b16 %v101
    %v104 = vunpack.c.h.b16 %v101
    %v105 = vpack.c.b16 %v103, %v103
    %v106 = vpack.c.b16 %v104, %v104
    %109 = vst [vmem:[%s3] sm:$0xf] %v105
    %110 = vst [vmem:[%s3 + $0x4] sm:$0xf] %v106
  $region21: #{seq2seq_forward.8} parent=0 // pred_fallthru
    _
  // Predicated region
  $region22: #{seq2seq_forward.8} parent=0 // pred_check
    _
  $region23: #{seq2seq_forward.8} parent=0 // pred_check_branch
    %112 = sbr.rel (0) target = $region25
  $region24: #{seq2seq_forward.8} parent=0 // pred_region
    _
  $region25: #{seq2seq_forward.8} parent=0 // pred_fallthru
    _
  // Predicated region
  $region26: #{seq2seq_forward.8} parent=0 // pred_check
    _
  $region27: #{seq2seq_forward.8} parent=0 // pred_check_branch
    %114 = sbr.rel (0) target = $region29
  $region28: #{seq2seq_forward.8} parent=0 // pred_region
    _
  $region29: #{seq2seq_forward.8} parent=0 // pred_fallthru
    _

// kernel: seq2seq_forward.10
$region0: #{seq2seq_forward.10}
  #allocation0 [shape = 'u32[]', space=smem, size = 0x4, offset = 0x4, fixed_abs, tag = 'smem constant byte address 0x4 - core index']
  #allocation1 [shape = 'u32[144,128]{1,0:T(1,128)}', space=vmem, size = 0x12000, scoped, tag = 'internal scratch']
  #allocation2 [shape = 'f32[16,128]{1,0:T(8,128)}', space=vmem, size = 0x2000, scoped, tag = 'scratch operand']
  %s0 = inlined_call_operand.vmem [shape: bf16[16,32], index: 0, kind: input, shape index: {}]
  %s1 = inlined_call_operand.vmem [shape: bf16[32,128], index: 1, kind: input, shape index: {}]
  %s2 = inlined_call_operand.vmem [shape: f32[1,128], index: 2, kind: input, shape index: {}]
  %s3 = inlined_call_operand.vmem [shape: bf16[16,128], index: 3, kind: output, shape index: {}]
  %s4 = sld [smem:[#allocation0]]
  $region30: #{seq2seq_forward.10} parent=0
    _
  %s6 = ssub.s32 1, %s4
  %s7 = scalar_select 0, %s6, %s4
  // Predicated region
  $region2: #{seq2seq_forward.10} parent=0 // pred_check
    _
  $region3: #{seq2seq_forward.10} parent=0 // pred_check_branch
    %9 = sbr.rel (0) target = $region5
  $region4: #{seq2seq_forward.10} parent=0 // pred_region
    _
  $region5: #{seq2seq_forward.10} parent=0 // pred_fallthru
    _
  // Predicated region
  $region6: #{seq2seq_forward.10} parent=0 // pred_check
    _
  $region7: #{seq2seq_forward.10} parent=0 // pred_check_branch
    %11 = sbr.rel (0) target = $region9
  $region8: #{seq2seq_forward.10} parent=0 // pred_region
    _
  $region9: #{seq2seq_forward.10} parent=0 // pred_fallthru
    _
  // Predicated region
  $region10: #{seq2seq_forward.10} parent=0 // pred_check
    _
  $region11: #{seq2seq_forward.10} parent=0 // pred_check_branch
    %13 = sbr.rel (0) target = $region13
  $region12: #{seq2seq_forward.10} parent=0 // pred_region
    _
  $region13: #{seq2seq_forward.10} parent=0 // pred_fallthru
    _
  %p15 = scmp.eq.s32.totalorder 0, 0
  // Predicated region
  $region14: #{seq2seq_forward.10} parent=0 // pred_check
    %p16 = pneg %p15
  $region15: #{seq2seq_forward.10} parent=0 // pred_check_branch
    %18 = sbr.rel (%p16) target = $region17
  $region16: #{seq2seq_forward.10} parent=0 // pred_region
    %19 = vst [vmem:[#allocation2] sm:$0xff] 0.0
    %20 = vst [vmem:[#allocation2 + $0x8] sm:$0xff] 0.0
  $region17: #{seq2seq_forward.10} parent=0 // pred_fallthru
    _
  %v21 = vld [vmem:[#allocation2] sm:$0xff]
  %v22 = vld [vmem:[#allocation2 + $0x8] sm:$0xff]
  %v23 = vld [vmem:[%s0] sm:$0xf]
  %v24 = vld [vmem:[%s0 + $0x4] sm:$0xf]
  %v25 = vld [vmem:[%s1] sm:$0xf]
  %v26 = vld [vmem:[%s1 + $0x4] sm:$0xf]
  %v27 = vld [vmem:[%s1 + $0x8] sm:$0xf]
  %v28 = vld [vmem:[%s1 + $0xc] sm:$0xf]
  %v31 = vunpack.c.l.b16 %v23
  %v32 = vunpack.c.l.b16 %v24
  %v33 = vpack.c.b16 %v32, %v31
  %v38 = vunpack.c.l.b16 %v25
  %v39 = vunpack.c.l.b16 %v26
  %v40 = vunpack.c.l.b16 %v27
  %v41 = vunpack.c.l.b16 %v28
  %v42 = vpack.c.b16 %v39, %v38
  %v43 = vpack.c.b16 %v41, %v40
  %vm46 = vcmask 261120
  %v48 = vsel %vm46, %v33, 0
  %50 = vmatprep.subr.bf16.mxu0 0
  %51 = vmatpush1.bf16.msra.mxu0 %v42
  %52 = vmatprep.subr.bf16.mxu0 0
  %53 = vmatpush1.bf16.msra.mxu0 %v43
  %54 = vmatprep.subr.bf16.mxu0 0
  %55 = vmatpush1.bf16.msra.mxu0 0
  %56 = vmatprep.subr.bf16.mxu0 0
  %57 = vmatpush1.bf16.msra.mxu0 0
  %58 = vmatprep.subr.bf16.mxu0 0
  %59 = vmatpush1.bf16.msra.mxu0 0
  %60 = vmatprep.subr.bf16.mxu0 0
  %61 = vmatpush1.bf16.msra.mxu0 0
  %62 = vmatprep.subr.bf16.mxu0 0
  %63 = vmatpush1.bf16.msra.mxu0 0
  %64 = vmatprep.subr.bf16.mxu0 0
  %65 = vmatpush1.bf16.msra.mxu0 0
  %66 = vmatprep.subr.bf16.mxu0 0
  %67 = vmatpush1.bf16.msra.mxu0 0
  %68 = vmatprep.subr.bf16.mxu0 0
  %69 = vmatpush1.bf16.msra.mxu0 0
  %70 = vmatprep.subr.bf16.mxu0 0
  %71 = vmatpush1.bf16.msra.mxu0 0
  %72 = vmatprep.subr.bf16.mxu0 0
  %73 = vmatpush1.bf16.msra.mxu0 0
  %74 = vmatprep.subr.bf16.mxu0 0
  %75 = vmatpush1.bf16.msra.mxu0 0
  %76 = vmatprep.subr.bf16.mxu0 0
  %77 = vmatpush1.bf16.msra.mxu0 0
  %78 = vmatprep.subr.bf16.mxu0 0
  %79 = vmatpush1.bf16.msra.mxu0 0
  %80 = vmatprep.subr.bf16.mxu0 0
  %81 = vmatpush1.bf16.msra.mxu0 0
  %82 = vmatprep.mubr.bf16.mxu0 0
  %83 = vmatmul.mubr.bf16.gmra.mrb[0].mxu0 %v48
  %v84 = vpop.f32.mrb[0].mxu0
  %v85 = vadd.f32 0.0, %v84
  %v86 = vpop.f32.mrb[0].mxu0
  %v87 = vpop.f32.mrb[0].mxu0
  %v88 = vadd.f32 0.0, %v87
  %v89 = vpop.f32.mrb[0].mxu0
  %90 = vdwg.mxu0
  %v91 = vadd.f32 %v21, %v85
  %v92 = vadd.f32 %v22, %v88
  %93 = vst [vmem:[#allocation2] sm:$0xff] %v91
  %94 = vst [vmem:[#allocation2 + $0x8] sm:$0xff] %v92
  // Predicated region
  $region18: #{seq2seq_forward.10} parent=0 // pred_check
    %p95 = pneg %p15
  $region19: #{seq2seq_forward.10} parent=0 // pred_check_branch
    %97 = sbr.rel (%p95) target = $region21
  $region20: #{seq2seq_forward.10} parent=0 // pred_region
    %v98 = vld [vmem:[#allocation2] sm:$0xff]
    %v99 = vld [vmem:[#allocation2 + $0x8] sm:$0xff]
    %v100 = vld [vmem:[%s2] sm:$0x1]
    %v102 = vlaneseq
    %v103 = vshrl.u32 %v102, 7
    %v104 = vsub.s32 0, %v103
    %v105 = vrot.slane %v100, %v104
    %v107 = vadd.f32 %v98, %v105
    %v108 = vadd.f32 %v99, %v105
    %v109 = vpack.c.bf16 %v108, %v107
    %v111 = vunpack.c.l.b16 %v109
    %v112 = vunpack.c.h.b16 %v109
    %v113 = vpack.c.b16 %v111, %v111
    %v114 = vpack.c.b16 %v112, %v112
    %117 = vst [vmem:[%s3] sm:$0xf] %v113
    %118 = vst [vmem:[%s3 + $0x4] sm:$0xf] %v114
  $region21: #{seq2seq_forward.10} parent=0 // pred_fallthru
    _
  // Predicated region
  $region22: #{seq2seq_forward.10} parent=0 // pred_check
    _
  $region23: #{seq2seq_forward.10} parent=0 // pred_check_branch
    %120 = sbr.rel (0) target = $region25
  $region24: #{seq2seq_forward.10} parent=0 // pred_region
    _
  $region25: #{seq2seq_forward.10} parent=0 // pred_fallthru
    _
  // Predicated region
  $region26: #{seq2seq_forward.10} parent=0 // pred_check
    _
  $region27: #{seq2seq_forward.10} parent=0 // pred_check_branch
    %122 = sbr.rel (0) target = $region29
  $region28: #{seq2seq_forward.10} parent=0 // pred_region
    _
  $region29: #{seq2seq_forward.10} parent=0 // pred_fallthru
    _

// kernel: seq2seq_forward.13
$region0: #{seq2seq_forward.13}
  #allocation0 [shape = 'u32[]', space=smem, size = 0x4, offset = 0x4, fixed_abs, tag = 'smem constant byte address 0x4 - core index']
  #allocation1 [shape = 'u32[144,128]{1,0:T(1,128)}', space=vmem, size = 0x12000, scoped, tag = 'internal scratch']
  #allocation2 [shape = 'f32[2,128]{1,0:T(2,128)}', space=vmem, size = 0x400, scoped, tag = 'scratch operand']
  %s0 = inlined_call_operand.vmem [shape: bf16[2,32], index: 0, kind: input, shape index: {}]
  %s1 = inlined_call_operand.vmem [shape: bf16[32,128], index: 1, kind: input, shape index: {}]
  %s2 = inlined_call_operand.vmem [shape: f32[1,128], index: 2, kind: input, shape index: {}]
  %s3 = inlined_call_operand.vmem [shape: f32[2,128], index: 3, kind: output, shape index: {}]
  %s4 = sld [smem:[#allocation0]]
  $region30: #{seq2seq_forward.13} parent=0
    _
  %s6 = ssub.s32 1, %s4
  %s7 = scalar_select 0, %s6, %s4
  // Predicated region
  $region2: #{seq2seq_forward.13} parent=0 // pred_check
    _
  $region3: #{seq2seq_forward.13} parent=0 // pred_check_branch
    %9 = sbr.rel (0) target = $region5
  $region4: #{seq2seq_forward.13} parent=0 // pred_region
    _
  $region5: #{seq2seq_forward.13} parent=0 // pred_fallthru
    _
  // Predicated region
  $region6: #{seq2seq_forward.13} parent=0 // pred_check
    _
  $region7: #{seq2seq_forward.13} parent=0 // pred_check_branch
    %11 = sbr.rel (0) target = $region9
  $region8: #{seq2seq_forward.13} parent=0 // pred_region
    _
  $region9: #{seq2seq_forward.13} parent=0 // pred_fallthru
    _
  // Predicated region
  $region10: #{seq2seq_forward.13} parent=0 // pred_check
    _
  $region11: #{seq2seq_forward.13} parent=0 // pred_check_branch
    %13 = sbr.rel (0) target = $region13
  $region12: #{seq2seq_forward.13} parent=0 // pred_region
    _
  $region13: #{seq2seq_forward.13} parent=0 // pred_fallthru
    _
  %p15 = scmp.eq.s32.totalorder 0, 0
  // Predicated region
  $region14: #{seq2seq_forward.13} parent=0 // pred_check
    %p16 = pneg %p15
  $region15: #{seq2seq_forward.13} parent=0 // pred_check_branch
    %18 = sbr.rel (%p16) target = $region17
  $region16: #{seq2seq_forward.13} parent=0 // pred_region
    %19 = vst [vmem:[#allocation2] sm:$0x3] 0.0
  $region17: #{seq2seq_forward.13} parent=0 // pred_fallthru
    _
  %v20 = vld [vmem:[#allocation2] sm:$0x3]
  %v21 = vld [vmem:[%s0] sm:$0x1]
  %v22 = vld [vmem:[%s1] sm:$0xf]
  %v23 = vld [vmem:[%s1 + $0x4] sm:$0xf]
  %v24 = vld [vmem:[%s1 + $0x8] sm:$0xf]
  %v25 = vld [vmem:[%s1 + $0xc] sm:$0xf]
  %v30 = vunpack.c.l.b16 %v22
  %v31 = vunpack.c.l.b16 %v23
  %v32 = vunpack.c.l.b16 %v24
  %v33 = vunpack.c.l.b16 %v25
  %v34 = vpack.c.b16 %v31, %v30
  %v35 = vpack.c.b16 %v33, %v32
  %vm38 = vcmask 261120
  %v40 = vsel %vm38, %v21, 0
  %42 = vmatprep.subr.bf16.mxu0 0
  %43 = vmatpush1.bf16.msra.mxu0 %v34
  %44 = vmatprep.subr.bf16.mxu0 0
  %45 = vmatpush1.bf16.msra.mxu0 %v35
  %46 = vmatprep.subr.bf16.mxu0 0
  %47 = vmatpush1.bf16.msra.mxu0 0
  %48 = vmatprep.subr.bf16.mxu0 0
  %49 = vmatpush1.bf16.msra.mxu0 0
  %50 = vmatprep.subr.bf16.mxu0 0
  %51 = vmatpush1.bf16.msra.mxu0 0
  %52 = vmatprep.subr.bf16.mxu0 0
  %53 = vmatpush1.bf16.msra.mxu0 0
  %54 = vmatprep.subr.bf16.mxu0 0
  %55 = vmatpush1.bf16.msra.mxu0 0
  %56 = vmatprep.subr.bf16.mxu0 0
  %57 = vmatpush1.bf16.msra.mxu0 0
  %58 = vmatprep.subr.bf16.mxu0 0
  %59 = vmatpush1.bf16.msra.mxu0 0
  %60 = vmatprep.subr.bf16.mxu0 0
  %61 = vmatpush1.bf16.msra.mxu0 0
  %62 = vmatprep.subr.bf16.mxu0 0
  %63 = vmatpush1.bf16.msra.mxu0 0
  %64 = vmatprep.subr.bf16.mxu0 0
  %65 = vmatpush1.bf16.msra.mxu0 0
  %66 = vmatprep.subr.bf16.mxu0 0
  %67 = vmatpush1.bf16.msra.mxu0 0
  %68 = vmatprep.subr.bf16.mxu0 0
  %69 = vmatpush1.bf16.msra.mxu0 0
  %70 = vmatprep.subr.bf16.mxu0 0
  %71 = vmatpush1.bf16.msra.mxu0 0
  %72 = vmatprep.subr.bf16.mxu0 0
  %73 = vmatpush1.bf16.msra.mxu0 0
  %74 = vmatprep.mubr.bf16.mxu0 0
  %75 = vmatmul.mubr.bf16.gmra.mrb[0].mxu0 %v40
  %v76 = vpop.f32.mrb[0].mxu0
  %v77 = vadd.f32 0.0, %v76
  %v78 = vpop.f32.mrb[0].mxu0
  %v79 = vpop.f32.mrb[0].mxu0
  %v80 = vpop.f32.mrb[0].mxu0
  %81 = vdwg.mxu0
  %v82 = vadd.f32 %v20, %v77
  %83 = vst [vmem:[#allocation2] sm:$0x3] %v82
  // Predicated region
  $region18: #{seq2seq_forward.13} parent=0 // pred_check
    %p84 = pneg %p15
  $region19: #{seq2seq_forward.13} parent=0 // pred_check_branch
    %86 = sbr.rel (%p84) target = $region21
  $region20: #{seq2seq_forward.13} parent=0 // pred_region
    %v87 = vld [vmem:[#allocation2] sm:$0x3]
    %v88 = vld [vmem:[%s2] sm:$0x1]
    %v90 = vlaneseq
    %v91 = vshrl.u32 %v90, 7
    %v92 = vsub.s32 0, %v91
    %v93 = vrot.slane %v88, %v92
    %v95 = vadd.f32 %v87, %v93
    %96 = vst [vmem:[%s3] sm:$0x3] %v95
  $region21: #{seq2seq_forward.13} parent=0 // pred_fallthru
    _
  // Predicated region
  $region22: #{seq2seq_forward.13} parent=0 // pred_check
    _
  $region23: #{seq2seq_forward.13} parent=0 // pred_check_branch
    %98 = sbr.rel (0) target = $region25
  $region24: #{seq2seq_forward.13} parent=0 // pred_region
    _
  $region25: #{seq2seq_forward.13} parent=0 // pred_fallthru
    _
  // Predicated region
  $region26: #{seq2seq_forward.13} parent=0 // pred_check
    _
  $region27: #{seq2seq_forward.13} parent=0 // pred_check_branch
    %100 = sbr.rel (0) target = $region29
  $region28: #{seq2seq_forward.13} parent=0 // pred_region
    _
  $region29: #{seq2seq_forward.13} parent=0 // pred_fallthru
    _

// kernel: seq2seq_forward.11
$region0: #{seq2seq_forward.11}
  #allocation0 [shape = 'u32[]', space=smem, size = 0x4, offset = 0x4, fixed_abs, tag = 'smem constant byte address 0x4 - core index']
  #allocation1 [shape = 'u32[144,128]{1,0:T(1,128)}', space=vmem, size = 0x12000, scoped, tag = 'internal scratch']
  #allocation2 [shape = 'f32[2,32]{1,0:T(2,128)}', space=vmem, size = 0x400, scoped, tag = 'scratch operand']
  %s0 = inlined_call_operand.vmem [shape: s32[2,1], index: 0, kind: input, shape index: {}]
  %s1 = inlined_call_operand.vmem [shape: bf16[8,2,128], index: 1, kind: input, shape index: {}]
  %s2 = inlined_call_operand.vmem [shape: bf16[32,128], index: 2, kind: input, shape index: {}]
  %s3 = inlined_call_operand.hbm [shape: bf16[8,2,32], index: 3, kind: output, shape index: {0}]
  %s4 = inlined_call_operand.vmem [shape: f32[2,32], index: 4, kind: output, shape index: {1}]
  %5 = xla_tuple %s3, %s4
  %s6 = sld [smem:[#allocation0]]
  $region34: #{seq2seq_forward.11} parent=0
    _
  %s8 = ssub.s32 1, %s6
  %s9 = scalar_select 0, %s8, %s6
  $region1: #{seq2seq_forward.11} parent=0
    #allocation3 [shape = 'u8[4096]{0}', space=vmem, size = 0x1000, scoped, tag = 'output window, operand 0, single buffered']
    #allocation4 [shape = 's32[1]{0}', space=sflag, size = 0x4, scoped, tag = 'scoped memory for seq2seq_forward.11']
    %10 = vsyncpa [#allocation4], 0
    // Predicated region
    $region2: #{seq2seq_forward.11} parent=1 // pred_check
      _
    $region3: #{seq2seq_forward.11} parent=1 // pred_check_branch
      %12 = sbr.rel (0) target = $region5
    $region4: #{seq2seq_forward.11} parent=1 // pred_region
      _
    $region5: #{seq2seq_forward.11} parent=1 // pred_fallthru
      _
    // Predicated region
    $region6: #{seq2seq_forward.11} parent=1 // pred_check
      _
    $region7: #{seq2seq_forward.11} parent=1 // pred_check_branch
      %14 = sbr.rel (0) target = $region9
    $region8: #{seq2seq_forward.11} parent=1 // pred_region
      _
    $region9: #{seq2seq_forward.11} parent=1 // pred_fallthru
      _
    // Predicated region
    $region10: #{seq2seq_forward.11} parent=1 // pred_check
      _
    $region11: #{seq2seq_forward.11} parent=1 // pred_check_branch
      %16 = sbr.rel (0) target = $region13
    $region12: #{seq2seq_forward.11} parent=1 // pred_region
      _
    $region13: #{seq2seq_forward.11} parent=1 // pred_fallthru
      _
    %p18 = scmp.eq.s32.totalorder 0, 0
    // Predicated region
    $region14: #{seq2seq_forward.11} parent=1 // pred_check
      %p19 = pneg %p18
    $region15: #{seq2seq_forward.11} parent=1 // pred_check_branch
      %21 = sbr.rel (%p19) target = $region17
    $region16: #{seq2seq_forward.11} parent=1 // pred_region
      %vm22 = vcmask 254976
      %23 = vst.msk [vmem:[%s4] sm:$0x3] %vm22, 0.0
      %24 = vst.msk [vmem:[#allocation2] sm:$0x3] %vm22, 0.0
    $region17: #{seq2seq_forward.11} parent=1 // pred_fallthru
      _
    %v25 = vld [vmem:[%s0] sm:$0x3]
    %v26 = vld [vmem:[%s2] sm:$0xf]
    %v27 = vld [vmem:[%s2 + $0x4] sm:$0xf]
    %v28 = vld [vmem:[%s2 + $0x8] sm:$0xf]
    %v29 = vld [vmem:[%s2 + $0xc] sm:$0xf]
    %s30 = smul.u32 0, 8
    %v31 = vstv %s30
    %vm32 = vcmp.lt.s32.totalorder %v31, %v25
    %v33 = vsel %vm32, 1, 0
    %v34 = vcvt.s32.f32 %v33
    %s35 = sadd.s32 %s30, 1
    %v36 = vstv %s35
    %vm37 = vcmp.lt.s32.totalorder %v36, %v25
    %v38 = vsel %vm37, 1, 0
    %v39 = vcvt.s32.f32 %v38
    %s40 = sadd.s32 %s30, 2
    %v41 = vstv %s40
    %vm42 = vcmp.lt.s32.totalorder %v41, %v25
    %v43 = vsel %vm42, 1, 0
    %v44 = vcvt.s32.f32 %v43
    %s45 = sadd.s32 %s30, 3
    %v46 = vstv %s45
    %vm47 = vcmp.lt.s32.totalorder %v46, %v25
    %v48 = vsel %vm47, 1, 0
    %v49 = vcvt.s32.f32 %v48
    %s50 = sadd.s32 %s30, 4
    %v51 = vstv %s50
    %vm52 = vcmp.lt.s32.totalorder %v51, %v25
    %v53 = vsel %vm52, 1, 0
    %v54 = vcvt.s32.f32 %v53
    %s55 = sadd.s32 %s30, 5
    %v56 = vstv %s55
    %vm57 = vcmp.lt.s32.totalorder %v56, %v25
    %v58 = vsel %vm57, 1, 0
    %v59 = vcvt.s32.f32 %v58
    %s60 = sadd.s32 %s30, 6
    %v61 = vstv %s60
    %vm62 = vcmp.lt.s32.totalorder %v61, %v25
    %v63 = vsel %vm62, 1, 0
    %v64 = vcvt.s32.f32 %v63
    %s65 = sadd.s32 %s30, 7
    %v66 = vstv %s65
    %vm67 = vcmp.lt.s32.totalorder %v66, %v25
    %v68 = vsel %vm67, 1, 0
    %v69 = vcvt.s32.f32 %v68
    %v70 = vld [vmem:[%s4] sm:$0x3]
    %v71 = vld [vmem:[#allocation2] sm:$0x3]
    %v72 = vld [vmem:[%s1] sm:$0x1]
    %v73 = vpack.c.bf16 %v70, %v70
    %v78 = vunpack.c.l.b16 %v26
    %v79 = vunpack.c.l.b16 %v27
    %v80 = vunpack.c.l.b16 %v28
    %v81 = vunpack.c.l.b16 %v29
    %v82 = vpack.c.b16 %v79, %v78
    %v83 = vpack.c.b16 %v81, %v80
    %vm86 = vcmask 261120
    %v88 = vsel %vm86, %v73, 0
    %90 = vmatprep.subr.bf16.mxu0 0
    %91 = vmatpush1.bf16.msra.mxu0 %v82
    %92 = vmatprep.subr.bf16.mxu0 0
    %93 = vmatpush1.bf16.msra.mxu0 %v83
    %94 = vmatprep.subr.bf16.mxu0 0
    %95 = vmatpush1.bf16.msra.mxu0 0
    %96 = vmatprep.subr.bf16.mxu0 0
    %97 = vmatpush1.bf16.msra.mxu0 0
    %98 = vmatprep.subr.bf16.mxu0 0
    %99 = vmatpush1.bf16.msra.mxu0 0
    %100 = vmatprep.subr.bf16.mxu0 0
    %101 = vmatpush1.bf16.msra.mxu0 0
    %102 = vmatprep.subr.bf16.mxu0 0
    %103 = vmatpush1.bf16.msra.mxu0 0
    %104 = vmatprep.subr.bf16.mxu0 0
    %105 = vmatpush1.bf16.msra.mxu0 0
    %106 = vmatprep.subr.bf16.mxu0 0
    %107 = vmatpush1.bf16.msra.mxu0 0
    %108 = vmatprep.subr.bf16.mxu0 0
    %109 = vmatpush1.bf16.msra.mxu0 0
    %110 = vmatprep.subr.bf16.mxu0 0
    %111 = vmatpush1.bf16.msra.mxu0 0
    %112 = vmatprep.subr.bf16.mxu0 0
    %113 = vmatpush1.bf16.msra.mxu0 0
    %114 = vmatprep.subr.bf16.mxu0 0
    %115 = vmatpush1.bf16.msra.mxu0 0
    %116 = vmatprep.subr.bf16.mxu0 0
    %117 = vmatpush1.bf16.msra.mxu0 0
    %118 = vmatprep.subr.bf16.mxu0 0
    %119 = vmatpush1.bf16.msra.mxu0 0
    %120 = vmatprep.subr.bf16.mxu0 0
    %121 = vmatpush1.bf16.msra.mxu0 0
    %122 = vmatprep.mubr.bf16.mxu0 0
    %123 = vmatmul.mubr.bf16.gmra.mrb[0].mxu0 %v88
    %v124 = vpop.f32.mrb[0].mxu0
    %v125 = vadd.f32 0.0, %v124
    %v126 = vpop.f32.mrb[0].mxu0
    %v127 = vpop.f32.mrb[0].mxu0
    %v128 = vpop.f32.mrb[0].mxu0
    %129 = vdwg.mxu0
    %v130 = vunpack.c.l.bf16 %v72
    %v131 = vadd.f32 %v130, %v125
    %v132 = vmul.f32 %v131, 0.5
    %v133 = vtanh.pop %v132
    %v134 = vadd.f32 %v133, 1.0
    %v135 = vmul.f32 %v134, 0.5
    %v136 = vtanh.pop %v131
    %v139 = vunpack.c.l.s4 1983009808
    %v140 = vunpack.c.0.s8 %v139
    %v141 = vlaneseq
    %v142 = vshrl.u32 %v141, 7
    %v143 = vsub.s32 %v140, %v142
    %v144 = vrot.slane %v71, %v143
    %145 = vrot.lane.b32.xlu0 %v144, 32
    %v146 = vpop.permute.xlu0 %145
    %v148 = vmul.f32 %v135, %v146
    %150 = vrot.lane.b32.xlu0 %v136, 64
    %v151 = vpop.permute.xlu0 %150
    %v153 = vmul.f32 %v135, %v151
    %155 = vrot.lane.b32.xlu0 %v153, 32
    %v156 = vpop.permute.xlu0 %155
    %v158 = vadd.f32 %v148, %v156
    %v159 = vtanh.pop %v158
    %161 = vrot.lane.b32.xlu0 %v159, 64
    %v162 = vpop.permute.xlu0 %161
    %v164 = vmul.f32 %v135, %v162
    %166 = vset.pattern.permute.xlu0 0
    %167 = vperm.xlu0 %166, %v34
    %v168 = vpop.permute.xlu0 %167
    %v172 = vunpack.c.l.s4 1983009808
    %v173 = vunpack.c.0.s8 %v172
    %v174 = vlaneseq
    %v175 = vshrl.u32 %v174, 7
    %v176 = vsub.s32 %v173, %v175
    %v177 = vrot.slane %v164, %v176
    %178 = vrot.lane.b32.xlu0 %v177, 32
    %v179 = vpop.permute.xlu0 %178
    %v181 = vmul.f32 %v168, %v179
    %v182 = vsub.f32 1.0, %v34
    %184 = vset.pattern.permute.xlu0 0
    %185 = vperm.xlu0 %184, %v182
    %v186 = vpop.permute.xlu0 %185
    %v188 = vmul.f32 %v186, %v70
    %v189 = vadd.f32 %v181, %v188
    %v192 = vunpack.c.l.s4 1983009808
    %v193 = vunpack.c.0.s8 %v192
    %v194 = vlaneseq
    %v195 = vshrl.u32 %v194, 7
    %v196 = vsub.s32 %v193, %v195
    %v197 = vrot.slane %v158, %v196
    %198 = vrot.lane.b32.xlu0 %v197, 96
    %v199 = vpop.permute.xlu0 %198
    %v201 = vmul.f32 %v168, %v199
    %v202 = vmul.f32 %v186, %v71
    %v203 = vadd.f32 %v201, %v202
    %vm204 = vcmask 254976
    %205 = vst.msk [vmem:[%s4] sm:$0x3] %vm204, %v189
    %206 = vst.msk [vmem:[#allocation2] sm:$0x3] %vm204, %v203
    %v207 = vmul.f32 %v189, %v168
    %v208 = vpack.c.bf16 %v207, %v207
    %vm209 = vcmask 253952
    %210 = vst.msk [vmem:[#allocation3] sm:$0x1] %vm209, %v208
    %v211 = vld [vmem:[%s4] sm:$0x3]
    %v212 = vld [vmem:[#allocation2] sm:$0x3]
    %s213 = scalar_lea.vmem %s1, 1
    %v214 = vld [vmem:[%s213] sm:$0x1]
    %v215 = vpack.c.bf16 %v211, %v211
    %v217 = vsel %vm86, %v215, 0
    %219 = vmatprep.subr.bf16.mxu0 0
    %220 = vmatpush1.bf16.msra.mxu0 %v82
    %221 = vmatprep.subr.bf16.mxu0 0
    %222 = vmatpush1.bf16.msra.mxu0 %v83
    %223 = vmatprep.subr.bf16.mxu0 0
    %224 = vmatpush1.bf16.msra.mxu0 0
    %225 = vmatprep.subr.bf16.mxu0 0
    %226 = vmatpush1.bf16.msra.mxu0 0
    %227 = vmatprep.subr.bf16.mxu0 0
    %228 = vmatpush1.bf16.msra.mxu0 0
    %229 = vmatprep.subr.bf16.mxu0 0
    %230 = vmatpush1.bf16.msra.mxu0 0
    %231 = vmatprep.subr.bf16.mxu0 0
    %232 = vmatpush1.bf16.msra.mxu0 0
    %233 = vmatprep.subr.bf16.mxu0 0
    %234 = vmatpush1.bf16.msra.mxu0 0
    %235 = vmatprep.subr.bf16.mxu0 0
    %236 = vmatpush1.bf16.msra.mxu0 0
    %237 = vmatprep.subr.bf16.mxu0 0
    %238 = vmatpush1.bf16.msra.mxu0 0
    %239 = vmatprep.subr.bf16.mxu0 0
    %240 = vmatpush1.bf16.msra.mxu0 0
    %241 = vmatprep.subr.bf16.mxu0 0
    %242 = vmatpush1.bf16.msra.mxu0 0
    %243 = vmatprep.subr.bf16.mxu0 0
    %244 = vmatpush1.bf16.msra.mxu0 0
    %245 = vmatprep.subr.bf16.mxu0 0
    %246 = vmatpush1.bf16.msra.mxu0 0
    %247 = vmatprep.subr.bf16.mxu0 0
    %248 = vmatpush1.bf16.msra.mxu0 0
    %249 = vmatprep.subr.bf16.mxu0 0
    %250 = vmatpush1.bf16.msra.mxu0 0
    %251 = vmatprep.mubr.bf16.mxu0 0
    %252 = vmatmul.mubr.bf16.gmra.mrb[0].mxu0 %v217
    %v253 = vpop.f32.mrb[0].mxu0
    %v254 = vadd.f32 0.0, %v253
    %v255 = vpop.f32.mrb[0].mxu0
    %v256 = vpop.f32.mrb[0].mxu0
    %v257 = vpop.f32.mrb[0].mxu0
    %258 = vdwg.mxu0
    %v259 = vunpack.c.l.bf16 %v214
    %v260 = vadd.f32 %v259, %v254
    %v261 = vmul.f32 %v260, 0.5
    %v262 = vtanh.pop %v261
    %v263 = vadd.f32 %v262, 1.0
    %v264 = vmul.f32 %v263, 0.5
    %v265 = vtanh.pop %v260
    %v268 = vunpack.c.l.s4 1983009808
    %v269 = vunpack.c.0.s8 %v268
    %v270 = vlaneseq
    %v271 = vshrl.u32 %v270, 7
    %v272 = vsub.s32 %v269, %v271
    %v273 = vrot.slane %v212, %v272
    %274 = vrot.lane.b32.xlu0 %v273, 32
    %v275 = vpop.permute.xlu0 %274
    %v277 = vmul.f32 %v264, %v275
    %279 = vrot.lane.b32.xlu0 %v265, 64
    %v280 = vpop.permute.xlu0 %279
    %v282 = vmul.f32 %v264, %v280
    %284 = vrot.lane.b32.xlu0 %v282, 32
    %v285 = vpop.permute.xlu0 %284
    %v287 = vadd.f32 %v277, %v285
    %v288 = vtanh.pop %v287
    %290 = vrot.lane.b32.xlu0 %v288, 64
    %v291 = vpop.permute.xlu0 %290
    %v293 = vmul.f32 %v264, %v291
    %295 = vset.pattern.permute.xlu0 0
    %296 = vperm.xlu0 %295, %v39
    %v297 = vpop.permute.xlu0 %296
    %v301 = vunpack.c.l.s4 1983009808
    %v302 = vunpack.c.0.s8 %v301
    %v303 = vlaneseq
    %v304 = vshrl.u32 %v303, 7
    %v305 = vsub.s32 %v302, %v304
    %v306 = vrot.slane %v293, %v305
    %307 = vrot.lane.b32.xlu0 %v306, 32
    %v308 = vpop.permute.xlu0 %307
    %v310 = vmul.f32 %v297, %v308
    %v311 = vsub.f32 1.0, %v39
    %313 = vset.pattern.permute.xlu0 0
    %314 = vperm.xlu0 %313, %v311
    %v315 = vpop.permute.xlu0 %314
    %v317 = vmul.f32 %v315, %v211
    %v318 = vadd.f32 %v310, %v317
    %v321 = vunpack.c.l.s4 1983009808
    %v322 = vunpack.c.0.s8 %v321
    %v323 = vlaneseq
    %v324 = vshrl.u32 %v323, 7
    %v325 = vsub.s32 %v322, %v324
    %v326 = vrot.slane %v287, %v325
    %327 = vrot.lane.b32.xlu0 %v326, 96
    %v328 = vpop.permute.xlu0 %327
    %v330 = vmul.f32 %v297, %v328
    %v331 = vmul.f32 %v315, %v212
    %v332 = vadd.f32 %v330, %v331
    %333 = vst.msk [vmem:[%s4] sm:$0x3] %vm204, %v318
    %334 = vst.msk [vmem:[#allocation2] sm:$0x3] %vm204, %v332
    %v335 = vmul.f32 %v318, %v297
    %v336 = vpack.c.bf16 %v335, %v335
    %s337 = scalar_lea.vmem [#allocation3], 1
    %338 = vst.msk [vmem:[%s337] sm:$0x1] %vm209, %v336
    %v339 = vld [vmem:[%s4] sm:$0x3]
    %v340 = vld [vmem:[#allocation2] sm:$0x3]
    %s341 = scalar_lea.vmem %s1, 2
    %v342 = vld [vmem:[%s341] sm:$0x1]
    %v343 = vpack.c.bf16 %v339, %v339
    %v345 = vsel %vm86, %v343, 0
    %347 = vmatprep.subr.bf16.mxu0 0
    %348 = vmatpush1.bf16.msra.mxu0 %v82
    %349 = vmatprep.subr.bf16.mxu0 0
    %350 = vmatpush1.bf16.msra.mxu0 %v83
    %351 = vmatprep.subr.bf16.mxu0 0
    %352 = vmatpush1.bf16.msra.mxu0 0
    %353 = vmatprep.subr.bf16.mxu0 0
    %354 = vmatpush1.bf16.msra.mxu0 0
    %355 = vmatprep.subr.bf16.mxu0 0
    %356 = vmatpush1.bf16.msra.mxu0 0
    %357 = vmatprep.subr.bf16.mxu0 0
    %358 = vmatpush1.bf16.msra.mxu0 0
    %359 = vmatprep.subr.bf16.mxu0 0
    %360 = vmatpush1.bf16.msra.mxu0 0
    %361 = vmatprep.subr.bf16.mxu0 0
    %362 = vmatpush1.bf16.msra.mxu0 0
    %363 = vmatprep.subr.bf16.mxu0 0
    %364 = vmatpush1.bf16.msra.mxu0 0
    %365 = vmatprep.subr.bf16.mxu0 0
    %366 = vmatpush1.bf16.msra.mxu0 0
    %367 = vmatprep.subr.bf16.mxu0 0
    %368 = vmatpush1.bf16.msra.mxu0 0
    %369 = vmatprep.subr.bf16.mxu0 0
    %370 = vmatpush1.bf16.msra.mxu0 0
    %371 = vmatprep.subr.bf16.mxu0 0
    %372 = vmatpush1.bf16.msra.mxu0 0
    %373 = vmatprep.subr.bf16.mxu0 0
    %374 = vmatpush1.bf16.msra.mxu0 0
    %375 = vmatprep.subr.bf16.mxu0 0
    %376 = vmatpush1.bf16.msra.mxu0 0
    %377 = vmatprep.subr.bf16.mxu0 0
    %378 = vmatpush1.bf16.msra.mxu0 0
    %379 = vmatprep.mubr.bf16.mxu0 0
    %380 = vmatmul.mubr.bf16.gmra.mrb[0].mxu0 %v345
    %v381 = vpop.f32.mrb[0].mxu0
    %v382 = vadd.f32 0.0, %v381
    %v383 = vpop.f32.mrb[0].mxu0
    %v384 = vpop.f32.mrb[0].mxu0
    %v385 = vpop.f32.mrb[0].mxu0
    %386 = vdwg.mxu0
    %v387 = vunpack.c.l.bf16 %v342
    %v388 = vadd.f32 %v387, %v382
    %v389 = vmul.f32 %v388, 0.5
    %v390 = vtanh.pop %v389
    %v391 = vadd.f32 %v390, 1.0
    %v392 = vmul.f32 %v391, 0.5
    %v393 = vtanh.pop %v388
    %v396 = vunpack.c.l.s4 1983009808
    %v397 = vunpack.c.0.s8 %v396
    %v398 = vlaneseq
    %v399 = vshrl.u32 %v398, 7
    %v400 = vsub.s32 %v397, %v399
    %v401 = vrot.slane %v340, %v400
    %402 = vrot.lane.b32.xlu0 %v401, 32
    %v403 = vpop.permute.xlu0 %402
    %v405 = vmul.f32 %v392, %v403
    %407 = vrot.lane.b32.xlu0 %v393, 64
    %v408 = vpop.permute.xlu0 %407
    %v410 = vmul.f32 %v392, %v408
    %412 = vrot.lane.b32.xlu0 %v410, 32
    %v413 = vpop.permute.xlu0 %412
    %v415 = vadd.f32 %v405, %v413
    %v416 = vtanh.pop %v415
    %418 = vrot.lane.b32.xlu0 %v416, 64
    %v419 = vpop.permute.xlu0 %418
    %v421 = vmul.f32 %v392, %v419
    %423 = vset.pattern.permute.xlu0 0
    %424 = vperm.xlu0 %423, %v44
    %v425 = vpop.permute.xlu0 %424
    %v429 = vunpack.c.l.s4 1983009808
    %v430 = vunpack.c.0.s8 %v429
    %v431 = vlaneseq
    %v432 = vshrl.u32 %v431, 7
    %v433 = vsub.s32 %v430, %v432
    %v434 = vrot.slane %v421, %v433
    %435 = vrot.lane.b32.xlu0 %v434, 32
    %v436 = vpop.permute.xlu0 %435
    %v438 = vmul.f32 %v425, %v436
    %v439 = vsub.f32 1.0, %v44
    %441 = vset.pattern.permute.xlu0 0
    %442 = vperm.xlu0 %441, %v439
    %v443 = vpop.permute.xlu0 %442
    %v445 = vmul.f32 %v443, %v339
    %v446 = vadd.f32 %v438, %v445
    %v449 = vunpack.c.l.s4 1983009808
    %v450 = vunpack.c.0.s8 %v449
    %v451 = vlaneseq
    %v452 = vshrl.u32 %v451, 7
    %v453 = vsub.s32 %v450, %v452
    %v454 = vrot.slane %v415, %v453
    %455 = vrot.lane.b32.xlu0 %v454, 96
    %v456 = vpop.permute.xlu0 %455
    %v458 = vmul.f32 %v425, %v456
    %v459 = vmul.f32 %v443, %v340
    %v460 = vadd.f32 %v458, %v459
    %461 = vst.msk [vmem:[%s4] sm:$0x3] %vm204, %v446
    %462 = vst.msk [vmem:[#allocation2] sm:$0x3] %vm204, %v460
    %v463 = vmul.f32 %v446, %v425
    %v464 = vpack.c.bf16 %v463, %v463
    %s465 = scalar_lea.vmem [#allocation3], 2
    %466 = vst.msk [vmem:[%s465] sm:$0x1] %vm209, %v464
    %v467 = vld [vmem:[%s4] sm:$0x3]
    %v468 = vld [vmem:[#allocation2] sm:$0x3]
    %s469 = scalar_lea.vmem %s1, 3
    %v470 = vld [vmem:[%s469] sm:$0x1]
    %v471 = vpack.c.bf16 %v467, %v467
    %v473 = vsel %vm86, %v471, 0
    %475 = vmatprep.subr.bf16.mxu0 0
    %476 = vmatpush1.bf16.msra.mxu0 %v82
    %477 = vmatprep.subr.bf16.mxu0 0
    %478 = vmatpush1.bf16.msra.mxu0 %v83
    %479 = vmatprep.subr.bf16.mxu0 0
    %480 = vmatpush1.bf16.msra.mxu0 0
    %481 = vmatprep.subr.bf16.mxu0 0
    %482 = vmatpush1.bf16.msra.mxu0 0
    %483 = vmatprep.subr.bf16.mxu0 0
    %484 = vmatpush1.bf16.msra.mxu0 0
    %485 = vmatprep.subr.bf16.mxu0 0
    %486 = vmatpush1.bf16.msra.mxu0 0
    %487 = vmatprep.subr.bf16.mxu0 0
    %488 = vmatpush1.bf16.msra.mxu0 0
    %489 = vmatprep.subr.bf16.mxu0 0
    %490 = vmatpush1.bf16.msra.mxu0 0
    %491 = vmatprep.subr.bf16.mxu0 0
    %492 = vmatpush1.bf16.msra.mxu0 0
    %493 = vmatprep.subr.bf16.mxu0 0
    %494 = vmatpush1.bf16.msra.mxu0 0
    %495 = vmatprep.subr.bf16.mxu0 0
    %496 = vmatpush1.bf16.msra.mxu0 0
    %497 = vmatprep.subr.bf16.mxu0 0
    %498 = vmatpush1.bf16.msra.mxu0 0
    %499 = vmatprep.subr.bf16.mxu0 0
    %500 = vmatpush1.bf16.msra.mxu0 0
    %501 = vmatprep.subr.bf16.mxu0 0
    %502 = vmatpush1.bf16.msra.mxu0 0
    %503 = vmatprep.subr.bf16.mxu0 0
    %504 = vmatpush1.bf16.msra.mxu0 0
    %505 = vmatprep.subr.bf16.mxu0 0
    %506 = vmatpush1.bf16.msra.mxu0 0
    %507 = vmatprep.mubr.bf16.mxu0 0
    %508 = vmatmul.mubr.bf16.gmra.mrb[0].mxu0 %v473
    %v509 = vpop.f32.mrb[0].mxu0
    %v510 = vadd.f32 0.0, %v509
    %v511 = vpop.f32.mrb[0].mxu0
    %v512 = vpop.f32.mrb[0].mxu0
    %v513 = vpop.f32.mrb[0].mxu0
    %514 = vdwg.mxu0
    %v515 = vunpack.c.l.bf16 %v470
    %v516 = vadd.f32 %v515, %v510
    %v517 = vmul.f32 %v516, 0.5
    %v518 = vtanh.pop %v517
    %v519 = vadd.f32 %v518, 1.0
    %v520 = vmul.f32 %v519, 0.5
    %v521 = vtanh.pop %v516
    %v524 = vunpack.c.l.s4 1983009808
    %v525 = vunpack.c.0.s8 %v524
    %v526 = vlaneseq
    %v527 = vshrl.u32 %v526, 7
    %v528 = vsub.s32 %v525, %v527
    %v529 = vrot.slane %v468, %v528
    %530 = vrot.lane.b32.xlu0 %v529, 32
    %v531 = vpop.permute.xlu0 %530
    %v533 = vmul.f32 %v520, %v531
    %535 = vrot.lane.b32.xlu0 %v521, 64
    %v536 = vpop.permute.xlu0 %535
    %v538 = vmul.f32 %v520, %v536
    %540 = vrot.lane.b32.xlu0 %v538, 32
    %v541 = vpop.permute.xlu0 %540
    %v543 = vadd.f32 %v533, %v541
    %v544 = vtanh.pop %v543
    %546 = vrot.lane.b32.xlu0 %v544, 64
    %v547 = vpop.permute.xlu0 %546
    %v549 = vmul.f32 %v520, %v547
    %551 = vset.pattern.permute.xlu0 0
    %552 = vperm.xlu0 %551, %v49
    %v553 = vpop.permute.xlu0 %552
    %v557 = vunpack.c.l.s4 1983009808
    %v558 = vunpack.c.0.s8 %v557
    %v559 = vlaneseq
    %v560 = vshrl.u32 %v559, 7
    %v561 = vsub.s32 %v558, %v560
    %v562 = vrot.slane %v549, %v561
    %563 = vrot.lane.b32.xlu0 %v562, 32
    %v564 = vpop.permute.xlu0 %563
    %v566 = vmul.f32 %v553, %v564
    %v567 = vsub.f32 1.0, %v49
    %569 = vset.pattern.permute.xlu0 0
    %570 = vperm.xlu0 %569, %v567
    %v571 = vpop.permute.xlu0 %570
    %v573 = vmul.f32 %v571, %v467
    %v574 = vadd.f32 %v566, %v573
    %v577 = vunpack.c.l.s4 1983009808
    %v578 = vunpack.c.0.s8 %v577
    %v579 = vlaneseq
    %v580 = vshrl.u32 %v579, 7
    %v581 = vsub.s32 %v578, %v580
    %v582 = vrot.slane %v543, %v581
    %583 = vrot.lane.b32.xlu0 %v582, 96
    %v584 = vpop.permute.xlu0 %583
    %v586 = vmul.f32 %v553, %v584
    %v587 = vmul.f32 %v571, %v468
    %v588 = vadd.f32 %v586, %v587
    %589 = vst.msk [vmem:[%s4] sm:$0x3] %vm204, %v574
    %590 = vst.msk [vmem:[#allocation2] sm:$0x3] %vm204, %v588
    %v591 = vmul.f32 %v574, %v553
    %v592 = vpack.c.bf16 %v591, %v591
    %s593 = scalar_lea.vmem [#allocation3], 3
    %594 = vst.msk [vmem:[%s593] sm:$0x1] %vm209, %v592
    %v595 = vld [vmem:[%s4] sm:$0x3]
    %v596 = vld [vmem:[#allocation2] sm:$0x3]
    %s597 = scalar_lea.vmem %s1, 4
    %v598 = vld [vmem:[%s597] sm:$0x1]
    %v599 = vpack.c.bf16 %v595, %v595
    %v601 = vsel %vm86, %v599, 0
    %603 = vmatprep.subr.bf16.mxu0 0
    %604 = vmatpush1.bf16.msra.mxu0 %v82
    %605 = vmatprep.subr.bf16.mxu0 0
    %606 = vmatpush1.bf16.msra.mxu0 %v83
    %607 = vmatprep.subr.bf16.mxu0 0
    %608 = vmatpush1.bf16.msra.mxu0 0
    %609 = vmatprep.subr.bf16.mxu0 0
    %610 = vmatpush1.bf16.msra.mxu0 0
    %611 = vmatprep.subr.bf16.mxu0 0
    %612 = vmatpush1.bf16.msra.mxu0 0
    %613 = vmatprep.subr.bf16.mxu0 0
    %614 = vmatpush1.bf16.msra.mxu0 0
    %615 = vmatprep.subr.bf16.mxu0 0
    %616 = vmatpush1.bf16.msra.mxu0 0
    %617 = vmatprep.subr.bf16.mxu0 0
    %618 = vmatpush1.bf16.msra.mxu0 0
    %619 = vmatprep.subr.bf16.mxu0 0
    %620 = vmatpush1.bf16.msra.mxu0 0
    %621 = vmatprep.subr.bf16.mxu0 0
    %622 = vmatpush1.bf16.msra.mxu0 0
    %623 = vmatprep.subr.bf16.mxu0 0
    %624 = vmatpush1.bf16.msra.mxu0 0
    %625 = vmatprep.subr.bf16.mxu0 0
    %626 = vmatpush1.bf16.msra.mxu0 0
    %627 = vmatprep.subr.bf16.mxu0 0
    %628 = vmatpush1.bf16.msra.mxu0 0
    %629 = vmatprep.subr.bf16.mxu0 0
    %630 = vmatpush1.bf16.msra.mxu0 0
    %631 = vmatprep.subr.bf16.mxu0 0
    %632 = vmatpush1.bf16.msra.mxu0 0
    %633 = vmatprep.subr.bf16.mxu0 0
    %634 = vmatpush1.bf16.msra.mxu0 0
    %635 = vmatprep.mubr.bf16.mxu0 0
    %636 = vmatmul.mubr.bf16.gmra.mrb[0].mxu0 %v601
    %v637 = vpop.f32.mrb[0].mxu0
    %v638 = vadd.f32 0.0, %v637
    %v639 = vpop.f32.mrb[0].mxu0
    %v640 = vpop.f32.mrb[0].mxu0
    %v641 = vpop.f32.mrb[0].mxu0
    %642 = vdwg.mxu0
    %v643 = vunpack.c.l.bf16 %v598
    %v644 = vadd.f32 %v643, %v638
    %v645 = vmul.f32 %v644, 0.5
    %v646 = vtanh.pop %v645
    %v647 = vadd.f32 %v646, 1.0
    %v648 = vmul.f32 %v647, 0.5
    %v649 = vtanh.pop %v644
    %v652 = vunpack.c.l.s4 1983009808
    %v653 = vunpack.c.0.s8 %v652
    %v654 = vlaneseq
    %v655 = vshrl.u32 %v654, 7
    %v656 = vsub.s32 %v653, %v655
    %v657 = vrot.slane %v596, %v656
    %658 = vrot.lane.b32.xlu0 %v657, 32
    %v659 = vpop.permute.xlu0 %658
    %v661 = vmul.f32 %v648, %v659
    %663 = vrot.lane.b32.xlu0 %v649, 64
    %v664 = vpop.permute.xlu0 %663
    %v666 = vmul.f32 %v648, %v664
    %668 = vrot.lane.b32.xlu0 %v666, 32
    %v669 = vpop.permute.xlu0 %668
    %v671 = vadd.f32 %v661, %v669
    %v672 = vtanh.pop %v671
    %674 = vrot.lane.b32.xlu0 %v672, 64
    %v675 = vpop.permute.xlu0 %674
    %v677 = vmul.f32 %v648, %v675
    %679 = vset.pattern.permute.xlu0 0
    %680 = vperm.xlu0 %679, %v54
    %v681 = vpop.permute.xlu0 %680
    %v685 = vunpack.c.l.s4 1983009808
    %v686 = vunpack.c.0.s8 %v685
    %v687 = vlaneseq
    %v688 = vshrl.u32 %v687, 7
    %v689 = vsub.s32 %v686, %v688
    %v690 = vrot.slane %v677, %v689
    %691 = vrot.lane.b32.xlu0 %v690, 32
    %v692 = vpop.permute.xlu0 %691
    %v694 = vmul.f32 %v681, %v692
    %v695 = vsub.f32 1.0, %v54
    %697 = vset.pattern.permute.xlu0 0
    %698 = vperm.xlu0 %697, %v695
    %v699 = vpop.permute.xlu0 %698
    %v701 = vmul.f32 %v699, %v595
    %v702 = vadd.f32 %v694, %v701
    %v705 = vunpack.c.l.s4 1983009808
    %v706 = vunpack.c.0.s8 %v705
    %v707 = vlaneseq
    %v708 = vshrl.u32 %v707, 7
    %v709 = vsub.s32 %v706, %v708
    %v710 = vrot.slane %v671, %v709
    %711 = vrot.lane.b32.xlu0 %v710, 96
    %v712 = vpop.permute.xlu0 %711
    %v714 = vmul.f32 %v681, %v712
    %v715 = vmul.f32 %v699, %v596
    %v716 = vadd.f32 %v714, %v715
    %717 = vst.msk [vmem:[%s4] sm:$0x3] %vm204, %v702
    %718 = vst.msk [vmem:[#allocation2] sm:$0x3] %vm204, %v716
    %v719 = vmul.f32 %v702, %v681
    %v720 = vpack.c.bf16 %v719, %v719
    %s721 = scalar_lea.vmem [#allocation3], 4
    %722 = vst.msk [vmem:[%s721] sm:$0x1] %vm209, %v720
    %v723 = vld [vmem:[%s4] sm:$0x3]
    %v724 = vld [vmem:[#allocation2] sm:$0x3]
    %s725 = scalar_lea.vmem %s1, 5
    %v726 = vld [vmem:[%s725] sm:$0x1]
    %v727 = vpack.c.bf16 %v723, %v723
    %v729 = vsel %vm86, %v727, 0
    %731 = vmatprep.subr.bf16.mxu0 0
    %732 = vmatpush1.bf16.msra.mxu0 %v82
    %733 = vmatprep.subr.bf16.mxu0 0
    %734 = vmatpush1.bf16.msra.mxu0 %v83
    %735 = vmatprep.subr.bf16.mxu0 0
    %736 = vmatpush1.bf16.msra.mxu0 0
    %737 = vmatprep.subr.bf16.mxu0 0
    %738 = vmatpush1.bf16.msra.mxu0 0
    %739 = vmatprep.subr.bf16.mxu0 0
    %740 = vmatpush1.bf16.msra.mxu0 0
    %741 = vmatprep.subr.bf16.mxu0 0
    %742 = vmatpush1.bf16.msra.mxu0 0
    %743 = vmatprep.subr.bf16.mxu0 0
    %744 = vmatpush1.bf16.msra.mxu0 0
    %745 = vmatprep.subr.bf16.mxu0 0
    %746 = vmatpush1.bf16.msra.mxu0 0
    %747 = vmatprep.subr.bf16.mxu0 0
    %748 = vmatpush1.bf16.msra.mxu0 0
    %749 = vmatprep.subr.bf16.mxu0 0
    %750 = vmatpush1.bf16.msra.mxu0 0
    %751 = vmatprep.subr.bf16.mxu0 0
    %752 = vmatpush1.bf16.msra.mxu0 0
    %753 = vmatprep.subr.bf16.mxu0 0
    %754 = vmatpush1.bf16.msra.mxu0 0
    %755 = vmatprep.subr.bf16.mxu0 0
    %756 = vmatpush1.bf16.msra.mxu0 0
    %757 = vmatprep.subr.bf16.mxu0 0
    %758 = vmatpush1.bf16.msra.mxu0 0
    %759 = vmatprep.subr.bf16.mxu0 0
    %760 = vmatpush1.bf16.msra.mxu0 0
    %761 = vmatprep.subr.bf16.mxu0 0
    %762 = vmatpush1.bf16.msra.mxu0 0
    %763 = vmatprep.mubr.bf16.mxu0 0
    %764 = vmatmul.mubr.bf16.gmra.mrb[0].mxu0 %v729
    %v765 = vpop.f32.mrb[0].mxu0
    %v766 = vadd.f32 0.0, %v765
    %v767 = vpop.f32.mrb[0].mxu0
    %v768 = vpop.f32.mrb[0].mxu0
    %v769 = vpop.f32.mrb[0].mxu0
    %770 = vdwg.mxu0
    %v771 = vunpack.c.l.bf16 %v726
    %v772 = vadd.f32 %v771, %v766
    %v773 = vmul.f32 %v772, 0.5
    %v774 = vtanh.pop %v773
    %v775 = vadd.f32 %v774, 1.0
    %v776 = vmul.f32 %v775, 0.5
    %v777 = vtanh.pop %v772
    %v780 = vunpack.c.l.s4 1983009808
    %v781 = vunpack.c.0.s8 %v780
    %v782 = vlaneseq
    %v783 = vshrl.u32 %v782, 7
    %v784 = vsub.s32 %v781, %v783
    %v785 = vrot.slane %v724, %v784
    %786 = vrot.lane.b32.xlu0 %v785, 32
    %v787 = vpop.permute.xlu0 %786
    %v789 = vmul.f32 %v776, %v787
    %791 = vrot.lane.b32.xlu0 %v777, 64
    %v792 = vpop.permute.xlu0 %791
    %v794 = vmul.f32 %v776, %v792
    %796 = vrot.lane.b32.xlu0 %v794, 32
    %v797 = vpop.permute.xlu0 %796
    %v799 = vadd.f32 %v789, %v797
    %v800 = vtanh.pop %v799
    %802 = vrot.lane.b32.xlu0 %v800, 64
    %v803 = vpop.permute.xlu0 %802
    %v805 = vmul.f32 %v776, %v803
    %807 = vset.pattern.permute.xlu0 0
    %808 = vperm.xlu0 %807, %v59
    %v809 = vpop.permute.xlu0 %808
    %v813 = vunpack.c.l.s4 1983009808
    %v814 = vunpack.c.0.s8 %v813
    %v815 = vlaneseq
    %v816 = vshrl.u32 %v815, 7
    %v817 = vsub.s32 %v814, %v816
    %v818 = vrot.slane %v805, %v817
    %819 = vrot.lane.b32.xlu0 %v818, 32
    %v820 = vpop.permute.xlu0 %819
    %v822 = vmul.f32 %v809, %v820
    %v823 = vsub.f32 1.0, %v59
    %825 = vset.pattern.permute.xlu0 0
    %826 = vperm.xlu0 %825, %v823
    %v827 = vpop.permute.xlu0 %826
    %v829 = vmul.f32 %v827, %v723
    %v830 = vadd.f32 %v822, %v829
    %v833 = vunpack.c.l.s4 1983009808
    %v834 = vunpack.c.0.s8 %v833
    %v835 = vlaneseq
    %v836 = vshrl.u32 %v835, 7
    %v837 = vsub.s32 %v834, %v836
    %v838 = vrot.slane %v799, %v837
    %839 = vrot.lane.b32.xlu0 %v838, 96
    %v840 = vpop.permute.xlu0 %839
    %v842 = vmul.f32 %v809, %v840
    %v843 = vmul.f32 %v827, %v724
    %v844 = vadd.f32 %v842, %v843
    %845 = vst.msk [vmem:[%s4] sm:$0x3] %vm204, %v830
    %846 = vst.msk [vmem:[#allocation2] sm:$0x3] %vm204, %v844
    %v847 = vmul.f32 %v830, %v809
    %v848 = vpack.c.bf16 %v847, %v847
    %s849 = scalar_lea.vmem [#allocation3], 5
    %850 = vst.msk [vmem:[%s849] sm:$0x1] %vm209, %v848
    %v851 = vld [vmem:[%s4] sm:$0x3]
    %v852 = vld [vmem:[#allocation2] sm:$0x3]
    %s853 = scalar_lea.vmem %s1, 6
    %v854 = vld [vmem:[%s853] sm:$0x1]
    %v855 = vpack.c.bf16 %v851, %v851
    %v857 = vsel %vm86, %v855, 0
    %859 = vmatprep.subr.bf16.mxu0 0
    %860 = vmatpush1.bf16.msra.mxu0 %v82
    %861 = vmatprep.subr.bf16.mxu0 0
    %862 = vmatpush1.bf16.msra.mxu0 %v83
    %863 = vmatprep.subr.bf16.mxu0 0
    %864 = vmatpush1.bf16.msra.mxu0 0
    %865 = vmatprep.subr.bf16.mxu0 0
    %866 = vmatpush1.bf16.msra.mxu0 0
    %867 = vmatprep.subr.bf16.mxu0 0
    %868 = vmatpush1.bf16.msra.mxu0 0
    %869 = vmatprep.subr.bf16.mxu0 0
    %870 = vmatpush1.bf16.msra.mxu0 0
    %871 = vmatprep.subr.bf16.mxu0 0
    %872 = vmatpush1.bf16.msra.mxu0 0
    %873 = vmatprep.subr.bf16.mxu0 0
    %874 = vmatpush1.bf16.msra.mxu0 0
    %875 = vmatprep.subr.bf16.mxu0 0
    %876 = vmatpush1.bf16.msra.mxu0 0
    %877 = vmatprep.subr.bf16.mxu0 0
    %878 = vmatpush1.bf16.msra.mxu0 0
    %879 = vmatprep.subr.bf16.mxu0 0
    %880 = vmatpush1.bf16.msra.mxu0 0
    %881 = vmatprep.subr.bf16.mxu0 0
    %882 = vmatpush1.bf16.msra.mxu0 0
    %883 = vmatprep.subr.bf16.mxu0 0
    %884 = vmatpush1.bf16.msra.mxu0 0
    %885 = vmatprep.subr.bf16.mxu0 0
    %886 = vmatpush1.bf16.msra.mxu0 0
    %887 = vmatprep.subr.bf16.mxu0 0
    %888 = vmatpush1.bf16.msra.mxu0 0
    %889 = vmatprep.subr.bf16.mxu0 0
    %890 = vmatpush1.bf16.msra.mxu0 0
    %891 = vmatprep.mubr.bf16.mxu0 0
    %892 = vmatmul.mubr.bf16.gmra.mrb[0].mxu0 %v857
    %v893 = vpop.f32.mrb[0].mxu0
    %v894 = vadd.f32 0.0, %v893
    %v895 = vpop.f32.mrb[0].mxu0
    %v896 = vpop.f32.mrb[0].mxu0
    %v897 = vpop.f32.mrb[0].mxu0
    %898 = vdwg.mxu0
    %v899 = vunpack.c.l.bf16 %v854
    %v900 = vadd.f32 %v899, %v894
    %v901 = vmul.f32 %v900, 0.5
    %v902 = vtanh.pop %v901
    %v903 = vadd.f32 %v902, 1.0
    %v904 = vmul.f32 %v903, 0.5
    %v905 = vtanh.pop %v900
    %v908 = vunpack.c.l.s4 1983009808
    %v909 = vunpack.c.0.s8 %v908
    %v910 = vlaneseq
    %v911 = vshrl.u32 %v910, 7
    %v912 = vsub.s32 %v909, %v911
    %v913 = vrot.slane %v852, %v912
    %914 = vrot.lane.b32.xlu0 %v913, 32
    %v915 = vpop.permute.xlu0 %914
    %v917 = vmul.f32 %v904, %v915
    %919 = vrot.lane.b32.xlu0 %v905, 64
    %v920 = vpop.permute.xlu0 %919
    %v922 = vmul.f32 %v904, %v920
    %924 = vrot.lane.b32.xlu0 %v922, 32
    %v925 = vpop.permute.xlu0 %924
    %v927 = vadd.f32 %v917, %v925
    %v928 = vtanh.pop %v927
    %930 = vrot.lane.b32.xlu0 %v928, 64
    %v931 = vpop.permute.xlu0 %930
    %v933 = vmul.f32 %v904, %v931
    %935 = vset.pattern.permute.xlu0 0
    %936 = vperm.xlu0 %935, %v64
    %v937 = vpop.permute.xlu0 %936
    %v941 = vunpack.c.l.s4 1983009808
    %v942 = vunpack.c.0.s8 %v941
    %v943 = vlaneseq
    %v944 = vshrl.u32 %v943, 7
    %v945 = vsub.s32 %v942, %v944
    %v946 = vrot.slane %v933, %v945
    %947 = vrot.lane.b32.xlu0 %v946, 32
    %v948 = vpop.permute.xlu0 %947
    %v950 = vmul.f32 %v937, %v948
    %v951 = vsub.f32 1.0, %v64
    %953 = vset.pattern.permute.xlu0 0
    %954 = vperm.xlu0 %953, %v951
    %v955 = vpop.permute.xlu0 %954
    %v957 = vmul.f32 %v955, %v851
    %v958 = vadd.f32 %v950, %v957
    %v961 = vunpack.c.l.s4 1983009808
    %v962 = vunpack.c.0.s8 %v961
    %v963 = vlaneseq
    %v964 = vshrl.u32 %v963, 7
    %v965 = vsub.s32 %v962, %v964
    %v966 = vrot.slane %v927, %v965
    %967 = vrot.lane.b32.xlu0 %v966, 96
    %v968 = vpop.permute.xlu0 %967
    %v970 = vmul.f32 %v937, %v968
    %v971 = vmul.f32 %v955, %v852
    %v972 = vadd.f32 %v970, %v971
    %973 = vst.msk [vmem:[%s4] sm:$0x3] %vm204, %v958
    %974 = vst.msk [vmem:[#allocation2] sm:$0x3] %vm204, %v972
    %v975 = vmul.f32 %v958, %v937
    %v976 = vpack.c.bf16 %v975, %v975
    %s977 = scalar_lea.vmem [#allocation3], 6
    %978 = vst.msk [vmem:[%s977] sm:$0x1] %vm209, %v976
    %v979 = vld [vmem:[%s4] sm:$0x3]
    %v980 = vld [vmem:[#allocation2] sm:$0x3]
    %s981 = scalar_lea.vmem %s1, 7
    %v982 = vld [vmem:[%s981] sm:$0x1]
    %v983 = vpack.c.bf16 %v979, %v979
    %v985 = vsel %vm86, %v983, 0
    %987 = vmatprep.subr.bf16.mxu0 0
    %988 = vmatpush1.bf16.msra.mxu0 %v82
    %989 = vmatprep.subr.bf16.mxu0 0
    %990 = vmatpush1.bf16.msra.mxu0 %v83
    %991 = vmatprep.subr.bf16.mxu0 0
    %992 = vmatpush1.bf16.msra.mxu0 0
    %993 = vmatprep.subr.bf16.mxu0 0
    %994 = vmatpush1.bf16.msra.mxu0 0
    %995 = vmatprep.subr.bf16.mxu0 0
    %996 = vmatpush1.bf16.msra.mxu0 0
    %997 = vmatprep.subr.bf16.mxu0 0
    %998 = vmatpush1.bf16.msra.mxu0 0
    %999 = vmatprep.subr.bf16.mxu0 0
    %1000 = vmatpush1.bf16.msra.mxu0 0
    %1001 = vmatprep.subr.bf16.mxu0 0
    %1002 = vmatpush1.bf16.msra.mxu0 0
    %1003 = vmatprep.subr.bf16.mxu0 0
    %1004 = vmatpush1.bf16.msra.mxu0 0
    %1005 = vmatprep.subr.bf16.mxu0 0
    %1006 = vmatpush1.bf16.msra.mxu0 0
    %1007 = vmatprep.subr.bf16.mxu0 0
    %1008 = vmatpush1.bf16.msra.mxu0 0
    %1009 = vmatprep.subr.bf16.mxu0 0
    %1010 = vmatpush1.bf16.msra.mxu0 0
    %1011 = vmatprep.subr.bf16.mxu0 0
    %1012 = vmatpush1.bf16.msra.mxu0 0
    %1013 = vmatprep.subr.bf16.mxu0 0
    %1014 = vmatpush1.bf16.msra.mxu0 0
    %1015 = vmatprep.subr.bf16.mxu0 0
    %1016 = vmatpush1.bf16.msra.mxu0 0
    %1017 = vmatprep.subr.bf16.mxu0 0
    %1018 = vmatpush1.bf16.msra.mxu0 0
    %1019 = vmatprep.mubr.bf16.mxu0 0
    %1020 = vmatmul.mubr.bf16.gmra.mrb[0].mxu0 %v985
    %v1021 = vpop.f32.mrb[0].mxu0
    %v1022 = vadd.f32 0.0, %v1021
    %v1023 = vpop.f32.mrb[0].mxu0
    %v1024 = vpop.f32.mrb[0].mxu0
    %v1025 = vpop.f32.mrb[0].mxu0
    %1026 = vdwg.mxu0
    %v1027 = vunpack.c.l.bf16 %v982
    %v1028 = vadd.f32 %v1027, %v1022
    %v1029 = vmul.f32 %v1028, 0.5
    %v1030 = vtanh.pop %v1029
    %v1031 = vadd.f32 %v1030, 1.0
    %v1032 = vmul.f32 %v1031, 0.5
    %v1033 = vtanh.pop %v1028
    %v1036 = vunpack.c.l.s4 1983009808
    %v1037 = vunpack.c.0.s8 %v1036
    %v1038 = vlaneseq
    %v1039 = vshrl.u32 %v1038, 7
    %v1040 = vsub.s32 %v1037, %v1039
    %v1041 = vrot.slane %v980, %v1040
    %1042 = vrot.lane.b32.xlu0 %v1041, 32
    %v1043 = vpop.permute.xlu0 %1042
    %v1045 = vmul.f32 %v1032, %v1043
    %1047 = vrot.lane.b32.xlu0 %v1033, 64
    %v1048 = vpop.permute.xlu0 %1047
    %v1050 = vmul.f32 %v1032, %v1048
    %1052 = vrot.lane.b32.xlu0 %v1050, 32
    %v1053 = vpop.permute.xlu0 %1052
    %v1055 = vadd.f32 %v1045, %v1053
    %v1056 = vtanh.pop %v1055
    %1058 = vrot.lane.b32.xlu0 %v1056, 64
    %v1059 = vpop.permute.xlu0 %1058
    %v1061 = vmul.f32 %v1032, %v1059
    %1063 = vset.pattern.permute.xlu0 0
    %1064 = vperm.xlu0 %1063, %v69
    %v1065 = vpop.permute.xlu0 %1064
    %v1069 = vunpack.c.l.s4 1983009808
    %v1070 = vunpack.c.0.s8 %v1069
    %v1071 = vlaneseq
    %v1072 = vshrl.u32 %v1071, 7
    %v1073 = vsub.s32 %v1070, %v1072
    %v1074 = vrot.slane %v1061, %v1073
    %1075 = vrot.lane.b32.xlu0 %v1074, 32
    %v1076 = vpop.permute.xlu0 %1075
    %v1078 = vmul.f32 %v1065, %v1076
    %v1079 = vsub.f32 1.0, %v69
    %1081 = vset.pattern.permute.xlu0 0
    %1082 = vperm.xlu0 %1081, %v1079
    %v1083 = vpop.permute.xlu0 %1082
    %v1085 = vmul.f32 %v1083, %v979
    %v1086 = vadd.f32 %v1078, %v1085
    %v1089 = vunpack.c.l.s4 1983009808
    %v1090 = vunpack.c.0.s8 %v1089
    %v1091 = vlaneseq
    %v1092 = vshrl.u32 %v1091, 7
    %v1093 = vsub.s32 %v1090, %v1092
    %v1094 = vrot.slane %v1055, %v1093
    %1095 = vrot.lane.b32.xlu0 %v1094, 96
    %v1096 = vpop.permute.xlu0 %1095
    %v1098 = vmul.f32 %v1065, %v1096
    %v1099 = vmul.f32 %v1083, %v980
    %v1100 = vadd.f32 %v1098, %v1099
    %1101 = vst.msk [vmem:[%s4] sm:$0x3] %vm204, %v1086
    %1102 = vst.msk [vmem:[#allocation2] sm:$0x3] %vm204, %v1100
    %v1103 = vmul.f32 %v1086, %v1065
    %v1104 = vpack.c.bf16 %v1103, %v1103
    %s1105 = scalar_lea.vmem [#allocation3], 7
    %1106 = vst.msk [vmem:[%s1105] sm:$0x1] %vm209, %v1104
    // Predicated region
    $region18: #{seq2seq_forward.11} parent=1 // pred_check
      _
    $region19: #{seq2seq_forward.11} parent=1 // pred_check_branch
      %1108 = sbr.rel (0) target = $region21
    $region20: #{seq2seq_forward.11} parent=1 // pred_region
      %s1110 = ssub.s32 128, 128
      %1111 = vsyncadd [#allocation4], %s1110
      %s1112 = sshll.u32 [#allocation3], 4
      %s1113 = int_to_ptr.vmem [resolvable:$true] %s1112
      %1118 = dma.vmem_to_hbm [thread:$0]  %s1113, 128, %s3, [#allocation4], 16, 16, 1
    $region21: #{seq2seq_forward.11} parent=1 // pred_fallthru
      _
    // Predicated region
    $region22: #{seq2seq_forward.11} parent=1 // pred_check
      _
    $region23: #{seq2seq_forward.11} parent=1 // pred_check_branch
      %1120 = sbr.rel (0) target = $region25
    $region24: #{seq2seq_forward.11} parent=1 // pred_region
      _
    $region25: #{seq2seq_forward.11} parent=1 // pred_fallthru
      _
    // Predicated region
    $region26: #{seq2seq_forward.11} parent=1 // pred_check
      _
    $region27: #{seq2seq_forward.11} parent=1 // pred_check_branch
      %1122 = sbr.rel (0) target = $region29
    $region28: #{seq2seq_forward.11} parent=1 // pred_region
      %1123 = dma.done [#allocation4], 128
    $region29: #{seq2seq_forward.11} parent=1 // pred_fallthru
      _
    // Predicated region
    $region30: #{seq2seq_forward.11} parent=1 // pred_check
      _
    $region31: #{seq2seq_forward.11} parent=1 // pred_check_branch
      %1125 = sbr.rel (0) target = $region33
    $region32: #{seq2seq_forward.11} parent=1 // pred_region
      _
    $region33: #{seq2seq_forward.11} parent=1 // pred_fallthru
      _
    %1126 = vsyncpa [#allocation4], 1

// kernel: seq2seq_forward.9
$region0: #{seq2seq_forward.9}
  #allocation0 [shape = 'u32[]', space=smem, size = 0x4, offset = 0x4, fixed_abs, tag = 'smem constant byte address 0x4 - core index']
  #allocation1 [shape = 'u32[144,128]{1,0:T(1,128)}', space=vmem, size = 0x12000, scoped, tag = 'internal scratch']
  #allocation2 [shape = 'f32[2,32]{1,0:T(2,128)}', space=vmem, size = 0x400, scoped, tag = 'scratch operand']
  %s0 = inlined_call_operand.vmem [shape: s32[2,1], index: 0, kind: input, shape index: {}]
  %s1 = inlined_call_operand.vmem [shape: bf16[8,2,128], index: 1, kind: input, shape index: {}]
  %s2 = inlined_call_operand.vmem [shape: bf16[32,128], index: 2, kind: input, shape index: {}]
  %s3 = inlined_call_operand.vmem [shape: bf16[8,2,32], index: 3, kind: output, shape index: {0}]
  %s4 = inlined_call_operand.hbm [shape: f32[2,32], index: 4, kind: output, shape index: {1}]
  %5 = xla_tuple %s3, %s4
  %s6 = sld [smem:[#allocation0]]
  $region34: #{seq2seq_forward.9} parent=0
    _
  %s8 = ssub.s32 1, %s6
  %s9 = scalar_select 0, %s8, %s6
  $region1: #{seq2seq_forward.9} parent=0
    #allocation3 [shape = 'u8[1024]{0}', space=vmem, size = 0x400, scoped, tag = 'output window, operand 1, single buffered']
    #allocation4 [shape = 's32[1]{0}', space=sflag, size = 0x4, scoped, tag = 'scoped memory for seq2seq_forward.9']
    %10 = vsyncpa [#allocation4], 0
    // Predicated region
    $region2: #{seq2seq_forward.9} parent=1 // pred_check
      _
    $region3: #{seq2seq_forward.9} parent=1 // pred_check_branch
      %12 = sbr.rel (0) target = $region5
    $region4: #{seq2seq_forward.9} parent=1 // pred_region
      _
    $region5: #{seq2seq_forward.9} parent=1 // pred_fallthru
      _
    // Predicated region
    $region6: #{seq2seq_forward.9} parent=1 // pred_check
      _
    $region7: #{seq2seq_forward.9} parent=1 // pred_check_branch
      %14 = sbr.rel (0) target = $region9
    $region8: #{seq2seq_forward.9} parent=1 // pred_region
      _
    $region9: #{seq2seq_forward.9} parent=1 // pred_fallthru
      _
    // Predicated region
    $region10: #{seq2seq_forward.9} parent=1 // pred_check
      _
    $region11: #{seq2seq_forward.9} parent=1 // pred_check_branch
      %16 = sbr.rel (0) target = $region13
    $region12: #{seq2seq_forward.9} parent=1 // pred_region
      _
    $region13: #{seq2seq_forward.9} parent=1 // pred_fallthru
      _
    %p18 = scmp.eq.s32.totalorder 0, 0
    // Predicated region
    $region14: #{seq2seq_forward.9} parent=1 // pred_check
      %p19 = pneg %p18
    $region15: #{seq2seq_forward.9} parent=1 // pred_check_branch
      %21 = sbr.rel (%p19) target = $region17
    $region16: #{seq2seq_forward.9} parent=1 // pred_region
      %vm22 = vcmask 254976
      %23 = vst.msk [vmem:[#allocation3] sm:$0x3] %vm22, 0.0
      %24 = vst.msk [vmem:[#allocation2] sm:$0x3] %vm22, 0.0
    $region17: #{seq2seq_forward.9} parent=1 // pred_fallthru
      _
    %v25 = vld [vmem:[%s0] sm:$0x3]
    %v26 = vld [vmem:[%s2] sm:$0xf]
    %v27 = vld [vmem:[%s2 + $0x4] sm:$0xf]
    %v28 = vld [vmem:[%s2 + $0x8] sm:$0xf]
    %v29 = vld [vmem:[%s2 + $0xc] sm:$0xf]
    %s30 = smul.u32 0, 8
    %v31 = vstv %s30
    %vm32 = vcmp.lt.s32.totalorder %v31, %v25
    %v33 = vsel %vm32, 1, 0
    %v34 = vcvt.s32.f32 %v33
    %s35 = sadd.s32 %s30, 1
    %v36 = vstv %s35
    %vm37 = vcmp.lt.s32.totalorder %v36, %v25
    %v38 = vsel %vm37, 1, 0
    %v39 = vcvt.s32.f32 %v38
    %s40 = sadd.s32 %s30, 2
    %v41 = vstv %s40
    %vm42 = vcmp.lt.s32.totalorder %v41, %v25
    %v43 = vsel %vm42, 1, 0
    %v44 = vcvt.s32.f32 %v43
    %s45 = sadd.s32 %s30, 3
    %v46 = vstv %s45
    %vm47 = vcmp.lt.s32.totalorder %v46, %v25
    %v48 = vsel %vm47, 1, 0
    %v49 = vcvt.s32.f32 %v48
    %s50 = sadd.s32 %s30, 4
    %v51 = vstv %s50
    %vm52 = vcmp.lt.s32.totalorder %v51, %v25
    %v53 = vsel %vm52, 1, 0
    %v54 = vcvt.s32.f32 %v53
    %s55 = sadd.s32 %s30, 5
    %v56 = vstv %s55
    %vm57 = vcmp.lt.s32.totalorder %v56, %v25
    %v58 = vsel %vm57, 1, 0
    %v59 = vcvt.s32.f32 %v58
    %s60 = sadd.s32 %s30, 6
    %v61 = vstv %s60
    %vm62 = vcmp.lt.s32.totalorder %v61, %v25
    %v63 = vsel %vm62, 1, 0
    %v64 = vcvt.s32.f32 %v63
    %s65 = sadd.s32 %s30, 7
    %v66 = vstv %s65
    %vm67 = vcmp.lt.s32.totalorder %v66, %v25
    %v68 = vsel %vm67, 1, 0
    %v69 = vcvt.s32.f32 %v68
    %v70 = vld [vmem:[#allocation3] sm:$0x3]
    %v71 = vld [vmem:[#allocation2] sm:$0x3]
    %v72 = vld [vmem:[%s1] sm:$0x1]
    %v73 = vpack.c.bf16 %v70, %v70
    %v78 = vunpack.c.l.b16 %v26
    %v79 = vunpack.c.l.b16 %v27
    %v80 = vunpack.c.l.b16 %v28
    %v81 = vunpack.c.l.b16 %v29
    %v82 = vpack.c.b16 %v79, %v78
    %v83 = vpack.c.b16 %v81, %v80
    %vm86 = vcmask 261120
    %v88 = vsel %vm86, %v73, 0
    %90 = vmatprep.subr.bf16.mxu0 0
    %91 = vmatpush1.bf16.msra.mxu0 %v82
    %92 = vmatprep.subr.bf16.mxu0 0
    %93 = vmatpush1.bf16.msra.mxu0 %v83
    %94 = vmatprep.subr.bf16.mxu0 0
    %95 = vmatpush1.bf16.msra.mxu0 0
    %96 = vmatprep.subr.bf16.mxu0 0
    %97 = vmatpush1.bf16.msra.mxu0 0
    %98 = vmatprep.subr.bf16.mxu0 0
    %99 = vmatpush1.bf16.msra.mxu0 0
    %100 = vmatprep.subr.bf16.mxu0 0
    %101 = vmatpush1.bf16.msra.mxu0 0
    %102 = vmatprep.subr.bf16.mxu0 0
    %103 = vmatpush1.bf16.msra.mxu0 0
    %104 = vmatprep.subr.bf16.mxu0 0
    %105 = vmatpush1.bf16.msra.mxu0 0
    %106 = vmatprep.subr.bf16.mxu0 0
    %107 = vmatpush1.bf16.msra.mxu0 0
    %108 = vmatprep.subr.bf16.mxu0 0
    %109 = vmatpush1.bf16.msra.mxu0 0
    %110 = vmatprep.subr.bf16.mxu0 0
    %111 = vmatpush1.bf16.msra.mxu0 0
    %112 = vmatprep.subr.bf16.mxu0 0
    %113 = vmatpush1.bf16.msra.mxu0 0
    %114 = vmatprep.subr.bf16.mxu0 0
    %115 = vmatpush1.bf16.msra.mxu0 0
    %116 = vmatprep.subr.bf16.mxu0 0
    %117 = vmatpush1.bf16.msra.mxu0 0
    %118 = vmatprep.subr.bf16.mxu0 0
    %119 = vmatpush1.bf16.msra.mxu0 0
    %120 = vmatprep.subr.bf16.mxu0 0
    %121 = vmatpush1.bf16.msra.mxu0 0
    %122 = vmatprep.mubr.bf16.mxu0 0
    %123 = vmatmul.mubr.bf16.gmra.mrb[0].mxu0 %v88
    %v124 = vpop.f32.mrb[0].mxu0
    %v125 = vadd.f32 0.0, %v124
    %v126 = vpop.f32.mrb[0].mxu0
    %v127 = vpop.f32.mrb[0].mxu0
    %v128 = vpop.f32.mrb[0].mxu0
    %129 = vdwg.mxu0
    %v130 = vunpack.c.l.bf16 %v72
    %v131 = vadd.f32 %v130, %v125
    %v132 = vmul.f32 %v131, 0.5
    %v133 = vtanh.pop %v132
    %v134 = vadd.f32 %v133, 1.0
    %v135 = vmul.f32 %v134, 0.5
    %v136 = vtanh.pop %v131
    %v139 = vunpack.c.l.s4 1983009808
    %v140 = vunpack.c.0.s8 %v139
    %v141 = vlaneseq
    %v142 = vshrl.u32 %v141, 7
    %v143 = vsub.s32 %v140, %v142
    %v144 = vrot.slane %v71, %v143
    %145 = vrot.lane.b32.xlu0 %v144, 32
    %v146 = vpop.permute.xlu0 %145
    %v148 = vmul.f32 %v135, %v146
    %150 = vrot.lane.b32.xlu0 %v136, 64
    %v151 = vpop.permute.xlu0 %150
    %v153 = vmul.f32 %v135, %v151
    %155 = vrot.lane.b32.xlu0 %v153, 32
    %v156 = vpop.permute.xlu0 %155
    %v158 = vadd.f32 %v148, %v156
    %v159 = vtanh.pop %v158
    %161 = vrot.lane.b32.xlu0 %v159, 64
    %v162 = vpop.permute.xlu0 %161
    %v164 = vmul.f32 %v135, %v162
    %166 = vset.pattern.permute.xlu0 0
    %167 = vperm.xlu0 %166, %v34
    %v168 = vpop.permute.xlu0 %167
    %v172 = vunpack.c.l.s4 1983009808
    %v173 = vunpack.c.0.s8 %v172
    %v174 = vlaneseq
    %v175 = vshrl.u32 %v174, 7
    %v176 = vsub.s32 %v173, %v175
    %v177 = vrot.slane %v164, %v176
    %178 = vrot.lane.b32.xlu0 %v177, 32
    %v179 = vpop.permute.xlu0 %178
    %v181 = vmul.f32 %v168, %v179
    %v182 = vsub.f32 1.0, %v34
    %184 = vset.pattern.permute.xlu0 0
    %185 = vperm.xlu0 %184, %v182
    %v186 = vpop.permute.xlu0 %185
    %v188 = vmul.f32 %v186, %v70
    %v189 = vadd.f32 %v181, %v188
    %v192 = vunpack.c.l.s4 1983009808
    %v193 = vunpack.c.0.s8 %v192
    %v194 = vlaneseq
    %v195 = vshrl.u32 %v194, 7
    %v196 = vsub.s32 %v193, %v195
    %v197 = vrot.slane %v158, %v196
    %198 = vrot.lane.b32.xlu0 %v197, 96
    %v199 = vpop.permute.xlu0 %198
    %v201 = vmul.f32 %v168, %v199
    %v202 = vmul.f32 %v186, %v71
    %v203 = vadd.f32 %v201, %v202
    %vm204 = vcmask 254976
    %205 = vst.msk [vmem:[#allocation3] sm:$0x3] %vm204, %v189
    %206 = vst.msk [vmem:[#allocation2] sm:$0x3] %vm204, %v203
    %v207 = vmul.f32 %v189, %v168
    %v208 = vpack.c.bf16 %v207, %v207
    %vm209 = vcmask 253952
    %210 = vst.msk [vmem:[%s3] sm:$0x1] %vm209, %v208
    %v211 = vld [vmem:[#allocation3] sm:$0x3]
    %v212 = vld [vmem:[#allocation2] sm:$0x3]
    %s213 = scalar_lea.vmem %s1, 1
    %v214 = vld [vmem:[%s213] sm:$0x1]
    %v215 = vpack.c.bf16 %v211, %v211
    %v217 = vsel %vm86, %v215, 0
    %219 = vmatprep.subr.bf16.mxu0 0
    %220 = vmatpush1.bf16.msra.mxu0 %v82
    %221 = vmatprep.subr.bf16.mxu0 0
    %222 = vmatpush1.bf16.msra.mxu0 %v83
    %223 = vmatprep.subr.bf16.mxu0 0
    %224 = vmatpush1.bf16.msra.mxu0 0
    %225 = vmatprep.subr.bf16.mxu0 0
    %226 = vmatpush1.bf16.msra.mxu0 0
    %227 = vmatprep.subr.bf16.mxu0 0
    %228 = vmatpush1.bf16.msra.mxu0 0
    %229 = vmatprep.subr.bf16.mxu0 0
    %230 = vmatpush1.bf16.msra.mxu0 0
    %231 = vmatprep.subr.bf16.mxu0 0
    %232 = vmatpush1.bf16.msra.mxu0 0
    %233 = vmatprep.subr.bf16.mxu0 0
    %234 = vmatpush1.bf16.msra.mxu0 0
    %235 = vmatprep.subr.bf16.mxu0 0
    %236 = vmatpush1.bf16.msra.mxu0 0
    %237 = vmatprep.subr.bf16.mxu0 0
    %238 = vmatpush1.bf16.msra.mxu0 0
    %239 = vmatprep.subr.bf16.mxu0 0
    %240 = vmatpush1.bf16.msra.mxu0 0
    %241 = vmatprep.subr.bf16.mxu0 0
    %242 = vmatpush1.bf16.msra.mxu0 0
    %243 = vmatprep.subr.bf16.mxu0 0
    %244 = vmatpush1.bf16.msra.mxu0 0
    %245 = vmatprep.subr.bf16.mxu0 0
    %246 = vmatpush1.bf16.msra.mxu0 0
    %247 = vmatprep.subr.bf16.mxu0 0
    %248 = vmatpush1.bf16.msra.mxu0 0
    %249 = vmatprep.subr.bf16.mxu0 0
    %250 = vmatpush1.bf16.msra.mxu0 0
    %251 = vmatprep.mubr.bf16.mxu0 0
    %252 = vmatmul.mubr.bf16.gmra.mrb[0].mxu0 %v217
    %v253 = vpop.f32.mrb[0].mxu0
    %v254 = vadd.f32 0.0, %v253
    %v255 = vpop.f32.mrb[0].mxu0
    %v256 = vpop.f32.mrb[0].mxu0
    %v257 = vpop.f32.mrb[0].mxu0
    %258 = vdwg.mxu0
    %v259 = vunpack.c.l.bf16 %v214
    %v260 = vadd.f32 %v259, %v254
    %v261 = vmul.f32 %v260, 0.5
    %v262 = vtanh.pop %v261
    %v263 = vadd.f32 %v262, 1.0
    %v264 = vmul.f32 %v263, 0.5
    %v265 = vtanh.pop %v260
    %v268 = vunpack.c.l.s4 1983009808
    %v269 = vunpack.c.0.s8 %v268
    %v270 = vlaneseq
    %v271 = vshrl.u32 %v270, 7
    %v272 = vsub.s32 %v269, %v271
    %v273 = vrot.slane %v212, %v272
    %274 = vrot.lane.b32.xlu0 %v273, 32
    %v275 = vpop.permute.xlu0 %274
    %v277 = vmul.f32 %v264, %v275
    %279 = vrot.lane.b32.xlu0 %v265, 64
    %v280 = vpop.permute.xlu0 %279
    %v282 = vmul.f32 %v264, %v280
    %284 = vrot.lane.b32.xlu0 %v282, 32
    %v285 = vpop.permute.xlu0 %284
    %v287 = vadd.f32 %v277, %v285
    %v288 = vtanh.pop %v287
    %290 = vrot.lane.b32.xlu0 %v288, 64
    %v291 = vpop.permute.xlu0 %290
    %v293 = vmul.f32 %v264, %v291
    %295 = vset.pattern.permute.xlu0 0
    %296 = vperm.xlu0 %295, %v39
    %v297 = vpop.permute.xlu0 %296
    %v301 = vunpack.c.l.s4 1983009808
    %v302 = vunpack.c.0.s8 %v301
    %v303 = vlaneseq
    %v304 = vshrl.u32 %v303, 7
    %v305 = vsub.s32 %v302, %v304
    %v306 = vrot.slane %v293, %v305
    %307 = vrot.lane.b32.xlu0 %v306, 32
    %v308 = vpop.permute.xlu0 %307
    %v310 = vmul.f32 %v297, %v308
    %v311 = vsub.f32 1.0, %v39
    %313 = vset.pattern.permute.xlu0 0
    %314 = vperm.xlu0 %313, %v311
    %v315 = vpop.permute.xlu0 %314
    %v317 = vmul.f32 %v315, %v211
    %v318 = vadd.f32 %v310, %v317
    %v321 = vunpack.c.l.s4 1983009808
    %v322 = vunpack.c.0.s8 %v321
    %v323 = vlaneseq
    %v324 = vshrl.u32 %v323, 7
    %v325 = vsub.s32 %v322, %v324
    %v326 = vrot.slane %v287, %v325
    %327 = vrot.lane.b32.xlu0 %v326, 96
    %v328 = vpop.permute.xlu0 %327
    %v330 = vmul.f32 %v297, %v328
    %v331 = vmul.f32 %v315, %v212
    %v332 = vadd.f32 %v330, %v331
    %333 = vst.msk [vmem:[#allocation3] sm:$0x3] %vm204, %v318
    %334 = vst.msk [vmem:[#allocation2] sm:$0x3] %vm204, %v332
    %v335 = vmul.f32 %v318, %v297
    %v336 = vpack.c.bf16 %v335, %v335
    %s337 = scalar_lea.vmem %s3, 1
    %338 = vst.msk [vmem:[%s337] sm:$0x1] %vm209, %v336
    %v339 = vld [vmem:[#allocation3] sm:$0x3]
    %v340 = vld [vmem:[#allocation2] sm:$0x3]
    %s341 = scalar_lea.vmem %s1, 2
    %v342 = vld [vmem:[%s341] sm:$0x1]
    %v343 = vpack.c.bf16 %v339, %v339
    %v345 = vsel %vm86, %v343, 0
    %347 = vmatprep.subr.bf16.mxu0 0
    %348 = vmatpush1.bf16.msra.mxu0 %v82
    %349 = vmatprep.subr.bf16.mxu0 0
    %350 = vmatpush1.bf16.msra.mxu0 %v83
    %351 = vmatprep.subr.bf16.mxu0 0
    %352 = vmatpush1.bf16.msra.mxu0 0
    %353 = vmatprep.subr.bf16.mxu0 0
    %354 = vmatpush1.bf16.msra.mxu0 0
    %355 = vmatprep.subr.bf16.mxu0 0
    %356 = vmatpush1.bf16.msra.mxu0 0
    %357 = vmatprep.subr.bf16.mxu0 0
    %358 = vmatpush1.bf16.msra.mxu0 0
    %359 = vmatprep.subr.bf16.mxu0 0
    %360 = vmatpush1.bf16.msra.mxu0 0
    %361 = vmatprep.subr.bf16.mxu0 0
    %362 = vmatpush1.bf16.msra.mxu0 0
    %363 = vmatprep.subr.bf16.mxu0 0
    %364 = vmatpush1.bf16.msra.mxu0 0
    %365 = vmatprep.subr.bf16.mxu0 0
    %366 = vmatpush1.bf16.msra.mxu0 0
    %367 = vmatprep.subr.bf16.mxu0 0
    %368 = vmatpush1.bf16.msra.mxu0 0
    %369 = vmatprep.subr.bf16.mxu0 0
    %370 = vmatpush1.bf16.msra.mxu0 0
    %371 = vmatprep.subr.bf16.mxu0 0
    %372 = vmatpush1.bf16.msra.mxu0 0
    %373 = vmatprep.subr.bf16.mxu0 0
    %374 = vmatpush1.bf16.msra.mxu0 0
    %375 = vmatprep.subr.bf16.mxu0 0
    %376 = vmatpush1.bf16.msra.mxu0 0
    %377 = vmatprep.subr.bf16.mxu0 0
    %378 = vmatpush1.bf16.msra.mxu0 0
    %379 = vmatprep.mubr.bf16.mxu0 0
    %380 = vmatmul.mubr.bf16.gmra.mrb[0].mxu0 %v345
    %v381 = vpop.f32.mrb[0].mxu0
    %v382 = vadd.f32 0.0, %v381
    %v383 = vpop.f32.mrb[0].mxu0
    %v384 = vpop.f32.mrb[0].mxu0
    %v385 = vpop.f32.mrb[0].mxu0
    %386 = vdwg.mxu0
    %v387 = vunpack.c.l.bf16 %v342
    %v388 = vadd.f32 %v387, %v382
    %v389 = vmul.f32 %v388, 0.5
    %v390 = vtanh.pop %v389
    %v391 = vadd.f32 %v390, 1.0
    %v392 = vmul.f32 %v391, 0.5
    %v393 = vtanh.pop %v388
    %v396 = vunpack.c.l.s4 1983009808
    %v397 = vunpack.c.0.s8 %v396
    %v398 = vlaneseq
    %v399 = vshrl.u32 %v398, 7
    %v400 = vsub.s32 %v397, %v399
    %v401 = vrot.slane %v340, %v400
    %402 = vrot.lane.b32.xlu0 %v401, 32
    %v403 = vpop.permute.xlu0 %402
    %v405 = vmul.f32 %v392, %v403
    %407 = vrot.lane.b32.xlu0 %v393, 64
    %v408 = vpop.permute.xlu0 %407
    %v410 = vmul.f32 %v392, %v408
    %412 = vrot.lane.b32.xlu0 %v410, 32
    %v413 = vpop.permute.xlu0 %412
    %v415 = vadd.f32 %v405, %v413
    %v416 = vtanh.pop %v415
    %418 = vrot.lane.b32.xlu0 %v416, 64
    %v419 = vpop.permute.xlu0 %418
    %v421 = vmul.f32 %v392, %v419
    %423 = vset.pattern.permute.xlu0 0
    %424 = vperm.xlu0 %423, %v44
    %v425 = vpop.permute.xlu0 %424
    %v429 = vunpack.c.l.s4 1983009808
    %v430 = vunpack.c.0.s8 %v429
    %v431 = vlaneseq
    %v432 = vshrl.u32 %v431, 7
    %v433 = vsub.s32 %v430, %v432
    %v434 = vrot.slane %v421, %v433
    %435 = vrot.lane.b32.xlu0 %v434, 32
    %v436 = vpop.permute.xlu0 %435
    %v438 = vmul.f32 %v425, %v436
    %v439 = vsub.f32 1.0, %v44
    %441 = vset.pattern.permute.xlu0 0
    %442 = vperm.xlu0 %441, %v439
    %v443 = vpop.permute.xlu0 %442
    %v445 = vmul.f32 %v443, %v339
    %v446 = vadd.f32 %v438, %v445
    %v449 = vunpack.c.l.s4 1983009808
    %v450 = vunpack.c.0.s8 %v449
    %v451 = vlaneseq
    %v452 = vshrl.u32 %v451, 7
    %v453 = vsub.s32 %v450, %v452
    %v454 = vrot.slane %v415, %v453
    %455 = vrot.lane.b32.xlu0 %v454, 96
    %v456 = vpop.permute.xlu0 %455
    %v458 = vmul.f32 %v425, %v456
    %v459 = vmul.f32 %v443, %v340
    %v460 = vadd.f32 %v458, %v459
    %461 = vst.msk [vmem:[#allocation3] sm:$0x3] %vm204, %v446
    %462 = vst.msk [vmem:[#allocation2] sm:$0x3] %vm204, %v460
    %v463 = vmul.f32 %v446, %v425
    %v464 = vpack.c.bf16 %v463, %v463
    %s465 = scalar_lea.vmem %s3, 2
    %466 = vst.msk [vmem:[%s465] sm:$0x1] %vm209, %v464
    %v467 = vld [vmem:[#allocation3] sm:$0x3]
    %v468 = vld [vmem:[#allocation2] sm:$0x3]
    %s469 = scalar_lea.vmem %s1, 3
    %v470 = vld [vmem:[%s469] sm:$0x1]
    %v471 = vpack.c.bf16 %v467, %v467
    %v473 = vsel %vm86, %v471, 0
    %475 = vmatprep.subr.bf16.mxu0 0
    %476 = vmatpush1.bf16.msra.mxu0 %v82
    %477 = vmatprep.subr.bf16.mxu0 0
    %478 = vmatpush1.bf16.msra.mxu0 %v83
    %479 = vmatprep.subr.bf16.mxu0 0
    %480 = vmatpush1.bf16.msra.mxu0 0
    %481 = vmatprep.subr.bf16.mxu0 0
    %482 = vmatpush1.bf16.msra.mxu0 0
    %483 = vmatprep.subr.bf16.mxu0 0
    %484 = vmatpush1.bf16.msra.mxu0 0
    %485 = vmatprep.subr.bf16.mxu0 0
    %486 = vmatpush1.bf16.msra.mxu0 0
    %487 = vmatprep.subr.bf16.mxu0 0
    %488 = vmatpush1.bf16.msra.mxu0 0
    %489 = vmatprep.subr.bf16.mxu0 0
    %490 = vmatpush1.bf16.msra.mxu0 0
    %491 = vmatprep.subr.bf16.mxu0 0
    %492 = vmatpush1.bf16.msra.mxu0 0
    %493 = vmatprep.subr.bf16.mxu0 0
    %494 = vmatpush1.bf16.msra.mxu0 0
    %495 = vmatprep.subr.bf16.mxu0 0
    %496 = vmatpush1.bf16.msra.mxu0 0
    %497 = vmatprep.subr.bf16.mxu0 0
    %498 = vmatpush1.bf16.msra.mxu0 0
    %499 = vmatprep.subr.bf16.mxu0 0
    %500 = vmatpush1.bf16.msra.mxu0 0
    %501 = vmatprep.subr.bf16.mxu0 0
    %502 = vmatpush1.bf16.msra.mxu0 0
    %503 = vmatprep.subr.bf16.mxu0 0
    %504 = vmatpush1.bf16.msra.mxu0 0
    %505 = vmatprep.subr.bf16.mxu0 0
    %506 = vmatpush1.bf16.msra.mxu0 0
    %507 = vmatprep.mubr.bf16.mxu0 0
    %508 = vmatmul.mubr.bf16.gmra.mrb[0].mxu0 %v473
    %v509 = vpop.f32.mrb[0].mxu0
    %v510 = vadd.f32 0.0, %v509
    %v511 = vpop.f32.mrb[0].mxu0
    %v512 = vpop.f32.mrb[0].mxu0
    %v513 = vpop.f32.mrb[0].mxu0
    %514 = vdwg.mxu0
    %v515 = vunpack.c.l.bf16 %v470
    %v516 = vadd.f32 %v515, %v510
    %v517 = vmul.f32 %v516, 0.5
    %v518 = vtanh.pop %v517
    %v519 = vadd.f32 %v518, 1.0
    %v520 = vmul.f32 %v519, 0.5
    %v521 = vtanh.pop %v516
    %v524 = vunpack.c.l.s4 1983009808
    %v525 = vunpack.c.0.s8 %v524
    %v526 = vlaneseq
    %v527 = vshrl.u32 %v526, 7
    %v528 = vsub.s32 %v525, %v527
    %v529 = vrot.slane %v468, %v528
    %530 = vrot.lane.b32.xlu0 %v529, 32
    %v531 = vpop.permute.xlu0 %530
    %v533 = vmul.f32 %v520, %v531
    %535 = vrot.lane.b32.xlu0 %v521, 64
    %v536 = vpop.permute.xlu0 %535
    %v538 = vmul.f32 %v520, %v536
    %540 = vrot.lane.b32.xlu0 %v538, 32
    %v541 = vpop.permute.xlu0 %540
    %v543 = vadd.f32 %v533, %v541
    %v544 = vtanh.pop %v543
    %546 = vrot.lane.b32.xlu0 %v544, 64
    %v547 = vpop.permute.xlu0 %546
    %v549 = vmul.f32 %v520, %v547
    %551 = vset.pattern.permute.xlu0 0
    %552 = vperm.xlu0 %551, %v49
    %v553 = vpop.permute.xlu0 %552
    %v557 = vunpack.c.l.s4 1983009808
    %v558 = vunpack.c.0.s8 %v557
    %v559 = vlaneseq
    %v560 = vshrl.u32 %v559, 7
    %v561 = vsub.s32 %v558, %v560
    %v562 = vrot.slane %v549, %v561
    %563 = vrot.lane.b32.xlu0 %v562, 32
    %v564 = vpop.permute.xlu0 %563
    %v566 = vmul.f32 %v553, %v564
    %v567 = vsub.f32 1.0, %v49
    %569 = vset.pattern.permute.xlu0 0
    %570 = vperm.xlu0 %569, %v567
    %v571 = vpop.permute.xlu0 %570
    %v573 = vmul.f32 %v571, %v467
    %v574 = vadd.f32 %v566, %v573
    %v577 = vunpack.c.l.s4 1983009808
    %v578 = vunpack.c.0.s8 %v577
    %v579 = vlaneseq
    %v580 = vshrl.u32 %v579, 7
    %v581 = vsub.s32 %v578, %v580
    %v582 = vrot.slane %v543, %v581
    %583 = vrot.lane.b32.xlu0 %v582, 96
    %v584 = vpop.permute.xlu0 %583
    %v586 = vmul.f32 %v553, %v584
    %v587 = vmul.f32 %v571, %v468
    %v588 = vadd.f32 %v586, %v587
    %589 = vst.msk [vmem:[#allocation3] sm:$0x3] %vm204, %v574
    %590 = vst.msk [vmem:[#allocation2] sm:$0x3] %vm204, %v588
    %v591 = vmul.f32 %v574, %v553
    %v592 = vpack.c.bf16 %v591, %v591
    %s593 = scalar_lea.vmem %s3, 3
    %594 = vst.msk [vmem:[%s593] sm:$0x1] %vm209, %v592
    %v595 = vld [vmem:[#allocation3] sm:$0x3]
    %v596 = vld [vmem:[#allocation2] sm:$0x3]
    %s597 = scalar_lea.vmem %s1, 4
    %v598 = vld [vmem:[%s597] sm:$0x1]
    %v599 = vpack.c.bf16 %v595, %v595
    %v601 = vsel %vm86, %v599, 0
    %603 = vmatprep.subr.bf16.mxu0 0
    %604 = vmatpush1.bf16.msra.mxu0 %v82
    %605 = vmatprep.subr.bf16.mxu0 0
    %606 = vmatpush1.bf16.msra.mxu0 %v83
    %607 = vmatprep.subr.bf16.mxu0 0
    %608 = vmatpush1.bf16.msra.mxu0 0
    %609 = vmatprep.subr.bf16.mxu0 0
    %610 = vmatpush1.bf16.msra.mxu0 0
    %611 = vmatprep.subr.bf16.mxu0 0
    %612 = vmatpush1.bf16.msra.mxu0 0
    %613 = vmatprep.subr.bf16.mxu0 0
    %614 = vmatpush1.bf16.msra.mxu0 0
    %615 = vmatprep.subr.bf16.mxu0 0
    %616 = vmatpush1.bf16.msra.mxu0 0
    %617 = vmatprep.subr.bf16.mxu0 0
    %618 = vmatpush1.bf16.msra.mxu0 0
    %619 = vmatprep.subr.bf16.mxu0 0
    %620 = vmatpush1.bf16.msra.mxu0 0
    %621 = vmatprep.subr.bf16.mxu0 0
    %622 = vmatpush1.bf16.msra.mxu0 0
    %623 = vmatprep.subr.bf16.mxu0 0
    %624 = vmatpush1.bf16.msra.mxu0 0
    %625 = vmatprep.subr.bf16.mxu0 0
    %626 = vmatpush1.bf16.msra.mxu0 0
    %627 = vmatprep.subr.bf16.mxu0 0
    %628 = vmatpush1.bf16.msra.mxu0 0
    %629 = vmatprep.subr.bf16.mxu0 0
    %630 = vmatpush1.bf16.msra.mxu0 0
    %631 = vmatprep.subr.bf16.mxu0 0
    %632 = vmatpush1.bf16.msra.mxu0 0
    %633 = vmatprep.subr.bf16.mxu0 0
    %634 = vmatpush1.bf16.msra.mxu0 0
    %635 = vmatprep.mubr.bf16.mxu0 0
    %636 = vmatmul.mubr.bf16.gmra.mrb[0].mxu0 %v601
    %v637 = vpop.f32.mrb[0].mxu0
    %v638 = vadd.f32 0.0, %v637
    %v639 = vpop.f32.mrb[0].mxu0
    %v640 = vpop.f32.mrb[0].mxu0
    %v641 = vpop.f32.mrb[0].mxu0
    %642 = vdwg.mxu0
    %v643 = vunpack.c.l.bf16 %v598
    %v644 = vadd.f32 %v643, %v638
    %v645 = vmul.f32 %v644, 0.5
    %v646 = vtanh.pop %v645
    %v647 = vadd.f32 %v646, 1.0
    %v648 = vmul.f32 %v647, 0.5
    %v649 = vtanh.pop %v644
    %v652 = vunpack.c.l.s4 1983009808
    %v653 = vunpack.c.0.s8 %v652
    %v654 = vlaneseq
    %v655 = vshrl.u32 %v654, 7
    %v656 = vsub.s32 %v653, %v655
    %v657 = vrot.slane %v596, %v656
    %658 = vrot.lane.b32.xlu0 %v657, 32
    %v659 = vpop.permute.xlu0 %658
    %v661 = vmul.f32 %v648, %v659
    %663 = vrot.lane.b32.xlu0 %v649, 64
    %v664 = vpop.permute.xlu0 %663
    %v666 = vmul.f32 %v648, %v664
    %668 = vrot.lane.b32.xlu0 %v666, 32
    %v669 = vpop.permute.xlu0 %668
    %v671 = vadd.f32 %v661, %v669
    %v672 = vtanh.pop %v671
    %674 = vrot.lane.b32.xlu0 %v672, 64
    %v675 = vpop.permute.xlu0 %674
    %v677 = vmul.f32 %v648, %v675
    %679 = vset.pattern.permute.xlu0 0
    %680 = vperm.xlu0 %679, %v54
    %v681 = vpop.permute.xlu0 %680
    %v685 = vunpack.c.l.s4 1983009808
    %v686 = vunpack.c.0.s8 %v685
    %v687 = vlaneseq
    %v688 = vshrl.u32 %v687, 7
    %v689 = vsub.s32 %v686, %v688
    %v690 = vrot.slane %v677, %v689
    %691 = vrot.lane.b32.xlu0 %v690, 32
    %v692 = vpop.permute.xlu0 %691
    %v694 = vmul.f32 %v681, %v692
    %v695 = vsub.f32 1.0, %v54
    %697 = vset.pattern.permute.xlu0 0
    %698 = vperm.xlu0 %697, %v695
    %v699 = vpop.permute.xlu0 %698
    %v701 = vmul.f32 %v699, %v595
    %v702 = vadd.f32 %v694, %v701
    %v705 = vunpack.c.l.s4 1983009808
    %v706 = vunpack.c.0.s8 %v705
    %v707 = vlaneseq
    %v708 = vshrl.u32 %v707, 7
    %v709 = vsub.s32 %v706, %v708
    %v710 = vrot.slane %v671, %v709
    %711 = vrot.lane.b32.xlu0 %v710, 96
    %v712 = vpop.permute.xlu0 %711
    %v714 = vmul.f32 %v681, %v712
    %v715 = vmul.f32 %v699, %v596
    %v716 = vadd.f32 %v714, %v715
    %717 = vst.msk [vmem:[#allocation3] sm:$0x3] %vm204, %v702
    %718 = vst.msk [vmem:[#allocation2] sm:$0x3] %vm204, %v716
    %v719 = vmul.f32 %v702, %v681
    %v720 = vpack.c.bf16 %v719, %v719
    %s721 = scalar_lea.vmem %s3, 4
    %722 = vst.msk [vmem:[%s721] sm:$0x1] %vm209, %v720
    %v723 = vld [vmem:[#allocation3] sm:$0x3]
    %v724 = vld [vmem:[#allocation2] sm:$0x3]
    %s725 = scalar_lea.vmem %s1, 5
    %v726 = vld [vmem:[%s725] sm:$0x1]
    %v727 = vpack.c.bf16 %v723, %v723
    %v729 = vsel %vm86, %v727, 0
    %731 = vmatprep.subr.bf16.mxu0 0
    %732 = vmatpush1.bf16.msra.mxu0 %v82
    %733 = vmatprep.subr.bf16.mxu0 0
    %734 = vmatpush1.bf16.msra.mxu0 %v83
    %735 = vmatprep.subr.bf16.mxu0 0
    %736 = vmatpush1.bf16.msra.mxu0 0
    %737 = vmatprep.subr.bf16.mxu0 0
    %738 = vmatpush1.bf16.msra.mxu0 0
    %739 = vmatprep.subr.bf16.mxu0 0
    %740 = vmatpush1.bf16.msra.mxu0 0
    %741 = vmatprep.subr.bf16.mxu0 0
    %742 = vmatpush1.bf16.msra.mxu0 0
    %743 = vmatprep.subr.bf16.mxu0 0
    %744 = vmatpush1.bf16.msra.mxu0 0
    %745 = vmatprep.subr.bf16.mxu0 0
    %746 = vmatpush1.bf16.msra.mxu0 0
    %747 = vmatprep.subr.bf16.mxu0 0
    %748 = vmatpush1.bf16.msra.mxu0 0
    %749 = vmatprep.subr.bf16.mxu0 0
    %750 = vmatpush1.bf16.msra.mxu0 0
    %751 = vmatprep.subr.bf16.mxu0 0
    %752 = vmatpush1.bf16.msra.mxu0 0
    %753 = vmatprep.subr.bf16.mxu0 0
    %754 = vmatpush1.bf16.msra.mxu0 0
    %755 = vmatprep.subr.bf16.mxu0 0
    %756 = vmatpush1.bf16.msra.mxu0 0
    %757 = vmatprep.subr.bf16.mxu0 0
    %758 = vmatpush1.bf16.msra.mxu0 0
    %759 = vmatprep.subr.bf16.mxu0 0
    %760 = vmatpush1.bf16.msra.mxu0 0
    %761 = vmatprep.subr.bf16.mxu0 0
    %762 = vmatpush1.bf16.msra.mxu0 0
    %763 = vmatprep.mubr.bf16.mxu0 0
    %764 = vmatmul.mubr.bf16.gmra.mrb[0].mxu0 %v729
    %v765 = vpop.f32.mrb[0].mxu0
    %v766 = vadd.f32 0.0, %v765
    %v767 = vpop.f32.mrb[0].mxu0
    %v768 = vpop.f32.mrb[0].mxu0
    %v769 = vpop.f32.mrb[0].mxu0
    %770 = vdwg.mxu0
    %v771 = vunpack.c.l.bf16 %v726
    %v772 = vadd.f32 %v771, %v766
    %v773 = vmul.f32 %v772, 0.5
    %v774 = vtanh.pop %v773
    %v775 = vadd.f32 %v774, 1.0
    %v776 = vmul.f32 %v775, 0.5
    %v777 = vtanh.pop %v772
    %v780 = vunpack.c.l.s4 1983009808
    %v781 = vunpack.c.0.s8 %v780
    %v782 = vlaneseq
    %v783 = vshrl.u32 %v782, 7
    %v784 = vsub.s32 %v781, %v783
    %v785 = vrot.slane %v724, %v784
    %786 = vrot.lane.b32.xlu0 %v785, 32
    %v787 = vpop.permute.xlu0 %786
    %v789 = vmul.f32 %v776, %v787
    %791 = vrot.lane.b32.xlu0 %v777, 64
    %v792 = vpop.permute.xlu0 %791
    %v794 = vmul.f32 %v776, %v792
    %796 = vrot.lane.b32.xlu0 %v794, 32
    %v797 = vpop.permute.xlu0 %796
    %v799 = vadd.f32 %v789, %v797
    %v800 = vtanh.pop %v799
    %802 = vrot.lane.b32.xlu0 %v800, 64
    %v803 = vpop.permute.xlu0 %802
    %v805 = vmul.f32 %v776, %v803
    %807 = vset.pattern.permute.xlu0 0
    %808 = vperm.xlu0 %807, %v59
    %v809 = vpop.permute.xlu0 %808
    %v813 = vunpack.c.l.s4 1983009808
    %v814 = vunpack.c.0.s8 %v813
    %v815 = vlaneseq
    %v816 = vshrl.u32 %v815, 7
    %v817 = vsub.s32 %v814, %v816
    %v818 = vrot.slane %v805, %v817
    %819 = vrot.lane.b32.xlu0 %v818, 32
    %v820 = vpop.permute.xlu0 %819
    %v822 = vmul.f32 %v809, %v820
    %v823 = vsub.f32 1.0, %v59
    %825 = vset.pattern.permute.xlu0 0
    %826 = vperm.xlu0 %825, %v823
    %v827 = vpop.permute.xlu0 %826
    %v829 = vmul.f32 %v827, %v723
    %v830 = vadd.f32 %v822, %v829
    %v833 = vunpack.c.l.s4 1983009808
    %v834 = vunpack.c.0.s8 %v833
    %v835 = vlaneseq
    %v836 = vshrl.u32 %v835, 7
    %v837 = vsub.s32 %v834, %v836
    %v838 = vrot.slane %v799, %v837
    %839 = vrot.lane.b32.xlu0 %v838, 96
    %v840 = vpop.permute.xlu0 %839
    %v842 = vmul.f32 %v809, %v840
    %v843 = vmul.f32 %v827, %v724
    %v844 = vadd.f32 %v842, %v843
    %845 = vst.msk [vmem:[#allocation3] sm:$0x3] %vm204, %v830
    %846 = vst.msk [vmem:[#allocation2] sm:$0x3] %vm204, %v844
    %v847 = vmul.f32 %v830, %v809
    %v848 = vpack.c.bf16 %v847, %v847
    %s849 = scalar_lea.vmem %s3, 5
    %850 = vst.msk [vmem:[%s849] sm:$0x1] %vm209, %v848
    %v851 = vld [vmem:[#allocation3] sm:$0x3]
    %v852 = vld [vmem:[#allocation2] sm:$0x3]
    %s853 = scalar_lea.vmem %s1, 6
    %v854 = vld [vmem:[%s853] sm:$0x1]
    %v855 = vpack.c.bf16 %v851, %v851
    %v857 = vsel %vm86, %v855, 0
    %859 = vmatprep.subr.bf16.mxu0 0
    %860 = vmatpush1.bf16.msra.mxu0 %v82
    %861 = vmatprep.subr.bf16.mxu0 0
    %862 = vmatpush1.bf16.msra.mxu0 %v83
    %863 = vmatprep.subr.bf16.mxu0 0
    %864 = vmatpush1.bf16.msra.mxu0 0
    %865 = vmatprep.subr.bf16.mxu0 0
    %866 = vmatpush1.bf16.msra.mxu0 0
    %867 = vmatprep.subr.bf16.mxu0 0
    %868 = vmatpush1.bf16.msra.mxu0 0
    %869 = vmatprep.subr.bf16.mxu0 0
    %870 = vmatpush1.bf16.msra.mxu0 0
    %871 = vmatprep.subr.bf16.mxu0 0
    %872 = vmatpush1.bf16.msra.mxu0 0
    %873 = vmatprep.subr.bf16.mxu0 0
    %874 = vmatpush1.bf16.msra.mxu0 0
    %875 = vmatprep.subr.bf16.mxu0 0
    %876 = vmatpush1.bf16.msra.mxu0 0
    %877 = vmatprep.subr.bf16.mxu0 0
    %878 = vmatpush1.bf16.msra.mxu0 0
    %879 = vmatprep.subr.bf16.mxu0 0
    %880 = vmatpush1.bf16.msra.mxu0 0
    %881 = vmatprep.subr.bf16.mxu0 0
    %882 = vmatpush1.bf16.msra.mxu0 0
    %883 = vmatprep.subr.bf16.mxu0 0
    %884 = vmatpush1.bf16.msra.mxu0 0
    %885 = vmatprep.subr.bf16.mxu0 0
    %886 = vmatpush1.bf16.msra.mxu0 0
    %887 = vmatprep.subr.bf16.mxu0 0
    %888 = vmatpush1.bf16.msra.mxu0 0
    %889 = vmatprep.subr.bf16.mxu0 0
    %890 = vmatpush1.bf16.msra.mxu0 0
    %891 = vmatprep.mubr.bf16.mxu0 0
    %892 = vmatmul.mubr.bf16.gmra.mrb[0].mxu0 %v857
    %v893 = vpop.f32.mrb[0].mxu0
    %v894 = vadd.f32 0.0, %v893
    %v895 = vpop.f32.mrb[0].mxu0
    %v896 = vpop.f32.mrb[0].mxu0
    %v897 = vpop.f32.mrb[0].mxu0
    %898 = vdwg.mxu0
    %v899 = vunpack.c.l.bf16 %v854
    %v900 = vadd.f32 %v899, %v894
    %v901 = vmul.f32 %v900, 0.5
    %v902 = vtanh.pop %v901
    %v903 = vadd.f32 %v902, 1.0
    %v904 = vmul.f32 %v903, 0.5
    %v905 = vtanh.pop %v900
    %v908 = vunpack.c.l.s4 1983009808
    %v909 = vunpack.c.0.s8 %v908
    %v910 = vlaneseq
    %v911 = vshrl.u32 %v910, 7
    %v912 = vsub.s32 %v909, %v911
    %v913 = vrot.slane %v852, %v912
    %914 = vrot.lane.b32.xlu0 %v913, 32
    %v915 = vpop.permute.xlu0 %914
    %v917 = vmul.f32 %v904, %v915
    %919 = vrot.lane.b32.xlu0 %v905, 64
    %v920 = vpop.permute.xlu0 %919
    %v922 = vmul.f32 %v904, %v920
    %924 = vrot.lane.b32.xlu0 %v922, 32
    %v925 = vpop.permute.xlu0 %924
    %v927 = vadd.f32 %v917, %v925
    %v928 = vtanh.pop %v927
    %930 = vrot.lane.b32.xlu0 %v928, 64
    %v931 = vpop.permute.xlu0 %930
    %v933 = vmul.f32 %v904, %v931
    %935 = vset.pattern.permute.xlu0 0
    %936 = vperm.xlu0 %935, %v64
    %v937 = vpop.permute.xlu0 %936
    %v941 = vunpack.c.l.s4 1983009808
    %v942 = vunpack.c.0.s8 %v941
    %v943 = vlaneseq
    %v944 = vshrl.u32 %v943, 7
    %v945 = vsub.s32 %v942, %v944
    %v946 = vrot.slane %v933, %v945
    %947 = vrot.lane.b32.xlu0 %v946, 32
    %v948 = vpop.permute.xlu0 %947
    %v950 = vmul.f32 %v937, %v948
    %v951 = vsub.f32 1.0, %v64
    %953 = vset.pattern.permute.xlu0 0
    %954 = vperm.xlu0 %953, %v951
    %v955 = vpop.permute.xlu0 %954
    %v957 = vmul.f32 %v955, %v851
    %v958 = vadd.f32 %v950, %v957
    %v961 = vunpack.c.l.s4 1983009808
    %v962 = vunpack.c.0.s8 %v961
    %v963 = vlaneseq
    %v964 = vshrl.u32 %v963, 7
    %v965 = vsub.s32 %v962, %v964
    %v966 = vrot.slane %v927, %v965
    %967 = vrot.lane.b32.xlu0 %v966, 96
    %v968 = vpop.permute.xlu0 %967
    %v970 = vmul.f32 %v937, %v968
    %v971 = vmul.f32 %v955, %v852
    %v972 = vadd.f32 %v970, %v971
    %973 = vst.msk [vmem:[#allocation3] sm:$0x3] %vm204, %v958
    %974 = vst.msk [vmem:[#allocation2] sm:$0x3] %vm204, %v972
    %v975 = vmul.f32 %v958, %v937
    %v976 = vpack.c.bf16 %v975, %v975
    %s977 = scalar_lea.vmem %s3, 6
    %978 = vst.msk [vmem:[%s977] sm:$0x1] %vm209, %v976
    %v979 = vld [vmem:[#allocation3] sm:$0x3]
    %v980 = vld [vmem:[#allocation2] sm:$0x3]
    %s981 = scalar_lea.vmem %s1, 7
    %v982 = vld [vmem:[%s981] sm:$0x1]
    %v983 = vpack.c.bf16 %v979, %v979
    %v985 = vsel %vm86, %v983, 0
    %987 = vmatprep.subr.bf16.mxu0 0
    %988 = vmatpush1.bf16.msra.mxu0 %v82
    %989 = vmatprep.subr.bf16.mxu0 0
    %990 = vmatpush1.bf16.msra.mxu0 %v83
    %991 = vmatprep.subr.bf16.mxu0 0
    %992 = vmatpush1.bf16.msra.mxu0 0
    %993 = vmatprep.subr.bf16.mxu0 0
    %994 = vmatpush1.bf16.msra.mxu0 0
    %995 = vmatprep.subr.bf16.mxu0 0
    %996 = vmatpush1.bf16.msra.mxu0 0
    %997 = vmatprep.subr.bf16.mxu0 0
    %998 = vmatpush1.bf16.msra.mxu0 0
    %999 = vmatprep.subr.bf16.mxu0 0
    %1000 = vmatpush1.bf16.msra.mxu0 0
    %1001 = vmatprep.subr.bf16.mxu0 0
    %1002 = vmatpush1.bf16.msra.mxu0 0
    %1003 = vmatprep.subr.bf16.mxu0 0
    %1004 = vmatpush1.bf16.msra.mxu0 0
    %1005 = vmatprep.subr.bf16.mxu0 0
    %1006 = vmatpush1.bf16.msra.mxu0 0
    %1007 = vmatprep.subr.bf16.mxu0 0
    %1008 = vmatpush1.bf16.msra.mxu0 0
    %1009 = vmatprep.subr.bf16.mxu0 0
    %1010 = vmatpush1.bf16.msra.mxu0 0
    %1011 = vmatprep.subr.bf16.mxu0 0
    %1012 = vmatpush1.bf16.msra.mxu0 0
    %1013 = vmatprep.subr.bf16.mxu0 0
    %1014 = vmatpush1.bf16.msra.mxu0 0
    %1015 = vmatprep.subr.bf16.mxu0 0
    %1016 = vmatpush1.bf16.msra.mxu0 0
    %1017 = vmatprep.subr.bf16.mxu0 0
    %1018 = vmatpush1.bf16.msra.mxu0 0
    %1019 = vmatprep.mubr.bf16.mxu0 0
    %1020 = vmatmul.mubr.bf16.gmra.mrb[0].mxu0 %v985
    %v1021 = vpop.f32.mrb[0].mxu0
    %v1022 = vadd.f32 0.0, %v1021
    %v1023 = vpop.f32.mrb[0].mxu0
    %v1024 = vpop.f32.mrb[0].mxu0
    %v1025 = vpop.f32.mrb[0].mxu0
    %1026 = vdwg.mxu0
    %v1027 = vunpack.c.l.bf16 %v982
    %v1028 = vadd.f32 %v1027, %v1022
    %v1029 = vmul.f32 %v1028, 0.5
    %v1030 = vtanh.pop %v1029
    %v1031 = vadd.f32 %v1030, 1.0
    %v1032 = vmul.f32 %v1031, 0.5
    %v1033 = vtanh.pop %v1028
    %v1036 = vunpack.c.l.s4 1983009808
    %v1037 = vunpack.c.0.s8 %v1036
    %v1038 = vlaneseq
    %v1039 = vshrl.u32 %v1038, 7
    %v1040 = vsub.s32 %v1037, %v1039
    %v1041 = vrot.slane %v980, %v1040
    %1042 = vrot.lane.b32.xlu0 %v1041, 32
    %v1043 = vpop.permute.xlu0 %1042
    %v1045 = vmul.f32 %v1032, %v1043
    %1047 = vrot.lane.b32.xlu0 %v1033, 64
    %v1048 = vpop.permute.xlu0 %1047
    %v1050 = vmul.f32 %v1032, %v1048
    %1052 = vrot.lane.b32.xlu0 %v1050, 32
    %v1053 = vpop.permute.xlu0 %1052
    %v1055 = vadd.f32 %v1045, %v1053
    %v1056 = vtanh.pop %v1055
    %1058 = vrot.lane.b32.xlu0 %v1056, 64
    %v1059 = vpop.permute.xlu0 %1058
    %v1061 = vmul.f32 %v1032, %v1059
    %1063 = vset.pattern.permute.xlu0 0
    %1064 = vperm.xlu0 %1063, %v69
    %v1065 = vpop.permute.xlu0 %1064
    %v1069 = vunpack.c.l.s4 1983009808
    %v1070 = vunpack.c.0.s8 %v1069
    %v1071 = vlaneseq
    %v1072 = vshrl.u32 %v1071, 7
    %v1073 = vsub.s32 %v1070, %v1072
    %v1074 = vrot.slane %v1061, %v1073
    %1075 = vrot.lane.b32.xlu0 %v1074, 32
    %v1076 = vpop.permute.xlu0 %1075
    %v1078 = vmul.f32 %v1065, %v1076
    %v1079 = vsub.f32 1.0, %v69
    %1081 = vset.pattern.permute.xlu0 0
    %1082 = vperm.xlu0 %1081, %v1079
    %v1083 = vpop.permute.xlu0 %1082
    %v1085 = vmul.f32 %v1083, %v979
    %v1086 = vadd.f32 %v1078, %v1085
    %v1089 = vunpack.c.l.s4 1983009808
    %v1090 = vunpack.c.0.s8 %v1089
    %v1091 = vlaneseq
    %v1092 = vshrl.u32 %v1091, 7
    %v1093 = vsub.s32 %v1090, %v1092
    %v1094 = vrot.slane %v1055, %v1093
    %1095 = vrot.lane.b32.xlu0 %v1094, 96
    %v1096 = vpop.permute.xlu0 %1095
    %v1098 = vmul.f32 %v1065, %v1096
    %v1099 = vmul.f32 %v1083, %v980
    %v1100 = vadd.f32 %v1098, %v1099
    %1101 = vst.msk [vmem:[#allocation3] sm:$0x3] %vm204, %v1086
    %1102 = vst.msk [vmem:[#allocation2] sm:$0x3] %vm204, %v1100
    %v1103 = vmul.f32 %v1086, %v1065
    %v1104 = vpack.c.bf16 %v1103, %v1103
    %s1105 = scalar_lea.vmem %s3, 7
    %1106 = vst.msk [vmem:[%s1105] sm:$0x1] %vm209, %v1104
    // Predicated region
    $region18: #{seq2seq_forward.9} parent=1 // pred_check
      _
    $region19: #{seq2seq_forward.9} parent=1 // pred_check_branch
      %1108 = sbr.rel (0) target = $region21
    $region20: #{seq2seq_forward.9} parent=1 // pred_region
      _
    $region21: #{seq2seq_forward.9} parent=1 // pred_fallthru
      _
    // Predicated region
    $region22: #{seq2seq_forward.9} parent=1 // pred_check
      _
    $region23: #{seq2seq_forward.9} parent=1 // pred_check_branch
      %1110 = sbr.rel (0) target = $region25
    $region24: #{seq2seq_forward.9} parent=1 // pred_region
      %s1112 = ssub.s32 32, 32
      %1113 = vsyncadd [#allocation4], %s1112
      %s1115 = sshll.u32 [#allocation3], 4
      %s1116 = int_to_ptr.vmem [resolvable:$true] %s1115
      %1118 = dma.vmem_to_hbm [thread:$0]  %s1116, 32, %s4, [#allocation4]
    $region25: #{seq2seq_forward.9} parent=1 // pred_fallthru
      _
    // Predicated region
    $region26: #{seq2seq_forward.9} parent=1 // pred_check
      _
    $region27: #{seq2seq_forward.9} parent=1 // pred_check_branch
      %1120 = sbr.rel (0) target = $region29
    $region28: #{seq2seq_forward.9} parent=1 // pred_region
      _
    $region29: #{seq2seq_forward.9} parent=1 // pred_fallthru
      _
    // Predicated region
    $region30: #{seq2seq_forward.9} parent=1 // pred_check
      _
    $region31: #{seq2seq_forward.9} parent=1 // pred_check_branch
      %1122 = sbr.rel (0) target = $region33
    $region32: #{seq2seq_forward.9} parent=1 // pred_region
      %1123 = dma.done [#allocation4], 32
    $region33: #{seq2seq_forward.9} parent=1 // pred_fallthru
      _
    %1124 = vsyncpa [#allocation4], 1

// kernel: seq2seq_forward.15
$region0: #{seq2seq_forward.15}
  #allocation0 [shape = 'u32[]', space=smem, size = 0x4, offset = 0x4, fixed_abs, tag = 'smem constant byte address 0x4 - core index']
  #allocation1 [shape = 'u32[144,128]{1,0:T(1,128)}', space=vmem, size = 0x12000, scoped, tag = 'internal scratch']
  #allocation2 [shape = 'f32[16,50]{1,0:T(8,128)}', space=vmem, size = 0x2000, scoped, tag = 'scratch operand']
  %s0 = inlined_call_operand.vmem [shape: bf16[16,32], index: 0, kind: input, shape index: {}]
  %s1 = inlined_call_operand.vmem [shape: bf16[32,50], index: 1, kind: input, shape index: {}]
  %s2 = inlined_call_operand.vmem [shape: f32[1,50], index: 2, kind: input, shape index: {}]
  %s3 = inlined_call_operand.hbm [shape: f32[16,50], index: 3, kind: output, shape index: {}]
  %s4 = sld [smem:[#allocation0]]
  $region30: #{seq2seq_forward.15} parent=0
    _
  %s6 = ssub.s32 1, %s4
  %s7 = scalar_select 0, %s6, %s4
  $region1: #{seq2seq_forward.15} parent=0
    #allocation3 [shape = 'u8[8192]{0}', space=vmem, size = 0x2000, scoped, tag = 'output window, operand 0, single buffered']
    #allocation4 [shape = 's32[1]{0}', space=sflag, size = 0x4, scoped, tag = 'scoped memory for seq2seq_forward.15']
    %8 = vsyncpa [#allocation4], 0
    // Predicated region
    $region2: #{seq2seq_forward.15} parent=1 // pred_check
      _
    $region3: #{seq2seq_forward.15} parent=1 // pred_check_branch
      %10 = sbr.rel (0) target = $region5
    $region4: #{seq2seq_forward.15} parent=1 // pred_region
      _
    $region5: #{seq2seq_forward.15} parent=1 // pred_fallthru
      _
    // Predicated region
    $region6: #{seq2seq_forward.15} parent=1 // pred_check
      _
    $region7: #{seq2seq_forward.15} parent=1 // pred_check_branch
      %12 = sbr.rel (0) target = $region9
    $region8: #{seq2seq_forward.15} parent=1 // pred_region
      _
    $region9: #{seq2seq_forward.15} parent=1 // pred_fallthru
      _
    // Predicated region
    $region10: #{seq2seq_forward.15} parent=1 // pred_check
      _
    $region11: #{seq2seq_forward.15} parent=1 // pred_check_branch
      %14 = sbr.rel (0) target = $region13
    $region12: #{seq2seq_forward.15} parent=1 // pred_region
      _
    $region13: #{seq2seq_forward.15} parent=1 // pred_fallthru
      _
    %p16 = scmp.eq.s32.totalorder 0, 0
    // Predicated region
    $region14: #{seq2seq_forward.15} parent=1 // pred_check
      %p17 = pneg %p16
    $region15: #{seq2seq_forward.15} parent=1 // pred_check_branch
      %19 = sbr.rel (%p17) target = $region17
    $region16: #{seq2seq_forward.15} parent=1 // pred_region
      %vm20 = vcmask 408576
      %21 = vst.msk [vmem:[#allocation2] sm:$0xff] %vm20, 0.0
      %22 = vst.msk [vmem:[#allocation2 + $0x8] sm:$0xff] %vm20, 0.0
    $region17: #{seq2seq_forward.15} parent=1 // pred_fallthru
      _
    %v23 = vld [vmem:[#allocation2] sm:$0xff]
    %v24 = vld [vmem:[#allocation2 + $0x8] sm:$0xff]
    %v25 = vld [vmem:[%s0] sm:$0xf]
    %v26 = vld [vmem:[%s0 + $0x4] sm:$0xf]
    %v27 = vld [vmem:[%s1] sm:$0xf]
    %v28 = vld [vmem:[%s1 + $0x4] sm:$0xf]
    %v29 = vld [vmem:[%s1 + $0x8] sm:$0xf]
    %v30 = vld [vmem:[%s1 + $0xc] sm:$0xf]
    %v33 = vunpack.c.l.b16 %v25
    %v34 = vunpack.c.l.b16 %v26
    %v35 = vpack.c.b16 %v34, %v33
    %v40 = vunpack.c.l.b16 %v27
    %v41 = vunpack.c.l.b16 %v28
    %v42 = vunpack.c.l.b16 %v29
    %v43 = vunpack.c.l.b16 %v30
    %v44 = vpack.c.b16 %v41, %v40
    %v45 = vpack.c.b16 %v43, %v42
    %vm48 = vcmask 261120
    %v50 = vsel %vm48, %v35, 0
    %52 = vmatprep.subr.bf16.mxu0 0
    %53 = vmatpush1.bf16.msra.mxu0 %v44
    %54 = vmatprep.subr.bf16.mxu0 0
    %55 = vmatpush1.bf16.msra.mxu0 %v45
    %56 = vmatprep.subr.bf16.mxu0 0
    %57 = vmatpush1.bf16.msra.mxu0 0
    %58 = vmatprep.subr.bf16.mxu0 0
    %59 = vmatpush1.bf16.msra.mxu0 0
    %60 = vmatprep.subr.bf16.mxu0 0
    %61 = vmatpush1.bf16.msra.mxu0 0
    %62 = vmatprep.subr.bf16.mxu0 0
    %63 = vmatpush1.bf16.msra.mxu0 0
    %64 = vmatprep.subr.bf16.mxu0 0
    %65 = vmatpush1.bf16.msra.mxu0 0
    %66 = vmatprep.subr.bf16.mxu0 0
    %67 = vmatpush1.bf16.msra.mxu0 0
    %68 = vmatprep.subr.bf16.mxu0 0
    %69 = vmatpush1.bf16.msra.mxu0 0
    %70 = vmatprep.subr.bf16.mxu0 0
    %71 = vmatpush1.bf16.msra.mxu0 0
    %72 = vmatprep.subr.bf16.mxu0 0
    %73 = vmatpush1.bf16.msra.mxu0 0
    %74 = vmatprep.subr.bf16.mxu0 0
    %75 = vmatpush1.bf16.msra.mxu0 0
    %76 = vmatprep.subr.bf16.mxu0 0
    %77 = vmatpush1.bf16.msra.mxu0 0
    %78 = vmatprep.subr.bf16.mxu0 0
    %79 = vmatpush1.bf16.msra.mxu0 0
    %80 = vmatprep.subr.bf16.mxu0 0
    %81 = vmatpush1.bf16.msra.mxu0 0
    %82 = vmatprep.subr.bf16.mxu0 0
    %83 = vmatpush1.bf16.msra.mxu0 0
    %84 = vmatprep.mubr.bf16.mxu0 0
    %85 = vmatmul.mubr.bf16.gmra.mrb[0].mxu0 %v50
    %v86 = vpop.f32.mrb[0].mxu0
    %v87 = vadd.f32 0.0, %v86
    %v88 = vpop.f32.mrb[0].mxu0
    %v89 = vpop.f32.mrb[0].mxu0
    %v90 = vadd.f32 0.0, %v89
    %v91 = vpop.f32.mrb[0].mxu0
    %92 = vdwg.mxu0
    %v93 = vadd.f32 %v23, %v87
    %v94 = vadd.f32 %v24, %v90
    %vm95 = vcmask 408576
    %96 = vst.msk [vmem:[#allocation2] sm:$0xff] %vm95, %v93
    %97 = vst.msk [vmem:[#allocation2 + $0x8] sm:$0xff] %vm95, %v94
    // Predicated region
    $region18: #{seq2seq_forward.15} parent=1 // pred_check
      %p98 = pneg %p16
    $region19: #{seq2seq_forward.15} parent=1 // pred_check_branch
      %100 = sbr.rel (%p98) target = $region21
    $region20: #{seq2seq_forward.15} parent=1 // pred_region
      %v101 = vld [vmem:[#allocation2] sm:$0xff]
      %v102 = vld [vmem:[#allocation2 + $0x8] sm:$0xff]
      %v103 = vld [vmem:[%s2] sm:$0x1]
      %v105 = vlaneseq
      %v106 = vshrl.u32 %v105, 7
      %v107 = vsub.s32 0, %v106
      %v108 = vrot.slane %v103, %v107
      %v110 = vadd.f32 %v101, %v108
      %v111 = vadd.f32 %v102, %v108
      %112 = vst.msk [vmem:[#allocation3] sm:$0xff] %vm95, %v110
      %113 = vst.msk [vmem:[#allocation3 + $0x8] sm:$0xff] %vm95, %v111
    $region21: #{seq2seq_forward.15} parent=1 // pred_fallthru
      _
    // Predicated region
    $region22: #{seq2seq_forward.15} parent=1 // pred_check
      _
    $region23: #{seq2seq_forward.15} parent=1 // pred_check_branch
      %115 = sbr.rel (0) target = $region25
    $region24: #{seq2seq_forward.15} parent=1 // pred_region
      %s117 = ssub.s32 256, 256
      %118 = vsyncadd [#allocation4], %s117
      %s119 = sshll.u32 [#allocation3], 4
      %s120 = int_to_ptr.vmem [resolvable:$true] %s119
      %125 = dma.vmem_to_hbm [thread:$0]  %s120, 256, %s3, [#allocation4], 128, 128, 8
    $region25: #{seq2seq_forward.15} parent=1 // pred_fallthru
      _
    // Predicated region
    $region26: #{seq2seq_forward.15} parent=1 // pred_check
      _
    $region27: #{seq2seq_forward.15} parent=1 // pred_check_branch
      %127 = sbr.rel (0) target = $region29
    $region28: #{seq2seq_forward.15} parent=1 // pred_region
      %128 = dma.done [#allocation4], 256
    $region29: #{seq2seq_forward.15} parent=1 // pred_fallthru
      _
    %129 = vsyncpa [#allocation4], 1

// kernel: seq2seq_forward.14
$region0: #{seq2seq_forward.14}
  #allocation0 [shape = 'u32[]', space=smem, size = 0x4, offset = 0x4, fixed_abs, tag = 'smem constant byte address 0x4 - core index']
  #allocation1 [shape = 'u32[144,128]{1,0:T(1,128)}', space=vmem, size = 0x12000, scoped, tag = 'internal scratch']
  #allocation2 [shape = 'f32[2,32]{1,0:T(2,128)}', space=vmem, size = 0x400, scoped, tag = 'scratch operand']
  %s0 = inlined_call_operand.vmem [shape: s32[2,1], index: 0, kind: input, shape index: {}]
  %s1 = inlined_call_operand.vmem [shape: bf16[8,2,128], index: 1, kind: input, shape index: {}]
  %s2 = inlined_call_operand.vmem [shape: bf16[32,128], index: 2, kind: input, shape index: {}]
  %s3 = inlined_call_operand.vmem [shape: f32[2,128], index: 3, kind: input, shape index: {}]
  %s4 = inlined_call_operand.vmem [shape: bf16[2,8,32], index: 4, kind: output, shape index: {0}]
  %s5 = inlined_call_operand.hbm [shape: f32[2,32], index: 5, kind: output, shape index: {1}]
  %6 = xla_tuple %s4, %s5
  %s7 = sld [smem:[#allocation0]]
  $region38: #{seq2seq_forward.14} parent=0
    _
  %s9 = ssub.s32 1, %s7
  %s10 = scalar_select 0, %s9, %s7
  $region1: #{seq2seq_forward.14} parent=0
    #allocation3 [shape = 'u8[1024]{0}', space=vmem, size = 0x400, scoped, tag = 'output window, operand 1, single buffered']
    #allocation4 [shape = 's32[1]{0}', space=sflag, size = 0x4, scoped, tag = 'scoped memory for seq2seq_forward.14']
    %11 = vsyncpa [#allocation4], 0
    // Predicated region
    $region2: #{seq2seq_forward.14} parent=1 // pred_check
      _
    $region3: #{seq2seq_forward.14} parent=1 // pred_check_branch
      %13 = sbr.rel (0) target = $region5
    $region4: #{seq2seq_forward.14} parent=1 // pred_region
      _
    $region5: #{seq2seq_forward.14} parent=1 // pred_fallthru
      _
    // Predicated region
    $region6: #{seq2seq_forward.14} parent=1 // pred_check
      _
    $region7: #{seq2seq_forward.14} parent=1 // pred_check_branch
      %15 = sbr.rel (0) target = $region9
    $region8: #{seq2seq_forward.14} parent=1 // pred_region
      _
    $region9: #{seq2seq_forward.14} parent=1 // pred_fallthru
      _
    // Predicated region
    $region10: #{seq2seq_forward.14} parent=1 // pred_check
      _
    $region11: #{seq2seq_forward.14} parent=1 // pred_check_branch
      %17 = sbr.rel (0) target = $region13
    $region12: #{seq2seq_forward.14} parent=1 // pred_region
      _
    $region13: #{seq2seq_forward.14} parent=1 // pred_fallthru
      _
    // Predicated region
    $region14: #{seq2seq_forward.14} parent=1 // pred_check
      _
    $region15: #{seq2seq_forward.14} parent=1 // pred_check_branch
      %19 = sbr.rel (0) target = $region17
    $region16: #{seq2seq_forward.14} parent=1 // pred_region
      _
    $region17: #{seq2seq_forward.14} parent=1 // pred_fallthru
      _
    %p21 = scmp.eq.s32.totalorder 0, 0
    // Predicated region
    $region18: #{seq2seq_forward.14} parent=1 // pred_check
      %p22 = pneg %p21
    $region19: #{seq2seq_forward.14} parent=1 // pred_check_branch
      %24 = sbr.rel (%p22) target = $region21
    $region20: #{seq2seq_forward.14} parent=1 // pred_region
      %vm25 = vcmask 254976
      %26 = vst.msk [vmem:[#allocation3] sm:$0x3] %vm25, 0.0
      %27 = vst.msk [vmem:[#allocation2] sm:$0x3] %vm25, 0.0
    $region21: #{seq2seq_forward.14} parent=1 // pred_fallthru
      _
    %v28 = vld [vmem:[%s0] sm:$0x3]
    %v29 = vld [vmem:[%s2] sm:$0xf]
    %v30 = vld [vmem:[%s2 + $0x4] sm:$0xf]
    %v31 = vld [vmem:[%s2 + $0x8] sm:$0xf]
    %v32 = vld [vmem:[%s2 + $0xc] sm:$0xf]
    %v33 = vld [vmem:[%s3] sm:$0x3]
    %s34 = smul.u32 0, 8
    %v35 = vstv %s34
    %vm36 = vcmp.lt.s32.totalorder %v35, %v28
    %v37 = vsel %vm36, 1, 0
    %v38 = vcvt.s32.f32 %v37
    %s39 = sadd.s32 %s34, 1
    %v40 = vstv %s39
    %vm41 = vcmp.lt.s32.totalorder %v40, %v28
    %v42 = vsel %vm41, 1, 0
    %v43 = vcvt.s32.f32 %v42
    %s44 = sadd.s32 %s34, 2
    %v45 = vstv %s44
    %vm46 = vcmp.lt.s32.totalorder %v45, %v28
    %v47 = vsel %vm46, 1, 0
    %v48 = vcvt.s32.f32 %v47
    %s49 = sadd.s32 %s34, 3
    %v50 = vstv %s49
    %vm51 = vcmp.lt.s32.totalorder %v50, %v28
    %v52 = vsel %vm51, 1, 0
    %v53 = vcvt.s32.f32 %v52
    %s54 = sadd.s32 %s34, 4
    %v55 = vstv %s54
    %vm56 = vcmp.lt.s32.totalorder %v55, %v28
    %v57 = vsel %vm56, 1, 0
    %v58 = vcvt.s32.f32 %v57
    %s59 = sadd.s32 %s34, 5
    %v60 = vstv %s59
    %vm61 = vcmp.lt.s32.totalorder %v60, %v28
    %v62 = vsel %vm61, 1, 0
    %v63 = vcvt.s32.f32 %v62
    %s64 = sadd.s32 %s34, 6
    %v65 = vstv %s64
    %vm66 = vcmp.lt.s32.totalorder %v65, %v28
    %v67 = vsel %vm66, 1, 0
    %v68 = vcvt.s32.f32 %v67
    %s69 = sadd.s32 %s34, 7
    %v70 = vstv %s69
    %vm71 = vcmp.lt.s32.totalorder %v70, %v28
    %v72 = vsel %vm71, 1, 0
    %v73 = vcvt.s32.f32 %v72
    %v74 = vld [vmem:[#allocation3] sm:$0x3]
    %v75 = vld [vmem:[#allocation2] sm:$0x3]
    %v76 = vld [vmem:[%s1] sm:$0x1]
    %v77 = vpack.c.bf16 %v74, %v74
    %v82 = vunpack.c.l.b16 %v29
    %v83 = vunpack.c.l.b16 %v30
    %v84 = vunpack.c.l.b16 %v31
    %v85 = vunpack.c.l.b16 %v32
    %v86 = vpack.c.b16 %v83, %v82
    %v87 = vpack.c.b16 %v85, %v84
    %vm90 = vcmask 261120
    %v92 = vsel %vm90, %v77, 0
    %94 = vmatprep.subr.bf16.mxu0 0
    %95 = vmatpush1.bf16.msra.mxu0 %v86
    %96 = vmatprep.subr.bf16.mxu0 0
    %97 = vmatpush1.bf16.msra.mxu0 %v87
    %98 = vmatprep.subr.bf16.mxu0 0
    %99 = vmatpush1.bf16.msra.mxu0 0
    %100 = vmatprep.subr.bf16.mxu0 0
    %101 = vmatpush1.bf16.msra.mxu0 0
    %102 = vmatprep.subr.bf16.mxu0 0
    %103 = vmatpush1.bf16.msra.mxu0 0
    %104 = vmatprep.subr.bf16.mxu0 0
    %105 = vmatpush1.bf16.msra.mxu0 0
    %106 = vmatprep.subr.bf16.mxu0 0
    %107 = vmatpush1.bf16.msra.mxu0 0
    %108 = vmatprep.subr.bf16.mxu0 0
    %109 = vmatpush1.bf16.msra.mxu0 0
    %110 = vmatprep.subr.bf16.mxu0 0
    %111 = vmatpush1.bf16.msra.mxu0 0
    %112 = vmatprep.subr.bf16.mxu0 0
    %113 = vmatpush1.bf16.msra.mxu0 0
    %114 = vmatprep.subr.bf16.mxu0 0
    %115 = vmatpush1.bf16.msra.mxu0 0
    %116 = vmatprep.subr.bf16.mxu0 0
    %117 = vmatpush1.bf16.msra.mxu0 0
    %118 = vmatprep.subr.bf16.mxu0 0
    %119 = vmatpush1.bf16.msra.mxu0 0
    %120 = vmatprep.subr.bf16.mxu0 0
    %121 = vmatpush1.bf16.msra.mxu0 0
    %122 = vmatprep.subr.bf16.mxu0 0
    %123 = vmatpush1.bf16.msra.mxu0 0
    %124 = vmatprep.subr.bf16.mxu0 0
    %125 = vmatpush1.bf16.msra.mxu0 0
    %126 = vmatprep.mubr.bf16.mxu0 0
    %127 = vmatmul.mubr.bf16.gmra.mrb[0].mxu0 %v92
    %v128 = vpop.f32.mrb[0].mxu0
    %v129 = vadd.f32 0.0, %v128
    %v130 = vpop.f32.mrb[0].mxu0
    %v131 = vpop.f32.mrb[0].mxu0
    %v132 = vpop.f32.mrb[0].mxu0
    %133 = vdwg.mxu0
    %v134 = vunpack.c.l.bf16 %v76
    %v135 = vadd.f32 %v134, %v129
    %v136 = vadd.f32 %v135, %v33
    %v137 = vmul.f32 %v136, 0.5
    %v138 = vtanh.pop %v137
    %v139 = vadd.f32 %v138, 1.0
    %v140 = vmul.f32 %v139, 0.5
    %v141 = vtanh.pop %v136
    %v144 = vunpack.c.l.s4 1983009808
    %v145 = vunpack.c.0.s8 %v144
    %v146 = vlaneseq
    %v147 = vshrl.u32 %v146, 7
    %v148 = vsub.s32 %v145, %v147
    %v149 = vrot.slane %v75, %v148
    %150 = vrot.lane.b32.xlu0 %v149, 32
    %v151 = vpop.permute.xlu0 %150
    %v153 = vmul.f32 %v140, %v151
    %155 = vrot.lane.b32.xlu0 %v141, 64
    %v156 = vpop.permute.xlu0 %155
    %v158 = vmul.f32 %v140, %v156
    %160 = vrot.lane.b32.xlu0 %v158, 32
    %v161 = vpop.permute.xlu0 %160
    %v163 = vadd.f32 %v153, %v161
    %v164 = vtanh.pop %v163
    %166 = vrot.lane.b32.xlu0 %v164, 64
    %v167 = vpop.permute.xlu0 %166
    %v169 = vmul.f32 %v140, %v167
    %171 = vset.pattern.permute.xlu0 0
    %172 = vperm.xlu0 %171, %v38
    %v173 = vpop.permute.xlu0 %172
    %v177 = vunpack.c.l.s4 1983009808
    %v178 = vunpack.c.0.s8 %v177
    %v179 = vlaneseq
    %v180 = vshrl.u32 %v179, 7
    %v181 = vsub.s32 %v178, %v180
    %v182 = vrot.slane %v169, %v181
    %183 = vrot.lane.b32.xlu0 %v182, 32
    %v184 = vpop.permute.xlu0 %183
    %v186 = vmul.f32 %v173, %v184
    %v187 = vsub.f32 1.0, %v38
    %189 = vset.pattern.permute.xlu0 0
    %190 = vperm.xlu0 %189, %v187
    %v191 = vpop.permute.xlu0 %190
    %v193 = vmul.f32 %v191, %v74
    %v194 = vadd.f32 %v186, %v193
    %v197 = vunpack.c.l.s4 1983009808
    %v198 = vunpack.c.0.s8 %v197
    %v199 = vlaneseq
    %v200 = vshrl.u32 %v199, 7
    %v201 = vsub.s32 %v198, %v200
    %v202 = vrot.slane %v163, %v201
    %203 = vrot.lane.b32.xlu0 %v202, 96
    %v204 = vpop.permute.xlu0 %203
    %v206 = vmul.f32 %v173, %v204
    %v207 = vmul.f32 %v191, %v75
    %v208 = vadd.f32 %v206, %v207
    %vm209 = vcmask 254976
    %210 = vst.msk [vmem:[#allocation3] sm:$0x3] %vm209, %v194
    %211 = vst.msk [vmem:[#allocation2] sm:$0x3] %vm209, %v208
    %v212 = vmul.f32 %v194, %v173
    %v213 = vpack.c.bf16 %v212, %v212
    %v216 = vunpack.c.l.s4 1966171168
    %v217 = vunpack.c.0.s8 %v216
    %v218 = vlaneseq
    %v219 = vshrl.u32 %v218, 7
    %v220 = vsub.s32 %v217, %v219
    %v221 = vrot.slane %v213, %v220
    %v223 = vunpack.c.l.s4 1966171168
    %v224 = vunpack.c.0.s8 %v223
    %v225 = vlaneseq
    %v226 = vshrl.u32 %v225, 7
    %v227 = vsub.s32 %v224, %v226
    %v228 = vrot.slane %v221, %v227
    %v229 = vunpack.i.l.s16 %v228
    %v230 = vunpack.i.h.s16 %v228
    %v231 = vpack.i.b16 %v229, %v229
    %v232 = vpack.i.b16 %v230, %v230
    %v234 = vunpack.c.l.s4 286326784
    %v235 = vunpack.c.0.s8 %v234
    %v236 = vlaneseq
    %v237 = vshrl.u32 %v236, 7
    %v238 = vsub.s32 %v235, %v237
    %v239 = vrot.slane %v231, %v238
    %v241 = vunpack.c.l.s4 286326784
    %v242 = vunpack.c.0.s8 %v241
    %v243 = vlaneseq
    %v244 = vshrl.u32 %v243, 7
    %v245 = vsub.s32 %v242, %v244
    %v246 = vrot.slane %v232, %v245
    %vm249 = vcmask 253952
    %vm250 = vsmask.f32 256
    %vm251 = vmand %vm249, %vm250
    %v252 = vld [vmem:[%s4] sm:$0x1]
    %v253 = vsel %vm251, %v239, %v252
    %254 = vst [vmem:[%s4] sm:$0x1] %v253
    %v255 = vld [vmem:[%s4 + $0x4] sm:$0x1]
    %v256 = vsel %vm251, %v246, %v255
    %257 = vst [vmem:[%s4 + $0x4] sm:$0x1] %v256
    %v258 = vld [vmem:[#allocation3] sm:$0x3]
    %v259 = vld [vmem:[#allocation2] sm:$0x3]
    %s260 = scalar_lea.vmem %s1, 1
    %v261 = vld [vmem:[%s260] sm:$0x1]
    %v262 = vpack.c.bf16 %v258, %v258
    %v264 = vsel %vm90, %v262, 0
    %266 = vmatprep.subr.bf16.mxu0 0
    %267 = vmatpush1.bf16.msra.mxu0 %v86
    %268 = vmatprep.subr.bf16.mxu0 0
    %269 = vmatpush1.bf16.msra.mxu0 %v87
    %270 = vmatprep.subr.bf16.mxu0 0
    %271 = vmatpush1.bf16.msra.mxu0 0
    %272 = vmatprep.subr.bf16.mxu0 0
    %273 = vmatpush1.bf16.msra.mxu0 0
    %274 = vmatprep.subr.bf16.mxu0 0
    %275 = vmatpush1.bf16.msra.mxu0 0
    %276 = vmatprep.subr.bf16.mxu0 0
    %277 = vmatpush1.bf16.msra.mxu0 0
    %278 = vmatprep.subr.bf16.mxu0 0
    %279 = vmatpush1.bf16.msra.mxu0 0
    %280 = vmatprep.subr.bf16.mxu0 0
    %281 = vmatpush1.bf16.msra.mxu0 0
    %282 = vmatprep.subr.bf16.mxu0 0
    %283 = vmatpush1.bf16.msra.mxu0 0
    %284 = vmatprep.subr.bf16.mxu0 0
    %285 = vmatpush1.bf16.msra.mxu0 0
    %286 = vmatprep.subr.bf16.mxu0 0
    %287 = vmatpush1.bf16.msra.mxu0 0
    %288 = vmatprep.subr.bf16.mxu0 0
    %289 = vmatpush1.bf16.msra.mxu0 0
    %290 = vmatprep.subr.bf16.mxu0 0
    %291 = vmatpush1.bf16.msra.mxu0 0
    %292 = vmatprep.subr.bf16.mxu0 0
    %293 = vmatpush1.bf16.msra.mxu0 0
    %294 = vmatprep.subr.bf16.mxu0 0
    %295 = vmatpush1.bf16.msra.mxu0 0
    %296 = vmatprep.subr.bf16.mxu0 0
    %297 = vmatpush1.bf16.msra.mxu0 0
    %298 = vmatprep.mubr.bf16.mxu0 0
    %299 = vmatmul.mubr.bf16.gmra.mrb[0].mxu0 %v264
    %v300 = vpop.f32.mrb[0].mxu0
    %v301 = vadd.f32 0.0, %v300
    %v302 = vpop.f32.mrb[0].mxu0
    %v303 = vpop.f32.mrb[0].mxu0
    %v304 = vpop.f32.mrb[0].mxu0
    %305 = vdwg.mxu0
    %v306 = vunpack.c.l.bf16 %v261
    %v307 = vadd.f32 %v306, %v301
    %v308 = vadd.f32 %v307, %v33
    %v309 = vmul.f32 %v308, 0.5
    %v310 = vtanh.pop %v309
    %v311 = vadd.f32 %v310, 1.0
    %v312 = vmul.f32 %v311, 0.5
    %v313 = vtanh.pop %v308
    %v316 = vunpack.c.l.s4 1983009808
    %v317 = vunpack.c.0.s8 %v316
    %v318 = vlaneseq
    %v319 = vshrl.u32 %v318, 7
    %v320 = vsub.s32 %v317, %v319
    %v321 = vrot.slane %v259, %v320
    %322 = vrot.lane.b32.xlu0 %v321, 32
    %v323 = vpop.permute.xlu0 %322
    %v325 = vmul.f32 %v312, %v323
    %327 = vrot.lane.b32.xlu0 %v313, 64
    %v328 = vpop.permute.xlu0 %327
    %v330 = vmul.f32 %v312, %v328
    %332 = vrot.lane.b32.xlu0 %v330, 32
    %v333 = vpop.permute.xlu0 %332
    %v335 = vadd.f32 %v325, %v333
    %v336 = vtanh.pop %v335
    %338 = vrot.lane.b32.xlu0 %v336, 64
    %v339 = vpop.permute.xlu0 %338
    %v341 = vmul.f32 %v312, %v339
    %343 = vset.pattern.permute.xlu0 0
    %344 = vperm.xlu0 %343, %v43
    %v345 = vpop.permute.xlu0 %344
    %v349 = vunpack.c.l.s4 1983009808
    %v350 = vunpack.c.0.s8 %v349
    %v351 = vlaneseq
    %v352 = vshrl.u32 %v351, 7
    %v353 = vsub.s32 %v350, %v352
    %v354 = vrot.slane %v341, %v353
    %355 = vrot.lane.b32.xlu0 %v354, 32
    %v356 = vpop.permute.xlu0 %355
    %v358 = vmul.f32 %v345, %v356
    %v359 = vsub.f32 1.0, %v43
    %361 = vset.pattern.permute.xlu0 0
    %362 = vperm.xlu0 %361, %v359
    %v363 = vpop.permute.xlu0 %362
    %v365 = vmul.f32 %v363, %v258
    %v366 = vadd.f32 %v358, %v365
    %v369 = vunpack.c.l.s4 1983009808
    %v370 = vunpack.c.0.s8 %v369
    %v371 = vlaneseq
    %v372 = vshrl.u32 %v371, 7
    %v373 = vsub.s32 %v370, %v372
    %v374 = vrot.slane %v335, %v373
    %375 = vrot.lane.b32.xlu0 %v374, 96
    %v376 = vpop.permute.xlu0 %375
    %v378 = vmul.f32 %v345, %v376
    %v379 = vmul.f32 %v363, %v259
    %v380 = vadd.f32 %v378, %v379
    %381 = vst.msk [vmem:[#allocation3] sm:$0x3] %vm209, %v366
    %382 = vst.msk [vmem:[#allocation2] sm:$0x3] %vm209, %v380
    %v383 = vmul.f32 %v366, %v345
    %v384 = vpack.c.bf16 %v383, %v383
    %v387 = vunpack.c.l.s4 1966171168
    %v388 = vunpack.c.0.s8 %v387
    %v389 = vlaneseq
    %v390 = vshrl.u32 %v389, 7
    %v391 = vsub.s32 %v388, %v390
    %v392 = vrot.slane %v384, %v391
    %v394 = vunpack.c.l.s4 1966171168
    %v395 = vunpack.c.0.s8 %v394
    %v396 = vlaneseq
    %v397 = vshrl.u32 %v396, 7
    %v398 = vsub.s32 %v395, %v397
    %v399 = vrot.slane %v392, %v398
    %v400 = vunpack.i.l.s16 %v399
    %v401 = vunpack.i.h.s16 %v399
    %v402 = vpack.i.b16 %v400, %v400
    %v403 = vpack.i.b16 %v401, %v401
    %v405 = vunpack.c.l.s4 286326784
    %v406 = vunpack.c.0.s8 %v405
    %v407 = vlaneseq
    %v408 = vshrl.u32 %v407, 7
    %v409 = vsub.s32 %v406, %v408
    %v410 = vrot.slane %v402, %v409
    %v412 = vunpack.c.l.s4 286326784
    %v413 = vunpack.c.0.s8 %v412
    %v414 = vlaneseq
    %v415 = vshrl.u32 %v414, 7
    %v416 = vsub.s32 %v413, %v415
    %v417 = vrot.slane %v403, %v416
    %vm420 = vsmask.f32 7938
    %vm421 = vmand %vm249, %vm420
    %v422 = vld [vmem:[%s4] sm:$0x1]
    %v423 = vsel %vm421, %v410, %v422
    %424 = vst [vmem:[%s4] sm:$0x1] %v423
    %v425 = vld [vmem:[%s4 + $0x4] sm:$0x1]
    %v426 = vsel %vm421, %v417, %v425
    %427 = vst [vmem:[%s4 + $0x4] sm:$0x1] %v426
    %v428 = vld [vmem:[#allocation3] sm:$0x3]
    %v429 = vld [vmem:[#allocation2] sm:$0x3]
    %s430 = scalar_lea.vmem %s1, 2
    %v431 = vld [vmem:[%s430] sm:$0x1]
    %v432 = vpack.c.bf16 %v428, %v428
    %v434 = vsel %vm90, %v432, 0
    %436 = vmatprep.subr.bf16.mxu0 0
    %437 = vmatpush1.bf16.msra.mxu0 %v86
    %438 = vmatprep.subr.bf16.mxu0 0
    %439 = vmatpush1.bf16.msra.mxu0 %v87
    %440 = vmatprep.subr.bf16.mxu0 0
    %441 = vmatpush1.bf16.msra.mxu0 0
    %442 = vmatprep.subr.bf16.mxu0 0
    %443 = vmatpush1.bf16.msra.mxu0 0
    %444 = vmatprep.subr.bf16.mxu0 0
    %445 = vmatpush1.bf16.msra.mxu0 0
    %446 = vmatprep.subr.bf16.mxu0 0
    %447 = vmatpush1.bf16.msra.mxu0 0
    %448 = vmatprep.subr.bf16.mxu0 0
    %449 = vmatpush1.bf16.msra.mxu0 0
    %450 = vmatprep.subr.bf16.mxu0 0
    %451 = vmatpush1.bf16.msra.mxu0 0
    %452 = vmatprep.subr.bf16.mxu0 0
    %453 = vmatpush1.bf16.msra.mxu0 0
    %454 = vmatprep.subr.bf16.mxu0 0
    %455 = vmatpush1.bf16.msra.mxu0 0
    %456 = vmatprep.subr.bf16.mxu0 0
    %457 = vmatpush1.bf16.msra.mxu0 0
    %458 = vmatprep.subr.bf16.mxu0 0
    %459 = vmatpush1.bf16.msra.mxu0 0
    %460 = vmatprep.subr.bf16.mxu0 0
    %461 = vmatpush1.bf16.msra.mxu0 0
    %462 = vmatprep.subr.bf16.mxu0 0
    %463 = vmatpush1.bf16.msra.mxu0 0
    %464 = vmatprep.subr.bf16.mxu0 0
    %465 = vmatpush1.bf16.msra.mxu0 0
    %466 = vmatprep.subr.bf16.mxu0 0
    %467 = vmatpush1.bf16.msra.mxu0 0
    %468 = vmatprep.mubr.bf16.mxu0 0
    %469 = vmatmul.mubr.bf16.gmra.mrb[0].mxu0 %v434
    %v470 = vpop.f32.mrb[0].mxu0
    %v471 = vadd.f32 0.0, %v470
    %v472 = vpop.f32.mrb[0].mxu0
    %v473 = vpop.f32.mrb[0].mxu0
    %v474 = vpop.f32.mrb[0].mxu0
    %475 = vdwg.mxu0
    %v476 = vunpack.c.l.bf16 %v431
    %v477 = vadd.f32 %v476, %v471
    %v478 = vadd.f32 %v477, %v33
    %v479 = vmul.f32 %v478, 0.5
    %v480 = vtanh.pop %v479
    %v481 = vadd.f32 %v480, 1.0
    %v482 = vmul.f32 %v481, 0.5
    %v483 = vtanh.pop %v478
    %v486 = vunpack.c.l.s4 1983009808
    %v487 = vunpack.c.0.s8 %v486
    %v488 = vlaneseq
    %v489 = vshrl.u32 %v488, 7
    %v490 = vsub.s32 %v487, %v489
    %v491 = vrot.slane %v429, %v490
    %492 = vrot.lane.b32.xlu0 %v491, 32
    %v493 = vpop.permute.xlu0 %492
    %v495 = vmul.f32 %v482, %v493
    %497 = vrot.lane.b32.xlu0 %v483, 64
    %v498 = vpop.permute.xlu0 %497
    %v500 = vmul.f32 %v482, %v498
    %502 = vrot.lane.b32.xlu0 %v500, 32
    %v503 = vpop.permute.xlu0 %502
    %v505 = vadd.f32 %v495, %v503
    %v506 = vtanh.pop %v505
    %508 = vrot.lane.b32.xlu0 %v506, 64
    %v509 = vpop.permute.xlu0 %508
    %v511 = vmul.f32 %v482, %v509
    %513 = vset.pattern.permute.xlu0 0
    %514 = vperm.xlu0 %513, %v48
    %v515 = vpop.permute.xlu0 %514
    %v519 = vunpack.c.l.s4 1983009808
    %v520 = vunpack.c.0.s8 %v519
    %v521 = vlaneseq
    %v522 = vshrl.u32 %v521, 7
    %v523 = vsub.s32 %v520, %v522
    %v524 = vrot.slane %v511, %v523
    %525 = vrot.lane.b32.xlu0 %v524, 32
    %v526 = vpop.permute.xlu0 %525
    %v528 = vmul.f32 %v515, %v526
    %v529 = vsub.f32 1.0, %v48
    %531 = vset.pattern.permute.xlu0 0
    %532 = vperm.xlu0 %531, %v529
    %v533 = vpop.permute.xlu0 %532
    %v535 = vmul.f32 %v533, %v428
    %v536 = vadd.f32 %v528, %v535
    %v539 = vunpack.c.l.s4 1983009808
    %v540 = vunpack.c.0.s8 %v539
    %v541 = vlaneseq
    %v542 = vshrl.u32 %v541, 7
    %v543 = vsub.s32 %v540, %v542
    %v544 = vrot.slane %v505, %v543
    %545 = vrot.lane.b32.xlu0 %v544, 96
    %v546 = vpop.permute.xlu0 %545
    %v548 = vmul.f32 %v515, %v546
    %v549 = vmul.f32 %v533, %v429
    %v550 = vadd.f32 %v548, %v549
    %551 = vst.msk [vmem:[#allocation3] sm:$0x3] %vm209, %v536
    %552 = vst.msk [vmem:[#allocation2] sm:$0x3] %vm209, %v550
    %v553 = vmul.f32 %v536, %v515
    %v554 = vpack.c.bf16 %v553, %v553
    %v557 = vunpack.c.l.s4 1966171168
    %v558 = vunpack.c.0.s8 %v557
    %v559 = vlaneseq
    %v560 = vshrl.u32 %v559, 7
    %v561 = vsub.s32 %v558, %v560
    %v562 = vrot.slane %v554, %v561
    %v564 = vunpack.c.l.s4 1966171168
    %v565 = vunpack.c.0.s8 %v564
    %v566 = vlaneseq
    %v567 = vshrl.u32 %v566, 7
    %v568 = vsub.s32 %v565, %v567
    %v569 = vrot.slane %v562, %v568
    %v570 = vunpack.i.l.s16 %v569
    %v571 = vunpack.i.h.s16 %v569
    %v572 = vpack.i.b16 %v570, %v570
    %v573 = vpack.i.b16 %v571, %v571
    %v575 = vunpack.c.l.s4 286326784
    %v576 = vunpack.c.0.s8 %v575
    %v577 = vlaneseq
    %v578 = vshrl.u32 %v577, 7
    %v579 = vsub.s32 %v576, %v578
    %v580 = vrot.slane %v572, %v579
    %v582 = vunpack.c.l.s4 286326784
    %v583 = vunpack.c.0.s8 %v582
    %v584 = vlaneseq
    %v585 = vshrl.u32 %v584, 7
    %v586 = vsub.s32 %v583, %v585
    %v587 = vrot.slane %v573, %v586
    %vm590 = vcmask 254977
    %vm591 = vsmask.f32 1280
    %vm592 = vmand %vm590, %vm591
    %v593 = vld [vmem:[%s4] sm:$0x2]
    %v594 = vsel %vm592, %v580, %v593
    %595 = vst [vmem:[%s4] sm:$0x2] %v594
    %v596 = vld [vmem:[%s4 + $0x4] sm:$0x2]
    %v597 = vsel %vm592, %v587, %v596
    %598 = vst [vmem:[%s4 + $0x4] sm:$0x2] %v597
    %v599 = vld [vmem:[#allocation3] sm:$0x3]
    %v600 = vld [vmem:[#allocation2] sm:$0x3]
    %s601 = scalar_lea.vmem %s1, 3
    %v602 = vld [vmem:[%s601] sm:$0x1]
    %v603 = vpack.c.bf16 %v599, %v599
    %v605 = vsel %vm90, %v603, 0
    %607 = vmatprep.subr.bf16.mxu0 0
    %608 = vmatpush1.bf16.msra.mxu0 %v86
    %609 = vmatprep.subr.bf16.mxu0 0
    %610 = vmatpush1.bf16.msra.mxu0 %v87
    %611 = vmatprep.subr.bf16.mxu0 0
    %612 = vmatpush1.bf16.msra.mxu0 0
    %613 = vmatprep.subr.bf16.mxu0 0
    %614 = vmatpush1.bf16.msra.mxu0 0
    %615 = vmatprep.subr.bf16.mxu0 0
    %616 = vmatpush1.bf16.msra.mxu0 0
    %617 = vmatprep.subr.bf16.mxu0 0
    %618 = vmatpush1.bf16.msra.mxu0 0
    %619 = vmatprep.subr.bf16.mxu0 0
    %620 = vmatpush1.bf16.msra.mxu0 0
    %621 = vmatprep.subr.bf16.mxu0 0
    %622 = vmatpush1.bf16.msra.mxu0 0
    %623 = vmatprep.subr.bf16.mxu0 0
    %624 = vmatpush1.bf16.msra.mxu0 0
    %625 = vmatprep.subr.bf16.mxu0 0
    %626 = vmatpush1.bf16.msra.mxu0 0
    %627 = vmatprep.subr.bf16.mxu0 0
    %628 = vmatpush1.bf16.msra.mxu0 0
    %629 = vmatprep.subr.bf16.mxu0 0
    %630 = vmatpush1.bf16.msra.mxu0 0
    %631 = vmatprep.subr.bf16.mxu0 0
    %632 = vmatpush1.bf16.msra.mxu0 0
    %633 = vmatprep.subr.bf16.mxu0 0
    %634 = vmatpush1.bf16.msra.mxu0 0
    %635 = vmatprep.subr.bf16.mxu0 0
    %636 = vmatpush1.bf16.msra.mxu0 0
    %637 = vmatprep.subr.bf16.mxu0 0
    %638 = vmatpush1.bf16.msra.mxu0 0
    %639 = vmatprep.mubr.bf16.mxu0 0
    %640 = vmatmul.mubr.bf16.gmra.mrb[0].mxu0 %v605
    %v641 = vpop.f32.mrb[0].mxu0
    %v642 = vadd.f32 0.0, %v641
    %v643 = vpop.f32.mrb[0].mxu0
    %v644 = vpop.f32.mrb[0].mxu0
    %v645 = vpop.f32.mrb[0].mxu0
    %646 = vdwg.mxu0
    %v647 = vunpack.c.l.bf16 %v602
    %v648 = vadd.f32 %v647, %v642
    %v649 = vadd.f32 %v648, %v33
    %v650 = vmul.f32 %v649, 0.5
    %v651 = vtanh.pop %v650
    %v652 = vadd.f32 %v651, 1.0
    %v653 = vmul.f32 %v652, 0.5
    %v654 = vtanh.pop %v649
    %v657 = vunpack.c.l.s4 1983009808
    %v658 = vunpack.c.0.s8 %v657
    %v659 = vlaneseq
    %v660 = vshrl.u32 %v659, 7
    %v661 = vsub.s32 %v658, %v660
    %v662 = vrot.slane %v600, %v661
    %663 = vrot.lane.b32.xlu0 %v662, 32
    %v664 = vpop.permute.xlu0 %663
    %v666 = vmul.f32 %v653, %v664
    %668 = vrot.lane.b32.xlu0 %v654, 64
    %v669 = vpop.permute.xlu0 %668
    %v671 = vmul.f32 %v653, %v669
    %673 = vrot.lane.b32.xlu0 %v671, 32
    %v674 = vpop.permute.xlu0 %673
    %v676 = vadd.f32 %v666, %v674
    %v677 = vtanh.pop %v676
    %679 = vrot.lane.b32.xlu0 %v677, 64
    %v680 = vpop.permute.xlu0 %679
    %v682 = vmul.f32 %v653, %v680
    %684 = vset.pattern.permute.xlu0 0
    %685 = vperm.xlu0 %684, %v53
    %v686 = vpop.permute.xlu0 %685
    %v690 = vunpack.c.l.s4 1983009808
    %v691 = vunpack.c.0.s8 %v690
    %v692 = vlaneseq
    %v693 = vshrl.u32 %v692, 7
    %v694 = vsub.s32 %v691, %v693
    %v695 = vrot.slane %v682, %v694
    %696 = vrot.lane.b32.xlu0 %v695, 32
    %v697 = vpop.permute.xlu0 %696
    %v699 = vmul.f32 %v686, %v697
    %v700 = vsub.f32 1.0, %v53
    %702 = vset.pattern.permute.xlu0 0
    %703 = vperm.xlu0 %702, %v700
    %v704 = vpop.permute.xlu0 %703
    %v706 = vmul.f32 %v704, %v599
    %v707 = vadd.f32 %v699, %v706
    %v710 = vunpack.c.l.s4 1983009808
    %v711 = vunpack.c.0.s8 %v710
    %v712 = vlaneseq
    %v713 = vshrl.u32 %v712, 7
    %v714 = vsub.s32 %v711, %v713
    %v715 = vrot.slane %v676, %v714
    %716 = vrot.lane.b32.xlu0 %v715, 96
    %v717 = vpop.permute.xlu0 %716
    %v719 = vmul.f32 %v686, %v717
    %v720 = vmul.f32 %v704, %v600
    %v721 = vadd.f32 %v719, %v720
    %722 = vst.msk [vmem:[#allocation3] sm:$0x3] %vm209, %v707
    %723 = vst.msk [vmem:[#allocation2] sm:$0x3] %vm209, %v721
    %v724 = vmul.f32 %v707, %v686
    %v725 = vpack.c.bf16 %v724, %v724
    %v728 = vunpack.c.l.s4 1966171168
    %v729 = vunpack.c.0.s8 %v728
    %v730 = vlaneseq
    %v731 = vshrl.u32 %v730, 7
    %v732 = vsub.s32 %v729, %v731
    %v733 = vrot.slane %v725, %v732
    %v735 = vunpack.c.l.s4 1966171168
    %v736 = vunpack.c.0.s8 %v735
    %v737 = vlaneseq
    %v738 = vshrl.u32 %v737, 7
    %v739 = vsub.s32 %v736, %v738
    %v740 = vrot.slane %v733, %v739
    %v741 = vunpack.i.l.s16 %v740
    %v742 = vunpack.i.h.s16 %v740
    %v743 = vpack.i.b16 %v741, %v741
    %v744 = vpack.i.b16 %v742, %v742
    %v746 = vunpack.c.l.s4 286326784
    %v747 = vunpack.c.0.s8 %v746
    %v748 = vlaneseq
    %v749 = vshrl.u32 %v748, 7
    %v750 = vsub.s32 %v747, %v749
    %v751 = vrot.slane %v743, %v750
    %v753 = vunpack.c.l.s4 286326784
    %v754 = vunpack.c.0.s8 %v753
    %v755 = vlaneseq
    %v756 = vshrl.u32 %v755, 7
    %v757 = vsub.s32 %v754, %v756
    %v758 = vrot.slane %v744, %v757
    %vm761 = vsmask.f32 7942
    %vm762 = vmand %vm590, %vm761
    %v763 = vld [vmem:[%s4] sm:$0x2]
    %v764 = vsel %vm762, %v751, %v763
    %765 = vst [vmem:[%s4] sm:$0x2] %v764
    %v766 = vld [vmem:[%s4 + $0x4] sm:$0x2]
    %v767 = vsel %vm762, %v758, %v766
    %768 = vst [vmem:[%s4 + $0x4] sm:$0x2] %v767
    %v769 = vld [vmem:[#allocation3] sm:$0x3]
    %v770 = vld [vmem:[#allocation2] sm:$0x3]
    %s771 = scalar_lea.vmem %s1, 4
    %v772 = vld [vmem:[%s771] sm:$0x1]
    %v773 = vpack.c.bf16 %v769, %v769
    %v775 = vsel %vm90, %v773, 0
    %777 = vmatprep.subr.bf16.mxu0 0
    %778 = vmatpush1.bf16.msra.mxu0 %v86
    %779 = vmatprep.subr.bf16.mxu0 0
    %780 = vmatpush1.bf16.msra.mxu0 %v87
    %781 = vmatprep.subr.bf16.mxu0 0
    %782 = vmatpush1.bf16.msra.mxu0 0
    %783 = vmatprep.subr.bf16.mxu0 0
    %784 = vmatpush1.bf16.msra.mxu0 0
    %785 = vmatprep.subr.bf16.mxu0 0
    %786 = vmatpush1.bf16.msra.mxu0 0
    %787 = vmatprep.subr.bf16.mxu0 0
    %788 = vmatpush1.bf16.msra.mxu0 0
    %789 = vmatprep.subr.bf16.mxu0 0
    %790 = vmatpush1.bf16.msra.mxu0 0
    %791 = vmatprep.subr.bf16.mxu0 0
    %792 = vmatpush1.bf16.msra.mxu0 0
    %793 = vmatprep.subr.bf16.mxu0 0
    %794 = vmatpush1.bf16.msra.mxu0 0
    %795 = vmatprep.subr.bf16.mxu0 0
    %796 = vmatpush1.bf16.msra.mxu0 0
    %797 = vmatprep.subr.bf16.mxu0 0
    %798 = vmatpush1.bf16.msra.mxu0 0
    %799 = vmatprep.subr.bf16.mxu0 0
    %800 = vmatpush1.bf16.msra.mxu0 0
    %801 = vmatprep.subr.bf16.mxu0 0
    %802 = vmatpush1.bf16.msra.mxu0 0
    %803 = vmatprep.subr.bf16.mxu0 0
    %804 = vmatpush1.bf16.msra.mxu0 0
    %805 = vmatprep.subr.bf16.mxu0 0
    %806 = vmatpush1.bf16.msra.mxu0 0
    %807 = vmatprep.subr.bf16.mxu0 0
    %808 = vmatpush1.bf16.msra.mxu0 0
    %809 = vmatprep.mubr.bf16.mxu0 0
    %810 = vmatmul.mubr.bf16.gmra.mrb[0].mxu0 %v775
    %v811 = vpop.f32.mrb[0].mxu0
    %v812 = vadd.f32 0.0, %v811
    %v813 = vpop.f32.mrb[0].mxu0
    %v814 = vpop.f32.mrb[0].mxu0
    %v815 = vpop.f32.mrb[0].mxu0
    %816 = vdwg.mxu0
    %v817 = vunpack.c.l.bf16 %v772
    %v818 = vadd.f32 %v817, %v812
    %v819 = vadd.f32 %v818, %v33
    %v820 = vmul.f32 %v819, 0.5
    %v821 = vtanh.pop %v820
    %v822 = vadd.f32 %v821, 1.0
    %v823 = vmul.f32 %v822, 0.5
    %v824 = vtanh.pop %v819
    %v827 = vunpack.c.l.s4 1983009808
    %v828 = vunpack.c.0.s8 %v827
    %v829 = vlaneseq
    %v830 = vshrl.u32 %v829, 7
    %v831 = vsub.s32 %v828, %v830
    %v832 = vrot.slane %v770, %v831
    %833 = vrot.lane.b32.xlu0 %v832, 32
    %v834 = vpop.permute.xlu0 %833
    %v836 = vmul.f32 %v823, %v834
    %838 = vrot.lane.b32.xlu0 %v824, 64
    %v839 = vpop.permute.xlu0 %838
    %v841 = vmul.f32 %v823, %v839
    %843 = vrot.lane.b32.xlu0 %v841, 32
    %v844 = vpop.permute.xlu0 %843
    %v846 = vadd.f32 %v836, %v844
    %v847 = vtanh.pop %v846
    %849 = vrot.lane.b32.xlu0 %v847, 64
    %v850 = vpop.permute.xlu0 %849
    %v852 = vmul.f32 %v823, %v850
    %854 = vset.pattern.permute.xlu0 0
    %855 = vperm.xlu0 %854, %v58
    %v856 = vpop.permute.xlu0 %855
    %v860 = vunpack.c.l.s4 1983009808
    %v861 = vunpack.c.0.s8 %v860
    %v862 = vlaneseq
    %v863 = vshrl.u32 %v862, 7
    %v864 = vsub.s32 %v861, %v863
    %v865 = vrot.slane %v852, %v864
    %866 = vrot.lane.b32.xlu0 %v865, 32
    %v867 = vpop.permute.xlu0 %866
    %v869 = vmul.f32 %v856, %v867
    %v870 = vsub.f32 1.0, %v58
    %872 = vset.pattern.permute.xlu0 0
    %873 = vperm.xlu0 %872, %v870
    %v874 = vpop.permute.xlu0 %873
    %v876 = vmul.f32 %v874, %v769
    %v877 = vadd.f32 %v869, %v876
    %v880 = vunpack.c.l.s4 1983009808
    %v881 = vunpack.c.0.s8 %v880
    %v882 = vlaneseq
    %v883 = vshrl.u32 %v882, 7
    %v884 = vsub.s32 %v881, %v883
    %v885 = vrot.slane %v846, %v884
    %886 = vrot.lane.b32.xlu0 %v885, 96
    %v887 = vpop.permute.xlu0 %886
    %v889 = vmul.f32 %v856, %v887
    %v890 = vmul.f32 %v874, %v770
    %v891 = vadd.f32 %v889, %v890
    %892 = vst.msk [vmem:[#allocation3] sm:$0x3] %vm209, %v877
    %893 = vst.msk [vmem:[#allocation2] sm:$0x3] %vm209, %v891
    %v894 = vmul.f32 %v877, %v856
    %v895 = vpack.c.bf16 %v894, %v894
    %v898 = vunpack.c.l.s4 1966171168
    %v899 = vunpack.c.0.s8 %v898
    %v900 = vlaneseq
    %v901 = vshrl.u32 %v900, 7
    %v902 = vsub.s32 %v899, %v901
    %v903 = vrot.slane %v895, %v902
    %v905 = vunpack.c.l.s4 1966171168
    %v906 = vunpack.c.0.s8 %v905
    %v907 = vlaneseq
    %v908 = vshrl.u32 %v907, 7
    %v909 = vsub.s32 %v906, %v908
    %v910 = vrot.slane %v903, %v909
    %v911 = vunpack.i.l.s16 %v910
    %v912 = vunpack.i.h.s16 %v910
    %v913 = vpack.i.b16 %v911, %v911
    %v914 = vpack.i.b16 %v912, %v912
    %v916 = vunpack.c.l.s4 286326784
    %v917 = vunpack.c.0.s8 %v916
    %v918 = vlaneseq
    %v919 = vshrl.u32 %v918, 7
    %v920 = vsub.s32 %v917, %v919
    %v921 = vrot.slane %v913, %v920
    %v923 = vunpack.c.l.s4 286326784
    %v924 = vunpack.c.0.s8 %v923
    %v925 = vlaneseq
    %v926 = vshrl.u32 %v925, 7
    %v927 = vsub.s32 %v924, %v926
    %v928 = vrot.slane %v914, %v927
    %vm931 = vcmask 256002
    %vm932 = vsmask.f32 2304
    %vm933 = vmand %vm931, %vm932
    %v934 = vld [vmem:[%s4] sm:$0x4]
    %v935 = vsel %vm933, %v921, %v934
    %936 = vst [vmem:[%s4] sm:$0x4] %v935
    %v937 = vld [vmem:[%s4 + $0x4] sm:$0x4]
    %v938 = vsel %vm933, %v928, %v937
    %939 = vst [vmem:[%s4 + $0x4] sm:$0x4] %v938
    %v940 = vld [vmem:[#allocation3] sm:$0x3]
    %v941 = vld [vmem:[#allocation2] sm:$0x3]
    %s942 = scalar_lea.vmem %s1, 5
    %v943 = vld [vmem:[%s942] sm:$0x1]
    %v944 = vpack.c.bf16 %v940, %v940
    %v946 = vsel %vm90, %v944, 0
    %948 = vmatprep.subr.bf16.mxu0 0
    %949 = vmatpush1.bf16.msra.mxu0 %v86
    %950 = vmatprep.subr.bf16.mxu0 0
    %951 = vmatpush1.bf16.msra.mxu0 %v87
    %952 = vmatprep.subr.bf16.mxu0 0
    %953 = vmatpush1.bf16.msra.mxu0 0
    %954 = vmatprep.subr.bf16.mxu0 0
    %955 = vmatpush1.bf16.msra.mxu0 0
    %956 = vmatprep.subr.bf16.mxu0 0
    %957 = vmatpush1.bf16.msra.mxu0 0
    %958 = vmatprep.subr.bf16.mxu0 0
    %959 = vmatpush1.bf16.msra.mxu0 0
    %960 = vmatprep.subr.bf16.mxu0 0
    %961 = vmatpush1.bf16.msra.mxu0 0
    %962 = vmatprep.subr.bf16.mxu0 0
    %963 = vmatpush1.bf16.msra.mxu0 0
    %964 = vmatprep.subr.bf16.mxu0 0
    %965 = vmatpush1.bf16.msra.mxu0 0
    %966 = vmatprep.subr.bf16.mxu0 0
    %967 = vmatpush1.bf16.msra.mxu0 0
    %968 = vmatprep.subr.bf16.mxu0 0
    %969 = vmatpush1.bf16.msra.mxu0 0
    %970 = vmatprep.subr.bf16.mxu0 0
    %971 = vmatpush1.bf16.msra.mxu0 0
    %972 = vmatprep.subr.bf16.mxu0 0
    %973 = vmatpush1.bf16.msra.mxu0 0
    %974 = vmatprep.subr.bf16.mxu0 0
    %975 = vmatpush1.bf16.msra.mxu0 0
    %976 = vmatprep.subr.bf16.mxu0 0
    %977 = vmatpush1.bf16.msra.mxu0 0
    %978 = vmatprep.subr.bf16.mxu0 0
    %979 = vmatpush1.bf16.msra.mxu0 0
    %980 = vmatprep.mubr.bf16.mxu0 0
    %981 = vmatmul.mubr.bf16.gmra.mrb[0].mxu0 %v946
    %v982 = vpop.f32.mrb[0].mxu0
    %v983 = vadd.f32 0.0, %v982
    %v984 = vpop.f32.mrb[0].mxu0
    %v985 = vpop.f32.mrb[0].mxu0
    %v986 = vpop.f32.mrb[0].mxu0
    %987 = vdwg.mxu0
    %v988 = vunpack.c.l.bf16 %v943
    %v989 = vadd.f32 %v988, %v983
    %v990 = vadd.f32 %v989, %v33
    %v991 = vmul.f32 %v990, 0.5
    %v992 = vtanh.pop %v991
    %v993 = vadd.f32 %v992, 1.0
    %v994 = vmul.f32 %v993, 0.5
    %v995 = vtanh.pop %v990
    %v998 = vunpack.c.l.s4 1983009808
    %v999 = vunpack.c.0.s8 %v998
    %v1000 = vlaneseq
    %v1001 = vshrl.u32 %v1000, 7
    %v1002 = vsub.s32 %v999, %v1001
    %v1003 = vrot.slane %v941, %v1002
    %1004 = vrot.lane.b32.xlu0 %v1003, 32
    %v1005 = vpop.permute.xlu0 %1004
    %v1007 = vmul.f32 %v994, %v1005
    %1009 = vrot.lane.b32.xlu0 %v995, 64
    %v1010 = vpop.permute.xlu0 %1009
    %v1012 = vmul.f32 %v994, %v1010
    %1014 = vrot.lane.b32.xlu0 %v1012, 32
    %v1015 = vpop.permute.xlu0 %1014
    %v1017 = vadd.f32 %v1007, %v1015
    %v1018 = vtanh.pop %v1017
    %1020 = vrot.lane.b32.xlu0 %v1018, 64
    %v1021 = vpop.permute.xlu0 %1020
    %v1023 = vmul.f32 %v994, %v1021
    %1025 = vset.pattern.permute.xlu0 0
    %1026 = vperm.xlu0 %1025, %v63
    %v1027 = vpop.permute.xlu0 %1026
    %v1031 = vunpack.c.l.s4 1983009808
    %v1032 = vunpack.c.0.s8 %v1031
    %v1033 = vlaneseq
    %v1034 = vshrl.u32 %v1033, 7
    %v1035 = vsub.s32 %v1032, %v1034
    %v1036 = vrot.slane %v1023, %v1035
    %1037 = vrot.lane.b32.xlu0 %v1036, 32
    %v1038 = vpop.permute.xlu0 %1037
    %v1040 = vmul.f32 %v1027, %v1038
    %v1041 = vsub.f32 1.0, %v63
    %1043 = vset.pattern.permute.xlu0 0
    %1044 = vperm.xlu0 %1043, %v1041
    %v1045 = vpop.permute.xlu0 %1044
    %v1047 = vmul.f32 %v1045, %v940
    %v1048 = vadd.f32 %v1040, %v1047
    %v1051 = vunpack.c.l.s4 1983009808
    %v1052 = vunpack.c.0.s8 %v1051
    %v1053 = vlaneseq
    %v1054 = vshrl.u32 %v1053, 7
    %v1055 = vsub.s32 %v1052, %v1054
    %v1056 = vrot.slane %v1017, %v1055
    %1057 = vrot.lane.b32.xlu0 %v1056, 96
    %v1058 = vpop.permute.xlu0 %1057
    %v1060 = vmul.f32 %v1027, %v1058
    %v1061 = vmul.f32 %v1045, %v941
    %v1062 = vadd.f32 %v1060, %v1061
    %1063 = vst.msk [vmem:[#allocation3] sm:$0x3] %vm209, %v1048
    %1064 = vst.msk [vmem:[#allocation2] sm:$0x3] %vm209, %v1062
    %v1065 = vmul.f32 %v1048, %v1027
    %v1066 = vpack.c.bf16 %v1065, %v1065
    %v1069 = vunpack.c.l.s4 1966171168
    %v1070 = vunpack.c.0.s8 %v1069
    %v1071 = vlaneseq
    %v1072 = vshrl.u32 %v1071, 7
    %v1073 = vsub.s32 %v1070, %v1072
    %v1074 = vrot.slane %v1066, %v1073
    %v1076 = vunpack.c.l.s4 1966171168
    %v1077 = vunpack.c.0.s8 %v1076
    %v1078 = vlaneseq
    %v1079 = vshrl.u32 %v1078, 7
    %v1080 = vsub.s32 %v1077, %v1079
    %v1081 = vrot.slane %v1074, %v1080
    %v1082 = vunpack.i.l.s16 %v1081
    %v1083 = vunpack.i.h.s16 %v1081
    %v1084 = vpack.i.b16 %v1082, %v1082
    %v1085 = vpack.i.b16 %v1083, %v1083
    %v1087 = vunpack.c.l.s4 286326784
    %v1088 = vunpack.c.0.s8 %v1087
    %v1089 = vlaneseq
    %v1090 = vshrl.u32 %v1089, 7
    %v1091 = vsub.s32 %v1088, %v1090
    %v1092 = vrot.slane %v1084, %v1091
    %v1094 = vunpack.c.l.s4 286326784
    %v1095 = vunpack.c.0.s8 %v1094
    %v1096 = vlaneseq
    %v1097 = vshrl.u32 %v1096, 7
    %v1098 = vsub.s32 %v1095, %v1097
    %v1099 = vrot.slane %v1085, %v1098
    %vm1102 = vsmask.f32 7946
    %vm1103 = vmand %vm931, %vm1102
    %v1104 = vld [vmem:[%s4] sm:$0x4]
    %v1105 = vsel %vm1103, %v1092, %v1104
    %1106 = vst [vmem:[%s4] sm:$0x4] %v1105
    %v1107 = vld [vmem:[%s4 + $0x4] sm:$0x4]
    %v1108 = vsel %vm1103, %v1099, %v1107
    %1109 = vst [vmem:[%s4 + $0x4] sm:$0x4] %v1108
    %v1110 = vld [vmem:[#allocation3] sm:$0x3]
    %v1111 = vld [vmem:[#allocation2] sm:$0x3]
    %s1112 = scalar_lea.vmem %s1, 6
    %v1113 = vld [vmem:[%s1112] sm:$0x1]
    %v1114 = vpack.c.bf16 %v1110, %v1110
    %v1116 = vsel %vm90, %v1114, 0
    %1118 = vmatprep.subr.bf16.mxu0 0
    %1119 = vmatpush1.bf16.msra.mxu0 %v86
    %1120 = vmatprep.subr.bf16.mxu0 0
    %1121 = vmatpush1.bf16.msra.mxu0 %v87
    %1122 = vmatprep.subr.bf16.mxu0 0
    %1123 = vmatpush1.bf16.msra.mxu0 0
    %1124 = vmatprep.subr.bf16.mxu0 0
    %1125 = vmatpush1.bf16.msra.mxu0 0
    %1126 = vmatprep.subr.bf16.mxu0 0
    %1127 = vmatpush1.bf16.msra.mxu0 0
    %1128 = vmatprep.subr.bf16.mxu0 0
    %1129 = vmatpush1.bf16.msra.mxu0 0
    %1130 = vmatprep.subr.bf16.mxu0 0
    %1131 = vmatpush1.bf16.msra.mxu0 0
    %1132 = vmatprep.subr.bf16.mxu0 0
    %1133 = vmatpush1.bf16.msra.mxu0 0
    %1134 = vmatprep.subr.bf16.mxu0 0
    %1135 = vmatpush1.bf16.msra.mxu0 0
    %1136 = vmatprep.subr.bf16.mxu0 0
    %1137 = vmatpush1.bf16.msra.mxu0 0
    %1138 = vmatprep.subr.bf16.mxu0 0
    %1139 = vmatpush1.bf16.msra.mxu0 0
    %1140 = vmatprep.subr.bf16.mxu0 0
    %1141 = vmatpush1.bf16.msra.mxu0 0
    %1142 = vmatprep.subr.bf16.mxu0 0
    %1143 = vmatpush1.bf16.msra.mxu0 0
    %1144 = vmatprep.subr.bf16.mxu0 0
    %1145 = vmatpush1.bf16.msra.mxu0 0
    %1146 = vmatprep.subr.bf16.mxu0 0
    %1147 = vmatpush1.bf16.msra.mxu0 0
    %1148 = vmatprep.subr.bf16.mxu0 0
    %1149 = vmatpush1.bf16.msra.mxu0 0
    %1150 = vmatprep.mubr.bf16.mxu0 0
    %1151 = vmatmul.mubr.bf16.gmra.mrb[0].mxu0 %v1116
    %v1152 = vpop.f32.mrb[0].mxu0
    %v1153 = vadd.f32 0.0, %v1152
    %v1154 = vpop.f32.mrb[0].mxu0
    %v1155 = vpop.f32.mrb[0].mxu0
    %v1156 = vpop.f32.mrb[0].mxu0
    %1157 = vdwg.mxu0
    %v1158 = vunpack.c.l.bf16 %v1113
    %v1159 = vadd.f32 %v1158, %v1153
    %v1160 = vadd.f32 %v1159, %v33
    %v1161 = vmul.f32 %v1160, 0.5
    %v1162 = vtanh.pop %v1161
    %v1163 = vadd.f32 %v1162, 1.0
    %v1164 = vmul.f32 %v1163, 0.5
    %v1165 = vtanh.pop %v1160
    %v1168 = vunpack.c.l.s4 1983009808
    %v1169 = vunpack.c.0.s8 %v1168
    %v1170 = vlaneseq
    %v1171 = vshrl.u32 %v1170, 7
    %v1172 = vsub.s32 %v1169, %v1171
    %v1173 = vrot.slane %v1111, %v1172
    %1174 = vrot.lane.b32.xlu0 %v1173, 32
    %v1175 = vpop.permute.xlu0 %1174
    %v1177 = vmul.f32 %v1164, %v1175
    %1179 = vrot.lane.b32.xlu0 %v1165, 64
    %v1180 = vpop.permute.xlu0 %1179
    %v1182 = vmul.f32 %v1164, %v1180
    %1184 = vrot.lane.b32.xlu0 %v1182, 32
    %v1185 = vpop.permute.xlu0 %1184
    %v1187 = vadd.f32 %v1177, %v1185
    %v1188 = vtanh.pop %v1187
    %1190 = vrot.lane.b32.xlu0 %v1188, 64
    %v1191 = vpop.permute.xlu0 %1190
    %v1193 = vmul.f32 %v1164, %v1191
    %1195 = vset.pattern.permute.xlu0 0
    %1196 = vperm.xlu0 %1195, %v68
    %v1197 = vpop.permute.xlu0 %1196
    %v1201 = vunpack.c.l.s4 1983009808
    %v1202 = vunpack.c.0.s8 %v1201
    %v1203 = vlaneseq
    %v1204 = vshrl.u32 %v1203, 7
    %v1205 = vsub.s32 %v1202, %v1204
    %v1206 = vrot.slane %v1193, %v1205
    %1207 = vrot.lane.b32.xlu0 %v1206, 32
    %v1208 = vpop.permute.xlu0 %1207
    %v1210 = vmul.f32 %v1197, %v1208
    %v1211 = vsub.f32 1.0, %v68
    %1213 = vset.pattern.permute.xlu0 0
    %1214 = vperm.xlu0 %1213, %v1211
    %v1215 = vpop.permute.xlu0 %1214
    %v1217 = vmul.f32 %v1215, %v1110
    %v1218 = vadd.f32 %v1210, %v1217
    %v1221 = vunpack.c.l.s4 1983009808
    %v1222 = vunpack.c.0.s8 %v1221
    %v1223 = vlaneseq
    %v1224 = vshrl.u32 %v1223, 7
    %v1225 = vsub.s32 %v1222, %v1224
    %v1226 = vrot.slane %v1187, %v1225
    %1227 = vrot.lane.b32.xlu0 %v1226, 96
    %v1228 = vpop.permute.xlu0 %1227
    %v1230 = vmul.f32 %v1197, %v1228
    %v1231 = vmul.f32 %v1215, %v1111
    %v1232 = vadd.f32 %v1230, %v1231
    %1233 = vst.msk [vmem:[#allocation3] sm:$0x3] %vm209, %v1218
    %1234 = vst.msk [vmem:[#allocation2] sm:$0x3] %vm209, %v1232
    %v1235 = vmul.f32 %v1218, %v1197
    %v1236 = vpack.c.bf16 %v1235, %v1235
    %v1239 = vunpack.c.l.s4 1966171168
    %v1240 = vunpack.c.0.s8 %v1239
    %v1241 = vlaneseq
    %v1242 = vshrl.u32 %v1241, 7
    %v1243 = vsub.s32 %v1240, %v1242
    %v1244 = vrot.slane %v1236, %v1243
    %v1246 = vunpack.c.l.s4 1966171168
    %v1247 = vunpack.c.0.s8 %v1246
    %v1248 = vlaneseq
    %v1249 = vshrl.u32 %v1248, 7
    %v1250 = vsub.s32 %v1247, %v1249
    %v1251 = vrot.slane %v1244, %v1250
    %v1252 = vunpack.i.l.s16 %v1251
    %v1253 = vunpack.i.h.s16 %v1251
    %v1254 = vpack.i.b16 %v1252, %v1252
    %v1255 = vpack.i.b16 %v1253, %v1253
    %v1257 = vunpack.c.l.s4 286326784
    %v1258 = vunpack.c.0.s8 %v1257
    %v1259 = vlaneseq
    %v1260 = vshrl.u32 %v1259, 7
    %v1261 = vsub.s32 %v1258, %v1260
    %v1262 = vrot.slane %v1254, %v1261
    %v1264 = vunpack.c.l.s4 286326784
    %v1265 = vunpack.c.0.s8 %v1264
    %v1266 = vlaneseq
    %v1267 = vshrl.u32 %v1266, 7
    %v1268 = vsub.s32 %v1265, %v1267
    %v1269 = vrot.slane %v1255, %v1268
    %vm1272 = vcmask 257027
    %vm1273 = vsmask.f32 3328
    %vm1274 = vmand %vm1272, %vm1273
    %v1275 = vld [vmem:[%s4] sm:$0x8]
    %v1276 = vsel %vm1274, %v1262, %v1275
    %1277 = vst [vmem:[%s4] sm:$0x8] %v1276
    %v1278 = vld [vmem:[%s4 + $0x4] sm:$0x8]
    %v1279 = vsel %vm1274, %v1269, %v1278
    %1280 = vst [vmem:[%s4 + $0x4] sm:$0x8] %v1279
    %v1281 = vld [vmem:[#allocation3] sm:$0x3]
    %v1282 = vld [vmem:[#allocation2] sm:$0x3]
    %s1283 = scalar_lea.vmem %s1, 7
    %v1284 = vld [vmem:[%s1283] sm:$0x1]
    %v1285 = vpack.c.bf16 %v1281, %v1281
    %v1287 = vsel %vm90, %v1285, 0
    %1289 = vmatprep.subr.bf16.mxu0 0
    %1290 = vmatpush1.bf16.msra.mxu0 %v86
    %1291 = vmatprep.subr.bf16.mxu0 0
    %1292 = vmatpush1.bf16.msra.mxu0 %v87
    %1293 = vmatprep.subr.bf16.mxu0 0
    %1294 = vmatpush1.bf16.msra.mxu0 0
    %1295 = vmatprep.subr.bf16.mxu0 0
    %1296 = vmatpush1.bf16.msra.mxu0 0
    %1297 = vmatprep.subr.bf16.mxu0 0
    %1298 = vmatpush1.bf16.msra.mxu0 0
    %1299 = vmatprep.subr.bf16.mxu0 0
    %1300 = vmatpush1.bf16.msra.mxu0 0
    %1301 = vmatprep.subr.bf16.mxu0 0
    %1302 = vmatpush1.bf16.msra.mxu0 0
    %1303 = vmatprep.subr.bf16.mxu0 0
    %1304 = vmatpush1.bf16.msra.mxu0 0
    %1305 = vmatprep.subr.bf16.mxu0 0
    %1306 = vmatpush1.bf16.msra.mxu0 0
    %1307 = vmatprep.subr.bf16.mxu0 0
    %1308 = vmatpush1.bf16.msra.mxu0 0
    %1309 = vmatprep.subr.bf16.mxu0 0
    %1310 = vmatpush1.bf16.msra.mxu0 0
    %1311 = vmatprep.subr.bf16.mxu0 0
    %1312 = vmatpush1.bf16.msra.mxu0 0
    %1313 = vmatprep.subr.bf16.mxu0 0
    %1314 = vmatpush1.bf16.msra.mxu0 0
    %1315 = vmatprep.subr.bf16.mxu0 0
    %1316 = vmatpush1.bf16.msra.mxu0 0
    %1317 = vmatprep.subr.bf16.mxu0 0
    %1318 = vmatpush1.bf16.msra.mxu0 0
    %1319 = vmatprep.subr.bf16.mxu0 0
    %1320 = vmatpush1.bf16.msra.mxu0 0
    %1321 = vmatprep.mubr.bf16.mxu0 0
    %1322 = vmatmul.mubr.bf16.gmra.mrb[0].mxu0 %v1287
    %v1323 = vpop.f32.mrb[0].mxu0
    %v1324 = vadd.f32 0.0, %v1323
    %v1325 = vpop.f32.mrb[0].mxu0
    %v1326 = vpop.f32.mrb[0].mxu0
    %v1327 = vpop.f32.mrb[0].mxu0
    %1328 = vdwg.mxu0
    %v1329 = vunpack.c.l.bf16 %v1284
    %v1330 = vadd.f32 %v1329, %v1324
    %v1331 = vadd.f32 %v1330, %v33
    %v1332 = vmul.f32 %v1331, 0.5
    %v1333 = vtanh.pop %v1332
    %v1334 = vadd.f32 %v1333, 1.0
    %v1335 = vmul.f32 %v1334, 0.5
    %v1336 = vtanh.pop %v1331
    %v1339 = vunpack.c.l.s4 1983009808
    %v1340 = vunpack.c.0.s8 %v1339
    %v1341 = vlaneseq
    %v1342 = vshrl.u32 %v1341, 7
    %v1343 = vsub.s32 %v1340, %v1342
    %v1344 = vrot.slane %v1282, %v1343
    %1345 = vrot.lane.b32.xlu0 %v1344, 32
    %v1346 = vpop.permute.xlu0 %1345
    %v1348 = vmul.f32 %v1335, %v1346
    %1350 = vrot.lane.b32.xlu0 %v1336, 64
    %v1351 = vpop.permute.xlu0 %1350
    %v1353 = vmul.f32 %v1335, %v1351
    %1355 = vrot.lane.b32.xlu0 %v1353, 32
    %v1356 = vpop.permute.xlu0 %1355
    %v1358 = vadd.f32 %v1348, %v1356
    %v1359 = vtanh.pop %v1358
    %1361 = vrot.lane.b32.xlu0 %v1359, 64
    %v1362 = vpop.permute.xlu0 %1361
    %v1364 = vmul.f32 %v1335, %v1362
    %1366 = vset.pattern.permute.xlu0 0
    %1367 = vperm.xlu0 %1366, %v73
    %v1368 = vpop.permute.xlu0 %1367
    %v1372 = vunpack.c.l.s4 1983009808
    %v1373 = vunpack.c.0.s8 %v1372
    %v1374 = vlaneseq
    %v1375 = vshrl.u32 %v1374, 7
    %v1376 = vsub.s32 %v1373, %v1375
    %v1377 = vrot.slane %v1364, %v1376
    %1378 = vrot.lane.b32.xlu0 %v1377, 32
    %v1379 = vpop.permute.xlu0 %1378
    %v1381 = vmul.f32 %v1368, %v1379
    %v1382 = vsub.f32 1.0, %v73
    %1384 = vset.pattern.permute.xlu0 0
    %1385 = vperm.xlu0 %1384, %v1382
    %v1386 = vpop.permute.xlu0 %1385
    %v1388 = vmul.f32 %v1386, %v1281
    %v1389 = vadd.f32 %v1381, %v1388
    %v1392 = vunpack.c.l.s4 1983009808
    %v1393 = vunpack.c.0.s8 %v1392
    %v1394 = vlaneseq
    %v1395 = vshrl.u32 %v1394, 7
    %v1396 = vsub.s32 %v1393, %v1395
    %v1397 = vrot.slane %v1358, %v1396
    %1398 = vrot.lane.b32.xlu0 %v1397, 96
    %v1399 = vpop.permute.xlu0 %1398
    %v1401 = vmul.f32 %v1368, %v1399
    %v1402 = vmul.f32 %v1386, %v1282
    %v1403 = vadd.f32 %v1401, %v1402
    %1404 = vst.msk [vmem:[#allocation3] sm:$0x3] %vm209, %v1389
    %1405 = vst.msk [vmem:[#allocation2] sm:$0x3] %vm209, %v1403
    %v1406 = vmul.f32 %v1389, %v1368
    %v1407 = vpack.c.bf16 %v1406, %v1406
    %v1410 = vunpack.c.l.s4 1966171168
    %v1411 = vunpack.c.0.s8 %v1410
    %v1412 = vlaneseq
    %v1413 = vshrl.u32 %v1412, 7
    %v1414 = vsub.s32 %v1411, %v1413
    %v1415 = vrot.slane %v1407, %v1414
    %v1417 = vunpack.c.l.s4 1966171168
    %v1418 = vunpack.c.0.s8 %v1417
    %v1419 = vlaneseq
    %v1420 = vshrl.u32 %v1419, 7
    %v1421 = vsub.s32 %v1418, %v1420
    %v1422 = vrot.slane %v1415, %v1421
    %v1423 = vunpack.i.l.s16 %v1422
    %v1424 = vunpack.i.h.s16 %v1422
    %v1425 = vpack.i.b16 %v1423, %v1423
    %v1426 = vpack.i.b16 %v1424, %v1424
    %v1428 = vunpack.c.l.s4 286326784
    %v1429 = vunpack.c.0.s8 %v1428
    %v1430 = vlaneseq
    %v1431 = vshrl.u32 %v1430, 7
    %v1432 = vsub.s32 %v1429, %v1431
    %v1433 = vrot.slane %v1425, %v1432
    %v1435 = vunpack.c.l.s4 286326784
    %v1436 = vunpack.c.0.s8 %v1435
    %v1437 = vlaneseq
    %v1438 = vshrl.u32 %v1437, 7
    %v1439 = vsub.s32 %v1436, %v1438
    %v1440 = vrot.slane %v1426, %v1439
    %vm1443 = vsmask.f32 7950
    %vm1444 = vmand %vm1272, %vm1443
    %v1445 = vld [vmem:[%s4] sm:$0x8]
    %v1446 = vsel %vm1444, %v1433, %v1445
    %1447 = vst [vmem:[%s4] sm:$0x8] %v1446
    %v1448 = vld [vmem:[%s4 + $0x4] sm:$0x8]
    %v1449 = vsel %vm1444, %v1440, %v1448
    %1450 = vst [vmem:[%s4 + $0x4] sm:$0x8] %v1449
    // Predicated region
    $region22: #{seq2seq_forward.14} parent=1 // pred_check
      _
    $region23: #{seq2seq_forward.14} parent=1 // pred_check_branch
      %1452 = sbr.rel (0) target = $region25
    $region24: #{seq2seq_forward.14} parent=1 // pred_region
      _
    $region25: #{seq2seq_forward.14} parent=1 // pred_fallthru
      _
    // Predicated region
    $region26: #{seq2seq_forward.14} parent=1 // pred_check
      _
    $region27: #{seq2seq_forward.14} parent=1 // pred_check_branch
      %1454 = sbr.rel (0) target = $region29
    $region28: #{seq2seq_forward.14} parent=1 // pred_region
      %s1456 = ssub.s32 32, 32
      %1457 = vsyncadd [#allocation4], %s1456
      %s1459 = sshll.u32 [#allocation3], 4
      %s1460 = int_to_ptr.vmem [resolvable:$true] %s1459
      %1462 = dma.vmem_to_hbm [thread:$0]  %s1460, 32, %s5, [#allocation4]
    $region29: #{seq2seq_forward.14} parent=1 // pred_fallthru
      _
    // Predicated region
    $region30: #{seq2seq_forward.14} parent=1 // pred_check
      _
    $region31: #{seq2seq_forward.14} parent=1 // pred_check_branch
      %1464 = sbr.rel (0) target = $region33
    $region32: #{seq2seq_forward.14} parent=1 // pred_region
      _
    $region33: #{seq2seq_forward.14} parent=1 // pred_fallthru
      _
    // Predicated region
    $region34: #{seq2seq_forward.14} parent=1 // pred_check
      _
    $region35: #{seq2seq_forward.14} parent=1 // pred_check_branch
      %1466 = sbr.rel (0) target = $region37
    $region36: #{seq2seq_forward.14} parent=1 // pred_region
      %1467 = dma.done [#allocation4], 32
    $region37: #{seq2seq_forward.14} parent=1 // pred_fallthru
      _
    %1468 = vsyncpa [#allocation4], 1

</llo_original>
